<compile_context>
chip_gen: v7x
topology: tpu7x:2x2x1
jax: 0.10.0
libtpu: 0.0.40
codegen_flags: <defaults>
</compile_context>

<pallas_src>
import functools
import math

import jax
import jax.numpy as jnp
from jax.experimental import pallas as pl
from jax.experimental.pallas import tpu as pltpu

_BN_EPS = 1e-5


def _round_up(x, m):
    return ((x + m - 1) // m) * m


def _pick_tile(m, tmax):
    """Row-tile size: multiple of 8, <= ~tmax, minimizing padded rows."""
    m8 = _round_up(m, 8)
    if m8 <= tmax:
        return m8
    nblocks = math.ceil(m8 / tmax)
    return _round_up(math.ceil(m / nblocks), 8)


# ----------------------------- Pallas kernels ------------------------------

def _conv_bn_relu_pool_kernel(cols_ref, w_ref, shift_ref, o_ref, *, taps):
    """o = relu(max_t(cols[t] @ w) + shift).

    `w` already carries the folded BatchNorm scale, `shift` the folded conv-bias/BN offset.
    The max over the `taps` leading axis implements MaxPool2d(3,3) (affine/ReLU commute with it
    because they are identical per-channel transforms applied before the max / monotone).
    """
    m = jnp.dot(cols_ref[0], w_ref[...], preferred_element_type=jnp.float32)
    for t in range(1, taps):
        m = jnp.maximum(
            m, jnp.dot(cols_ref[t], w_ref[...], preferred_element_type=jnp.float32))
    o_ref[...] = jnp.maximum(m + shift_ref[...], 0.0).astype(o_ref.dtype)


def _fc_fused_kernel(x_ref, w1_ref, b1_ref, w2_ref, b2_ref, o_ref):
    """o = relu(x @ w1 + b1) @ w2 + b2  (Dropout between fc1/ReLU is eval-mode identity)."""
    h = jnp.dot(x_ref[...], w1_ref[...], preferred_element_type=jnp.float32)
    h = jnp.maximum(h + b1_ref[...], 0.0)
    y = jnp.dot(h, w2_ref[...], preferred_element_type=jnp.float32)
    o_ref[...] = (y + b2_ref[...]).astype(o_ref.dtype)


# ------------------------------- wrappers -----------------------------------

def _im2col_pool_taps(x_nhwc, KH, KW, pool):
    """im2col with rows ordered (pool_tap_h, pool_tap_w, N, Hp, Wp).

    Returns cols of shape (pool*pool, N*Hp*Wp, KH*KW*Cin) so the fused kernel can max-reduce
    the pool taps in registers.  Pure data-movement glue on a tiny tensor (XLA handles it).
    """
    N, H, W, Cin = x_nhwc.shape
    Ho, Wo = H - KH + 1, W - KW + 1
    Hp, Wp = Ho // pool, Wo // pool         # floor-mode pooling crop
    Hc, Wc = Hp * pool, Wp * pool
    K = KH * KW * Cin
    cols = jnp.concatenate(
        [x_nhwc[:, kh:kh + Hc, kw:kw + Wc, :] for kh in range(KH) for kw in range(KW)],
        axis=-1,
    )                                        # (N, Hc, Wc, K), column order (kh, kw, ci)
    cols = cols.reshape(N, Hp, pool, Wp, pool, K)
    cols = jnp.transpose(cols, (2, 4, 0, 1, 3, 5))   # (pool, pool, N, Hp, Wp, K)
    return cols.reshape(pool * pool, N * Hp * Wp, K), (Hp, Wp)


def conv_bn_relu_pool(x_nhwc, w_oihw, b, gamma, beta, mean, var, *, tmax=512):
    """Conv2d(k=3, valid) + BatchNorm(eval) + [Dropout=identity] + ReLU + MaxPool2d(3), fused."""
    N, H, W, Cin = x_nhwc.shape
    Cout, _, KH, KW = w_oihw.shape
    cols, (Hp, Wp) = _im2col_pool_taps(x_nhwc, KH, KW, 3)
    taps, M, K = cols.shape

    # Fold inference-mode BatchNorm: scale into the weight matrix, offset (+conv bias) into shift.
    scale = gamma / jnp.sqrt(var + _BN_EPS)
    w2 = jnp.transpose(w_oihw, (2, 3, 1, 0)).reshape(K, Cout) * scale[None, :]
    shift = beta + (b - mean) * scale

    tm = _pick_tile(M, tmax)
    Mp = _round_up(M, tm)
    if Mp != M:
        cols = jnp.pad(cols, ((0, 0), (0, Mp - M), (0, 0)))

    out = pl.pallas_call(
        functools.partial(_conv_bn_relu_pool_kernel, taps=taps),
        out_shape=jax.ShapeDtypeStruct((Mp, Cout), jnp.float32),
        grid=(Mp // tm,),
        in_specs=[
            pl.BlockSpec((taps, tm, K), lambda i: (0, i, 0)),
            pl.BlockSpec((K, Cout), lambda i: (0, 0)),
            pl.BlockSpec((1, Cout), lambda i: (0, 0)),
        ],
        out_specs=pl.BlockSpec((tm, Cout), lambda i: (i, 0)),
        compiler_params=pltpu.CompilerParams(dimension_semantics=("parallel",)),
    )(cols, w2, shift.reshape(1, Cout))
    return out[:M].reshape(N, Hp, Wp, Cout)


def fc_fused(x, w1, b1, w2, b2, *, tmax=512):
    """Linear(1080,150) + Dropout(identity) + ReLU + Linear(150,15) in one pallas_call."""
    M, K1 = x.shape
    N1 = w1.shape[1]
    N2 = w2.shape[1]
    tm = _pick_tile(M, tmax)
    Mp = _round_up(M, tm)
    if Mp != M:
        x = jnp.pad(x, ((0, Mp - M), (0, 0)))
    out = pl.pallas_call(
        _fc_fused_kernel,
        out_shape=jax.ShapeDtypeStruct((Mp, N2), jnp.float32),
        grid=(Mp // tm,),
        in_specs=[
            pl.BlockSpec((tm, K1), lambda i: (i, 0)),
            pl.BlockSpec((K1, N1), lambda i: (0, 0)),
            pl.BlockSpec((1, N1), lambda i: (0, 0)),
            pl.BlockSpec((N1, N2), lambda i: (0, 0)),
            pl.BlockSpec((1, N2), lambda i: (0, 0)),
        ],
        out_specs=pl.BlockSpec((tm, N2), lambda i: (i, 0)),
        compiler_params=pltpu.CompilerParams(dimension_semantics=("parallel",)),
    )(x, w1, b1.reshape(1, N1), w2, b2.reshape(1, N2))
    return out[:M]


# ------------------------------ model forward -------------------------------

def simple_net_dropout_forward(x_nchw, p):
    """Forward pass of SimpleNetDropout (raw scores, no softmax). Input NCHW -> (N, 15)."""
    x = jnp.transpose(x_nchw, (0, 2, 3, 1)).astype(jnp.float32)  # NHWC
    # TODO(synk): train-mode Dropout(0.1) is stochastic; eval-mode identity implemented.
    # conv block 1: Conv(1->30,3) + BN + Dropout + ReLU + MaxPool(3)   (fully fused kernel)
    h = conv_bn_relu_pool(x, p['conv1_w'], p['conv1_b'],
                          p['bn1_gamma'], p['bn1_beta'], p['bn1_mean'], p['bn1_var'])
    # conv block 2: Conv(30->30,3) + BN + ReLU + MaxPool(3)            (fully fused kernel)
    h = conv_bn_relu_pool(h, p['conv2_w'], p['conv2_b'],
                          p['bn2_gamma'], p['bn2_beta'], p['bn2_mean'], p['bn2_var'])
    # Flatten using PyTorch's NCHW ordering: (N, C, H, W) -> (N, 1080).
    flat = jnp.transpose(h, (0, 3, 1, 2)).reshape(h.shape[0], -1)
    # fc layers (single fused kernel): Linear(1080,150) + Dropout[id] + ReLU + Linear(150,15)
    return fc_fused(flat, p['fc1_w'].T, p['fc1_b'], p['fc2_w'].T, p['fc2_b'])


# --------------------------- params & reference -----------------------------

def init_params(key):
    ks = jax.random.split(key, 16)

    def n(i, shape, scale):
        return scale * jax.random.normal(ks[i], shape, jnp.float32)

    def u(i, shape):
        return jax.random.uniform(ks[i], shape, jnp.float32, 0.5, 1.5)

    return dict(
        conv1_w=n(0, (30, 1, 3, 3), 0.2), conv1_b=n(1, (30,), 0.1),
        bn1_gamma=u(2, (30,)), bn1_beta=n(3, (30,), 0.1),
        bn1_mean=n(4, (30,), 0.1), bn1_var=u(5, (30,)),
        conv2_w=n(6, (30, 30, 3, 3), 0.1), conv2_b=n(7, (30,), 0.1),
        bn2_gamma=u(8, (30,)), bn2_beta=n(9, (30,), 0.1),
        bn2_mean=n(10, (30,), 0.1), bn2_var=u(11, (30,)),
        fc1_w=n(12, (150, 1080), 0.03), fc1_b=n(13, (150,), 0.1),
        fc2_w=n(14, (15, 150), 0.05), fc2_b=n(15, (15,), 0.1),
    )


def reference_forward(x_nchw, p):
    """Pure-JAX (XLA) reference with identical inference-mode semantics."""
    x = jnp.transpose(x_nchw, (0, 2, 3, 1)).astype(jnp.float32)

    def conv(x, w, b):
        w_hwio = jnp.transpose(w, (2, 3, 1, 0))
        y = jax.lax.conv_general_dilated(
            x, w_hwio, window_strides=(1, 1), padding='VALID',
            dimension_numbers=('NHWC', 'HWIO', 'NHWC'),
            precision=jax.lax.Precision.HIGHEST)
        return y + b

    def bn(x, g, bt, m, v):
        return (x - m) / jnp.sqrt(v + _BN_EPS) * g + bt

    def pool(x):
        return jax.lax.reduce_window(x, -jnp.inf, jax.lax.max,
                                     (1, 3, 3, 1), (1, 3, 3, 1), 'VALID')

    h = pool(jax.nn.relu(bn(conv(x, p['conv1_w'], p['conv1_b']),
                            p['bn1_gamma'], p['bn1_beta'], p['bn1_mean'], p['bn1_var'])))
    h = pool(jax.nn.relu(bn(conv(h, p['conv2_w'], p['conv2_b']),
                            p['bn2_gamma'], p['bn2_beta'], p['bn2_mean'], p['bn2_var'])))
    flat = jnp.transpose(h, (0, 3, 1, 2)).reshape(h.shape[0], -1)
    h = jax.nn.relu(jnp.dot(flat, p['fc1_w'].T, precision=jax.lax.Precision.HIGHEST)
                    + p['fc1_b'])
    return jnp.dot(h, p['fc2_w'].T, precision=jax.lax.Precision.HIGHEST) + p['fc2_b']


if __name__ == "__main__":
    key = jax.random.PRNGKey(0)
    k_x, k_p = jax.random.split(key)
    params = init_params(k_p)
    # Input implied by the module: Linear(1080 = 30*6*6) after two (conv3 -> pool3) stages
    # forces 64x64 single-channel images.  N=2 keeps it small.
    x = jax.random.normal(k_x, (2, 1, 64, 64), jnp.float32)

    y = jax.jit(simple_net_dropout_forward)(x, params)
    y = jax.block_until_ready(y)
    assert y.shape == (2, 15), y.shape

    y_ref = reference_forward(x, params)
    err = float(jnp.max(jnp.abs(y - y_ref)) / (jnp.max(jnp.abs(y_ref)) + 1e-6))
    assert err < 1e-2, f"mismatch vs reference: rel max err = {err}"

    print("KERNEL_OK")
</pallas_src>

<mosaic_0001>
module attributes {stable_mosaic.version = 11 : i64} {
  func.func @_conv_bn_relu_pool_kernel(%arg0: i32, %arg1: memref<9x400x9xf32, #tpu.memory_space<vmem>>, %arg2: memref<9x30xf32, #tpu.memory_space<vmem>>, %arg3: memref<1x30xf32, #tpu.memory_space<vmem>>, %arg4: memref<400x30xf32, #tpu.memory_space<vmem>>) attributes {dimension_semantics = [#tpu.dimension_semantics<parallel>], iteration_bounds = array<i64: 2>, scalar_prefetch = 0 : i64, scratch_operands = 0 : i64, tpu.core_type = #tpu.core_type<tc>, window_params = [{transform_indices = @transform_0, window_bounds = array<i64: 9, 400, 9>}, {pipeline_mode = #tpu.pipeline_mode<synchronous>, transform_indices = @transform_1, window_bounds = array<i64: 9, 30>}, {pipeline_mode = #tpu.pipeline_mode<synchronous>, transform_indices = @transform_2, window_bounds = array<i64: 1, 30>}, {transform_indices = @transform_3, window_bounds = array<i64: 400, 30>}]} {
    %c0 = arith.constant 0 : index
    %c0_0 = arith.constant 0 : index
    %c0_1 = arith.constant 0 : index
    %0 = vector.load %arg1[%c0, %c0_0, %c0_1] : memref<9x400x9xf32, #tpu.memory_space<vmem>>, vector<1x400x9xf32>
    %1 = vector.shape_cast %0 : vector<1x400x9xf32> to vector<400x9xf32>
    %c0_2 = arith.constant 0 : index
    %c0_3 = arith.constant 0 : index
    %2 = vector.load %arg2[%c0_2, %c0_3] : memref<9x30xf32, #tpu.memory_space<vmem>>, vector<9x30xf32>
    %cst = arith.constant dense<0.000000e+00> : vector<400x30xf32>
    %3 = tpu.matmul %1, %2, %cst {dimension_numbers = #tpu.dot_dimension_numbers<[1], [0], [0], [1], [0, 0, 1, 1], [], []>} : vector<400x9xf32>, vector<9x30xf32>, vector<400x30xf32> -> vector<400x30xf32>
    %c1 = arith.constant 1 : index
    %c0_4 = arith.constant 0 : index
    %c0_5 = arith.constant 0 : index
    %4 = vector.load %arg1[%c1, %c0_4, %c0_5] : memref<9x400x9xf32, #tpu.memory_space<vmem>>, vector<1x400x9xf32>
    %5 = vector.shape_cast %4 : vector<1x400x9xf32> to vector<400x9xf32>
    %c0_6 = arith.constant 0 : index
    %c0_7 = arith.constant 0 : index
    %6 = vector.load %arg2[%c0_6, %c0_7] : memref<9x30xf32, #tpu.memory_space<vmem>>, vector<9x30xf32>
    %cst_8 = arith.constant dense<0.000000e+00> : vector<400x30xf32>
    %7 = tpu.matmul %5, %6, %cst_8 {dimension_numbers = #tpu.dot_dimension_numbers<[1], [0], [0], [1], [0, 0, 1, 1], [], []>} : vector<400x9xf32>, vector<9x30xf32>, vector<400x30xf32> -> vector<400x30xf32>
    %8 = arith.maximumf %3, %7 : vector<400x30xf32>
    %c2 = arith.constant 2 : index
    %c0_9 = arith.constant 0 : index
    %c0_10 = arith.constant 0 : index
    %9 = vector.load %arg1[%c2, %c0_9, %c0_10] : memref<9x400x9xf32, #tpu.memory_space<vmem>>, vector<1x400x9xf32>
    %10 = vector.shape_cast %9 : vector<1x400x9xf32> to vector<400x9xf32>
    %c0_11 = arith.constant 0 : index
    %c0_12 = arith.constant 0 : index
    %11 = vector.load %arg2[%c0_11, %c0_12] : memref<9x30xf32, #tpu.memory_space<vmem>>, vector<9x30xf32>
    %cst_13 = arith.constant dense<0.000000e+00> : vector<400x30xf32>
    %12 = tpu.matmul %10, %11, %cst_13 {dimension_numbers = #tpu.dot_dimension_numbers<[1], [0], [0], [1], [0, 0, 1, 1], [], []>} : vector<400x9xf32>, vector<9x30xf32>, vector<400x30xf32> -> vector<400x30xf32>
    %13 = arith.maximumf %8, %12 : vector<400x30xf32>
    %c3 = arith.constant 3 : index
    %c0_14 = arith.constant 0 : index
    %c0_15 = arith.constant 0 : index
    %14 = vector.load %arg1[%c3, %c0_14, %c0_15] : memref<9x400x9xf32, #tpu.memory_space<vmem>>, vector<1x400x9xf32>
    %15 = vector.shape_cast %14 : vector<1x400x9xf32> to vector<400x9xf32>
    %c0_16 = arith.constant 0 : index
    %c0_17 = arith.constant 0 : index
    %16 = vector.load %arg2[%c0_16, %c0_17] : memref<9x30xf32, #tpu.memory_space<vmem>>, vector<9x30xf32>
    %cst_18 = arith.constant dense<0.000000e+00> : vector<400x30xf32>
    %17 = tpu.matmul %15, %16, %cst_18 {dimension_numbers = #tpu.dot_dimension_numbers<[1], [0], [0], [1], [0, 0, 1, 1], [], []>} : vector<400x9xf32>, vector<9x30xf32>, vector<400x30xf32> -> vector<400x30xf32>
    %18 = arith.maximumf %13, %17 : vector<400x30xf32>
    %c4 = arith.constant 4 : index
    %c0_19 = arith.constant 0 : index
    %c0_20 = arith.constant 0 : index
    %19 = vector.load %arg1[%c4, %c0_19, %c0_20] : memref<9x400x9xf32, #tpu.memory_space<vmem>>, vector<1x400x9xf32>
    %20 = vector.shape_cast %19 : vector<1x400x9xf32> to vector<400x9xf32>
    %c0_21 = arith.constant 0 : index
    %c0_22 = arith.constant 0 : index
    %21 = vector.load %arg2[%c0_21, %c0_22] : memref<9x30xf32, #tpu.memory_space<vmem>>, vector<9x30xf32>
    %cst_23 = arith.constant dense<0.000000e+00> : vector<400x30xf32>
    %22 = tpu.matmul %20, %21, %cst_23 {dimension_numbers = #tpu.dot_dimension_numbers<[1], [0], [0], [1], [0, 0, 1, 1], [], []>} : vector<400x9xf32>, vector<9x30xf32>, vector<400x30xf32> -> vector<400x30xf32>
    %23 = arith.maximumf %18, %22 : vector<400x30xf32>
    %c5 = arith.constant 5 : index
    %c0_24 = arith.constant 0 : index
    %c0_25 = arith.constant 0 : index
    %24 = vector.load %arg1[%c5, %c0_24, %c0_25] : memref<9x400x9xf32, #tpu.memory_space<vmem>>, vector<1x400x9xf32>
    %25 = vector.shape_cast %24 : vector<1x400x9xf32> to vector<400x9xf32>
    %c0_26 = arith.constant 0 : index
    %c0_27 = arith.constant 0 : index
    %26 = vector.load %arg2[%c0_26, %c0_27] : memref<9x30xf32, #tpu.memory_space<vmem>>, vector<9x30xf32>
    %cst_28 = arith.constant dense<0.000000e+00> : vector<400x30xf32>
    %27 = tpu.matmul %25, %26, %cst_28 {dimension_numbers = #tpu.dot_dimension_numbers<[1], [0], [0], [1], [0, 0, 1, 1], [], []>} : vector<400x9xf32>, vector<9x30xf32>, vector<400x30xf32> -> vector<400x30xf32>
    %28 = arith.maximumf %23, %27 : vector<400x30xf32>
    %c6 = arith.constant 6 : index
    %c0_29 = arith.constant 0 : index
    %c0_30 = arith.constant 0 : index
    %29 = vector.load %arg1[%c6, %c0_29, %c0_30] : memref<9x400x9xf32, #tpu.memory_space<vmem>>, vector<1x400x9xf32>
    %30 = vector.shape_cast %29 : vector<1x400x9xf32> to vector<400x9xf32>
    %c0_31 = arith.constant 0 : index
    %c0_32 = arith.constant 0 : index
    %31 = vector.load %arg2[%c0_31, %c0_32] : memref<9x30xf32, #tpu.memory_space<vmem>>, vector<9x30xf32>
    %cst_33 = arith.constant dense<0.000000e+00> : vector<400x30xf32>
    %32 = tpu.matmul %30, %31, %cst_33 {dimension_numbers = #tpu.dot_dimension_numbers<[1], [0], [0], [1], [0, 0, 1, 1], [], []>} : vector<400x9xf32>, vector<9x30xf32>, vector<400x30xf32> -> vector<400x30xf32>
    %33 = arith.maximumf %28, %32 : vector<400x30xf32>
    %c7 = arith.constant 7 : index
    %c0_34 = arith.constant 0 : index
    %c0_35 = arith.constant 0 : index
    %34 = vector.load %arg1[%c7, %c0_34, %c0_35] : memref<9x400x9xf32, #tpu.memory_space<vmem>>, vector<1x400x9xf32>
    %35 = vector.shape_cast %34 : vector<1x400x9xf32> to vector<400x9xf32>
    %c0_36 = arith.constant 0 : index
    %c0_37 = arith.constant 0 : index
    %36 = vector.load %arg2[%c0_36, %c0_37] : memref<9x30xf32, #tpu.memory_space<vmem>>, vector<9x30xf32>
    %cst_38 = arith.constant dense<0.000000e+00> : vector<400x30xf32>
    %37 = tpu.matmul %35, %36, %cst_38 {dimension_numbers = #tpu.dot_dimension_numbers<[1], [0], [0], [1], [0, 0, 1, 1], [], []>} : vector<400x9xf32>, vector<9x30xf32>, vector<400x30xf32> -> vector<400x30xf32>
    %38 = arith.maximumf %33, %37 : vector<400x30xf32>
    %c8 = arith.constant 8 : index
    %c0_39 = arith.constant 0 : index
    %c0_40 = arith.constant 0 : index
    %39 = vector.load %arg1[%c8, %c0_39, %c0_40] : memref<9x400x9xf32, #tpu.memory_space<vmem>>, vector<1x400x9xf32>
    %40 = vector.shape_cast %39 : vector<1x400x9xf32> to vector<400x9xf32>
    %c0_41 = arith.constant 0 : index
    %c0_42 = arith.constant 0 : index
    %41 = vector.load %arg2[%c0_41, %c0_42] : memref<9x30xf32, #tpu.memory_space<vmem>>, vector<9x30xf32>
    %cst_43 = arith.constant dense<0.000000e+00> : vector<400x30xf32>
    %42 = tpu.matmul %40, %41, %cst_43 {dimension_numbers = #tpu.dot_dimension_numbers<[1], [0], [0], [1], [0, 0, 1, 1], [], []>} : vector<400x9xf32>, vector<9x30xf32>, vector<400x30xf32> -> vector<400x30xf32>
    %43 = arith.maximumf %38, %42 : vector<400x30xf32>
    %c0_44 = arith.constant 0 : index
    %c0_45 = arith.constant 0 : index
    %44 = vector.load %arg3[%c0_44, %c0_45] : memref<1x30xf32, #tpu.memory_space<vmem>>, vector<1x30xf32>
    %45 = vector.broadcast %44 : vector<1x30xf32> to vector<400x30xf32>
    %46 = arith.addf %43, %45 : vector<400x30xf32>
    %cst_46 = arith.constant 0.000000e+00 : f32
    %47 = vector.broadcast %cst_46 : f32 to vector<400x30xf32>
    %48 = arith.maximumf %46, %47 : vector<400x30xf32>
    %c0_47 = arith.constant 0 : index
    %c0_48 = arith.constant 0 : index
    %49 = vector.load %arg4[%c0_47, %c0_48] : memref<400x30xf32, #tpu.memory_space<vmem>>, vector<400x30xf32>
    tpu.vector_store %arg4[%c0_47, %c0_48], %48 {strides = array<i32>} : memref<400x30xf32, #tpu.memory_space<vmem>>, vector<400x30xf32>,
    return
  }
  func.func @transform_0(%arg0: i32) -> (i32, i32, i32) {
    %c0_i32 = arith.constant 0 : i32
    %c0_i32_0 = arith.constant 0 : i32
    %c0_i32_1 = arith.constant 0 : i32
    return %c0_i32, %arg0, %c0_i32_0 : i32, i32, i32
  }
  func.func @transform_1(%arg0: i32) -> (i32, i32) {
    %c0_i32 = arith.constant 0 : i32
    %c0_i32_0 = arith.constant 0 : i32
    %c0_i32_1 = arith.constant 0 : i32
    return %c0_i32, %c0_i32_0 : i32, i32
  }
  func.func @transform_2(%arg0: i32) -> (i32, i32) {
    %c0_i32 = arith.constant 0 : i32
    %c0_i32_0 = arith.constant 0 : i32
    %c0_i32_1 = arith.constant 0 : i32
    return %c0_i32, %c0_i32_0 : i32, i32
  }
  func.func @transform_3(%arg0: i32) -> (i32, i32) {
    %c0_i32 = arith.constant 0 : i32
    %c0_i32_0 = arith.constant 0 : i32
    return %arg0, %c0_i32 : i32, i32
  }
}

module attributes {stable_mosaic.version = 11 : i64} {
  func.func @_conv_bn_relu_pool_kernel(%arg0: i32, %arg1: memref<9x72x270xf32, #tpu.memory_space<vmem>>, %arg2: memref<270x30xf32, #tpu.memory_space<vmem>>, %arg3: memref<1x30xf32, #tpu.memory_space<vmem>>, %arg4: memref<72x30xf32, #tpu.memory_space<vmem>>) attributes {dimension_semantics = [#tpu.dimension_semantics<parallel>], iteration_bounds = array<i64: 1>, scalar_prefetch = 0 : i64, scratch_operands = 0 : i64, tpu.core_type = #tpu.core_type<tc>, window_params = [{transform_indices = @transform_0, window_bounds = array<i64: 9, 72, 270>}, {pipeline_mode = #tpu.pipeline_mode<synchronous>, transform_indices = @transform_1, window_bounds = array<i64: 270, 30>}, {pipeline_mode = #tpu.pipeline_mode<synchronous>, transform_indices = @transform_2, window_bounds = array<i64: 1, 30>}, {transform_indices = @transform_3, window_bounds = array<i64: 72, 30>}]} {
    %c0 = arith.constant 0 : index
    %c0_0 = arith.constant 0 : index
    %c0_1 = arith.constant 0 : index
    %0 = vector.load %arg1[%c0, %c0_0, %c0_1] : memref<9x72x270xf32, #tpu.memory_space<vmem>>, vector<1x72x270xf32>
    %1 = vector.shape_cast %0 : vector<1x72x270xf32> to vector<72x270xf32>
    %c0_2 = arith.constant 0 : index
    %c0_3 = arith.constant 0 : index
    %2 = vector.load %arg2[%c0_2, %c0_3] : memref<270x30xf32, #tpu.memory_space<vmem>>, vector<270x30xf32>
    %cst = arith.constant dense<0.000000e+00> : vector<72x30xf32>
    %3 = tpu.matmul %1, %2, %cst {dimension_numbers = #tpu.dot_dimension_numbers<[1], [0], [0], [1], [0, 0, 1, 1], [], []>} : vector<72x270xf32>, vector<270x30xf32>, vector<72x30xf32> -> vector<72x30xf32>
    %c1 = arith.constant 1 : index
    %c0_4 = arith.constant 0 : index
    %c0_5 = arith.constant 0 : index
    %4 = vector.load %arg1[%c1, %c0_4, %c0_5] : memref<9x72x270xf32, #tpu.memory_space<vmem>>, vector<1x72x270xf32>
    %5 = vector.shape_cast %4 : vector<1x72x270xf32> to vector<72x270xf32>
    %c0_6 = arith.constant 0 : index
    %c0_7 = arith.constant 0 : index
    %6 = vector.load %arg2[%c0_6, %c0_7] : memref<270x30xf32, #tpu.memory_space<vmem>>, vector<270x30xf32>
    %cst_8 = arith.constant dense<0.000000e+00> : vector<72x30xf32>
    %7 = tpu.matmul %5, %6, %cst_8 {dimension_numbers = #tpu.dot_dimension_numbers<[1], [0], [0], [1], [0, 0, 1, 1], [], []>} : vector<72x270xf32>, vector<270x30xf32>, vector<72x30xf32> -> vector<72x30xf32>
    %8 = arith.maximumf %3, %7 : vector<72x30xf32>
    %c2 = arith.constant 2 : index
    %c0_9 = arith.constant 0 : index
    %c0_10 = arith.constant 0 : index
    %9 = vector.load %arg1[%c2, %c0_9, %c0_10] : memref<9x72x270xf32, #tpu.memory_space<vmem>>, vector<1x72x270xf32>
    %10 = vector.shape_cast %9 : vector<1x72x270xf32> to vector<72x270xf32>
    %c0_11 = arith.constant 0 : index
    %c0_12 = arith.constant 0 : index
    %11 = vector.load %arg2[%c0_11, %c0_12] : memref<270x30xf32, #tpu.memory_space<vmem>>, vector<270x30xf32>
    %cst_13 = arith.constant dense<0.000000e+00> : vector<72x30xf32>
    %12 = tpu.matmul %10, %11, %cst_13 {dimension_numbers = #tpu.dot_dimension_numbers<[1], [0], [0], [1], [0, 0, 1, 1], [], []>} : vector<72x270xf32>, vector<270x30xf32>, vector<72x30xf32> -> vector<72x30xf32>
    %13 = arith.maximumf %8, %12 : vector<72x30xf32>
    %c3 = arith.constant 3 : index
    %c0_14 = arith.constant 0 : index
    %c0_15 = arith.constant 0 : index
    %14 = vector.load %arg1[%c3, %c0_14, %c0_15] : memref<9x72x270xf32, #tpu.memory_space<vmem>>, vector<1x72x270xf32>
    %15 = vector.shape_cast %14 : vector<1x72x270xf32> to vector<72x270xf32>
    %c0_16 = arith.constant 0 : index
    %c0_17 = arith.constant 0 : index
    %16 = vector.load %arg2[%c0_16, %c0_17] : memref<270x30xf32, #tpu.memory_space<vmem>>, vector<270x30xf32>
    %cst_18 = arith.constant dense<0.000000e+00> : vector<72x30xf32>
    %17 = tpu.matmul %15, %16, %cst_18 {dimension_numbers = #tpu.dot_dimension_numbers<[1], [0], [0], [1], [0, 0, 1, 1], [], []>} : vector<72x270xf32>, vector<270x30xf32>, vector<72x30xf32> -> vector<72x30xf32>
    %18 = arith.maximumf %13, %17 : vector<72x30xf32>
    %c4 = arith.constant 4 : index
    %c0_19 = arith.constant 0 : index
    %c0_20 = arith.constant 0 : index
    %19 = vector.load %arg1[%c4, %c0_19, %c0_20] : memref<9x72x270xf32, #tpu.memory_space<vmem>>, vector<1x72x270xf32>
    %20 = vector.shape_cast %19 : vector<1x72x270xf32> to vector<72x270xf32>
    %c0_21 = arith.constant 0 : index
    %c0_22 = arith.constant 0 : index
    %21 = vector.load %arg2[%c0_21, %c0_22] : memref<270x30xf32, #tpu.memory_space<vmem>>, vector<270x30xf32>
    %cst_23 = arith.constant dense<0.000000e+00> : vector<72x30xf32>
    %22 = tpu.matmul %20, %21, %cst_23 {dimension_numbers = #tpu.dot_dimension_numbers<[1], [0], [0], [1], [0, 0, 1, 1], [], []>} : vector<72x270xf32>, vector<270x30xf32>, vector<72x30xf32> -> vector<72x30xf32>
    %23 = arith.maximumf %18, %22 : vector<72x30xf32>
    %c5 = arith.constant 5 : index
    %c0_24 = arith.constant 0 : index
    %c0_25 = arith.constant 0 : index
    %24 = vector.load %arg1[%c5, %c0_24, %c0_25] : memref<9x72x270xf32, #tpu.memory_space<vmem>>, vector<1x72x270xf32>
    %25 = vector.shape_cast %24 : vector<1x72x270xf32> to vector<72x270xf32>
    %c0_26 = arith.constant 0 : index
    %c0_27 = arith.constant 0 : index
    %26 = vector.load %arg2[%c0_26, %c0_27] : memref<270x30xf32, #tpu.memory_space<vmem>>, vector<270x30xf32>
    %cst_28 = arith.constant dense<0.000000e+00> : vector<72x30xf32>
    %27 = tpu.matmul %25, %26, %cst_28 {dimension_numbers = #tpu.dot_dimension_numbers<[1], [0], [0], [1], [0, 0, 1, 1], [], []>} : vector<72x270xf32>, vector<270x30xf32>, vector<72x30xf32> -> vector<72x30xf32>
    %28 = arith.maximumf %23, %27 : vector<72x30xf32>
    %c6 = arith.constant 6 : index
    %c0_29 = arith.constant 0 : index
    %c0_30 = arith.constant 0 : index
    %29 = vector.load %arg1[%c6, %c0_29, %c0_30] : memref<9x72x270xf32, #tpu.memory_space<vmem>>, vector<1x72x270xf32>
    %30 = vector.shape_cast %29 : vector<1x72x270xf32> to vector<72x270xf32>
    %c0_31 = arith.constant 0 : index
    %c0_32 = arith.constant 0 : index
    %31 = vector.load %arg2[%c0_31, %c0_32] : memref<270x30xf32, #tpu.memory_space<vmem>>, vector<270x30xf32>
    %cst_33 = arith.constant dense<0.000000e+00> : vector<72x30xf32>
    %32 = tpu.matmul %30, %31, %cst_33 {dimension_numbers = #tpu.dot_dimension_numbers<[1], [0], [0], [1], [0, 0, 1, 1], [], []>} : vector<72x270xf32>, vector<270x30xf32>, vector<72x30xf32> -> vector<72x30xf32>
    %33 = arith.maximumf %28, %32 : vector<72x30xf32>
    %c7 = arith.constant 7 : index
    %c0_34 = arith.constant 0 : index
    %c0_35 = arith.constant 0 : index
    %34 = vector.load %arg1[%c7, %c0_34, %c0_35] : memref<9x72x270xf32, #tpu.memory_space<vmem>>, vector<1x72x270xf32>
    %35 = vector.shape_cast %34 : vector<1x72x270xf32> to vector<72x270xf32>
    %c0_36 = arith.constant 0 : index
    %c0_37 = arith.constant 0 : index
    %36 = vector.load %arg2[%c0_36, %c0_37] : memref<270x30xf32, #tpu.memory_space<vmem>>, vector<270x30xf32>
    %cst_38 = arith.constant dense<0.000000e+00> : vector<72x30xf32>
    %37 = tpu.matmul %35, %36, %cst_38 {dimension_numbers = #tpu.dot_dimension_numbers<[1], [0], [0], [1], [0, 0, 1, 1], [], []>} : vector<72x270xf32>, vector<270x30xf32>, vector<72x30xf32> -> vector<72x30xf32>
    %38 = arith.maximumf %33, %37 : vector<72x30xf32>
    %c8 = arith.constant 8 : index
    %c0_39 = arith.constant 0 : index
    %c0_40 = arith.constant 0 : index
    %39 = vector.load %arg1[%c8, %c0_39, %c0_40] : memref<9x72x270xf32, #tpu.memory_space<vmem>>, vector<1x72x270xf32>
    %40 = vector.shape_cast %39 : vector<1x72x270xf32> to vector<72x270xf32>
    %c0_41 = arith.constant 0 : index
    %c0_42 = arith.constant 0 : index
    %41 = vector.load %arg2[%c0_41, %c0_42] : memref<270x30xf32, #tpu.memory_space<vmem>>, vector<270x30xf32>
    %cst_43 = arith.constant dense<0.000000e+00> : vector<72x30xf32>
    %42 = tpu.matmul %40, %41, %cst_43 {dimension_numbers = #tpu.dot_dimension_numbers<[1], [0], [0], [1], [0, 0, 1, 1], [], []>} : vector<72x270xf32>, vector<270x30xf32>, vector<72x30xf32> -> vector<72x30xf32>
    %43 = arith.maximumf %38, %42 : vector<72x30xf32>
    %c0_44 = arith.constant 0 : index
    %c0_45 = arith.constant 0 : index
    %44 = vector.load %arg3[%c0_44, %c0_45] : memref<1x30xf32, #tpu.memory_space<vmem>>, vector<1x30xf32>
    %45 = vector.broadcast %44 : vector<1x30xf32> to vector<72x30xf32>
    %46 = arith.addf %43, %45 : vector<72x30xf32>
    %cst_46 = arith.constant 0.000000e+00 : f32
    %47 = vector.broadcast %cst_46 : f32 to vector<72x30xf32>
    %48 = arith.maximumf %46, %47 : vector<72x30xf32>
    %c0_47 = arith.constant 0 : index
    %c0_48 = arith.constant 0 : index
    %49 = vector.load %arg4[%c0_47, %c0_48] : memref<72x30xf32, #tpu.memory_space<vmem>>, vector<72x30xf32>
    tpu.vector_store %arg4[%c0_47, %c0_48], %48 {strides = array<i32>} : memref<72x30xf32, #tpu.memory_space<vmem>>, vector<72x30xf32>,
    return
  }
  func.func @transform_0(%arg0: i32) -> (i32, i32, i32) {
    %c0_i32 = arith.constant 0 : i32
    %c0_i32_0 = arith.constant 0 : i32
    %c0_i32_1 = arith.constant 0 : i32
    return %c0_i32, %arg0, %c0_i32_0 : i32, i32, i32
  }
  func.func @transform_1(%arg0: i32) -> (i32, i32) {
    %c0_i32 = arith.constant 0 : i32
    %c0_i32_0 = arith.constant 0 : i32
    %c0_i32_1 = arith.constant 0 : i32
    return %c0_i32, %c0_i32_0 : i32, i32
  }
  func.func @transform_2(%arg0: i32) -> (i32, i32) {
    %c0_i32 = arith.constant 0 : i32
    %c0_i32_0 = arith.constant 0 : i32
    %c0_i32_1 = arith.constant 0 : i32
    return %c0_i32, %c0_i32_0 : i32, i32
  }
  func.func @transform_3(%arg0: i32) -> (i32, i32) {
    %c0_i32 = arith.constant 0 : i32
    %c0_i32_0 = arith.constant 0 : i32
    return %arg0, %c0_i32 : i32, i32
  }
}

module attributes {stable_mosaic.version = 11 : i64} {
  func.func @_fc_fused_kernel(%arg0: i32, %arg1: memref<8x1080xf32, #tpu.memory_space<vmem>>, %arg2: memref<1080x150xf32, #tpu.memory_space<vmem>>, %arg3: memref<1x150xf32, #tpu.memory_space<vmem>>, %arg4: memref<150x15xf32, #tpu.memory_space<vmem>>, %arg5: memref<1x15xf32, #tpu.memory_space<vmem>>, %arg6: memref<8x15xf32, #tpu.memory_space<vmem>>) attributes {dimension_semantics = [#tpu.dimension_semantics<parallel>], iteration_bounds = array<i64: 1>, scalar_prefetch = 0 : i64, scratch_operands = 0 : i64, tpu.core_type = #tpu.core_type<tc>, window_params = [{transform_indices = @transform_0, window_bounds = array<i64: 8, 1080>}, {pipeline_mode = #tpu.pipeline_mode<synchronous>, transform_indices = @transform_1, window_bounds = array<i64: 1080, 150>}, {pipeline_mode = #tpu.pipeline_mode<synchronous>, transform_indices = @transform_2, window_bounds = array<i64: 1, 150>}, {pipeline_mode = #tpu.pipeline_mode<synchronous>, transform_indices = @transform_3, window_bounds = array<i64: 150, 15>}, {pipeline_mode = #tpu.pipeline_mode<synchronous>, transform_indices = @transform_4, window_bounds = array<i64: 1, 15>}, {transform_indices = @transform_5, window_bounds = array<i64: 8, 15>}]} {
    %c0 = arith.constant 0 : index
    %c0_0 = arith.constant 0 : index
    %0 = vector.load %arg1[%c0, %c0_0] : memref<8x1080xf32, #tpu.memory_space<vmem>>, vector<8x1080xf32>
    %c0_1 = arith.constant 0 : index
    %c0_2 = arith.constant 0 : index
    %1 = vector.load %arg2[%c0_1, %c0_2] : memref<1080x150xf32, #tpu.memory_space<vmem>>, vector<1080x150xf32>
    %cst = arith.constant dense<0.000000e+00> : vector<8x150xf32>
    %2 = tpu.matmul %0, %1, %cst {dimension_numbers = #tpu.dot_dimension_numbers<[1], [0], [0], [1], [0, 0, 1, 1], [], []>} : vector<8x1080xf32>, vector<1080x150xf32>, vector<8x150xf32> -> vector<8x150xf32>
    %c0_3 = arith.constant 0 : index
    %c0_4 = arith.constant 0 : index
    %3 = vector.load %arg3[%c0_3, %c0_4] : memref<1x150xf32, #tpu.memory_space<vmem>>, vector<1x150xf32>
    %4 = vector.broadcast %3 : vector<1x150xf32> to vector<8x150xf32>
    %5 = arith.addf %2, %4 : vector<8x150xf32>
    %cst_5 = arith.constant 0.000000e+00 : f32
    %6 = vector.broadcast %cst_5 : f32 to vector<8x150xf32>
    %7 = arith.maximumf %5, %6 : vector<8x150xf32>
    %c0_6 = arith.constant 0 : index
    %c0_7 = arith.constant 0 : index
    %8 = vector.load %arg4[%c0_6, %c0_7] : memref<150x15xf32, #tpu.memory_space<vmem>>, vector<150x15xf32>
    %cst_8 = arith.constant dense<0.000000e+00> : vector<8x15xf32>
    %9 = tpu.matmul %7, %8, %cst_8 {dimension_numbers = #tpu.dot_dimension_numbers<[1], [0], [0], [1], [0, 0, 1, 1], [], []>} : vector<8x150xf32>, vector<150x15xf32>, vector<8x15xf32> -> vector<8x15xf32>
    %c0_9 = arith.constant 0 : index
    %c0_10 = arith.constant 0 : index
    %10 = vector.load %arg5[%c0_9, %c0_10] : memref<1x15xf32, #tpu.memory_space<vmem>>, vector<1x15xf32>
    %11 = vector.broadcast %10 : vector<1x15xf32> to vector<8x15xf32>
    %12 = arith.addf %9, %11 : vector<8x15xf32>
    %c0_11 = arith.constant 0 : index
    %c0_12 = arith.constant 0 : index
    %13 = vector.load %arg6[%c0_11, %c0_12] : memref<8x15xf32, #tpu.memory_space<vmem>>, vector<8x15xf32>
    tpu.vector_store %arg6[%c0_11, %c0_12], %12 {strides = array<i32>} : memref<8x15xf32, #tpu.memory_space<vmem>>, vector<8x15xf32>,
    return
  }
  func.func @transform_0(%arg0: i32) -> (i32, i32) {
    %c0_i32 = arith.constant 0 : i32
    %c0_i32_0 = arith.constant 0 : i32
    return %arg0, %c0_i32 : i32, i32
  }
  func.func @transform_1(%arg0: i32) -> (i32, i32) {
    %c0_i32 = arith.constant 0 : i32
    %c0_i32_0 = arith.constant 0 : i32
    %c0_i32_1 = arith.constant 0 : i32
    return %c0_i32, %c0_i32_0 : i32, i32
  }
  func.func @transform_2(%arg0: i32) -> (i32, i32) {
    %c0_i32 = arith.constant 0 : i32
    %c0_i32_0 = arith.constant 0 : i32
    %c0_i32_1 = arith.constant 0 : i32
    return %c0_i32, %c0_i32_0 : i32, i32
  }
  func.func @transform_3(%arg0: i32) -> (i32, i32) {
    %c0_i32 = arith.constant 0 : i32
    %c0_i32_0 = arith.constant 0 : i32
    %c0_i32_1 = arith.constant 0 : i32
    return %c0_i32, %c0_i32_0 : i32, i32
  }
  func.func @transform_4(%arg0: i32) -> (i32, i32) {
    %c0_i32 = arith.constant 0 : i32
    %c0_i32_0 = arith.constant 0 : i32
    %c0_i32_1 = arith.constant 0 : i32
    return %c0_i32, %c0_i32_0 : i32, i32
  }
  func.func @transform_5(%arg0: i32) -> (i32, i32) {
    %c0_i32 = arith.constant 0 : i32
    %c0_i32_0 = arith.constant 0 : i32
    return %arg0, %c0_i32 : i32, i32
  }
}

</mosaic_0001>

<llo_original>
// kernel: simple_net_dropout_forward.3
$region0: #{simple_net_dropout_forward.3}
  #allocation0 [shape = 'u32[]', space=smem, size = 0x4, offset = 0x4, fixed_abs, tag = 'smem constant byte address 0x4 - core index']
  #allocation1 [shape = 'u32[144,128]{1,0:T(1,128)}', space=vmem, size = 0x12000, scoped, tag = 'internal scratch']
  %s0 = inlined_call_operand.vmem [shape: f32[9,800,9], index: 0, kind: input, shape index: {}]
  %s1 = inlined_call_operand.vmem [shape: f32[9,30], index: 1, kind: input, shape index: {}]
  %s2 = inlined_call_operand.vmem [shape: f32[1,30], index: 2, kind: input, shape index: {}]
  %s3 = inlined_call_operand.vmem [shape: f32[800,30], index: 3, kind: output, shape index: {}]
  %s4 = sld [smem:[#allocation0]]
  $region83: #{simple_net_dropout_forward.3} parent=0
    _
  %s6 = ssub.s32 1, %s4
  %s7 = scalar_select 0, %s6, %s4
  $region1: #{simple_net_dropout_forward.3} parent=0
    #allocation2 [shape = 'u8[3686400]{0}', space=vmem, size = 0x384000, scoped, tag = 'input window, operand 0']
    loop: start=0, step=1, limit=4
    $region2: #{simple_net_dropout_forward.3} parent=1 // loop_pre_header
      _
    $region3: #{simple_net_dropout_forward.3} parent=1 // loop_header
      %s9 = sphi 0, %s13
      %p10 = scmp.ge.s32.totalorder %s9, 4
      %s19 = sphi 0, %s21
      %s22 = sphi 0, %s19
      %s23 = sphi 0, %s22
      %s39 = sphi 0, %s23
      %s43 = sphi 0, %s43
      %s45 = sphi 0, %s43
      %s46 = sphi 0, %s45
      %s60 = sphi 0, %s46
      %s64 = sphi 0, %s64
      %s66 = sphi 0, %s64
      %s67 = sphi 0, %s66
      %s81 = sphi 0, %s67
      %s87 = sphi 0, %s89
      %s90 = sphi 0, %s87
      %s91 = sphi 0, %s90
      %s107 = sphi 0, %s91
    $region4: #{simple_net_dropout_forward.3} parent=1 // loop_header_branch
      %12 = sbr.rel (%p10) target = $region8
    $region5: #{simple_net_dropout_forward.3} parent=1 // loop_body
      %s14 = ssub.s32 %s9, 1
      %s15 = ssub.s32 %s9, 2
      %s16 = sadd.s32 %s9, 1
      %s17 = ssub.s32 %s9, %s16
      %p18 = scmp.eq.s32.totalorder %s17, 0
      %s20 = sadd.s32 %s19, 1
      %s21 = scalar_select %p18, %s19, %s20
      %p24 = pneg %p18
      %p25 = scmp.eq.s32.totalorder %s9, 1
      %p26 = por %p24, %p25
      %p27 = scmp.ne.s32.totalorder %s19, %s22
      %p28 = scmp.eq.s32.totalorder %s9, 0
      %p29 = por %p27, %p28
      %p30 = scmp.ne.s32.totalorder %s19, %s22
      %p31 = scmp.eq.s32.totalorder %s14, 1
      %p32 = por %p30, %p31
      %p33 = scmp.ne.s32.totalorder %s22, %s23
      %p34 = scmp.eq.s32.totalorder %s14, 0
      %p35 = por %p33, %p34
      %p36 = scmp.ne.s32.totalorder %s22, %s23
      %p37 = scmp.eq.s32.totalorder %s15, 1
      %p38 = por %p36, %p37
      %p40 = scmp.ne.s32.totalorder %s23, %s39
      %p41 = scmp.eq.s32.totalorder %s15, 0
      %p42 = por %p40, %p41
      %s44 = sadd.s32 %s43, 1
      %p47 = scmp.eq.s32.totalorder %s9, 1
      %p48 = scmp.ne.s32.totalorder %s43, %s45
      %p49 = scmp.eq.s32.totalorder %s9, 0
      %p50 = por %p48, %p49
      %p51 = scmp.ne.s32.totalorder %s43, %s45
      %p52 = scmp.eq.s32.totalorder %s14, 1
      %p53 = por %p51, %p52
      %p54 = scmp.ne.s32.totalorder %s45, %s46
      %p55 = scmp.eq.s32.totalorder %s14, 0
      %p56 = por %p54, %p55
      %p57 = scmp.ne.s32.totalorder %s45, %s46
      %p58 = scmp.eq.s32.totalorder %s15, 1
      %p59 = por %p57, %p58
      %p61 = scmp.ne.s32.totalorder %s46, %s60
      %p62 = scmp.eq.s32.totalorder %s15, 0
      %p63 = por %p61, %p62
      %s65 = sadd.s32 %s64, 1
      %p68 = scmp.eq.s32.totalorder %s9, 1
      %p69 = scmp.ne.s32.totalorder %s64, %s66
      %p70 = scmp.eq.s32.totalorder %s9, 0
      %p71 = por %p69, %p70
      %p72 = scmp.ne.s32.totalorder %s64, %s66
      %p73 = scmp.eq.s32.totalorder %s14, 1
      %p74 = por %p72, %p73
      %p75 = scmp.ne.s32.totalorder %s66, %s67
      %p76 = scmp.eq.s32.totalorder %s14, 0
      %p77 = por %p75, %p76
      %p78 = scmp.ne.s32.totalorder %s66, %s67
      %p79 = scmp.eq.s32.totalorder %s15, 1
      %p80 = por %p78, %p79
      %p82 = scmp.ne.s32.totalorder %s67, %s81
      %p83 = scmp.eq.s32.totalorder %s15, 0
      %p84 = por %p82, %p83
      %s85 = ssub.s32 %s9, %s16
      %p86 = scmp.eq.s32.totalorder %s85, 0
      %s88 = sadd.s32 %s87, 1
      %s89 = scalar_select %p86, %s87, %s88
      %p92 = pneg %p86
      %p93 = scmp.eq.s32.totalorder %s9, 1
      %p94 = por %p92, %p93
      %p95 = scmp.ne.s32.totalorder %s87, %s90
      %p96 = scmp.eq.s32.totalorder %s9, 0
      %p97 = por %p95, %p96
      %p98 = scmp.ne.s32.totalorder %s87, %s90
      %p99 = scmp.eq.s32.totalorder %s14, 1
      %p100 = por %p98, %p99
      %p101 = scmp.ne.s32.totalorder %s90, %s91
      %p102 = scmp.eq.s32.totalorder %s14, 0
      %p103 = por %p101, %p102
      %p104 = scmp.ne.s32.totalorder %s90, %s91
      %p105 = scmp.eq.s32.totalorder %s15, 1
      %p106 = por %p104, %p105
      %p108 = scmp.ne.s32.totalorder %s91, %s107
      %p109 = scmp.eq.s32.totalorder %s15, 0
      %p110 = por %p108, %p109
      %p111 = scmp.le.s32.totalorder 1, %s9
      %p112 = scmp.lt.s32.totalorder %s9, 3
      %p113 = pnand %p111, %p112
      %p114 = pneg %p113
      // Predicated region
      $region9: #{simple_net_dropout_forward.3} parent=5 // pred_check
        _
      $region10: #{simple_net_dropout_forward.3} parent=5 // pred_check_branch
        %116 = sbr.rel (%p113) target = $region12
      $region11: #{simple_net_dropout_forward.3} parent=5 // pred_region
        %s117 = ssub.s32 %s9, 1
        // Predicated region
        $region13: #{simple_net_dropout_forward.3} parent=11 // pred_check
          %p118 = pneg %p56
        $region14: #{simple_net_dropout_forward.3} parent=11 // pred_check_branch
          %120 = sbr.rel (%p118) target = $region16
        $region15: #{simple_net_dropout_forward.3} parent=11 // pred_region
          _
        $region16: #{simple_net_dropout_forward.3} parent=11 // pred_fallthru
          _
        // Predicated region
        $region17: #{simple_net_dropout_forward.3} parent=11 // pred_check
          %p121 = pneg %p77
        $region18: #{simple_net_dropout_forward.3} parent=11 // pred_check_branch
          %123 = sbr.rel (%p121) target = $region20
        $region19: #{simple_net_dropout_forward.3} parent=11 // pred_region
          _
        $region20: #{simple_net_dropout_forward.3} parent=11 // pred_fallthru
          _
      $region12: #{simple_net_dropout_forward.3} parent=5 // pred_fallthru
        _
      %p124 = scmp.lt.s32.totalorder %s9, 2
      // Predicated region
      $region21: #{simple_net_dropout_forward.3} parent=5 // pred_check
        %p125 = pneg %p124
      $region22: #{simple_net_dropout_forward.3} parent=5 // pred_check_branch
        %127 = sbr.rel (%p125) target = $region24
      $region23: #{simple_net_dropout_forward.3} parent=5 // pred_region
        // Predicated region
        $region25: #{simple_net_dropout_forward.3} parent=23 // pred_check
          %p128 = pneg %p29
        $region26: #{simple_net_dropout_forward.3} parent=23 // pred_check_branch
          %130 = sbr.rel (%p128) target = $region28
        $region27: #{simple_net_dropout_forward.3} parent=23 // pred_region
          %s131 = sand.u32 %s19, 1
          %s132 = sand.u32 %s19, 1
          %s133 = smul.addr %s132, 3600
          %s134 = scalar_lea.vmem [#allocation2], %s133
          %s135 = smul.u32 50, %s9
          %s136 = smul.addr %s135, 8
          %s137 = scalar_lea.vmem %s0, %s136
          // Predicated region
          $region29: #{simple_net_dropout_forward.3} parent=27 // pred_check
            _
          $region30: #{simple_net_dropout_forward.3} parent=27 // pred_check_branch
            %139 = sbr.rel (0) target = $region32
          $region31: #{simple_net_dropout_forward.3} parent=27 // pred_region
            // Predicated region
            $region33: #{simple_net_dropout_forward.3} parent=31 // pred_check
              _
            $region34: #{simple_net_dropout_forward.3} parent=31 // pred_check_branch
              %141 = sbr.rel (0) target = $region36
            $region35: #{simple_net_dropout_forward.3} parent=31 // pred_region
              // Predicated region
              $region48: #{simple_net_dropout_forward.3} parent=35 // pred_check
                _
              $region49: #{simple_net_dropout_forward.3} parent=35 // pred_check_branch
                %1054 = sbr.rel (0) target = $region51
              $region50: #{simple_net_dropout_forward.3} parent=35 // pred_region
                loop: start=0, step=1, limit=1
                $region52: #{simple_net_dropout_forward.3} parent=50 // loop_pre_header
                  _
                $region53: #{simple_net_dropout_forward.3} parent=50 // loop_header
                  %s1056 = sphi 0, %s1060
                  %p1057 = scmp.ge.s32.totalorder %s1056, 1
                  %s1061 = sphi %s137, %s137
                  %s1062 = sphi %s134, %s134
                $region54: #{simple_net_dropout_forward.3} parent=50 // loop_header_branch
                  %1059 = sbr.rel (%p1057) target = $region58
                $region55: #{simple_net_dropout_forward.3} parent=50 // loop_body
                  %v1063 = vld [vmem:[%s1061] sm:$0xff]
                  %1064 = vst [vmem:[%s1062] sm:$0xff] %v1063
                  %v1065 = vld [vmem:[%s1061 + $0x8] sm:$0xff]
                  %1066 = vst [vmem:[%s1062 + $0x8] sm:$0xff] %v1065
                  %v1067 = vld [vmem:[%s1061 + $0x10] sm:$0xff]
                  %1068 = vst [vmem:[%s1062 + $0x10] sm:$0xff] %v1067
                  %v1069 = vld [vmem:[%s1061 + $0x18] sm:$0xff]
                  %1070 = vst [vmem:[%s1062 + $0x18] sm:$0xff] %v1069
                  %v1071 = vld [vmem:[%s1061 + $0x20] sm:$0xff]
                  %1072 = vst [vmem:[%s1062 + $0x20] sm:$0xff] %v1071
                  %v1073 = vld [vmem:[%s1061 + $0x28] sm:$0xff]
                  %1074 = vst [vmem:[%s1062 + $0x28] sm:$0xff] %v1073
                  %v1075 = vld [vmem:[%s1061 + $0x30] sm:$0xff]
                  %1076 = vst [vmem:[%s1062 + $0x30] sm:$0xff] %v1075
                  %v1077 = vld [vmem:[%s1061 + $0x38] sm:$0xff]
                  %1078 = vst [vmem:[%s1062 + $0x38] sm:$0xff] %v1077
                  %v1079 = vld [vmem:[%s1061 + $0x40] sm:$0xff]
                  %1080 = vst [vmem:[%s1062 + $0x40] sm:$0xff] %v1079
                  %v1081 = vld [vmem:[%s1061 + $0x48] sm:$0xff]
                  %1082 = vst [vmem:[%s1062 + $0x48] sm:$0xff] %v1081
                  %v1083 = vld [vmem:[%s1061 + $0x50] sm:$0xff]
                  %1084 = vst [vmem:[%s1062 + $0x50] sm:$0xff] %v1083
                  %v1085 = vld [vmem:[%s1061 + $0x58] sm:$0xff]
                  %1086 = vst [vmem:[%s1062 + $0x58] sm:$0xff] %v1085
                  %v1087 = vld [vmem:[%s1061 + $0x60] sm:$0xff]
                  %1088 = vst [vmem:[%s1062 + $0x60] sm:$0xff] %v1087
                  %v1089 = vld [vmem:[%s1061 + $0x68] sm:$0xff]
                  %1090 = vst [vmem:[%s1062 + $0x68] sm:$0xff] %v1089
                  %v1091 = vld [vmem:[%s1061 + $0x70] sm:$0xff]
                  %1092 = vst [vmem:[%s1062 + $0x70] sm:$0xff] %v1091
                  %v1093 = vld [vmem:[%s1061 + $0x78] sm:$0xff]
                  %1094 = vst [vmem:[%s1062 + $0x78] sm:$0xff] %v1093
                  %v1095 = vld [vmem:[%s1061 + $0x80] sm:$0xff]
                  %1096 = vst [vmem:[%s1062 + $0x80] sm:$0xff] %v1095
                  %v1097 = vld [vmem:[%s1061 + $0x88] sm:$0xff]
                  %1098 = vst [vmem:[%s1062 + $0x88] sm:$0xff] %v1097
                  %v1099 = vld [vmem:[%s1061 + $0x90] sm:$0xff]
                  %1100 = vst [vmem:[%s1062 + $0x90] sm:$0xff] %v1099
                  %v1101 = vld [vmem:[%s1061 + $0x98] sm:$0xff]
                  %1102 = vst [vmem:[%s1062 + $0x98] sm:$0xff] %v1101
                  %v1103 = vld [vmem:[%s1061 + $0xa0] sm:$0xff]
                  %1104 = vst [vmem:[%s1062 + $0xa0] sm:$0xff] %v1103
                  %v1105 = vld [vmem:[%s1061 + $0xa8] sm:$0xff]
                  %1106 = vst [vmem:[%s1062 + $0xa8] sm:$0xff] %v1105
                  %v1107 = vld [vmem:[%s1061 + $0xb0] sm:$0xff]
                  %1108 = vst [vmem:[%s1062 + $0xb0] sm:$0xff] %v1107
                  %v1109 = vld [vmem:[%s1061 + $0xb8] sm:$0xff]
                  %1110 = vst [vmem:[%s1062 + $0xb8] sm:$0xff] %v1109
                  %v1111 = vld [vmem:[%s1061 + $0xc0] sm:$0xff]
                  %1112 = vst [vmem:[%s1062 + $0xc0] sm:$0xff] %v1111
                  %v1113 = vld [vmem:[%s1061 + $0xc8] sm:$0xff]
                  %1114 = vst [vmem:[%s1062 + $0xc8] sm:$0xff] %v1113
                  %v1115 = vld [vmem:[%s1061 + $0xd0] sm:$0xff]
                  %1116 = vst [vmem:[%s1062 + $0xd0] sm:$0xff] %v1115
                  %v1117 = vld [vmem:[%s1061 + $0xd8] sm:$0xff]
                  %1118 = vst [vmem:[%s1062 + $0xd8] sm:$0xff] %v1117
                  %v1119 = vld [vmem:[%s1061 + $0xe0] sm:$0xff]
                  %1120 = vst [vmem:[%s1062 + $0xe0] sm:$0xff] %v1119
                  %v1121 = vld [vmem:[%s1061 + $0xe8] sm:$0xff]
                  %1122 = vst [vmem:[%s1062 + $0xe8] sm:$0xff] %v1121
                  %v1123 = vld [vmem:[%s1061 + $0xf0] sm:$0xff]
                  %1124 = vst [vmem:[%s1062 + $0xf0] sm:$0xff] %v1123
                  %v1125 = vld [vmem:[%s1061 + $0xf8] sm:$0xff]
                  %1126 = vst [vmem:[%s1062 + $0xf8] sm:$0xff] %v1125
                  %v1127 = vld [vmem:[%s1061 + $0x100] sm:$0xff]
                  %1128 = vst [vmem:[%s1062 + $0x100] sm:$0xff] %v1127
                  %v1129 = vld [vmem:[%s1061 + $0x108] sm:$0xff]
                  %1130 = vst [vmem:[%s1062 + $0x108] sm:$0xff] %v1129
                  %v1131 = vld [vmem:[%s1061 + $0x110] sm:$0xff]
                  %1132 = vst [vmem:[%s1062 + $0x110] sm:$0xff] %v1131
                  %v1133 = vld [vmem:[%s1061 + $0x118] sm:$0xff]
                  %1134 = vst [vmem:[%s1062 + $0x118] sm:$0xff] %v1133
                  %v1135 = vld [vmem:[%s1061 + $0x120] sm:$0xff]
                  %1136 = vst [vmem:[%s1062 + $0x120] sm:$0xff] %v1135
                  %v1137 = vld [vmem:[%s1061 + $0x128] sm:$0xff]
                  %1138 = vst [vmem:[%s1062 + $0x128] sm:$0xff] %v1137
                  %v1139 = vld [vmem:[%s1061 + $0x130] sm:$0xff]
                  %1140 = vst [vmem:[%s1062 + $0x130] sm:$0xff] %v1139
                  %v1141 = vld [vmem:[%s1061 + $0x138] sm:$0xff]
                  %1142 = vst [vmem:[%s1062 + $0x138] sm:$0xff] %v1141
                  %v1143 = vld [vmem:[%s1061 + $0x140] sm:$0xff]
                  %1144 = vst [vmem:[%s1062 + $0x140] sm:$0xff] %v1143
                  %v1145 = vld [vmem:[%s1061 + $0x148] sm:$0xff]
                  %1146 = vst [vmem:[%s1062 + $0x148] sm:$0xff] %v1145
                  %v1147 = vld [vmem:[%s1061 + $0x150] sm:$0xff]
                  %1148 = vst [vmem:[%s1062 + $0x150] sm:$0xff] %v1147
                  %v1149 = vld [vmem:[%s1061 + $0x158] sm:$0xff]
                  %1150 = vst [vmem:[%s1062 + $0x158] sm:$0xff] %v1149
                  %v1151 = vld [vmem:[%s1061 + $0x160] sm:$0xff]
                  %1152 = vst [vmem:[%s1062 + $0x160] sm:$0xff] %v1151
                  %v1153 = vld [vmem:[%s1061 + $0x168] sm:$0xff]
                  %1154 = vst [vmem:[%s1062 + $0x168] sm:$0xff] %v1153
                  %v1155 = vld [vmem:[%s1061 + $0x170] sm:$0xff]
                  %1156 = vst [vmem:[%s1062 + $0x170] sm:$0xff] %v1155
                  %v1157 = vld [vmem:[%s1061 + $0x178] sm:$0xff]
                  %1158 = vst [vmem:[%s1062 + $0x178] sm:$0xff] %v1157
                  %v1159 = vld [vmem:[%s1061 + $0x180] sm:$0xff]
                  %1160 = vst [vmem:[%s1062 + $0x180] sm:$0xff] %v1159
                  %v1161 = vld [vmem:[%s1061 + $0x188] sm:$0xff]
                  %1162 = vst [vmem:[%s1062 + $0x188] sm:$0xff] %v1161
                  %v1163 = vld [vmem:[%s1061 + $0x320] sm:$0xff]
                  %1164 = vst [vmem:[%s1062 + $0x190] sm:$0xff] %v1163
                  %v1165 = vld [vmem:[%s1061 + $0x328] sm:$0xff]
                  %1166 = vst [vmem:[%s1062 + $0x198] sm:$0xff] %v1165
                  %v1167 = vld [vmem:[%s1061 + $0x330] sm:$0xff]
                  %1168 = vst [vmem:[%s1062 + $0x1a0] sm:$0xff] %v1167
                  %v1169 = vld [vmem:[%s1061 + $0x338] sm:$0xff]
                  %1170 = vst [vmem:[%s1062 + $0x1a8] sm:$0xff] %v1169
                  %v1171 = vld [vmem:[%s1061 + $0x340] sm:$0xff]
                  %1172 = vst [vmem:[%s1062 + $0x1b0] sm:$0xff] %v1171
                  %v1173 = vld [vmem:[%s1061 + $0x348] sm:$0xff]
                  %1174 = vst [vmem:[%s1062 + $0x1b8] sm:$0xff] %v1173
                  %v1175 = vld [vmem:[%s1061 + $0x350] sm:$0xff]
                  %1176 = vst [vmem:[%s1062 + $0x1c0] sm:$0xff] %v1175
                  %v1177 = vld [vmem:[%s1061 + $0x358] sm:$0xff]
                  %1178 = vst [vmem:[%s1062 + $0x1c8] sm:$0xff] %v1177
                  %v1179 = vld [vmem:[%s1061 + $0x360] sm:$0xff]
                  %1180 = vst [vmem:[%s1062 + $0x1d0] sm:$0xff] %v1179
                  %v1181 = vld [vmem:[%s1061 + $0x368] sm:$0xff]
                  %1182 = vst [vmem:[%s1062 + $0x1d8] sm:$0xff] %v1181
                  %v1183 = vld [vmem:[%s1061 + $0x370] sm:$0xff]
                  %1184 = vst [vmem:[%s1062 + $0x1e0] sm:$0xff] %v1183
                  %v1185 = vld [vmem:[%s1061 + $0x378] sm:$0xff]
                  %1186 = vst [vmem:[%s1062 + $0x1e8] sm:$0xff] %v1185
                  %v1187 = vld [vmem:[%s1061 + $0x380] sm:$0xff]
                  %1188 = vst [vmem:[%s1062 + $0x1f0] sm:$0xff] %v1187
                  %v1189 = vld [vmem:[%s1061 + $0x388] sm:$0xff]
                  %1190 = vst [vmem:[%s1062 + $0x1f8] sm:$0xff] %v1189
                  %v1191 = vld [vmem:[%s1061 + $0x390] sm:$0xff]
                  %1192 = vst [vmem:[%s1062 + $0x200] sm:$0xff] %v1191
                  %v1193 = vld [vmem:[%s1061 + $0x398] sm:$0xff]
                  %1194 = vst [vmem:[%s1062 + $0x208] sm:$0xff] %v1193
                  %v1195 = vld [vmem:[%s1061 + $0x3a0] sm:$0xff]
                  %1196 = vst [vmem:[%s1062 + $0x210] sm:$0xff] %v1195
                  %v1197 = vld [vmem:[%s1061 + $0x3a8] sm:$0xff]
                  %1198 = vst [vmem:[%s1062 + $0x218] sm:$0xff] %v1197
                  %v1199 = vld [vmem:[%s1061 + $0x3b0] sm:$0xff]
                  %1200 = vst [vmem:[%s1062 + $0x220] sm:$0xff] %v1199
                  %v1201 = vld [vmem:[%s1061 + $0x3b8] sm:$0xff]
                  %1202 = vst [vmem:[%s1062 + $0x228] sm:$0xff] %v1201
                  %v1203 = vld [vmem:[%s1061 + $0x3c0] sm:$0xff]
                  %1204 = vst [vmem:[%s1062 + $0x230] sm:$0xff] %v1203
                  %v1205 = vld [vmem:[%s1061 + $0x3c8] sm:$0xff]
                  %1206 = vst [vmem:[%s1062 + $0x238] sm:$0xff] %v1205
                  %v1207 = vld [vmem:[%s1061 + $0x3d0] sm:$0xff]
                  %1208 = vst [vmem:[%s1062 + $0x240] sm:$0xff] %v1207
                  %v1209 = vld [vmem:[%s1061 + $0x3d8] sm:$0xff]
                  %1210 = vst [vmem:[%s1062 + $0x248] sm:$0xff] %v1209
                  %v1211 = vld [vmem:[%s1061 + $0x3e0] sm:$0xff]
                  %1212 = vst [vmem:[%s1062 + $0x250] sm:$0xff] %v1211
                  %v1213 = vld [vmem:[%s1061 + $0x3e8] sm:$0xff]
                  %1214 = vst [vmem:[%s1062 + $0x258] sm:$0xff] %v1213
                  %v1215 = vld [vmem:[%s1061 + $0x3f0] sm:$0xff]
                  %1216 = vst [vmem:[%s1062 + $0x260] sm:$0xff] %v1215
                  %v1217 = vld [vmem:[%s1061 + $0x3f8] sm:$0xff]
                  %1218 = vst [vmem:[%s1062 + $0x268] sm:$0xff] %v1217
                  %v1219 = vld [vmem:[%s1061 + $0x400] sm:$0xff]
                  %1220 = vst [vmem:[%s1062 + $0x270] sm:$0xff] %v1219
                  %v1221 = vld [vmem:[%s1061 + $0x408] sm:$0xff]
                  %1222 = vst [vmem:[%s1062 + $0x278] sm:$0xff] %v1221
                  %v1223 = vld [vmem:[%s1061 + $0x410] sm:$0xff]
                  %1224 = vst [vmem:[%s1062 + $0x280] sm:$0xff] %v1223
                  %v1225 = vld [vmem:[%s1061 + $0x418] sm:$0xff]
                  %1226 = vst [vmem:[%s1062 + $0x288] sm:$0xff] %v1225
                  %v1227 = vld [vmem:[%s1061 + $0x420] sm:$0xff]
                  %1228 = vst [vmem:[%s1062 + $0x290] sm:$0xff] %v1227
                  %v1229 = vld [vmem:[%s1061 + $0x428] sm:$0xff]
                  %1230 = vst [vmem:[%s1062 + $0x298] sm:$0xff] %v1229
                  %v1231 = vld [vmem:[%s1061 + $0x430] sm:$0xff]
                  %1232 = vst [vmem:[%s1062 + $0x2a0] sm:$0xff] %v1231
                  %v1233 = vld [vmem:[%s1061 + $0x438] sm:$0xff]
                  %1234 = vst [vmem:[%s1062 + $0x2a8] sm:$0xff] %v1233
                  %v1235 = vld [vmem:[%s1061 + $0x440] sm:$0xff]
                  %1236 = vst [vmem:[%s1062 + $0x2b0] sm:$0xff] %v1235
                  %v1237 = vld [vmem:[%s1061 + $0x448] sm:$0xff]
                  %1238 = vst [vmem:[%s1062 + $0x2b8] sm:$0xff] %v1237
                  %v1239 = vld [vmem:[%s1061 + $0x450] sm:$0xff]
                  %1240 = vst [vmem:[%s1062 + $0x2c0] sm:$0xff] %v1239
                  %v1241 = vld [vmem:[%s1061 + $0x458] sm:$0xff]
                  %1242 = vst [vmem:[%s1062 + $0x2c8] sm:$0xff] %v1241
                  %v1243 = vld [vmem:[%s1061 + $0x460] sm:$0xff]
                  %1244 = vst [vmem:[%s1062 + $0x2d0] sm:$0xff] %v1243
                  %v1245 = vld [vmem:[%s1061 + $0x468] sm:$0xff]
                  %1246 = vst [vmem:[%s1062 + $0x2d8] sm:$0xff] %v1245
                  %v1247 = vld [vmem:[%s1061 + $0x470] sm:$0xff]
                  %1248 = vst [vmem:[%s1062 + $0x2e0] sm:$0xff] %v1247
                  %v1249 = vld [vmem:[%s1061 + $0x478] sm:$0xff]
                  %1250 = vst [vmem:[%s1062 + $0x2e8] sm:$0xff] %v1249
                  %v1251 = vld [vmem:[%s1061 + $0x480] sm:$0xff]
                  %1252 = vst [vmem:[%s1062 + $0x2f0] sm:$0xff] %v1251
                  %v1253 = vld [vmem:[%s1061 + $0x488] sm:$0xff]
                  %1254 = vst [vmem:[%s1062 + $0x2f8] sm:$0xff] %v1253
                  %v1255 = vld [vmem:[%s1061 + $0x490] sm:$0xff]
                  %1256 = vst [vmem:[%s1062 + $0x300] sm:$0xff] %v1255
                  %v1257 = vld [vmem:[%s1061 + $0x498] sm:$0xff]
                  %1258 = vst [vmem:[%s1062 + $0x308] sm:$0xff] %v1257
                  %v1259 = vld [vmem:[%s1061 + $0x4a0] sm:$0xff]
                  %1260 = vst [vmem:[%s1062 + $0x310] sm:$0xff] %v1259
                  %v1261 = vld [vmem:[%s1061 + $0x4a8] sm:$0xff]
                  %1262 = vst [vmem:[%s1062 + $0x318] sm:$0xff] %v1261
                  %v1263 = vld [vmem:[%s1061 + $0x640] sm:$0xff]
                  %1264 = vst [vmem:[%s1062 + $0x320] sm:$0xff] %v1263
                  %v1265 = vld [vmem:[%s1061 + $0x648] sm:$0xff]
                  %1266 = vst [vmem:[%s1062 + $0x328] sm:$0xff] %v1265
                  %v1267 = vld [vmem:[%s1061 + $0x650] sm:$0xff]
                  %1268 = vst [vmem:[%s1062 + $0x330] sm:$0xff] %v1267
                  %v1269 = vld [vmem:[%s1061 + $0x658] sm:$0xff]
                  %1270 = vst [vmem:[%s1062 + $0x338] sm:$0xff] %v1269
                  %v1271 = vld [vmem:[%s1061 + $0x660] sm:$0xff]
                  %1272 = vst [vmem:[%s1062 + $0x340] sm:$0xff] %v1271
                  %v1273 = vld [vmem:[%s1061 + $0x668] sm:$0xff]
                  %1274 = vst [vmem:[%s1062 + $0x348] sm:$0xff] %v1273
                  %v1275 = vld [vmem:[%s1061 + $0x670] sm:$0xff]
                  %1276 = vst [vmem:[%s1062 + $0x350] sm:$0xff] %v1275
                  %v1277 = vld [vmem:[%s1061 + $0x678] sm:$0xff]
                  %1278 = vst [vmem:[%s1062 + $0x358] sm:$0xff] %v1277
                  %v1279 = vld [vmem:[%s1061 + $0x680] sm:$0xff]
                  %1280 = vst [vmem:[%s1062 + $0x360] sm:$0xff] %v1279
                  %v1281 = vld [vmem:[%s1061 + $0x688] sm:$0xff]
                  %1282 = vst [vmem:[%s1062 + $0x368] sm:$0xff] %v1281
                  %v1283 = vld [vmem:[%s1061 + $0x690] sm:$0xff]
                  %1284 = vst [vmem:[%s1062 + $0x370] sm:$0xff] %v1283
                  %v1285 = vld [vmem:[%s1061 + $0x698] sm:$0xff]
                  %1286 = vst [vmem:[%s1062 + $0x378] sm:$0xff] %v1285
                  %v1287 = vld [vmem:[%s1061 + $0x6a0] sm:$0xff]
                  %1288 = vst [vmem:[%s1062 + $0x380] sm:$0xff] %v1287
                  %v1289 = vld [vmem:[%s1061 + $0x6a8] sm:$0xff]
                  %1290 = vst [vmem:[%s1062 + $0x388] sm:$0xff] %v1289
                  %v1291 = vld [vmem:[%s1061 + $0x6b0] sm:$0xff]
                  %1292 = vst [vmem:[%s1062 + $0x390] sm:$0xff] %v1291
                  %v1293 = vld [vmem:[%s1061 + $0x6b8] sm:$0xff]
                  %1294 = vst [vmem:[%s1062 + $0x398] sm:$0xff] %v1293
                  %v1295 = vld [vmem:[%s1061 + $0x6c0] sm:$0xff]
                  %1296 = vst [vmem:[%s1062 + $0x3a0] sm:$0xff] %v1295
                  %v1297 = vld [vmem:[%s1061 + $0x6c8] sm:$0xff]
                  %1298 = vst [vmem:[%s1062 + $0x3a8] sm:$0xff] %v1297
                  %v1299 = vld [vmem:[%s1061 + $0x6d0] sm:$0xff]
                  %1300 = vst [vmem:[%s1062 + $0x3b0] sm:$0xff] %v1299
                  %v1301 = vld [vmem:[%s1061 + $0x6d8] sm:$0xff]
                  %1302 = vst [vmem:[%s1062 + $0x3b8] sm:$0xff] %v1301
                  %v1303 = vld [vmem:[%s1061 + $0x6e0] sm:$0xff]
                  %1304 = vst [vmem:[%s1062 + $0x3c0] sm:$0xff] %v1303
                  %v1305 = vld [vmem:[%s1061 + $0x6e8] sm:$0xff]
                  %1306 = vst [vmem:[%s1062 + $0x3c8] sm:$0xff] %v1305
                  %v1307 = vld [vmem:[%s1061 + $0x6f0] sm:$0xff]
                  %1308 = vst [vmem:[%s1062 + $0x3d0] sm:$0xff] %v1307
                  %v1309 = vld [vmem:[%s1061 + $0x6f8] sm:$0xff]
                  %1310 = vst [vmem:[%s1062 + $0x3d8] sm:$0xff] %v1309
                  %v1311 = vld [vmem:[%s1061 + $0x700] sm:$0xff]
                  %1312 = vst [vmem:[%s1062 + $0x3e0] sm:$0xff] %v1311
                  %v1313 = vld [vmem:[%s1061 + $0x708] sm:$0xff]
                  %1314 = vst [vmem:[%s1062 + $0x3e8] sm:$0xff] %v1313
                  %v1315 = vld [vmem:[%s1061 + $0x710] sm:$0xff]
                  %1316 = vst [vmem:[%s1062 + $0x3f0] sm:$0xff] %v1315
                  %v1317 = vld [vmem:[%s1061 + $0x718] sm:$0xff]
                  %1318 = vst [vmem:[%s1062 + $0x3f8] sm:$0xff] %v1317
                  %v1319 = vld [vmem:[%s1061 + $0x720] sm:$0xff]
                  %1320 = vst [vmem:[%s1062 + $0x400] sm:$0xff] %v1319
                  %v1321 = vld [vmem:[%s1061 + $0x728] sm:$0xff]
                  %1322 = vst [vmem:[%s1062 + $0x408] sm:$0xff] %v1321
                  %v1323 = vld [vmem:[%s1061 + $0x730] sm:$0xff]
                  %1324 = vst [vmem:[%s1062 + $0x410] sm:$0xff] %v1323
                  %v1325 = vld [vmem:[%s1061 + $0x738] sm:$0xff]
                  %1326 = vst [vmem:[%s1062 + $0x418] sm:$0xff] %v1325
                  %v1327 = vld [vmem:[%s1061 + $0x740] sm:$0xff]
                  %1328 = vst [vmem:[%s1062 + $0x420] sm:$0xff] %v1327
                  %v1329 = vld [vmem:[%s1061 + $0x748] sm:$0xff]
                  %1330 = vst [vmem:[%s1062 + $0x428] sm:$0xff] %v1329
                  %v1331 = vld [vmem:[%s1061 + $0x750] sm:$0xff]
                  %1332 = vst [vmem:[%s1062 + $0x430] sm:$0xff] %v1331
                  %v1333 = vld [vmem:[%s1061 + $0x758] sm:$0xff]
                  %1334 = vst [vmem:[%s1062 + $0x438] sm:$0xff] %v1333
                  %v1335 = vld [vmem:[%s1061 + $0x760] sm:$0xff]
                  %1336 = vst [vmem:[%s1062 + $0x440] sm:$0xff] %v1335
                  %v1337 = vld [vmem:[%s1061 + $0x768] sm:$0xff]
                  %1338 = vst [vmem:[%s1062 + $0x448] sm:$0xff] %v1337
                  %v1339 = vld [vmem:[%s1061 + $0x770] sm:$0xff]
                  %1340 = vst [vmem:[%s1062 + $0x450] sm:$0xff] %v1339
                  %v1341 = vld [vmem:[%s1061 + $0x778] sm:$0xff]
                  %1342 = vst [vmem:[%s1062 + $0x458] sm:$0xff] %v1341
                  %v1343 = vld [vmem:[%s1061 + $0x780] sm:$0xff]
                  %1344 = vst [vmem:[%s1062 + $0x460] sm:$0xff] %v1343
                  %v1345 = vld [vmem:[%s1061 + $0x788] sm:$0xff]
                  %1346 = vst [vmem:[%s1062 + $0x468] sm:$0xff] %v1345
                  %v1347 = vld [vmem:[%s1061 + $0x790] sm:$0xff]
                  %1348 = vst [vmem:[%s1062 + $0x470] sm:$0xff] %v1347
                  %v1349 = vld [vmem:[%s1061 + $0x798] sm:$0xff]
                  %1350 = vst [vmem:[%s1062 + $0x478] sm:$0xff] %v1349
                  %v1351 = vld [vmem:[%s1061 + $0x7a0] sm:$0xff]
                  %1352 = vst [vmem:[%s1062 + $0x480] sm:$0xff] %v1351
                  %v1353 = vld [vmem:[%s1061 + $0x7a8] sm:$0xff]
                  %1354 = vst [vmem:[%s1062 + $0x488] sm:$0xff] %v1353
                  %v1355 = vld [vmem:[%s1061 + $0x7b0] sm:$0xff]
                  %1356 = vst [vmem:[%s1062 + $0x490] sm:$0xff] %v1355
                  %v1357 = vld [vmem:[%s1061 + $0x7b8] sm:$0xff]
                  %1358 = vst [vmem:[%s1062 + $0x498] sm:$0xff] %v1357
                  %v1359 = vld [vmem:[%s1061 + $0x7c0] sm:$0xff]
                  %1360 = vst [vmem:[%s1062 + $0x4a0] sm:$0xff] %v1359
                  %v1361 = vld [vmem:[%s1061 + $0x7c8] sm:$0xff]
                  %1362 = vst [vmem:[%s1062 + $0x4a8] sm:$0xff] %v1361
                  %v1363 = vld [vmem:[%s1061 + $0x960] sm:$0xff]
                  %1364 = vst [vmem:[%s1062 + $0x4b0] sm:$0xff] %v1363
                  %v1365 = vld [vmem:[%s1061 + $0x968] sm:$0xff]
                  %1366 = vst [vmem:[%s1062 + $0x4b8] sm:$0xff] %v1365
                  %v1367 = vld [vmem:[%s1061 + $0x970] sm:$0xff]
                  %1368 = vst [vmem:[%s1062 + $0x4c0] sm:$0xff] %v1367
                  %v1369 = vld [vmem:[%s1061 + $0x978] sm:$0xff]
                  %1370 = vst [vmem:[%s1062 + $0x4c8] sm:$0xff] %v1369
                  %v1371 = vld [vmem:[%s1061 + $0x980] sm:$0xff]
                  %1372 = vst [vmem:[%s1062 + $0x4d0] sm:$0xff] %v1371
                  %v1373 = vld [vmem:[%s1061 + $0x988] sm:$0xff]
                  %1374 = vst [vmem:[%s1062 + $0x4d8] sm:$0xff] %v1373
                  %v1375 = vld [vmem:[%s1061 + $0x990] sm:$0xff]
                  %1376 = vst [vmem:[%s1062 + $0x4e0] sm:$0xff] %v1375
                  %v1377 = vld [vmem:[%s1061 + $0x998] sm:$0xff]
                  %1378 = vst [vmem:[%s1062 + $0x4e8] sm:$0xff] %v1377
                  %v1379 = vld [vmem:[%s1061 + $0x9a0] sm:$0xff]
                  %1380 = vst [vmem:[%s1062 + $0x4f0] sm:$0xff] %v1379
                  %v1381 = vld [vmem:[%s1061 + $0x9a8] sm:$0xff]
                  %1382 = vst [vmem:[%s1062 + $0x4f8] sm:$0xff] %v1381
                  %v1383 = vld [vmem:[%s1061 + $0x9b0] sm:$0xff]
                  %1384 = vst [vmem:[%s1062 + $0x500] sm:$0xff] %v1383
                  %v1385 = vld [vmem:[%s1061 + $0x9b8] sm:$0xff]
                  %1386 = vst [vmem:[%s1062 + $0x508] sm:$0xff] %v1385
                  %v1387 = vld [vmem:[%s1061 + $0x9c0] sm:$0xff]
                  %1388 = vst [vmem:[%s1062 + $0x510] sm:$0xff] %v1387
                  %v1389 = vld [vmem:[%s1061 + $0x9c8] sm:$0xff]
                  %1390 = vst [vmem:[%s1062 + $0x518] sm:$0xff] %v1389
                  %v1391 = vld [vmem:[%s1061 + $0x9d0] sm:$0xff]
                  %1392 = vst [vmem:[%s1062 + $0x520] sm:$0xff] %v1391
                  %v1393 = vld [vmem:[%s1061 + $0x9d8] sm:$0xff]
                  %1394 = vst [vmem:[%s1062 + $0x528] sm:$0xff] %v1393
                  %v1395 = vld [vmem:[%s1061 + $0x9e0] sm:$0xff]
                  %1396 = vst [vmem:[%s1062 + $0x530] sm:$0xff] %v1395
                  %v1397 = vld [vmem:[%s1061 + $0x9e8] sm:$0xff]
                  %1398 = vst [vmem:[%s1062 + $0x538] sm:$0xff] %v1397
                  %v1399 = vld [vmem:[%s1061 + $0x9f0] sm:$0xff]
                  %1400 = vst [vmem:[%s1062 + $0x540] sm:$0xff] %v1399
                  %v1401 = vld [vmem:[%s1061 + $0x9f8] sm:$0xff]
                  %1402 = vst [vmem:[%s1062 + $0x548] sm:$0xff] %v1401
                  %v1403 = vld [vmem:[%s1061 + $0xa00] sm:$0xff]
                  %1404 = vst [vmem:[%s1062 + $0x550] sm:$0xff] %v1403
                  %v1405 = vld [vmem:[%s1061 + $0xa08] sm:$0xff]
                  %1406 = vst [vmem:[%s1062 + $0x558] sm:$0xff] %v1405
                  %v1407 = vld [vmem:[%s1061 + $0xa10] sm:$0xff]
                  %1408 = vst [vmem:[%s1062 + $0x560] sm:$0xff] %v1407
                  %v1409 = vld [vmem:[%s1061 + $0xa18] sm:$0xff]
                  %1410 = vst [vmem:[%s1062 + $0x568] sm:$0xff] %v1409
                  %v1411 = vld [vmem:[%s1061 + $0xa20] sm:$0xff]
                  %1412 = vst [vmem:[%s1062 + $0x570] sm:$0xff] %v1411
                  %v1413 = vld [vmem:[%s1061 + $0xa28] sm:$0xff]
                  %1414 = vst [vmem:[%s1062 + $0x578] sm:$0xff] %v1413
                  %v1415 = vld [vmem:[%s1061 + $0xa30] sm:$0xff]
                  %1416 = vst [vmem:[%s1062 + $0x580] sm:$0xff] %v1415
                  %v1417 = vld [vmem:[%s1061 + $0xa38] sm:$0xff]
                  %1418 = vst [vmem:[%s1062 + $0x588] sm:$0xff] %v1417
                  %v1419 = vld [vmem:[%s1061 + $0xa40] sm:$0xff]
                  %1420 = vst [vmem:[%s1062 + $0x590] sm:$0xff] %v1419
                  %v1421 = vld [vmem:[%s1061 + $0xa48] sm:$0xff]
                  %1422 = vst [vmem:[%s1062 + $0x598] sm:$0xff] %v1421
                  %v1423 = vld [vmem:[%s1061 + $0xa50] sm:$0xff]
                  %1424 = vst [vmem:[%s1062 + $0x5a0] sm:$0xff] %v1423
                  %v1425 = vld [vmem:[%s1061 + $0xa58] sm:$0xff]
                  %1426 = vst [vmem:[%s1062 + $0x5a8] sm:$0xff] %v1425
                  %v1427 = vld [vmem:[%s1061 + $0xa60] sm:$0xff]
                  %1428 = vst [vmem:[%s1062 + $0x5b0] sm:$0xff] %v1427
                  %v1429 = vld [vmem:[%s1061 + $0xa68] sm:$0xff]
                  %1430 = vst [vmem:[%s1062 + $0x5b8] sm:$0xff] %v1429
                  %v1431 = vld [vmem:[%s1061 + $0xa70] sm:$0xff]
                  %1432 = vst [vmem:[%s1062 + $0x5c0] sm:$0xff] %v1431
                  %v1433 = vld [vmem:[%s1061 + $0xa78] sm:$0xff]
                  %1434 = vst [vmem:[%s1062 + $0x5c8] sm:$0xff] %v1433
                  %v1435 = vld [vmem:[%s1061 + $0xa80] sm:$0xff]
                  %1436 = vst [vmem:[%s1062 + $0x5d0] sm:$0xff] %v1435
                  %v1437 = vld [vmem:[%s1061 + $0xa88] sm:$0xff]
                  %1438 = vst [vmem:[%s1062 + $0x5d8] sm:$0xff] %v1437
                  %v1439 = vld [vmem:[%s1061 + $0xa90] sm:$0xff]
                  %1440 = vst [vmem:[%s1062 + $0x5e0] sm:$0xff] %v1439
                  %v1441 = vld [vmem:[%s1061 + $0xa98] sm:$0xff]
                  %1442 = vst [vmem:[%s1062 + $0x5e8] sm:$0xff] %v1441
                  %v1443 = vld [vmem:[%s1061 + $0xaa0] sm:$0xff]
                  %1444 = vst [vmem:[%s1062 + $0x5f0] sm:$0xff] %v1443
                  %v1445 = vld [vmem:[%s1061 + $0xaa8] sm:$0xff]
                  %1446 = vst [vmem:[%s1062 + $0x5f8] sm:$0xff] %v1445
                  %v1447 = vld [vmem:[%s1061 + $0xab0] sm:$0xff]
                  %1448 = vst [vmem:[%s1062 + $0x600] sm:$0xff] %v1447
                  %v1449 = vld [vmem:[%s1061 + $0xab8] sm:$0xff]
                  %1450 = vst [vmem:[%s1062 + $0x608] sm:$0xff] %v1449
                  %v1451 = vld [vmem:[%s1061 + $0xac0] sm:$0xff]
                  %1452 = vst [vmem:[%s1062 + $0x610] sm:$0xff] %v1451
                  %v1453 = vld [vmem:[%s1061 + $0xac8] sm:$0xff]
                  %1454 = vst [vmem:[%s1062 + $0x618] sm:$0xff] %v1453
                  %v1455 = vld [vmem:[%s1061 + $0xad0] sm:$0xff]
                  %1456 = vst [vmem:[%s1062 + $0x620] sm:$0xff] %v1455
                  %v1457 = vld [vmem:[%s1061 + $0xad8] sm:$0xff]
                  %1458 = vst [vmem:[%s1062 + $0x628] sm:$0xff] %v1457
                  %v1459 = vld [vmem:[%s1061 + $0xae0] sm:$0xff]
                  %1460 = vst [vmem:[%s1062 + $0x630] sm:$0xff] %v1459
                  %v1461 = vld [vmem:[%s1061 + $0xae8] sm:$0xff]
                  %1462 = vst [vmem:[%s1062 + $0x638] sm:$0xff] %v1461
                  %v1463 = vld [vmem:[%s1061 + $0xc80] sm:$0xff]
                  %1464 = vst [vmem:[%s1062 + $0x640] sm:$0xff] %v1463
                  %v1465 = vld [vmem:[%s1061 + $0xc88] sm:$0xff]
                  %1466 = vst [vmem:[%s1062 + $0x648] sm:$0xff] %v1465
                  %v1467 = vld [vmem:[%s1061 + $0xc90] sm:$0xff]
                  %1468 = vst [vmem:[%s1062 + $0x650] sm:$0xff] %v1467
                  %v1469 = vld [vmem:[%s1061 + $0xc98] sm:$0xff]
                  %1470 = vst [vmem:[%s1062 + $0x658] sm:$0xff] %v1469
                  %v1471 = vld [vmem:[%s1061 + $0xca0] sm:$0xff]
                  %1472 = vst [vmem:[%s1062 + $0x660] sm:$0xff] %v1471
                  %v1473 = vld [vmem:[%s1061 + $0xca8] sm:$0xff]
                  %1474 = vst [vmem:[%s1062 + $0x668] sm:$0xff] %v1473
                  %v1475 = vld [vmem:[%s1061 + $0xcb0] sm:$0xff]
                  %1476 = vst [vmem:[%s1062 + $0x670] sm:$0xff] %v1475
                  %v1477 = vld [vmem:[%s1061 + $0xcb8] sm:$0xff]
                  %1478 = vst [vmem:[%s1062 + $0x678] sm:$0xff] %v1477
                  %v1479 = vld [vmem:[%s1061 + $0xcc0] sm:$0xff]
                  %1480 = vst [vmem:[%s1062 + $0x680] sm:$0xff] %v1479
                  %v1481 = vld [vmem:[%s1061 + $0xcc8] sm:$0xff]
                  %1482 = vst [vmem:[%s1062 + $0x688] sm:$0xff] %v1481
                  %v1483 = vld [vmem:[%s1061 + $0xcd0] sm:$0xff]
                  %1484 = vst [vmem:[%s1062 + $0x690] sm:$0xff] %v1483
                  %v1485 = vld [vmem:[%s1061 + $0xcd8] sm:$0xff]
                  %1486 = vst [vmem:[%s1062 + $0x698] sm:$0xff] %v1485
                  %v1487 = vld [vmem:[%s1061 + $0xce0] sm:$0xff]
                  %1488 = vst [vmem:[%s1062 + $0x6a0] sm:$0xff] %v1487
                  %v1489 = vld [vmem:[%s1061 + $0xce8] sm:$0xff]
                  %1490 = vst [vmem:[%s1062 + $0x6a8] sm:$0xff] %v1489
                  %v1491 = vld [vmem:[%s1061 + $0xcf0] sm:$0xff]
                  %1492 = vst [vmem:[%s1062 + $0x6b0] sm:$0xff] %v1491
                  %v1493 = vld [vmem:[%s1061 + $0xcf8] sm:$0xff]
                  %1494 = vst [vmem:[%s1062 + $0x6b8] sm:$0xff] %v1493
                  %v1495 = vld [vmem:[%s1061 + $0xd00] sm:$0xff]
                  %1496 = vst [vmem:[%s1062 + $0x6c0] sm:$0xff] %v1495
                  %v1497 = vld [vmem:[%s1061 + $0xd08] sm:$0xff]
                  %1498 = vst [vmem:[%s1062 + $0x6c8] sm:$0xff] %v1497
                  %v1499 = vld [vmem:[%s1061 + $0xd10] sm:$0xff]
                  %1500 = vst [vmem:[%s1062 + $0x6d0] sm:$0xff] %v1499
                  %v1501 = vld [vmem:[%s1061 + $0xd18] sm:$0xff]
                  %1502 = vst [vmem:[%s1062 + $0x6d8] sm:$0xff] %v1501
                  %v1503 = vld [vmem:[%s1061 + $0xd20] sm:$0xff]
                  %1504 = vst [vmem:[%s1062 + $0x6e0] sm:$0xff] %v1503
                  %v1505 = vld [vmem:[%s1061 + $0xd28] sm:$0xff]
                  %1506 = vst [vmem:[%s1062 + $0x6e8] sm:$0xff] %v1505
                  %v1507 = vld [vmem:[%s1061 + $0xd30] sm:$0xff]
                  %1508 = vst [vmem:[%s1062 + $0x6f0] sm:$0xff] %v1507
                  %v1509 = vld [vmem:[%s1061 + $0xd38] sm:$0xff]
                  %1510 = vst [vmem:[%s1062 + $0x6f8] sm:$0xff] %v1509
                  %v1511 = vld [vmem:[%s1061 + $0xd40] sm:$0xff]
                  %1512 = vst [vmem:[%s1062 + $0x700] sm:$0xff] %v1511
                  %v1513 = vld [vmem:[%s1061 + $0xd48] sm:$0xff]
                  %1514 = vst [vmem:[%s1062 + $0x708] sm:$0xff] %v1513
                  %v1515 = vld [vmem:[%s1061 + $0xd50] sm:$0xff]
                  %1516 = vst [vmem:[%s1062 + $0x710] sm:$0xff] %v1515
                  %v1517 = vld [vmem:[%s1061 + $0xd58] sm:$0xff]
                  %1518 = vst [vmem:[%s1062 + $0x718] sm:$0xff] %v1517
                  %v1519 = vld [vmem:[%s1061 + $0xd60] sm:$0xff]
                  %1520 = vst [vmem:[%s1062 + $0x720] sm:$0xff] %v1519
                  %v1521 = vld [vmem:[%s1061 + $0xd68] sm:$0xff]
                  %1522 = vst [vmem:[%s1062 + $0x728] sm:$0xff] %v1521
                  %v1523 = vld [vmem:[%s1061 + $0xd70] sm:$0xff]
                  %1524 = vst [vmem:[%s1062 + $0x730] sm:$0xff] %v1523
                  %v1525 = vld [vmem:[%s1061 + $0xd78] sm:$0xff]
                  %1526 = vst [vmem:[%s1062 + $0x738] sm:$0xff] %v1525
                  %v1527 = vld [vmem:[%s1061 + $0xd80] sm:$0xff]
                  %1528 = vst [vmem:[%s1062 + $0x740] sm:$0xff] %v1527
                  %v1529 = vld [vmem:[%s1061 + $0xd88] sm:$0xff]
                  %1530 = vst [vmem:[%s1062 + $0x748] sm:$0xff] %v1529
                  %v1531 = vld [vmem:[%s1061 + $0xd90] sm:$0xff]
                  %1532 = vst [vmem:[%s1062 + $0x750] sm:$0xff] %v1531
                  %v1533 = vld [vmem:[%s1061 + $0xd98] sm:$0xff]
                  %1534 = vst [vmem:[%s1062 + $0x758] sm:$0xff] %v1533
                  %v1535 = vld [vmem:[%s1061 + $0xda0] sm:$0xff]
                  %1536 = vst [vmem:[%s1062 + $0x760] sm:$0xff] %v1535
                  %v1537 = vld [vmem:[%s1061 + $0xda8] sm:$0xff]
                  %1538 = vst [vmem:[%s1062 + $0x768] sm:$0xff] %v1537
                  %v1539 = vld [vmem:[%s1061 + $0xdb0] sm:$0xff]
                  %1540 = vst [vmem:[%s1062 + $0x770] sm:$0xff] %v1539
                  %v1541 = vld [vmem:[%s1061 + $0xdb8] sm:$0xff]
                  %1542 = vst [vmem:[%s1062 + $0x778] sm:$0xff] %v1541
                  %v1543 = vld [vmem:[%s1061 + $0xdc0] sm:$0xff]
                  %1544 = vst [vmem:[%s1062 + $0x780] sm:$0xff] %v1543
                  %v1545 = vld [vmem:[%s1061 + $0xdc8] sm:$0xff]
                  %1546 = vst [vmem:[%s1062 + $0x788] sm:$0xff] %v1545
                  %v1547 = vld [vmem:[%s1061 + $0xdd0] sm:$0xff]
                  %1548 = vst [vmem:[%s1062 + $0x790] sm:$0xff] %v1547
                  %v1549 = vld [vmem:[%s1061 + $0xdd8] sm:$0xff]
                  %1550 = vst [vmem:[%s1062 + $0x798] sm:$0xff] %v1549
                  %v1551 = vld [vmem:[%s1061 + $0xde0] sm:$0xff]
                  %1552 = vst [vmem:[%s1062 + $0x7a0] sm:$0xff] %v1551
                  %v1553 = vld [vmem:[%s1061 + $0xde8] sm:$0xff]
                  %1554 = vst [vmem:[%s1062 + $0x7a8] sm:$0xff] %v1553
                  %v1555 = vld [vmem:[%s1061 + $0xdf0] sm:$0xff]
                  %1556 = vst [vmem:[%s1062 + $0x7b0] sm:$0xff] %v1555
                  %v1557 = vld [vmem:[%s1061 + $0xdf8] sm:$0xff]
                  %1558 = vst [vmem:[%s1062 + $0x7b8] sm:$0xff] %v1557
                  %v1559 = vld [vmem:[%s1061 + $0xe00] sm:$0xff]
                  %1560 = vst [vmem:[%s1062 + $0x7c0] sm:$0xff] %v1559
                  %v1561 = vld [vmem:[%s1061 + $0xe08] sm:$0xff]
                  %1562 = vst [vmem:[%s1062 + $0x7c8] sm:$0xff] %v1561
                  %v1563 = vld [vmem:[%s1061 + $0xfa0] sm:$0xff]
                  %1564 = vst [vmem:[%s1062 + $0x7d0] sm:$0xff] %v1563
                  %v1565 = vld [vmem:[%s1061 + $0xfa8] sm:$0xff]
                  %1566 = vst [vmem:[%s1062 + $0x7d8] sm:$0xff] %v1565
                  %v1567 = vld [vmem:[%s1061 + $0xfb0] sm:$0xff]
                  %1568 = vst [vmem:[%s1062 + $0x7e0] sm:$0xff] %v1567
                  %v1569 = vld [vmem:[%s1061 + $0xfb8] sm:$0xff]
                  %1570 = vst [vmem:[%s1062 + $0x7e8] sm:$0xff] %v1569
                  %v1571 = vld [vmem:[%s1061 + $0xfc0] sm:$0xff]
                  %1572 = vst [vmem:[%s1062 + $0x7f0] sm:$0xff] %v1571
                  %v1573 = vld [vmem:[%s1061 + $0xfc8] sm:$0xff]
                  %1574 = vst [vmem:[%s1062 + $0x7f8] sm:$0xff] %v1573
                  %v1575 = vld [vmem:[%s1061 + $0xfd0] sm:$0xff]
                  %1576 = vst [vmem:[%s1062 + $0x800] sm:$0xff] %v1575
                  %v1577 = vld [vmem:[%s1061 + $0xfd8] sm:$0xff]
                  %1578 = vst [vmem:[%s1062 + $0x808] sm:$0xff] %v1577
                  %v1579 = vld [vmem:[%s1061 + $0xfe0] sm:$0xff]
                  %1580 = vst [vmem:[%s1062 + $0x810] sm:$0xff] %v1579
                  %v1581 = vld [vmem:[%s1061 + $0xfe8] sm:$0xff]
                  %1582 = vst [vmem:[%s1062 + $0x818] sm:$0xff] %v1581
                  %v1583 = vld [vmem:[%s1061 + $0xff0] sm:$0xff]
                  %1584 = vst [vmem:[%s1062 + $0x820] sm:$0xff] %v1583
                  %v1585 = vld [vmem:[%s1061 + $0xff8] sm:$0xff]
                  %1586 = vst [vmem:[%s1062 + $0x828] sm:$0xff] %v1585
                  %v1587 = vld [vmem:[%s1061 + $0x1000] sm:$0xff]
                  %1588 = vst [vmem:[%s1062 + $0x830] sm:$0xff] %v1587
                  %v1589 = vld [vmem:[%s1061 + $0x1008] sm:$0xff]
                  %1590 = vst [vmem:[%s1062 + $0x838] sm:$0xff] %v1589
                  %v1591 = vld [vmem:[%s1061 + $0x1010] sm:$0xff]
                  %1592 = vst [vmem:[%s1062 + $0x840] sm:$0xff] %v1591
                  %v1593 = vld [vmem:[%s1061 + $0x1018] sm:$0xff]
                  %1594 = vst [vmem:[%s1062 + $0x848] sm:$0xff] %v1593
                  %v1595 = vld [vmem:[%s1061 + $0x1020] sm:$0xff]
                  %1596 = vst [vmem:[%s1062 + $0x850] sm:$0xff] %v1595
                  %v1597 = vld [vmem:[%s1061 + $0x1028] sm:$0xff]
                  %1598 = vst [vmem:[%s1062 + $0x858] sm:$0xff] %v1597
                  %v1599 = vld [vmem:[%s1061 + $0x1030] sm:$0xff]
                  %1600 = vst [vmem:[%s1062 + $0x860] sm:$0xff] %v1599
                  %v1601 = vld [vmem:[%s1061 + $0x1038] sm:$0xff]
                  %1602 = vst [vmem:[%s1062 + $0x868] sm:$0xff] %v1601
                  %v1603 = vld [vmem:[%s1061 + $0x1040] sm:$0xff]
                  %1604 = vst [vmem:[%s1062 + $0x870] sm:$0xff] %v1603
                  %v1605 = vld [vmem:[%s1061 + $0x1048] sm:$0xff]
                  %1606 = vst [vmem:[%s1062 + $0x878] sm:$0xff] %v1605
                  %v1607 = vld [vmem:[%s1061 + $0x1050] sm:$0xff]
                  %1608 = vst [vmem:[%s1062 + $0x880] sm:$0xff] %v1607
                  %v1609 = vld [vmem:[%s1061 + $0x1058] sm:$0xff]
                  %1610 = vst [vmem:[%s1062 + $0x888] sm:$0xff] %v1609
                  %v1611 = vld [vmem:[%s1061 + $0x1060] sm:$0xff]
                  %1612 = vst [vmem:[%s1062 + $0x890] sm:$0xff] %v1611
                  %v1613 = vld [vmem:[%s1061 + $0x1068] sm:$0xff]
                  %1614 = vst [vmem:[%s1062 + $0x898] sm:$0xff] %v1613
                  %v1615 = vld [vmem:[%s1061 + $0x1070] sm:$0xff]
                  %1616 = vst [vmem:[%s1062 + $0x8a0] sm:$0xff] %v1615
                  %v1617 = vld [vmem:[%s1061 + $0x1078] sm:$0xff]
                  %1618 = vst [vmem:[%s1062 + $0x8a8] sm:$0xff] %v1617
                  %v1619 = vld [vmem:[%s1061 + $0x1080] sm:$0xff]
                  %1620 = vst [vmem:[%s1062 + $0x8b0] sm:$0xff] %v1619
                  %v1621 = vld [vmem:[%s1061 + $0x1088] sm:$0xff]
                  %1622 = vst [vmem:[%s1062 + $0x8b8] sm:$0xff] %v1621
                  %v1623 = vld [vmem:[%s1061 + $0x1090] sm:$0xff]
                  %1624 = vst [vmem:[%s1062 + $0x8c0] sm:$0xff] %v1623
                  %v1625 = vld [vmem:[%s1061 + $0x1098] sm:$0xff]
                  %1626 = vst [vmem:[%s1062 + $0x8c8] sm:$0xff] %v1625
                  %v1627 = vld [vmem:[%s1061 + $0x10a0] sm:$0xff]
                  %1628 = vst [vmem:[%s1062 + $0x8d0] sm:$0xff] %v1627
                  %v1629 = vld [vmem:[%s1061 + $0x10a8] sm:$0xff]
                  %1630 = vst [vmem:[%s1062 + $0x8d8] sm:$0xff] %v1629
                  %v1631 = vld [vmem:[%s1061 + $0x10b0] sm:$0xff]
                  %1632 = vst [vmem:[%s1062 + $0x8e0] sm:$0xff] %v1631
                  %v1633 = vld [vmem:[%s1061 + $0x10b8] sm:$0xff]
                  %1634 = vst [vmem:[%s1062 + $0x8e8] sm:$0xff] %v1633
                  %v1635 = vld [vmem:[%s1061 + $0x10c0] sm:$0xff]
                  %1636 = vst [vmem:[%s1062 + $0x8f0] sm:$0xff] %v1635
                  %v1637 = vld [vmem:[%s1061 + $0x10c8] sm:$0xff]
                  %1638 = vst [vmem:[%s1062 + $0x8f8] sm:$0xff] %v1637
                  %v1639 = vld [vmem:[%s1061 + $0x10d0] sm:$0xff]
                  %1640 = vst [vmem:[%s1062 + $0x900] sm:$0xff] %v1639
                  %v1641 = vld [vmem:[%s1061 + $0x10d8] sm:$0xff]
                  %1642 = vst [vmem:[%s1062 + $0x908] sm:$0xff] %v1641
                  %v1643 = vld [vmem:[%s1061 + $0x10e0] sm:$0xff]
                  %1644 = vst [vmem:[%s1062 + $0x910] sm:$0xff] %v1643
                  %v1645 = vld [vmem:[%s1061 + $0x10e8] sm:$0xff]
                  %1646 = vst [vmem:[%s1062 + $0x918] sm:$0xff] %v1645
                  %v1647 = vld [vmem:[%s1061 + $0x10f0] sm:$0xff]
                  %1648 = vst [vmem:[%s1062 + $0x920] sm:$0xff] %v1647
                  %v1649 = vld [vmem:[%s1061 + $0x10f8] sm:$0xff]
                  %1650 = vst [vmem:[%s1062 + $0x928] sm:$0xff] %v1649
                  %v1651 = vld [vmem:[%s1061 + $0x1100] sm:$0xff]
                  %1652 = vst [vmem:[%s1062 + $0x930] sm:$0xff] %v1651
                  %v1653 = vld [vmem:[%s1061 + $0x1108] sm:$0xff]
                  %1654 = vst [vmem:[%s1062 + $0x938] sm:$0xff] %v1653
                  %v1655 = vld [vmem:[%s1061 + $0x1110] sm:$0xff]
                  %1656 = vst [vmem:[%s1062 + $0x940] sm:$0xff] %v1655
                  %v1657 = vld [vmem:[%s1061 + $0x1118] sm:$0xff]
                  %1658 = vst [vmem:[%s1062 + $0x948] sm:$0xff] %v1657
                  %v1659 = vld [vmem:[%s1061 + $0x1120] sm:$0xff]
                  %1660 = vst [vmem:[%s1062 + $0x950] sm:$0xff] %v1659
                  %v1661 = vld [vmem:[%s1061 + $0x1128] sm:$0xff]
                  %1662 = vst [vmem:[%s1062 + $0x958] sm:$0xff] %v1661
                  %v1663 = vld [vmem:[%s1061 + $0x12c0] sm:$0xff]
                  %1664 = vst [vmem:[%s1062 + $0x960] sm:$0xff] %v1663
                  %v1665 = vld [vmem:[%s1061 + $0x12c8] sm:$0xff]
                  %1666 = vst [vmem:[%s1062 + $0x968] sm:$0xff] %v1665
                  %v1667 = vld [vmem:[%s1061 + $0x12d0] sm:$0xff]
                  %1668 = vst [vmem:[%s1062 + $0x970] sm:$0xff] %v1667
                  %v1669 = vld [vmem:[%s1061 + $0x12d8] sm:$0xff]
                  %1670 = vst [vmem:[%s1062 + $0x978] sm:$0xff] %v1669
                  %v1671 = vld [vmem:[%s1061 + $0x12e0] sm:$0xff]
                  %1672 = vst [vmem:[%s1062 + $0x980] sm:$0xff] %v1671
                  %v1673 = vld [vmem:[%s1061 + $0x12e8] sm:$0xff]
                  %1674 = vst [vmem:[%s1062 + $0x988] sm:$0xff] %v1673
                  %v1675 = vld [vmem:[%s1061 + $0x12f0] sm:$0xff]
                  %1676 = vst [vmem:[%s1062 + $0x990] sm:$0xff] %v1675
                  %v1677 = vld [vmem:[%s1061 + $0x12f8] sm:$0xff]
                  %1678 = vst [vmem:[%s1062 + $0x998] sm:$0xff] %v1677
                  %v1679 = vld [vmem:[%s1061 + $0x1300] sm:$0xff]
                  %1680 = vst [vmem:[%s1062 + $0x9a0] sm:$0xff] %v1679
                  %v1681 = vld [vmem:[%s1061 + $0x1308] sm:$0xff]
                  %1682 = vst [vmem:[%s1062 + $0x9a8] sm:$0xff] %v1681
                  %v1683 = vld [vmem:[%s1061 + $0x1310] sm:$0xff]
                  %1684 = vst [vmem:[%s1062 + $0x9b0] sm:$0xff] %v1683
                  %v1685 = vld [vmem:[%s1061 + $0x1318] sm:$0xff]
                  %1686 = vst [vmem:[%s1062 + $0x9b8] sm:$0xff] %v1685
                  %v1687 = vld [vmem:[%s1061 + $0x1320] sm:$0xff]
                  %1688 = vst [vmem:[%s1062 + $0x9c0] sm:$0xff] %v1687
                  %v1689 = vld [vmem:[%s1061 + $0x1328] sm:$0xff]
                  %1690 = vst [vmem:[%s1062 + $0x9c8] sm:$0xff] %v1689
                  %v1691 = vld [vmem:[%s1061 + $0x1330] sm:$0xff]
                  %1692 = vst [vmem:[%s1062 + $0x9d0] sm:$0xff] %v1691
                  %v1693 = vld [vmem:[%s1061 + $0x1338] sm:$0xff]
                  %1694 = vst [vmem:[%s1062 + $0x9d8] sm:$0xff] %v1693
                  %v1695 = vld [vmem:[%s1061 + $0x1340] sm:$0xff]
                  %1696 = vst [vmem:[%s1062 + $0x9e0] sm:$0xff] %v1695
                  %v1697 = vld [vmem:[%s1061 + $0x1348] sm:$0xff]
                  %1698 = vst [vmem:[%s1062 + $0x9e8] sm:$0xff] %v1697
                  %v1699 = vld [vmem:[%s1061 + $0x1350] sm:$0xff]
                  %1700 = vst [vmem:[%s1062 + $0x9f0] sm:$0xff] %v1699
                  %v1701 = vld [vmem:[%s1061 + $0x1358] sm:$0xff]
                  %1702 = vst [vmem:[%s1062 + $0x9f8] sm:$0xff] %v1701
                  %v1703 = vld [vmem:[%s1061 + $0x1360] sm:$0xff]
                  %1704 = vst [vmem:[%s1062 + $0xa00] sm:$0xff] %v1703
                  %v1705 = vld [vmem:[%s1061 + $0x1368] sm:$0xff]
                  %1706 = vst [vmem:[%s1062 + $0xa08] sm:$0xff] %v1705
                  %v1707 = vld [vmem:[%s1061 + $0x1370] sm:$0xff]
                  %1708 = vst [vmem:[%s1062 + $0xa10] sm:$0xff] %v1707
                  %v1709 = vld [vmem:[%s1061 + $0x1378] sm:$0xff]
                  %1710 = vst [vmem:[%s1062 + $0xa18] sm:$0xff] %v1709
                  %v1711 = vld [vmem:[%s1061 + $0x1380] sm:$0xff]
                  %1712 = vst [vmem:[%s1062 + $0xa20] sm:$0xff] %v1711
                  %v1713 = vld [vmem:[%s1061 + $0x1388] sm:$0xff]
                  %1714 = vst [vmem:[%s1062 + $0xa28] sm:$0xff] %v1713
                  %v1715 = vld [vmem:[%s1061 + $0x1390] sm:$0xff]
                  %1716 = vst [vmem:[%s1062 + $0xa30] sm:$0xff] %v1715
                  %v1717 = vld [vmem:[%s1061 + $0x1398] sm:$0xff]
                  %1718 = vst [vmem:[%s1062 + $0xa38] sm:$0xff] %v1717
                  %v1719 = vld [vmem:[%s1061 + $0x13a0] sm:$0xff]
                  %1720 = vst [vmem:[%s1062 + $0xa40] sm:$0xff] %v1719
                  %v1721 = vld [vmem:[%s1061 + $0x13a8] sm:$0xff]
                  %1722 = vst [vmem:[%s1062 + $0xa48] sm:$0xff] %v1721
                  %v1723 = vld [vmem:[%s1061 + $0x13b0] sm:$0xff]
                  %1724 = vst [vmem:[%s1062 + $0xa50] sm:$0xff] %v1723
                  %v1725 = vld [vmem:[%s1061 + $0x13b8] sm:$0xff]
                  %1726 = vst [vmem:[%s1062 + $0xa58] sm:$0xff] %v1725
                  %v1727 = vld [vmem:[%s1061 + $0x13c0] sm:$0xff]
                  %1728 = vst [vmem:[%s1062 + $0xa60] sm:$0xff] %v1727
                  %v1729 = vld [vmem:[%s1061 + $0x13c8] sm:$0xff]
                  %1730 = vst [vmem:[%s1062 + $0xa68] sm:$0xff] %v1729
                  %v1731 = vld [vmem:[%s1061 + $0x13d0] sm:$0xff]
                  %1732 = vst [vmem:[%s1062 + $0xa70] sm:$0xff] %v1731
                  %v1733 = vld [vmem:[%s1061 + $0x13d8] sm:$0xff]
                  %1734 = vst [vmem:[%s1062 + $0xa78] sm:$0xff] %v1733
                  %v1735 = vld [vmem:[%s1061 + $0x13e0] sm:$0xff]
                  %1736 = vst [vmem:[%s1062 + $0xa80] sm:$0xff] %v1735
                  %v1737 = vld [vmem:[%s1061 + $0x13e8] sm:$0xff]
                  %1738 = vst [vmem:[%s1062 + $0xa88] sm:$0xff] %v1737
                  %v1739 = vld [vmem:[%s1061 + $0x13f0] sm:$0xff]
                  %1740 = vst [vmem:[%s1062 + $0xa90] sm:$0xff] %v1739
                  %v1741 = vld [vmem:[%s1061 + $0x13f8] sm:$0xff]
                  %1742 = vst [vmem:[%s1062 + $0xa98] sm:$0xff] %v1741
                  %v1743 = vld [vmem:[%s1061 + $0x1400] sm:$0xff]
                  %1744 = vst [vmem:[%s1062 + $0xaa0] sm:$0xff] %v1743
                  %v1745 = vld [vmem:[%s1061 + $0x1408] sm:$0xff]
                  %1746 = vst [vmem:[%s1062 + $0xaa8] sm:$0xff] %v1745
                  %v1747 = vld [vmem:[%s1061 + $0x1410] sm:$0xff]
                  %1748 = vst [vmem:[%s1062 + $0xab0] sm:$0xff] %v1747
                  %v1749 = vld [vmem:[%s1061 + $0x1418] sm:$0xff]
                  %1750 = vst [vmem:[%s1062 + $0xab8] sm:$0xff] %v1749
                  %v1751 = vld [vmem:[%s1061 + $0x1420] sm:$0xff]
                  %1752 = vst [vmem:[%s1062 + $0xac0] sm:$0xff] %v1751
                  %v1753 = vld [vmem:[%s1061 + $0x1428] sm:$0xff]
                  %1754 = vst [vmem:[%s1062 + $0xac8] sm:$0xff] %v1753
                  %v1755 = vld [vmem:[%s1061 + $0x1430] sm:$0xff]
                  %1756 = vst [vmem:[%s1062 + $0xad0] sm:$0xff] %v1755
                  %v1757 = vld [vmem:[%s1061 + $0x1438] sm:$0xff]
                  %1758 = vst [vmem:[%s1062 + $0xad8] sm:$0xff] %v1757
                  %v1759 = vld [vmem:[%s1061 + $0x1440] sm:$0xff]
                  %1760 = vst [vmem:[%s1062 + $0xae0] sm:$0xff] %v1759
                  %v1761 = vld [vmem:[%s1061 + $0x1448] sm:$0xff]
                  %1762 = vst [vmem:[%s1062 + $0xae8] sm:$0xff] %v1761
                  %v1763 = vld [vmem:[%s1061 + $0x15e0] sm:$0xff]
                  %1764 = vst [vmem:[%s1062 + $0xaf0] sm:$0xff] %v1763
                  %v1765 = vld [vmem:[%s1061 + $0x15e8] sm:$0xff]
                  %1766 = vst [vmem:[%s1062 + $0xaf8] sm:$0xff] %v1765
                  %v1767 = vld [vmem:[%s1061 + $0x15f0] sm:$0xff]
                  %1768 = vst [vmem:[%s1062 + $0xb00] sm:$0xff] %v1767
                  %v1769 = vld [vmem:[%s1061 + $0x15f8] sm:$0xff]
                  %1770 = vst [vmem:[%s1062 + $0xb08] sm:$0xff] %v1769
                  %v1771 = vld [vmem:[%s1061 + $0x1600] sm:$0xff]
                  %1772 = vst [vmem:[%s1062 + $0xb10] sm:$0xff] %v1771
                  %v1773 = vld [vmem:[%s1061 + $0x1608] sm:$0xff]
                  %1774 = vst [vmem:[%s1062 + $0xb18] sm:$0xff] %v1773
                  %v1775 = vld [vmem:[%s1061 + $0x1610] sm:$0xff]
                  %1776 = vst [vmem:[%s1062 + $0xb20] sm:$0xff] %v1775
                  %v1777 = vld [vmem:[%s1061 + $0x1618] sm:$0xff]
                  %1778 = vst [vmem:[%s1062 + $0xb28] sm:$0xff] %v1777
                  %v1779 = vld [vmem:[%s1061 + $0x1620] sm:$0xff]
                  %1780 = vst [vmem:[%s1062 + $0xb30] sm:$0xff] %v1779
                  %v1781 = vld [vmem:[%s1061 + $0x1628] sm:$0xff]
                  %1782 = vst [vmem:[%s1062 + $0xb38] sm:$0xff] %v1781
                  %v1783 = vld [vmem:[%s1061 + $0x1630] sm:$0xff]
                  %1784 = vst [vmem:[%s1062 + $0xb40] sm:$0xff] %v1783
                  %v1785 = vld [vmem:[%s1061 + $0x1638] sm:$0xff]
                  %1786 = vst [vmem:[%s1062 + $0xb48] sm:$0xff] %v1785
                  %v1787 = vld [vmem:[%s1061 + $0x1640] sm:$0xff]
                  %1788 = vst [vmem:[%s1062 + $0xb50] sm:$0xff] %v1787
                  %v1789 = vld [vmem:[%s1061 + $0x1648] sm:$0xff]
                  %1790 = vst [vmem:[%s1062 + $0xb58] sm:$0xff] %v1789
                  %v1791 = vld [vmem:[%s1061 + $0x1650] sm:$0xff]
                  %1792 = vst [vmem:[%s1062 + $0xb60] sm:$0xff] %v1791
                  %v1793 = vld [vmem:[%s1061 + $0x1658] sm:$0xff]
                  %1794 = vst [vmem:[%s1062 + $0xb68] sm:$0xff] %v1793
                  %v1795 = vld [vmem:[%s1061 + $0x1660] sm:$0xff]
                  %1796 = vst [vmem:[%s1062 + $0xb70] sm:$0xff] %v1795
                  %v1797 = vld [vmem:[%s1061 + $0x1668] sm:$0xff]
                  %1798 = vst [vmem:[%s1062 + $0xb78] sm:$0xff] %v1797
                  %v1799 = vld [vmem:[%s1061 + $0x1670] sm:$0xff]
                  %1800 = vst [vmem:[%s1062 + $0xb80] sm:$0xff] %v1799
                  %v1801 = vld [vmem:[%s1061 + $0x1678] sm:$0xff]
                  %1802 = vst [vmem:[%s1062 + $0xb88] sm:$0xff] %v1801
                  %v1803 = vld [vmem:[%s1061 + $0x1680] sm:$0xff]
                  %1804 = vst [vmem:[%s1062 + $0xb90] sm:$0xff] %v1803
                  %v1805 = vld [vmem:[%s1061 + $0x1688] sm:$0xff]
                  %1806 = vst [vmem:[%s1062 + $0xb98] sm:$0xff] %v1805
                  %v1807 = vld [vmem:[%s1061 + $0x1690] sm:$0xff]
                  %1808 = vst [vmem:[%s1062 + $0xba0] sm:$0xff] %v1807
                  %v1809 = vld [vmem:[%s1061 + $0x1698] sm:$0xff]
                  %1810 = vst [vmem:[%s1062 + $0xba8] sm:$0xff] %v1809
                  %v1811 = vld [vmem:[%s1061 + $0x16a0] sm:$0xff]
                  %1812 = vst [vmem:[%s1062 + $0xbb0] sm:$0xff] %v1811
                  %v1813 = vld [vmem:[%s1061 + $0x16a8] sm:$0xff]
                  %1814 = vst [vmem:[%s1062 + $0xbb8] sm:$0xff] %v1813
                  %v1815 = vld [vmem:[%s1061 + $0x16b0] sm:$0xff]
                  %1816 = vst [vmem:[%s1062 + $0xbc0] sm:$0xff] %v1815
                  %v1817 = vld [vmem:[%s1061 + $0x16b8] sm:$0xff]
                  %1818 = vst [vmem:[%s1062 + $0xbc8] sm:$0xff] %v1817
                  %v1819 = vld [vmem:[%s1061 + $0x16c0] sm:$0xff]
                  %1820 = vst [vmem:[%s1062 + $0xbd0] sm:$0xff] %v1819
                  %v1821 = vld [vmem:[%s1061 + $0x16c8] sm:$0xff]
                  %1822 = vst [vmem:[%s1062 + $0xbd8] sm:$0xff] %v1821
                  %v1823 = vld [vmem:[%s1061 + $0x16d0] sm:$0xff]
                  %1824 = vst [vmem:[%s1062 + $0xbe0] sm:$0xff] %v1823
                  %v1825 = vld [vmem:[%s1061 + $0x16d8] sm:$0xff]
                  %1826 = vst [vmem:[%s1062 + $0xbe8] sm:$0xff] %v1825
                  %v1827 = vld [vmem:[%s1061 + $0x16e0] sm:$0xff]
                  %1828 = vst [vmem:[%s1062 + $0xbf0] sm:$0xff] %v1827
                  %v1829 = vld [vmem:[%s1061 + $0x16e8] sm:$0xff]
                  %1830 = vst [vmem:[%s1062 + $0xbf8] sm:$0xff] %v1829
                  %v1831 = vld [vmem:[%s1061 + $0x16f0] sm:$0xff]
                  %1832 = vst [vmem:[%s1062 + $0xc00] sm:$0xff] %v1831
                  %v1833 = vld [vmem:[%s1061 + $0x16f8] sm:$0xff]
                  %1834 = vst [vmem:[%s1062 + $0xc08] sm:$0xff] %v1833
                  %v1835 = vld [vmem:[%s1061 + $0x1700] sm:$0xff]
                  %1836 = vst [vmem:[%s1062 + $0xc10] sm:$0xff] %v1835
                  %v1837 = vld [vmem:[%s1061 + $0x1708] sm:$0xff]
                  %1838 = vst [vmem:[%s1062 + $0xc18] sm:$0xff] %v1837
                  %v1839 = vld [vmem:[%s1061 + $0x1710] sm:$0xff]
                  %1840 = vst [vmem:[%s1062 + $0xc20] sm:$0xff] %v1839
                  %v1841 = vld [vmem:[%s1061 + $0x1718] sm:$0xff]
                  %1842 = vst [vmem:[%s1062 + $0xc28] sm:$0xff] %v1841
                  %v1843 = vld [vmem:[%s1061 + $0x1720] sm:$0xff]
                  %1844 = vst [vmem:[%s1062 + $0xc30] sm:$0xff] %v1843
                  %v1845 = vld [vmem:[%s1061 + $0x1728] sm:$0xff]
                  %1846 = vst [vmem:[%s1062 + $0xc38] sm:$0xff] %v1845
                  %v1847 = vld [vmem:[%s1061 + $0x1730] sm:$0xff]
                  %1848 = vst [vmem:[%s1062 + $0xc40] sm:$0xff] %v1847
                  %v1849 = vld [vmem:[%s1061 + $0x1738] sm:$0xff]
                  %1850 = vst [vmem:[%s1062 + $0xc48] sm:$0xff] %v1849
                  %v1851 = vld [vmem:[%s1061 + $0x1740] sm:$0xff]
                  %1852 = vst [vmem:[%s1062 + $0xc50] sm:$0xff] %v1851
                  %v1853 = vld [vmem:[%s1061 + $0x1748] sm:$0xff]
                  %1854 = vst [vmem:[%s1062 + $0xc58] sm:$0xff] %v1853
                  %v1855 = vld [vmem:[%s1061 + $0x1750] sm:$0xff]
                  %1856 = vst [vmem:[%s1062 + $0xc60] sm:$0xff] %v1855
                  %v1857 = vld [vmem:[%s1061 + $0x1758] sm:$0xff]
                  %1858 = vst [vmem:[%s1062 + $0xc68] sm:$0xff] %v1857
                  %v1859 = vld [vmem:[%s1061 + $0x1760] sm:$0xff]
                  %1860 = vst [vmem:[%s1062 + $0xc70] sm:$0xff] %v1859
                  %v1861 = vld [vmem:[%s1061 + $0x1768] sm:$0xff]
                  %1862 = vst [vmem:[%s1062 + $0xc78] sm:$0xff] %v1861
                  %v1863 = vld [vmem:[%s1061 + $0x1900] sm:$0xff]
                  %1864 = vst [vmem:[%s1062 + $0xc80] sm:$0xff] %v1863
                  %v1865 = vld [vmem:[%s1061 + $0x1908] sm:$0xff]
                  %1866 = vst [vmem:[%s1062 + $0xc88] sm:$0xff] %v1865
                  %v1867 = vld [vmem:[%s1061 + $0x1910] sm:$0xff]
                  %1868 = vst [vmem:[%s1062 + $0xc90] sm:$0xff] %v1867
                  %v1869 = vld [vmem:[%s1061 + $0x1918] sm:$0xff]
                  %1870 = vst [vmem:[%s1062 + $0xc98] sm:$0xff] %v1869
                  %v1871 = vld [vmem:[%s1061 + $0x1920] sm:$0xff]
                  %1872 = vst [vmem:[%s1062 + $0xca0] sm:$0xff] %v1871
                  %v1873 = vld [vmem:[%s1061 + $0x1928] sm:$0xff]
                  %1874 = vst [vmem:[%s1062 + $0xca8] sm:$0xff] %v1873
                  %v1875 = vld [vmem:[%s1061 + $0x1930] sm:$0xff]
                  %1876 = vst [vmem:[%s1062 + $0xcb0] sm:$0xff] %v1875
                  %v1877 = vld [vmem:[%s1061 + $0x1938] sm:$0xff]
                  %1878 = vst [vmem:[%s1062 + $0xcb8] sm:$0xff] %v1877
                  %v1879 = vld [vmem:[%s1061 + $0x1940] sm:$0xff]
                  %1880 = vst [vmem:[%s1062 + $0xcc0] sm:$0xff] %v1879
                  %v1881 = vld [vmem:[%s1061 + $0x1948] sm:$0xff]
                  %1882 = vst [vmem:[%s1062 + $0xcc8] sm:$0xff] %v1881
                  %v1883 = vld [vmem:[%s1061 + $0x1950] sm:$0xff]
                  %1884 = vst [vmem:[%s1062 + $0xcd0] sm:$0xff] %v1883
                  %v1885 = vld [vmem:[%s1061 + $0x1958] sm:$0xff]
                  %1886 = vst [vmem:[%s1062 + $0xcd8] sm:$0xff] %v1885
                  %v1887 = vld [vmem:[%s1061 + $0x1960] sm:$0xff]
                  %1888 = vst [vmem:[%s1062 + $0xce0] sm:$0xff] %v1887
                  %v1889 = vld [vmem:[%s1061 + $0x1968] sm:$0xff]
                  %1890 = vst [vmem:[%s1062 + $0xce8] sm:$0xff] %v1889
                  %v1891 = vld [vmem:[%s1061 + $0x1970] sm:$0xff]
                  %1892 = vst [vmem:[%s1062 + $0xcf0] sm:$0xff] %v1891
                  %v1893 = vld [vmem:[%s1061 + $0x1978] sm:$0xff]
                  %1894 = vst [vmem:[%s1062 + $0xcf8] sm:$0xff] %v1893
                  %v1895 = vld [vmem:[%s1061 + $0x1980] sm:$0xff]
                  %1896 = vst [vmem:[%s1062 + $0xd00] sm:$0xff] %v1895
                  %v1897 = vld [vmem:[%s1061 + $0x1988] sm:$0xff]
                  %1898 = vst [vmem:[%s1062 + $0xd08] sm:$0xff] %v1897
                  %v1899 = vld [vmem:[%s1061 + $0x1990] sm:$0xff]
                  %1900 = vst [vmem:[%s1062 + $0xd10] sm:$0xff] %v1899
                  %v1901 = vld [vmem:[%s1061 + $0x1998] sm:$0xff]
                  %1902 = vst [vmem:[%s1062 + $0xd18] sm:$0xff] %v1901
                  %v1903 = vld [vmem:[%s1061 + $0x19a0] sm:$0xff]
                  %1904 = vst [vmem:[%s1062 + $0xd20] sm:$0xff] %v1903
                  %v1905 = vld [vmem:[%s1061 + $0x19a8] sm:$0xff]
                  %1906 = vst [vmem:[%s1062 + $0xd28] sm:$0xff] %v1905
                  %v1907 = vld [vmem:[%s1061 + $0x19b0] sm:$0xff]
                  %1908 = vst [vmem:[%s1062 + $0xd30] sm:$0xff] %v1907
                  %v1909 = vld [vmem:[%s1061 + $0x19b8] sm:$0xff]
                  %1910 = vst [vmem:[%s1062 + $0xd38] sm:$0xff] %v1909
                  %v1911 = vld [vmem:[%s1061 + $0x19c0] sm:$0xff]
                  %1912 = vst [vmem:[%s1062 + $0xd40] sm:$0xff] %v1911
                  %v1913 = vld [vmem:[%s1061 + $0x19c8] sm:$0xff]
                  %1914 = vst [vmem:[%s1062 + $0xd48] sm:$0xff] %v1913
                  %v1915 = vld [vmem:[%s1061 + $0x19d0] sm:$0xff]
                  %1916 = vst [vmem:[%s1062 + $0xd50] sm:$0xff] %v1915
                  %v1917 = vld [vmem:[%s1061 + $0x19d8] sm:$0xff]
                  %1918 = vst [vmem:[%s1062 + $0xd58] sm:$0xff] %v1917
                  %v1919 = vld [vmem:[%s1061 + $0x19e0] sm:$0xff]
                  %1920 = vst [vmem:[%s1062 + $0xd60] sm:$0xff] %v1919
                  %v1921 = vld [vmem:[%s1061 + $0x19e8] sm:$0xff]
                  %1922 = vst [vmem:[%s1062 + $0xd68] sm:$0xff] %v1921
                  %v1923 = vld [vmem:[%s1061 + $0x19f0] sm:$0xff]
                  %1924 = vst [vmem:[%s1062 + $0xd70] sm:$0xff] %v1923
                  %v1925 = vld [vmem:[%s1061 + $0x19f8] sm:$0xff]
                  %1926 = vst [vmem:[%s1062 + $0xd78] sm:$0xff] %v1925
                  %v1927 = vld [vmem:[%s1061 + $0x1a00] sm:$0xff]
                  %1928 = vst [vmem:[%s1062 + $0xd80] sm:$0xff] %v1927
                  %v1929 = vld [vmem:[%s1061 + $0x1a08] sm:$0xff]
                  %1930 = vst [vmem:[%s1062 + $0xd88] sm:$0xff] %v1929
                  %v1931 = vld [vmem:[%s1061 + $0x1a10] sm:$0xff]
                  %1932 = vst [vmem:[%s1062 + $0xd90] sm:$0xff] %v1931
                  %v1933 = vld [vmem:[%s1061 + $0x1a18] sm:$0xff]
                  %1934 = vst [vmem:[%s1062 + $0xd98] sm:$0xff] %v1933
                  %v1935 = vld [vmem:[%s1061 + $0x1a20] sm:$0xff]
                  %1936 = vst [vmem:[%s1062 + $0xda0] sm:$0xff] %v1935
                  %v1937 = vld [vmem:[%s1061 + $0x1a28] sm:$0xff]
                  %1938 = vst [vmem:[%s1062 + $0xda8] sm:$0xff] %v1937
                  %v1939 = vld [vmem:[%s1061 + $0x1a30] sm:$0xff]
                  %1940 = vst [vmem:[%s1062 + $0xdb0] sm:$0xff] %v1939
                  %v1941 = vld [vmem:[%s1061 + $0x1a38] sm:$0xff]
                  %1942 = vst [vmem:[%s1062 + $0xdb8] sm:$0xff] %v1941
                  %v1943 = vld [vmem:[%s1061 + $0x1a40] sm:$0xff]
                  %1944 = vst [vmem:[%s1062 + $0xdc0] sm:$0xff] %v1943
                  %v1945 = vld [vmem:[%s1061 + $0x1a48] sm:$0xff]
                  %1946 = vst [vmem:[%s1062 + $0xdc8] sm:$0xff] %v1945
                  %v1947 = vld [vmem:[%s1061 + $0x1a50] sm:$0xff]
                  %1948 = vst [vmem:[%s1062 + $0xdd0] sm:$0xff] %v1947
                  %v1949 = vld [vmem:[%s1061 + $0x1a58] sm:$0xff]
                  %1950 = vst [vmem:[%s1062 + $0xdd8] sm:$0xff] %v1949
                  %v1951 = vld [vmem:[%s1061 + $0x1a60] sm:$0xff]
                  %1952 = vst [vmem:[%s1062 + $0xde0] sm:$0xff] %v1951
                  %v1953 = vld [vmem:[%s1061 + $0x1a68] sm:$0xff]
                  %1954 = vst [vmem:[%s1062 + $0xde8] sm:$0xff] %v1953
                  %v1955 = vld [vmem:[%s1061 + $0x1a70] sm:$0xff]
                  %1956 = vst [vmem:[%s1062 + $0xdf0] sm:$0xff] %v1955
                  %v1957 = vld [vmem:[%s1061 + $0x1a78] sm:$0xff]
                  %1958 = vst [vmem:[%s1062 + $0xdf8] sm:$0xff] %v1957
                  %v1959 = vld [vmem:[%s1061 + $0x1a80] sm:$0xff]
                  %1960 = vst [vmem:[%s1062 + $0xe00] sm:$0xff] %v1959
                  %v1961 = vld [vmem:[%s1061 + $0x1a88] sm:$0xff]
                  %1962 = vst [vmem:[%s1062 + $0xe08] sm:$0xff] %v1961
                $region56: #{simple_net_dropout_forward.3} parent=50 // loop_footer
                  %s1060 = sadd.s32 1, %s1056
                $region57: #{simple_net_dropout_forward.3} parent=50 // loop_footer_branch
                  %1055 = sbr.rel target = $region53
                $region58: #{simple_net_dropout_forward.3} parent=50 // loop_exit
                  _
              $region51: #{simple_net_dropout_forward.3} parent=35 // pred_fallthru
                _
              // Predicated region
              $region59: #{simple_net_dropout_forward.3} parent=35 // pred_check
                _
              $region60: #{simple_net_dropout_forward.3} parent=35 // pred_check_branch
                %1964 = sbr.rel target = $region62
              $region61: #{simple_net_dropout_forward.3} parent=35 // pred_region
                _
              $region62: #{simple_net_dropout_forward.3} parent=35 // pred_fallthru
                _
            $region36: #{simple_net_dropout_forward.3} parent=31 // pred_fallthru
              _
            // Predicated region
            $region37: #{simple_net_dropout_forward.3} parent=31 // pred_check
              _
            $region38: #{simple_net_dropout_forward.3} parent=31 // pred_check_branch
              %143 = sbr.rel target = $region40
            $region39: #{simple_net_dropout_forward.3} parent=31 // pred_region
              loop: start=0, step=1, limit=1
              $region41: #{simple_net_dropout_forward.3} parent=39 // loop_pre_header
                _
              $region42: #{simple_net_dropout_forward.3} parent=39 // loop_header
                %s146 = sphi 0, %s150
                %p147 = scmp.ge.s32.totalorder %s146, 1
                %s151 = sphi %s137, %s137
                %s152 = sphi %s134, %s134
              $region43: #{simple_net_dropout_forward.3} parent=39 // loop_header_branch
                %149 = sbr.rel (%p147) target = $region47
              $region44: #{simple_net_dropout_forward.3} parent=39 // loop_body
                %v153 = vld [vmem:[%s151] sm:$0xff]
                %154 = vst [vmem:[%s152] sm:$0xff] %v153
                %v155 = vld [vmem:[%s151 + $0x8] sm:$0xff]
                %156 = vst [vmem:[%s152 + $0x8] sm:$0xff] %v155
                %v157 = vld [vmem:[%s151 + $0x10] sm:$0xff]
                %158 = vst [vmem:[%s152 + $0x10] sm:$0xff] %v157
                %v159 = vld [vmem:[%s151 + $0x18] sm:$0xff]
                %160 = vst [vmem:[%s152 + $0x18] sm:$0xff] %v159
                %v161 = vld [vmem:[%s151 + $0x20] sm:$0xff]
                %162 = vst [vmem:[%s152 + $0x20] sm:$0xff] %v161
                %v163 = vld [vmem:[%s151 + $0x28] sm:$0xff]
                %164 = vst [vmem:[%s152 + $0x28] sm:$0xff] %v163
                %v165 = vld [vmem:[%s151 + $0x30] sm:$0xff]
                %166 = vst [vmem:[%s152 + $0x30] sm:$0xff] %v165
                %v167 = vld [vmem:[%s151 + $0x38] sm:$0xff]
                %168 = vst [vmem:[%s152 + $0x38] sm:$0xff] %v167
                %v169 = vld [vmem:[%s151 + $0x40] sm:$0xff]
                %170 = vst [vmem:[%s152 + $0x40] sm:$0xff] %v169
                %v171 = vld [vmem:[%s151 + $0x48] sm:$0xff]
                %172 = vst [vmem:[%s152 + $0x48] sm:$0xff] %v171
                %v173 = vld [vmem:[%s151 + $0x50] sm:$0xff]
                %174 = vst [vmem:[%s152 + $0x50] sm:$0xff] %v173
                %v175 = vld [vmem:[%s151 + $0x58] sm:$0xff]
                %176 = vst [vmem:[%s152 + $0x58] sm:$0xff] %v175
                %v177 = vld [vmem:[%s151 + $0x60] sm:$0xff]
                %178 = vst [vmem:[%s152 + $0x60] sm:$0xff] %v177
                %v179 = vld [vmem:[%s151 + $0x68] sm:$0xff]
                %180 = vst [vmem:[%s152 + $0x68] sm:$0xff] %v179
                %v181 = vld [vmem:[%s151 + $0x70] sm:$0xff]
                %182 = vst [vmem:[%s152 + $0x70] sm:$0xff] %v181
                %v183 = vld [vmem:[%s151 + $0x78] sm:$0xff]
                %184 = vst [vmem:[%s152 + $0x78] sm:$0xff] %v183
                %v185 = vld [vmem:[%s151 + $0x80] sm:$0xff]
                %186 = vst [vmem:[%s152 + $0x80] sm:$0xff] %v185
                %v187 = vld [vmem:[%s151 + $0x88] sm:$0xff]
                %188 = vst [vmem:[%s152 + $0x88] sm:$0xff] %v187
                %v189 = vld [vmem:[%s151 + $0x90] sm:$0xff]
                %190 = vst [vmem:[%s152 + $0x90] sm:$0xff] %v189
                %v191 = vld [vmem:[%s151 + $0x98] sm:$0xff]
                %192 = vst [vmem:[%s152 + $0x98] sm:$0xff] %v191
                %v193 = vld [vmem:[%s151 + $0xa0] sm:$0xff]
                %194 = vst [vmem:[%s152 + $0xa0] sm:$0xff] %v193
                %v195 = vld [vmem:[%s151 + $0xa8] sm:$0xff]
                %196 = vst [vmem:[%s152 + $0xa8] sm:$0xff] %v195
                %v197 = vld [vmem:[%s151 + $0xb0] sm:$0xff]
                %198 = vst [vmem:[%s152 + $0xb0] sm:$0xff] %v197
                %v199 = vld [vmem:[%s151 + $0xb8] sm:$0xff]
                %200 = vst [vmem:[%s152 + $0xb8] sm:$0xff] %v199
                %v201 = vld [vmem:[%s151 + $0xc0] sm:$0xff]
                %202 = vst [vmem:[%s152 + $0xc0] sm:$0xff] %v201
                %v203 = vld [vmem:[%s151 + $0xc8] sm:$0xff]
                %204 = vst [vmem:[%s152 + $0xc8] sm:$0xff] %v203
                %v205 = vld [vmem:[%s151 + $0xd0] sm:$0xff]
                %206 = vst [vmem:[%s152 + $0xd0] sm:$0xff] %v205
                %v207 = vld [vmem:[%s151 + $0xd8] sm:$0xff]
                %208 = vst [vmem:[%s152 + $0xd8] sm:$0xff] %v207
                %v209 = vld [vmem:[%s151 + $0xe0] sm:$0xff]
                %210 = vst [vmem:[%s152 + $0xe0] sm:$0xff] %v209
                %v211 = vld [vmem:[%s151 + $0xe8] sm:$0xff]
                %212 = vst [vmem:[%s152 + $0xe8] sm:$0xff] %v211
                %v213 = vld [vmem:[%s151 + $0xf0] sm:$0xff]
                %214 = vst [vmem:[%s152 + $0xf0] sm:$0xff] %v213
                %v215 = vld [vmem:[%s151 + $0xf8] sm:$0xff]
                %216 = vst [vmem:[%s152 + $0xf8] sm:$0xff] %v215
                %v217 = vld [vmem:[%s151 + $0x100] sm:$0xff]
                %218 = vst [vmem:[%s152 + $0x100] sm:$0xff] %v217
                %v219 = vld [vmem:[%s151 + $0x108] sm:$0xff]
                %220 = vst [vmem:[%s152 + $0x108] sm:$0xff] %v219
                %v221 = vld [vmem:[%s151 + $0x110] sm:$0xff]
                %222 = vst [vmem:[%s152 + $0x110] sm:$0xff] %v221
                %v223 = vld [vmem:[%s151 + $0x118] sm:$0xff]
                %224 = vst [vmem:[%s152 + $0x118] sm:$0xff] %v223
                %v225 = vld [vmem:[%s151 + $0x120] sm:$0xff]
                %226 = vst [vmem:[%s152 + $0x120] sm:$0xff] %v225
                %v227 = vld [vmem:[%s151 + $0x128] sm:$0xff]
                %228 = vst [vmem:[%s152 + $0x128] sm:$0xff] %v227
                %v229 = vld [vmem:[%s151 + $0x130] sm:$0xff]
                %230 = vst [vmem:[%s152 + $0x130] sm:$0xff] %v229
                %v231 = vld [vmem:[%s151 + $0x138] sm:$0xff]
                %232 = vst [vmem:[%s152 + $0x138] sm:$0xff] %v231
                %v233 = vld [vmem:[%s151 + $0x140] sm:$0xff]
                %234 = vst [vmem:[%s152 + $0x140] sm:$0xff] %v233
                %v235 = vld [vmem:[%s151 + $0x148] sm:$0xff]
                %236 = vst [vmem:[%s152 + $0x148] sm:$0xff] %v235
                %v237 = vld [vmem:[%s151 + $0x150] sm:$0xff]
                %238 = vst [vmem:[%s152 + $0x150] sm:$0xff] %v237
                %v239 = vld [vmem:[%s151 + $0x158] sm:$0xff]
                %240 = vst [vmem:[%s152 + $0x158] sm:$0xff] %v239
                %v241 = vld [vmem:[%s151 + $0x160] sm:$0xff]
                %242 = vst [vmem:[%s152 + $0x160] sm:$0xff] %v241
                %v243 = vld [vmem:[%s151 + $0x168] sm:$0xff]
                %244 = vst [vmem:[%s152 + $0x168] sm:$0xff] %v243
                %v245 = vld [vmem:[%s151 + $0x170] sm:$0xff]
                %246 = vst [vmem:[%s152 + $0x170] sm:$0xff] %v245
                %v247 = vld [vmem:[%s151 + $0x178] sm:$0xff]
                %248 = vst [vmem:[%s152 + $0x178] sm:$0xff] %v247
                %v249 = vld [vmem:[%s151 + $0x180] sm:$0xff]
                %250 = vst [vmem:[%s152 + $0x180] sm:$0xff] %v249
                %v251 = vld [vmem:[%s151 + $0x188] sm:$0xff]
                %252 = vst [vmem:[%s152 + $0x188] sm:$0xff] %v251
                %v253 = vld [vmem:[%s151 + $0x320] sm:$0xff]
                %254 = vst [vmem:[%s152 + $0x190] sm:$0xff] %v253
                %v255 = vld [vmem:[%s151 + $0x328] sm:$0xff]
                %256 = vst [vmem:[%s152 + $0x198] sm:$0xff] %v255
                %v257 = vld [vmem:[%s151 + $0x330] sm:$0xff]
                %258 = vst [vmem:[%s152 + $0x1a0] sm:$0xff] %v257
                %v259 = vld [vmem:[%s151 + $0x338] sm:$0xff]
                %260 = vst [vmem:[%s152 + $0x1a8] sm:$0xff] %v259
                %v261 = vld [vmem:[%s151 + $0x340] sm:$0xff]
                %262 = vst [vmem:[%s152 + $0x1b0] sm:$0xff] %v261
                %v263 = vld [vmem:[%s151 + $0x348] sm:$0xff]
                %264 = vst [vmem:[%s152 + $0x1b8] sm:$0xff] %v263
                %v265 = vld [vmem:[%s151 + $0x350] sm:$0xff]
                %266 = vst [vmem:[%s152 + $0x1c0] sm:$0xff] %v265
                %v267 = vld [vmem:[%s151 + $0x358] sm:$0xff]
                %268 = vst [vmem:[%s152 + $0x1c8] sm:$0xff] %v267
                %v269 = vld [vmem:[%s151 + $0x360] sm:$0xff]
                %270 = vst [vmem:[%s152 + $0x1d0] sm:$0xff] %v269
                %v271 = vld [vmem:[%s151 + $0x368] sm:$0xff]
                %272 = vst [vmem:[%s152 + $0x1d8] sm:$0xff] %v271
                %v273 = vld [vmem:[%s151 + $0x370] sm:$0xff]
                %274 = vst [vmem:[%s152 + $0x1e0] sm:$0xff] %v273
                %v275 = vld [vmem:[%s151 + $0x378] sm:$0xff]
                %276 = vst [vmem:[%s152 + $0x1e8] sm:$0xff] %v275
                %v277 = vld [vmem:[%s151 + $0x380] sm:$0xff]
                %278 = vst [vmem:[%s152 + $0x1f0] sm:$0xff] %v277
                %v279 = vld [vmem:[%s151 + $0x388] sm:$0xff]
                %280 = vst [vmem:[%s152 + $0x1f8] sm:$0xff] %v279
                %v281 = vld [vmem:[%s151 + $0x390] sm:$0xff]
                %282 = vst [vmem:[%s152 + $0x200] sm:$0xff] %v281
                %v283 = vld [vmem:[%s151 + $0x398] sm:$0xff]
                %284 = vst [vmem:[%s152 + $0x208] sm:$0xff] %v283
                %v285 = vld [vmem:[%s151 + $0x3a0] sm:$0xff]
                %286 = vst [vmem:[%s152 + $0x210] sm:$0xff] %v285
                %v287 = vld [vmem:[%s151 + $0x3a8] sm:$0xff]
                %288 = vst [vmem:[%s152 + $0x218] sm:$0xff] %v287
                %v289 = vld [vmem:[%s151 + $0x3b0] sm:$0xff]
                %290 = vst [vmem:[%s152 + $0x220] sm:$0xff] %v289
                %v291 = vld [vmem:[%s151 + $0x3b8] sm:$0xff]
                %292 = vst [vmem:[%s152 + $0x228] sm:$0xff] %v291
                %v293 = vld [vmem:[%s151 + $0x3c0] sm:$0xff]
                %294 = vst [vmem:[%s152 + $0x230] sm:$0xff] %v293
                %v295 = vld [vmem:[%s151 + $0x3c8] sm:$0xff]
                %296 = vst [vmem:[%s152 + $0x238] sm:$0xff] %v295
                %v297 = vld [vmem:[%s151 + $0x3d0] sm:$0xff]
                %298 = vst [vmem:[%s152 + $0x240] sm:$0xff] %v297
                %v299 = vld [vmem:[%s151 + $0x3d8] sm:$0xff]
                %300 = vst [vmem:[%s152 + $0x248] sm:$0xff] %v299
                %v301 = vld [vmem:[%s151 + $0x3e0] sm:$0xff]
                %302 = vst [vmem:[%s152 + $0x250] sm:$0xff] %v301
                %v303 = vld [vmem:[%s151 + $0x3e8] sm:$0xff]
                %304 = vst [vmem:[%s152 + $0x258] sm:$0xff] %v303
                %v305 = vld [vmem:[%s151 + $0x3f0] sm:$0xff]
                %306 = vst [vmem:[%s152 + $0x260] sm:$0xff] %v305
                %v307 = vld [vmem:[%s151 + $0x3f8] sm:$0xff]
                %308 = vst [vmem:[%s152 + $0x268] sm:$0xff] %v307
                %v309 = vld [vmem:[%s151 + $0x400] sm:$0xff]
                %310 = vst [vmem:[%s152 + $0x270] sm:$0xff] %v309
                %v311 = vld [vmem:[%s151 + $0x408] sm:$0xff]
                %312 = vst [vmem:[%s152 + $0x278] sm:$0xff] %v311
                %v313 = vld [vmem:[%s151 + $0x410] sm:$0xff]
                %314 = vst [vmem:[%s152 + $0x280] sm:$0xff] %v313
                %v315 = vld [vmem:[%s151 + $0x418] sm:$0xff]
                %316 = vst [vmem:[%s152 + $0x288] sm:$0xff] %v315
                %v317 = vld [vmem:[%s151 + $0x420] sm:$0xff]
                %318 = vst [vmem:[%s152 + $0x290] sm:$0xff] %v317
                %v319 = vld [vmem:[%s151 + $0x428] sm:$0xff]
                %320 = vst [vmem:[%s152 + $0x298] sm:$0xff] %v319
                %v321 = vld [vmem:[%s151 + $0x430] sm:$0xff]
                %322 = vst [vmem:[%s152 + $0x2a0] sm:$0xff] %v321
                %v323 = vld [vmem:[%s151 + $0x438] sm:$0xff]
                %324 = vst [vmem:[%s152 + $0x2a8] sm:$0xff] %v323
                %v325 = vld [vmem:[%s151 + $0x440] sm:$0xff]
                %326 = vst [vmem:[%s152 + $0x2b0] sm:$0xff] %v325
                %v327 = vld [vmem:[%s151 + $0x448] sm:$0xff]
                %328 = vst [vmem:[%s152 + $0x2b8] sm:$0xff] %v327
                %v329 = vld [vmem:[%s151 + $0x450] sm:$0xff]
                %330 = vst [vmem:[%s152 + $0x2c0] sm:$0xff] %v329
                %v331 = vld [vmem:[%s151 + $0x458] sm:$0xff]
                %332 = vst [vmem:[%s152 + $0x2c8] sm:$0xff] %v331
                %v333 = vld [vmem:[%s151 + $0x460] sm:$0xff]
                %334 = vst [vmem:[%s152 + $0x2d0] sm:$0xff] %v333
                %v335 = vld [vmem:[%s151 + $0x468] sm:$0xff]
                %336 = vst [vmem:[%s152 + $0x2d8] sm:$0xff] %v335
                %v337 = vld [vmem:[%s151 + $0x470] sm:$0xff]
                %338 = vst [vmem:[%s152 + $0x2e0] sm:$0xff] %v337
                %v339 = vld [vmem:[%s151 + $0x478] sm:$0xff]
                %340 = vst [vmem:[%s152 + $0x2e8] sm:$0xff] %v339
                %v341 = vld [vmem:[%s151 + $0x480] sm:$0xff]
                %342 = vst [vmem:[%s152 + $0x2f0] sm:$0xff] %v341
                %v343 = vld [vmem:[%s151 + $0x488] sm:$0xff]
                %344 = vst [vmem:[%s152 + $0x2f8] sm:$0xff] %v343
                %v345 = vld [vmem:[%s151 + $0x490] sm:$0xff]
                %346 = vst [vmem:[%s152 + $0x300] sm:$0xff] %v345
                %v347 = vld [vmem:[%s151 + $0x498] sm:$0xff]
                %348 = vst [vmem:[%s152 + $0x308] sm:$0xff] %v347
                %v349 = vld [vmem:[%s151 + $0x4a0] sm:$0xff]
                %350 = vst [vmem:[%s152 + $0x310] sm:$0xff] %v349
                %v351 = vld [vmem:[%s151 + $0x4a8] sm:$0xff]
                %352 = vst [vmem:[%s152 + $0x318] sm:$0xff] %v351
                %v353 = vld [vmem:[%s151 + $0x640] sm:$0xff]
                %354 = vst [vmem:[%s152 + $0x320] sm:$0xff] %v353
                %v355 = vld [vmem:[%s151 + $0x648] sm:$0xff]
                %356 = vst [vmem:[%s152 + $0x328] sm:$0xff] %v355
                %v357 = vld [vmem:[%s151 + $0x650] sm:$0xff]
                %358 = vst [vmem:[%s152 + $0x330] sm:$0xff] %v357
                %v359 = vld [vmem:[%s151 + $0x658] sm:$0xff]
                %360 = vst [vmem:[%s152 + $0x338] sm:$0xff] %v359
                %v361 = vld [vmem:[%s151 + $0x660] sm:$0xff]
                %362 = vst [vmem:[%s152 + $0x340] sm:$0xff] %v361
                %v363 = vld [vmem:[%s151 + $0x668] sm:$0xff]
                %364 = vst [vmem:[%s152 + $0x348] sm:$0xff] %v363
                %v365 = vld [vmem:[%s151 + $0x670] sm:$0xff]
                %366 = vst [vmem:[%s152 + $0x350] sm:$0xff] %v365
                %v367 = vld [vmem:[%s151 + $0x678] sm:$0xff]
                %368 = vst [vmem:[%s152 + $0x358] sm:$0xff] %v367
                %v369 = vld [vmem:[%s151 + $0x680] sm:$0xff]
                %370 = vst [vmem:[%s152 + $0x360] sm:$0xff] %v369
                %v371 = vld [vmem:[%s151 + $0x688] sm:$0xff]
                %372 = vst [vmem:[%s152 + $0x368] sm:$0xff] %v371
                %v373 = vld [vmem:[%s151 + $0x690] sm:$0xff]
                %374 = vst [vmem:[%s152 + $0x370] sm:$0xff] %v373
                %v375 = vld [vmem:[%s151 + $0x698] sm:$0xff]
                %376 = vst [vmem:[%s152 + $0x378] sm:$0xff] %v375
                %v377 = vld [vmem:[%s151 + $0x6a0] sm:$0xff]
                %378 = vst [vmem:[%s152 + $0x380] sm:$0xff] %v377
                %v379 = vld [vmem:[%s151 + $0x6a8] sm:$0xff]
                %380 = vst [vmem:[%s152 + $0x388] sm:$0xff] %v379
                %v381 = vld [vmem:[%s151 + $0x6b0] sm:$0xff]
                %382 = vst [vmem:[%s152 + $0x390] sm:$0xff] %v381
                %v383 = vld [vmem:[%s151 + $0x6b8] sm:$0xff]
                %384 = vst [vmem:[%s152 + $0x398] sm:$0xff] %v383
                %v385 = vld [vmem:[%s151 + $0x6c0] sm:$0xff]
                %386 = vst [vmem:[%s152 + $0x3a0] sm:$0xff] %v385
                %v387 = vld [vmem:[%s151 + $0x6c8] sm:$0xff]
                %388 = vst [vmem:[%s152 + $0x3a8] sm:$0xff] %v387
                %v389 = vld [vmem:[%s151 + $0x6d0] sm:$0xff]
                %390 = vst [vmem:[%s152 + $0x3b0] sm:$0xff] %v389
                %v391 = vld [vmem:[%s151 + $0x6d8] sm:$0xff]
                %392 = vst [vmem:[%s152 + $0x3b8] sm:$0xff] %v391
                %v393 = vld [vmem:[%s151 + $0x6e0] sm:$0xff]
                %394 = vst [vmem:[%s152 + $0x3c0] sm:$0xff] %v393
                %v395 = vld [vmem:[%s151 + $0x6e8] sm:$0xff]
                %396 = vst [vmem:[%s152 + $0x3c8] sm:$0xff] %v395
                %v397 = vld [vmem:[%s151 + $0x6f0] sm:$0xff]
                %398 = vst [vmem:[%s152 + $0x3d0] sm:$0xff] %v397
                %v399 = vld [vmem:[%s151 + $0x6f8] sm:$0xff]
                %400 = vst [vmem:[%s152 + $0x3d8] sm:$0xff] %v399
                %v401 = vld [vmem:[%s151 + $0x700] sm:$0xff]
                %402 = vst [vmem:[%s152 + $0x3e0] sm:$0xff] %v401
                %v403 = vld [vmem:[%s151 + $0x708] sm:$0xff]
                %404 = vst [vmem:[%s152 + $0x3e8] sm:$0xff] %v403
                %v405 = vld [vmem:[%s151 + $0x710] sm:$0xff]
                %406 = vst [vmem:[%s152 + $0x3f0] sm:$0xff] %v405
                %v407 = vld [vmem:[%s151 + $0x718] sm:$0xff]
                %408 = vst [vmem:[%s152 + $0x3f8] sm:$0xff] %v407
                %v409 = vld [vmem:[%s151 + $0x720] sm:$0xff]
                %410 = vst [vmem:[%s152 + $0x400] sm:$0xff] %v409
                %v411 = vld [vmem:[%s151 + $0x728] sm:$0xff]
                %412 = vst [vmem:[%s152 + $0x408] sm:$0xff] %v411
                %v413 = vld [vmem:[%s151 + $0x730] sm:$0xff]
                %414 = vst [vmem:[%s152 + $0x410] sm:$0xff] %v413
                %v415 = vld [vmem:[%s151 + $0x738] sm:$0xff]
                %416 = vst [vmem:[%s152 + $0x418] sm:$0xff] %v415
                %v417 = vld [vmem:[%s151 + $0x740] sm:$0xff]
                %418 = vst [vmem:[%s152 + $0x420] sm:$0xff] %v417
                %v419 = vld [vmem:[%s151 + $0x748] sm:$0xff]
                %420 = vst [vmem:[%s152 + $0x428] sm:$0xff] %v419
                %v421 = vld [vmem:[%s151 + $0x750] sm:$0xff]
                %422 = vst [vmem:[%s152 + $0x430] sm:$0xff] %v421
                %v423 = vld [vmem:[%s151 + $0x758] sm:$0xff]
                %424 = vst [vmem:[%s152 + $0x438] sm:$0xff] %v423
                %v425 = vld [vmem:[%s151 + $0x760] sm:$0xff]
                %426 = vst [vmem:[%s152 + $0x440] sm:$0xff] %v425
                %v427 = vld [vmem:[%s151 + $0x768] sm:$0xff]
                %428 = vst [vmem:[%s152 + $0x448] sm:$0xff] %v427
                %v429 = vld [vmem:[%s151 + $0x770] sm:$0xff]
                %430 = vst [vmem:[%s152 + $0x450] sm:$0xff] %v429
                %v431 = vld [vmem:[%s151 + $0x778] sm:$0xff]
                %432 = vst [vmem:[%s152 + $0x458] sm:$0xff] %v431
                %v433 = vld [vmem:[%s151 + $0x780] sm:$0xff]
                %434 = vst [vmem:[%s152 + $0x460] sm:$0xff] %v433
                %v435 = vld [vmem:[%s151 + $0x788] sm:$0xff]
                %436 = vst [vmem:[%s152 + $0x468] sm:$0xff] %v435
                %v437 = vld [vmem:[%s151 + $0x790] sm:$0xff]
                %438 = vst [vmem:[%s152 + $0x470] sm:$0xff] %v437
                %v439 = vld [vmem:[%s151 + $0x798] sm:$0xff]
                %440 = vst [vmem:[%s152 + $0x478] sm:$0xff] %v439
                %v441 = vld [vmem:[%s151 + $0x7a0] sm:$0xff]
                %442 = vst [vmem:[%s152 + $0x480] sm:$0xff] %v441
                %v443 = vld [vmem:[%s151 + $0x7a8] sm:$0xff]
                %444 = vst [vmem:[%s152 + $0x488] sm:$0xff] %v443
                %v445 = vld [vmem:[%s151 + $0x7b0] sm:$0xff]
                %446 = vst [vmem:[%s152 + $0x490] sm:$0xff] %v445
                %v447 = vld [vmem:[%s151 + $0x7b8] sm:$0xff]
                %448 = vst [vmem:[%s152 + $0x498] sm:$0xff] %v447
                %v449 = vld [vmem:[%s151 + $0x7c0] sm:$0xff]
                %450 = vst [vmem:[%s152 + $0x4a0] sm:$0xff] %v449
                %v451 = vld [vmem:[%s151 + $0x7c8] sm:$0xff]
                %452 = vst [vmem:[%s152 + $0x4a8] sm:$0xff] %v451
                %v453 = vld [vmem:[%s151 + $0x960] sm:$0xff]
                %454 = vst [vmem:[%s152 + $0x4b0] sm:$0xff] %v453
                %v455 = vld [vmem:[%s151 + $0x968] sm:$0xff]
                %456 = vst [vmem:[%s152 + $0x4b8] sm:$0xff] %v455
                %v457 = vld [vmem:[%s151 + $0x970] sm:$0xff]
                %458 = vst [vmem:[%s152 + $0x4c0] sm:$0xff] %v457
                %v459 = vld [vmem:[%s151 + $0x978] sm:$0xff]
                %460 = vst [vmem:[%s152 + $0x4c8] sm:$0xff] %v459
                %v461 = vld [vmem:[%s151 + $0x980] sm:$0xff]
                %462 = vst [vmem:[%s152 + $0x4d0] sm:$0xff] %v461
                %v463 = vld [vmem:[%s151 + $0x988] sm:$0xff]
                %464 = vst [vmem:[%s152 + $0x4d8] sm:$0xff] %v463
                %v465 = vld [vmem:[%s151 + $0x990] sm:$0xff]
                %466 = vst [vmem:[%s152 + $0x4e0] sm:$0xff] %v465
                %v467 = vld [vmem:[%s151 + $0x998] sm:$0xff]
                %468 = vst [vmem:[%s152 + $0x4e8] sm:$0xff] %v467
                %v469 = vld [vmem:[%s151 + $0x9a0] sm:$0xff]
                %470 = vst [vmem:[%s152 + $0x4f0] sm:$0xff] %v469
                %v471 = vld [vmem:[%s151 + $0x9a8] sm:$0xff]
                %472 = vst [vmem:[%s152 + $0x4f8] sm:$0xff] %v471
                %v473 = vld [vmem:[%s151 + $0x9b0] sm:$0xff]
                %474 = vst [vmem:[%s152 + $0x500] sm:$0xff] %v473
                %v475 = vld [vmem:[%s151 + $0x9b8] sm:$0xff]
                %476 = vst [vmem:[%s152 + $0x508] sm:$0xff] %v475
                %v477 = vld [vmem:[%s151 + $0x9c0] sm:$0xff]
                %478 = vst [vmem:[%s152 + $0x510] sm:$0xff] %v477
                %v479 = vld [vmem:[%s151 + $0x9c8] sm:$0xff]
                %480 = vst [vmem:[%s152 + $0x518] sm:$0xff] %v479
                %v481 = vld [vmem:[%s151 + $0x9d0] sm:$0xff]
                %482 = vst [vmem:[%s152 + $0x520] sm:$0xff] %v481
                %v483 = vld [vmem:[%s151 + $0x9d8] sm:$0xff]
                %484 = vst [vmem:[%s152 + $0x528] sm:$0xff] %v483
                %v485 = vld [vmem:[%s151 + $0x9e0] sm:$0xff]
                %486 = vst [vmem:[%s152 + $0x530] sm:$0xff] %v485
                %v487 = vld [vmem:[%s151 + $0x9e8] sm:$0xff]
                %488 = vst [vmem:[%s152 + $0x538] sm:$0xff] %v487
                %v489 = vld [vmem:[%s151 + $0x9f0] sm:$0xff]
                %490 = vst [vmem:[%s152 + $0x540] sm:$0xff] %v489
                %v491 = vld [vmem:[%s151 + $0x9f8] sm:$0xff]
                %492 = vst [vmem:[%s152 + $0x548] sm:$0xff] %v491
                %v493 = vld [vmem:[%s151 + $0xa00] sm:$0xff]
                %494 = vst [vmem:[%s152 + $0x550] sm:$0xff] %v493
                %v495 = vld [vmem:[%s151 + $0xa08] sm:$0xff]
                %496 = vst [vmem:[%s152 + $0x558] sm:$0xff] %v495
                %v497 = vld [vmem:[%s151 + $0xa10] sm:$0xff]
                %498 = vst [vmem:[%s152 + $0x560] sm:$0xff] %v497
                %v499 = vld [vmem:[%s151 + $0xa18] sm:$0xff]
                %500 = vst [vmem:[%s152 + $0x568] sm:$0xff] %v499
                %v501 = vld [vmem:[%s151 + $0xa20] sm:$0xff]
                %502 = vst [vmem:[%s152 + $0x570] sm:$0xff] %v501
                %v503 = vld [vmem:[%s151 + $0xa28] sm:$0xff]
                %504 = vst [vmem:[%s152 + $0x578] sm:$0xff] %v503
                %v505 = vld [vmem:[%s151 + $0xa30] sm:$0xff]
                %506 = vst [vmem:[%s152 + $0x580] sm:$0xff] %v505
                %v507 = vld [vmem:[%s151 + $0xa38] sm:$0xff]
                %508 = vst [vmem:[%s152 + $0x588] sm:$0xff] %v507
                %v509 = vld [vmem:[%s151 + $0xa40] sm:$0xff]
                %510 = vst [vmem:[%s152 + $0x590] sm:$0xff] %v509
                %v511 = vld [vmem:[%s151 + $0xa48] sm:$0xff]
                %512 = vst [vmem:[%s152 + $0x598] sm:$0xff] %v511
                %v513 = vld [vmem:[%s151 + $0xa50] sm:$0xff]
                %514 = vst [vmem:[%s152 + $0x5a0] sm:$0xff] %v513
                %v515 = vld [vmem:[%s151 + $0xa58] sm:$0xff]
                %516 = vst [vmem:[%s152 + $0x5a8] sm:$0xff] %v515
                %v517 = vld [vmem:[%s151 + $0xa60] sm:$0xff]
                %518 = vst [vmem:[%s152 + $0x5b0] sm:$0xff] %v517
                %v519 = vld [vmem:[%s151 + $0xa68] sm:$0xff]
                %520 = vst [vmem:[%s152 + $0x5b8] sm:$0xff] %v519
                %v521 = vld [vmem:[%s151 + $0xa70] sm:$0xff]
                %522 = vst [vmem:[%s152 + $0x5c0] sm:$0xff] %v521
                %v523 = vld [vmem:[%s151 + $0xa78] sm:$0xff]
                %524 = vst [vmem:[%s152 + $0x5c8] sm:$0xff] %v523
                %v525 = vld [vmem:[%s151 + $0xa80] sm:$0xff]
                %526 = vst [vmem:[%s152 + $0x5d0] sm:$0xff] %v525
                %v527 = vld [vmem:[%s151 + $0xa88] sm:$0xff]
                %528 = vst [vmem:[%s152 + $0x5d8] sm:$0xff] %v527
                %v529 = vld [vmem:[%s151 + $0xa90] sm:$0xff]
                %530 = vst [vmem:[%s152 + $0x5e0] sm:$0xff] %v529
                %v531 = vld [vmem:[%s151 + $0xa98] sm:$0xff]
                %532 = vst [vmem:[%s152 + $0x5e8] sm:$0xff] %v531
                %v533 = vld [vmem:[%s151 + $0xaa0] sm:$0xff]
                %534 = vst [vmem:[%s152 + $0x5f0] sm:$0xff] %v533
                %v535 = vld [vmem:[%s151 + $0xaa8] sm:$0xff]
                %536 = vst [vmem:[%s152 + $0x5f8] sm:$0xff] %v535
                %v537 = vld [vmem:[%s151 + $0xab0] sm:$0xff]
                %538 = vst [vmem:[%s152 + $0x600] sm:$0xff] %v537
                %v539 = vld [vmem:[%s151 + $0xab8] sm:$0xff]
                %540 = vst [vmem:[%s152 + $0x608] sm:$0xff] %v539
                %v541 = vld [vmem:[%s151 + $0xac0] sm:$0xff]
                %542 = vst [vmem:[%s152 + $0x610] sm:$0xff] %v541
                %v543 = vld [vmem:[%s151 + $0xac8] sm:$0xff]
                %544 = vst [vmem:[%s152 + $0x618] sm:$0xff] %v543
                %v545 = vld [vmem:[%s151 + $0xad0] sm:$0xff]
                %546 = vst [vmem:[%s152 + $0x620] sm:$0xff] %v545
                %v547 = vld [vmem:[%s151 + $0xad8] sm:$0xff]
                %548 = vst [vmem:[%s152 + $0x628] sm:$0xff] %v547
                %v549 = vld [vmem:[%s151 + $0xae0] sm:$0xff]
                %550 = vst [vmem:[%s152 + $0x630] sm:$0xff] %v549
                %v551 = vld [vmem:[%s151 + $0xae8] sm:$0xff]
                %552 = vst [vmem:[%s152 + $0x638] sm:$0xff] %v551
                %v553 = vld [vmem:[%s151 + $0xc80] sm:$0xff]
                %554 = vst [vmem:[%s152 + $0x640] sm:$0xff] %v553
                %v555 = vld [vmem:[%s151 + $0xc88] sm:$0xff]
                %556 = vst [vmem:[%s152 + $0x648] sm:$0xff] %v555
                %v557 = vld [vmem:[%s151 + $0xc90] sm:$0xff]
                %558 = vst [vmem:[%s152 + $0x650] sm:$0xff] %v557
                %v559 = vld [vmem:[%s151 + $0xc98] sm:$0xff]
                %560 = vst [vmem:[%s152 + $0x658] sm:$0xff] %v559
                %v561 = vld [vmem:[%s151 + $0xca0] sm:$0xff]
                %562 = vst [vmem:[%s152 + $0x660] sm:$0xff] %v561
                %v563 = vld [vmem:[%s151 + $0xca8] sm:$0xff]
                %564 = vst [vmem:[%s152 + $0x668] sm:$0xff] %v563
                %v565 = vld [vmem:[%s151 + $0xcb0] sm:$0xff]
                %566 = vst [vmem:[%s152 + $0x670] sm:$0xff] %v565
                %v567 = vld [vmem:[%s151 + $0xcb8] sm:$0xff]
                %568 = vst [vmem:[%s152 + $0x678] sm:$0xff] %v567
                %v569 = vld [vmem:[%s151 + $0xcc0] sm:$0xff]
                %570 = vst [vmem:[%s152 + $0x680] sm:$0xff] %v569
                %v571 = vld [vmem:[%s151 + $0xcc8] sm:$0xff]
                %572 = vst [vmem:[%s152 + $0x688] sm:$0xff] %v571
                %v573 = vld [vmem:[%s151 + $0xcd0] sm:$0xff]
                %574 = vst [vmem:[%s152 + $0x690] sm:$0xff] %v573
                %v575 = vld [vmem:[%s151 + $0xcd8] sm:$0xff]
                %576 = vst [vmem:[%s152 + $0x698] sm:$0xff] %v575
                %v577 = vld [vmem:[%s151 + $0xce0] sm:$0xff]
                %578 = vst [vmem:[%s152 + $0x6a0] sm:$0xff] %v577
                %v579 = vld [vmem:[%s151 + $0xce8] sm:$0xff]
                %580 = vst [vmem:[%s152 + $0x6a8] sm:$0xff] %v579
                %v581 = vld [vmem:[%s151 + $0xcf0] sm:$0xff]
                %582 = vst [vmem:[%s152 + $0x6b0] sm:$0xff] %v581
                %v583 = vld [vmem:[%s151 + $0xcf8] sm:$0xff]
                %584 = vst [vmem:[%s152 + $0x6b8] sm:$0xff] %v583
                %v585 = vld [vmem:[%s151 + $0xd00] sm:$0xff]
                %586 = vst [vmem:[%s152 + $0x6c0] sm:$0xff] %v585
                %v587 = vld [vmem:[%s151 + $0xd08] sm:$0xff]
                %588 = vst [vmem:[%s152 + $0x6c8] sm:$0xff] %v587
                %v589 = vld [vmem:[%s151 + $0xd10] sm:$0xff]
                %590 = vst [vmem:[%s152 + $0x6d0] sm:$0xff] %v589
                %v591 = vld [vmem:[%s151 + $0xd18] sm:$0xff]
                %592 = vst [vmem:[%s152 + $0x6d8] sm:$0xff] %v591
                %v593 = vld [vmem:[%s151 + $0xd20] sm:$0xff]
                %594 = vst [vmem:[%s152 + $0x6e0] sm:$0xff] %v593
                %v595 = vld [vmem:[%s151 + $0xd28] sm:$0xff]
                %596 = vst [vmem:[%s152 + $0x6e8] sm:$0xff] %v595
                %v597 = vld [vmem:[%s151 + $0xd30] sm:$0xff]
                %598 = vst [vmem:[%s152 + $0x6f0] sm:$0xff] %v597
                %v599 = vld [vmem:[%s151 + $0xd38] sm:$0xff]
                %600 = vst [vmem:[%s152 + $0x6f8] sm:$0xff] %v599
                %v601 = vld [vmem:[%s151 + $0xd40] sm:$0xff]
                %602 = vst [vmem:[%s152 + $0x700] sm:$0xff] %v601
                %v603 = vld [vmem:[%s151 + $0xd48] sm:$0xff]
                %604 = vst [vmem:[%s152 + $0x708] sm:$0xff] %v603
                %v605 = vld [vmem:[%s151 + $0xd50] sm:$0xff]
                %606 = vst [vmem:[%s152 + $0x710] sm:$0xff] %v605
                %v607 = vld [vmem:[%s151 + $0xd58] sm:$0xff]
                %608 = vst [vmem:[%s152 + $0x718] sm:$0xff] %v607
                %v609 = vld [vmem:[%s151 + $0xd60] sm:$0xff]
                %610 = vst [vmem:[%s152 + $0x720] sm:$0xff] %v609
                %v611 = vld [vmem:[%s151 + $0xd68] sm:$0xff]
                %612 = vst [vmem:[%s152 + $0x728] sm:$0xff] %v611
                %v613 = vld [vmem:[%s151 + $0xd70] sm:$0xff]
                %614 = vst [vmem:[%s152 + $0x730] sm:$0xff] %v613
                %v615 = vld [vmem:[%s151 + $0xd78] sm:$0xff]
                %616 = vst [vmem:[%s152 + $0x738] sm:$0xff] %v615
                %v617 = vld [vmem:[%s151 + $0xd80] sm:$0xff]
                %618 = vst [vmem:[%s152 + $0x740] sm:$0xff] %v617
                %v619 = vld [vmem:[%s151 + $0xd88] sm:$0xff]
                %620 = vst [vmem:[%s152 + $0x748] sm:$0xff] %v619
                %v621 = vld [vmem:[%s151 + $0xd90] sm:$0xff]
                %622 = vst [vmem:[%s152 + $0x750] sm:$0xff] %v621
                %v623 = vld [vmem:[%s151 + $0xd98] sm:$0xff]
                %624 = vst [vmem:[%s152 + $0x758] sm:$0xff] %v623
                %v625 = vld [vmem:[%s151 + $0xda0] sm:$0xff]
                %626 = vst [vmem:[%s152 + $0x760] sm:$0xff] %v625
                %v627 = vld [vmem:[%s151 + $0xda8] sm:$0xff]
                %628 = vst [vmem:[%s152 + $0x768] sm:$0xff] %v627
                %v629 = vld [vmem:[%s151 + $0xdb0] sm:$0xff]
                %630 = vst [vmem:[%s152 + $0x770] sm:$0xff] %v629
                %v631 = vld [vmem:[%s151 + $0xdb8] sm:$0xff]
                %632 = vst [vmem:[%s152 + $0x778] sm:$0xff] %v631
                %v633 = vld [vmem:[%s151 + $0xdc0] sm:$0xff]
                %634 = vst [vmem:[%s152 + $0x780] sm:$0xff] %v633
                %v635 = vld [vmem:[%s151 + $0xdc8] sm:$0xff]
                %636 = vst [vmem:[%s152 + $0x788] sm:$0xff] %v635
                %v637 = vld [vmem:[%s151 + $0xdd0] sm:$0xff]
                %638 = vst [vmem:[%s152 + $0x790] sm:$0xff] %v637
                %v639 = vld [vmem:[%s151 + $0xdd8] sm:$0xff]
                %640 = vst [vmem:[%s152 + $0x798] sm:$0xff] %v639
                %v641 = vld [vmem:[%s151 + $0xde0] sm:$0xff]
                %642 = vst [vmem:[%s152 + $0x7a0] sm:$0xff] %v641
                %v643 = vld [vmem:[%s151 + $0xde8] sm:$0xff]
                %644 = vst [vmem:[%s152 + $0x7a8] sm:$0xff] %v643
                %v645 = vld [vmem:[%s151 + $0xdf0] sm:$0xff]
                %646 = vst [vmem:[%s152 + $0x7b0] sm:$0xff] %v645
                %v647 = vld [vmem:[%s151 + $0xdf8] sm:$0xff]
                %648 = vst [vmem:[%s152 + $0x7b8] sm:$0xff] %v647
                %v649 = vld [vmem:[%s151 + $0xe00] sm:$0xff]
                %650 = vst [vmem:[%s152 + $0x7c0] sm:$0xff] %v649
                %v651 = vld [vmem:[%s151 + $0xe08] sm:$0xff]
                %652 = vst [vmem:[%s152 + $0x7c8] sm:$0xff] %v651
                %v653 = vld [vmem:[%s151 + $0xfa0] sm:$0xff]
                %654 = vst [vmem:[%s152 + $0x7d0] sm:$0xff] %v653
                %v655 = vld [vmem:[%s151 + $0xfa8] sm:$0xff]
                %656 = vst [vmem:[%s152 + $0x7d8] sm:$0xff] %v655
                %v657 = vld [vmem:[%s151 + $0xfb0] sm:$0xff]
                %658 = vst [vmem:[%s152 + $0x7e0] sm:$0xff] %v657
                %v659 = vld [vmem:[%s151 + $0xfb8] sm:$0xff]
                %660 = vst [vmem:[%s152 + $0x7e8] sm:$0xff] %v659
                %v661 = vld [vmem:[%s151 + $0xfc0] sm:$0xff]
                %662 = vst [vmem:[%s152 + $0x7f0] sm:$0xff] %v661
                %v663 = vld [vmem:[%s151 + $0xfc8] sm:$0xff]
                %664 = vst [vmem:[%s152 + $0x7f8] sm:$0xff] %v663
                %v665 = vld [vmem:[%s151 + $0xfd0] sm:$0xff]
                %666 = vst [vmem:[%s152 + $0x800] sm:$0xff] %v665
                %v667 = vld [vmem:[%s151 + $0xfd8] sm:$0xff]
                %668 = vst [vmem:[%s152 + $0x808] sm:$0xff] %v667
                %v669 = vld [vmem:[%s151 + $0xfe0] sm:$0xff]
                %670 = vst [vmem:[%s152 + $0x810] sm:$0xff] %v669
                %v671 = vld [vmem:[%s151 + $0xfe8] sm:$0xff]
                %672 = vst [vmem:[%s152 + $0x818] sm:$0xff] %v671
                %v673 = vld [vmem:[%s151 + $0xff0] sm:$0xff]
                %674 = vst [vmem:[%s152 + $0x820] sm:$0xff] %v673
                %v675 = vld [vmem:[%s151 + $0xff8] sm:$0xff]
                %676 = vst [vmem:[%s152 + $0x828] sm:$0xff] %v675
                %v677 = vld [vmem:[%s151 + $0x1000] sm:$0xff]
                %678 = vst [vmem:[%s152 + $0x830] sm:$0xff] %v677
                %v679 = vld [vmem:[%s151 + $0x1008] sm:$0xff]
                %680 = vst [vmem:[%s152 + $0x838] sm:$0xff] %v679
                %v681 = vld [vmem:[%s151 + $0x1010] sm:$0xff]
                %682 = vst [vmem:[%s152 + $0x840] sm:$0xff] %v681
                %v683 = vld [vmem:[%s151 + $0x1018] sm:$0xff]
                %684 = vst [vmem:[%s152 + $0x848] sm:$0xff] %v683
                %v685 = vld [vmem:[%s151 + $0x1020] sm:$0xff]
                %686 = vst [vmem:[%s152 + $0x850] sm:$0xff] %v685
                %v687 = vld [vmem:[%s151 + $0x1028] sm:$0xff]
                %688 = vst [vmem:[%s152 + $0x858] sm:$0xff] %v687
                %v689 = vld [vmem:[%s151 + $0x1030] sm:$0xff]
                %690 = vst [vmem:[%s152 + $0x860] sm:$0xff] %v689
                %v691 = vld [vmem:[%s151 + $0x1038] sm:$0xff]
                %692 = vst [vmem:[%s152 + $0x868] sm:$0xff] %v691
                %v693 = vld [vmem:[%s151 + $0x1040] sm:$0xff]
                %694 = vst [vmem:[%s152 + $0x870] sm:$0xff] %v693
                %v695 = vld [vmem:[%s151 + $0x1048] sm:$0xff]
                %696 = vst [vmem:[%s152 + $0x878] sm:$0xff] %v695
                %v697 = vld [vmem:[%s151 + $0x1050] sm:$0xff]
                %698 = vst [vmem:[%s152 + $0x880] sm:$0xff] %v697
                %v699 = vld [vmem:[%s151 + $0x1058] sm:$0xff]
                %700 = vst [vmem:[%s152 + $0x888] sm:$0xff] %v699
                %v701 = vld [vmem:[%s151 + $0x1060] sm:$0xff]
                %702 = vst [vmem:[%s152 + $0x890] sm:$0xff] %v701
                %v703 = vld [vmem:[%s151 + $0x1068] sm:$0xff]
                %704 = vst [vmem:[%s152 + $0x898] sm:$0xff] %v703
                %v705 = vld [vmem:[%s151 + $0x1070] sm:$0xff]
                %706 = vst [vmem:[%s152 + $0x8a0] sm:$0xff] %v705
                %v707 = vld [vmem:[%s151 + $0x1078] sm:$0xff]
                %708 = vst [vmem:[%s152 + $0x8a8] sm:$0xff] %v707
                %v709 = vld [vmem:[%s151 + $0x1080] sm:$0xff]
                %710 = vst [vmem:[%s152 + $0x8b0] sm:$0xff] %v709
                %v711 = vld [vmem:[%s151 + $0x1088] sm:$0xff]
                %712 = vst [vmem:[%s152 + $0x8b8] sm:$0xff] %v711
                %v713 = vld [vmem:[%s151 + $0x1090] sm:$0xff]
                %714 = vst [vmem:[%s152 + $0x8c0] sm:$0xff] %v713
                %v715 = vld [vmem:[%s151 + $0x1098] sm:$0xff]
                %716 = vst [vmem:[%s152 + $0x8c8] sm:$0xff] %v715
                %v717 = vld [vmem:[%s151 + $0x10a0] sm:$0xff]
                %718 = vst [vmem:[%s152 + $0x8d0] sm:$0xff] %v717
                %v719 = vld [vmem:[%s151 + $0x10a8] sm:$0xff]
                %720 = vst [vmem:[%s152 + $0x8d8] sm:$0xff] %v719
                %v721 = vld [vmem:[%s151 + $0x10b0] sm:$0xff]
                %722 = vst [vmem:[%s152 + $0x8e0] sm:$0xff] %v721
                %v723 = vld [vmem:[%s151 + $0x10b8] sm:$0xff]
                %724 = vst [vmem:[%s152 + $0x8e8] sm:$0xff] %v723
                %v725 = vld [vmem:[%s151 + $0x10c0] sm:$0xff]
                %726 = vst [vmem:[%s152 + $0x8f0] sm:$0xff] %v725
                %v727 = vld [vmem:[%s151 + $0x10c8] sm:$0xff]
                %728 = vst [vmem:[%s152 + $0x8f8] sm:$0xff] %v727
                %v729 = vld [vmem:[%s151 + $0x10d0] sm:$0xff]
                %730 = vst [vmem:[%s152 + $0x900] sm:$0xff] %v729
                %v731 = vld [vmem:[%s151 + $0x10d8] sm:$0xff]
                %732 = vst [vmem:[%s152 + $0x908] sm:$0xff] %v731
                %v733 = vld [vmem:[%s151 + $0x10e0] sm:$0xff]
                %734 = vst [vmem:[%s152 + $0x910] sm:$0xff] %v733
                %v735 = vld [vmem:[%s151 + $0x10e8] sm:$0xff]
                %736 = vst [vmem:[%s152 + $0x918] sm:$0xff] %v735
                %v737 = vld [vmem:[%s151 + $0x10f0] sm:$0xff]
                %738 = vst [vmem:[%s152 + $0x920] sm:$0xff] %v737
                %v739 = vld [vmem:[%s151 + $0x10f8] sm:$0xff]
                %740 = vst [vmem:[%s152 + $0x928] sm:$0xff] %v739
                %v741 = vld [vmem:[%s151 + $0x1100] sm:$0xff]
                %742 = vst [vmem:[%s152 + $0x930] sm:$0xff] %v741
                %v743 = vld [vmem:[%s151 + $0x1108] sm:$0xff]
                %744 = vst [vmem:[%s152 + $0x938] sm:$0xff] %v743
                %v745 = vld [vmem:[%s151 + $0x1110] sm:$0xff]
                %746 = vst [vmem:[%s152 + $0x940] sm:$0xff] %v745
                %v747 = vld [vmem:[%s151 + $0x1118] sm:$0xff]
                %748 = vst [vmem:[%s152 + $0x948] sm:$0xff] %v747
                %v749 = vld [vmem:[%s151 + $0x1120] sm:$0xff]
                %750 = vst [vmem:[%s152 + $0x950] sm:$0xff] %v749
                %v751 = vld [vmem:[%s151 + $0x1128] sm:$0xff]
                %752 = vst [vmem:[%s152 + $0x958] sm:$0xff] %v751
                %v753 = vld [vmem:[%s151 + $0x12c0] sm:$0xff]
                %754 = vst [vmem:[%s152 + $0x960] sm:$0xff] %v753
                %v755 = vld [vmem:[%s151 + $0x12c8] sm:$0xff]
                %756 = vst [vmem:[%s152 + $0x968] sm:$0xff] %v755
                %v757 = vld [vmem:[%s151 + $0x12d0] sm:$0xff]
                %758 = vst [vmem:[%s152 + $0x970] sm:$0xff] %v757
                %v759 = vld [vmem:[%s151 + $0x12d8] sm:$0xff]
                %760 = vst [vmem:[%s152 + $0x978] sm:$0xff] %v759
                %v761 = vld [vmem:[%s151 + $0x12e0] sm:$0xff]
                %762 = vst [vmem:[%s152 + $0x980] sm:$0xff] %v761
                %v763 = vld [vmem:[%s151 + $0x12e8] sm:$0xff]
                %764 = vst [vmem:[%s152 + $0x988] sm:$0xff] %v763
                %v765 = vld [vmem:[%s151 + $0x12f0] sm:$0xff]
                %766 = vst [vmem:[%s152 + $0x990] sm:$0xff] %v765
                %v767 = vld [vmem:[%s151 + $0x12f8] sm:$0xff]
                %768 = vst [vmem:[%s152 + $0x998] sm:$0xff] %v767
                %v769 = vld [vmem:[%s151 + $0x1300] sm:$0xff]
                %770 = vst [vmem:[%s152 + $0x9a0] sm:$0xff] %v769
                %v771 = vld [vmem:[%s151 + $0x1308] sm:$0xff]
                %772 = vst [vmem:[%s152 + $0x9a8] sm:$0xff] %v771
                %v773 = vld [vmem:[%s151 + $0x1310] sm:$0xff]
                %774 = vst [vmem:[%s152 + $0x9b0] sm:$0xff] %v773
                %v775 = vld [vmem:[%s151 + $0x1318] sm:$0xff]
                %776 = vst [vmem:[%s152 + $0x9b8] sm:$0xff] %v775
                %v777 = vld [vmem:[%s151 + $0x1320] sm:$0xff]
                %778 = vst [vmem:[%s152 + $0x9c0] sm:$0xff] %v777
                %v779 = vld [vmem:[%s151 + $0x1328] sm:$0xff]
                %780 = vst [vmem:[%s152 + $0x9c8] sm:$0xff] %v779
                %v781 = vld [vmem:[%s151 + $0x1330] sm:$0xff]
                %782 = vst [vmem:[%s152 + $0x9d0] sm:$0xff] %v781
                %v783 = vld [vmem:[%s151 + $0x1338] sm:$0xff]
                %784 = vst [vmem:[%s152 + $0x9d8] sm:$0xff] %v783
                %v785 = vld [vmem:[%s151 + $0x1340] sm:$0xff]
                %786 = vst [vmem:[%s152 + $0x9e0] sm:$0xff] %v785
                %v787 = vld [vmem:[%s151 + $0x1348] sm:$0xff]
                %788 = vst [vmem:[%s152 + $0x9e8] sm:$0xff] %v787
                %v789 = vld [vmem:[%s151 + $0x1350] sm:$0xff]
                %790 = vst [vmem:[%s152 + $0x9f0] sm:$0xff] %v789
                %v791 = vld [vmem:[%s151 + $0x1358] sm:$0xff]
                %792 = vst [vmem:[%s152 + $0x9f8] sm:$0xff] %v791
                %v793 = vld [vmem:[%s151 + $0x1360] sm:$0xff]
                %794 = vst [vmem:[%s152 + $0xa00] sm:$0xff] %v793
                %v795 = vld [vmem:[%s151 + $0x1368] sm:$0xff]
                %796 = vst [vmem:[%s152 + $0xa08] sm:$0xff] %v795
                %v797 = vld [vmem:[%s151 + $0x1370] sm:$0xff]
                %798 = vst [vmem:[%s152 + $0xa10] sm:$0xff] %v797
                %v799 = vld [vmem:[%s151 + $0x1378] sm:$0xff]
                %800 = vst [vmem:[%s152 + $0xa18] sm:$0xff] %v799
                %v801 = vld [vmem:[%s151 + $0x1380] sm:$0xff]
                %802 = vst [vmem:[%s152 + $0xa20] sm:$0xff] %v801
                %v803 = vld [vmem:[%s151 + $0x1388] sm:$0xff]
                %804 = vst [vmem:[%s152 + $0xa28] sm:$0xff] %v803
                %v805 = vld [vmem:[%s151 + $0x1390] sm:$0xff]
                %806 = vst [vmem:[%s152 + $0xa30] sm:$0xff] %v805
                %v807 = vld [vmem:[%s151 + $0x1398] sm:$0xff]
                %808 = vst [vmem:[%s152 + $0xa38] sm:$0xff] %v807
                %v809 = vld [vmem:[%s151 + $0x13a0] sm:$0xff]
                %810 = vst [vmem:[%s152 + $0xa40] sm:$0xff] %v809
                %v811 = vld [vmem:[%s151 + $0x13a8] sm:$0xff]
                %812 = vst [vmem:[%s152 + $0xa48] sm:$0xff] %v811
                %v813 = vld [vmem:[%s151 + $0x13b0] sm:$0xff]
                %814 = vst [vmem:[%s152 + $0xa50] sm:$0xff] %v813
                %v815 = vld [vmem:[%s151 + $0x13b8] sm:$0xff]
                %816 = vst [vmem:[%s152 + $0xa58] sm:$0xff] %v815
                %v817 = vld [vmem:[%s151 + $0x13c0] sm:$0xff]
                %818 = vst [vmem:[%s152 + $0xa60] sm:$0xff] %v817
                %v819 = vld [vmem:[%s151 + $0x13c8] sm:$0xff]
                %820 = vst [vmem:[%s152 + $0xa68] sm:$0xff] %v819
                %v821 = vld [vmem:[%s151 + $0x13d0] sm:$0xff]
                %822 = vst [vmem:[%s152 + $0xa70] sm:$0xff] %v821
                %v823 = vld [vmem:[%s151 + $0x13d8] sm:$0xff]
                %824 = vst [vmem:[%s152 + $0xa78] sm:$0xff] %v823
                %v825 = vld [vmem:[%s151 + $0x13e0] sm:$0xff]
                %826 = vst [vmem:[%s152 + $0xa80] sm:$0xff] %v825
                %v827 = vld [vmem:[%s151 + $0x13e8] sm:$0xff]
                %828 = vst [vmem:[%s152 + $0xa88] sm:$0xff] %v827
                %v829 = vld [vmem:[%s151 + $0x13f0] sm:$0xff]
                %830 = vst [vmem:[%s152 + $0xa90] sm:$0xff] %v829
                %v831 = vld [vmem:[%s151 + $0x13f8] sm:$0xff]
                %832 = vst [vmem:[%s152 + $0xa98] sm:$0xff] %v831
                %v833 = vld [vmem:[%s151 + $0x1400] sm:$0xff]
                %834 = vst [vmem:[%s152 + $0xaa0] sm:$0xff] %v833
                %v835 = vld [vmem:[%s151 + $0x1408] sm:$0xff]
                %836 = vst [vmem:[%s152 + $0xaa8] sm:$0xff] %v835
                %v837 = vld [vmem:[%s151 + $0x1410] sm:$0xff]
                %838 = vst [vmem:[%s152 + $0xab0] sm:$0xff] %v837
                %v839 = vld [vmem:[%s151 + $0x1418] sm:$0xff]
                %840 = vst [vmem:[%s152 + $0xab8] sm:$0xff] %v839
                %v841 = vld [vmem:[%s151 + $0x1420] sm:$0xff]
                %842 = vst [vmem:[%s152 + $0xac0] sm:$0xff] %v841
                %v843 = vld [vmem:[%s151 + $0x1428] sm:$0xff]
                %844 = vst [vmem:[%s152 + $0xac8] sm:$0xff] %v843
                %v845 = vld [vmem:[%s151 + $0x1430] sm:$0xff]
                %846 = vst [vmem:[%s152 + $0xad0] sm:$0xff] %v845
                %v847 = vld [vmem:[%s151 + $0x1438] sm:$0xff]
                %848 = vst [vmem:[%s152 + $0xad8] sm:$0xff] %v847
                %v849 = vld [vmem:[%s151 + $0x1440] sm:$0xff]
                %850 = vst [vmem:[%s152 + $0xae0] sm:$0xff] %v849
                %v851 = vld [vmem:[%s151 + $0x1448] sm:$0xff]
                %852 = vst [vmem:[%s152 + $0xae8] sm:$0xff] %v851
                %v853 = vld [vmem:[%s151 + $0x15e0] sm:$0xff]
                %854 = vst [vmem:[%s152 + $0xaf0] sm:$0xff] %v853
                %v855 = vld [vmem:[%s151 + $0x15e8] sm:$0xff]
                %856 = vst [vmem:[%s152 + $0xaf8] sm:$0xff] %v855
                %v857 = vld [vmem:[%s151 + $0x15f0] sm:$0xff]
                %858 = vst [vmem:[%s152 + $0xb00] sm:$0xff] %v857
                %v859 = vld [vmem:[%s151 + $0x15f8] sm:$0xff]
                %860 = vst [vmem:[%s152 + $0xb08] sm:$0xff] %v859
                %v861 = vld [vmem:[%s151 + $0x1600] sm:$0xff]
                %862 = vst [vmem:[%s152 + $0xb10] sm:$0xff] %v861
                %v863 = vld [vmem:[%s151 + $0x1608] sm:$0xff]
                %864 = vst [vmem:[%s152 + $0xb18] sm:$0xff] %v863
                %v865 = vld [vmem:[%s151 + $0x1610] sm:$0xff]
                %866 = vst [vmem:[%s152 + $0xb20] sm:$0xff] %v865
                %v867 = vld [vmem:[%s151 + $0x1618] sm:$0xff]
                %868 = vst [vmem:[%s152 + $0xb28] sm:$0xff] %v867
                %v869 = vld [vmem:[%s151 + $0x1620] sm:$0xff]
                %870 = vst [vmem:[%s152 + $0xb30] sm:$0xff] %v869
                %v871 = vld [vmem:[%s151 + $0x1628] sm:$0xff]
                %872 = vst [vmem:[%s152 + $0xb38] sm:$0xff] %v871
                %v873 = vld [vmem:[%s151 + $0x1630] sm:$0xff]
                %874 = vst [vmem:[%s152 + $0xb40] sm:$0xff] %v873
                %v875 = vld [vmem:[%s151 + $0x1638] sm:$0xff]
                %876 = vst [vmem:[%s152 + $0xb48] sm:$0xff] %v875
                %v877 = vld [vmem:[%s151 + $0x1640] sm:$0xff]
                %878 = vst [vmem:[%s152 + $0xb50] sm:$0xff] %v877
                %v879 = vld [vmem:[%s151 + $0x1648] sm:$0xff]
                %880 = vst [vmem:[%s152 + $0xb58] sm:$0xff] %v879
                %v881 = vld [vmem:[%s151 + $0x1650] sm:$0xff]
                %882 = vst [vmem:[%s152 + $0xb60] sm:$0xff] %v881
                %v883 = vld [vmem:[%s151 + $0x1658] sm:$0xff]
                %884 = vst [vmem:[%s152 + $0xb68] sm:$0xff] %v883
                %v885 = vld [vmem:[%s151 + $0x1660] sm:$0xff]
                %886 = vst [vmem:[%s152 + $0xb70] sm:$0xff] %v885
                %v887 = vld [vmem:[%s151 + $0x1668] sm:$0xff]
                %888 = vst [vmem:[%s152 + $0xb78] sm:$0xff] %v887
                %v889 = vld [vmem:[%s151 + $0x1670] sm:$0xff]
                %890 = vst [vmem:[%s152 + $0xb80] sm:$0xff] %v889
                %v891 = vld [vmem:[%s151 + $0x1678] sm:$0xff]
                %892 = vst [vmem:[%s152 + $0xb88] sm:$0xff] %v891
                %v893 = vld [vmem:[%s151 + $0x1680] sm:$0xff]
                %894 = vst [vmem:[%s152 + $0xb90] sm:$0xff] %v893
                %v895 = vld [vmem:[%s151 + $0x1688] sm:$0xff]
                %896 = vst [vmem:[%s152 + $0xb98] sm:$0xff] %v895
                %v897 = vld [vmem:[%s151 + $0x1690] sm:$0xff]
                %898 = vst [vmem:[%s152 + $0xba0] sm:$0xff] %v897
                %v899 = vld [vmem:[%s151 + $0x1698] sm:$0xff]
                %900 = vst [vmem:[%s152 + $0xba8] sm:$0xff] %v899
                %v901 = vld [vmem:[%s151 + $0x16a0] sm:$0xff]
                %902 = vst [vmem:[%s152 + $0xbb0] sm:$0xff] %v901
                %v903 = vld [vmem:[%s151 + $0x16a8] sm:$0xff]
                %904 = vst [vmem:[%s152 + $0xbb8] sm:$0xff] %v903
                %v905 = vld [vmem:[%s151 + $0x16b0] sm:$0xff]
                %906 = vst [vmem:[%s152 + $0xbc0] sm:$0xff] %v905
                %v907 = vld [vmem:[%s151 + $0x16b8] sm:$0xff]
                %908 = vst [vmem:[%s152 + $0xbc8] sm:$0xff] %v907
                %v909 = vld [vmem:[%s151 + $0x16c0] sm:$0xff]
                %910 = vst [vmem:[%s152 + $0xbd0] sm:$0xff] %v909
                %v911 = vld [vmem:[%s151 + $0x16c8] sm:$0xff]
                %912 = vst [vmem:[%s152 + $0xbd8] sm:$0xff] %v911
                %v913 = vld [vmem:[%s151 + $0x16d0] sm:$0xff]
                %914 = vst [vmem:[%s152 + $0xbe0] sm:$0xff] %v913
                %v915 = vld [vmem:[%s151 + $0x16d8] sm:$0xff]
                %916 = vst [vmem:[%s152 + $0xbe8] sm:$0xff] %v915
                %v917 = vld [vmem:[%s151 + $0x16e0] sm:$0xff]
                %918 = vst [vmem:[%s152 + $0xbf0] sm:$0xff] %v917
                %v919 = vld [vmem:[%s151 + $0x16e8] sm:$0xff]
                %920 = vst [vmem:[%s152 + $0xbf8] sm:$0xff] %v919
                %v921 = vld [vmem:[%s151 + $0x16f0] sm:$0xff]
                %922 = vst [vmem:[%s152 + $0xc00] sm:$0xff] %v921
                %v923 = vld [vmem:[%s151 + $0x16f8] sm:$0xff]
                %924 = vst [vmem:[%s152 + $0xc08] sm:$0xff] %v923
                %v925 = vld [vmem:[%s151 + $0x1700] sm:$0xff]
                %926 = vst [vmem:[%s152 + $0xc10] sm:$0xff] %v925
                %v927 = vld [vmem:[%s151 + $0x1708] sm:$0xff]
                %928 = vst [vmem:[%s152 + $0xc18] sm:$0xff] %v927
                %v929 = vld [vmem:[%s151 + $0x1710] sm:$0xff]
                %930 = vst [vmem:[%s152 + $0xc20] sm:$0xff] %v929
                %v931 = vld [vmem:[%s151 + $0x1718] sm:$0xff]
                %932 = vst [vmem:[%s152 + $0xc28] sm:$0xff] %v931
                %v933 = vld [vmem:[%s151 + $0x1720] sm:$0xff]
                %934 = vst [vmem:[%s152 + $0xc30] sm:$0xff] %v933
                %v935 = vld [vmem:[%s151 + $0x1728] sm:$0xff]
                %936 = vst [vmem:[%s152 + $0xc38] sm:$0xff] %v935
                %v937 = vld [vmem:[%s151 + $0x1730] sm:$0xff]
                %938 = vst [vmem:[%s152 + $0xc40] sm:$0xff] %v937
                %v939 = vld [vmem:[%s151 + $0x1738] sm:$0xff]
                %940 = vst [vmem:[%s152 + $0xc48] sm:$0xff] %v939
                %v941 = vld [vmem:[%s151 + $0x1740] sm:$0xff]
                %942 = vst [vmem:[%s152 + $0xc50] sm:$0xff] %v941
                %v943 = vld [vmem:[%s151 + $0x1748] sm:$0xff]
                %944 = vst [vmem:[%s152 + $0xc58] sm:$0xff] %v943
                %v945 = vld [vmem:[%s151 + $0x1750] sm:$0xff]
                %946 = vst [vmem:[%s152 + $0xc60] sm:$0xff] %v945
                %v947 = vld [vmem:[%s151 + $0x1758] sm:$0xff]
                %948 = vst [vmem:[%s152 + $0xc68] sm:$0xff] %v947
                %v949 = vld [vmem:[%s151 + $0x1760] sm:$0xff]
                %950 = vst [vmem:[%s152 + $0xc70] sm:$0xff] %v949
                %v951 = vld [vmem:[%s151 + $0x1768] sm:$0xff]
                %952 = vst [vmem:[%s152 + $0xc78] sm:$0xff] %v951
                %v953 = vld [vmem:[%s151 + $0x1900] sm:$0xff]
                %954 = vst [vmem:[%s152 + $0xc80] sm:$0xff] %v953
                %v955 = vld [vmem:[%s151 + $0x1908] sm:$0xff]
                %956 = vst [vmem:[%s152 + $0xc88] sm:$0xff] %v955
                %v957 = vld [vmem:[%s151 + $0x1910] sm:$0xff]
                %958 = vst [vmem:[%s152 + $0xc90] sm:$0xff] %v957
                %v959 = vld [vmem:[%s151 + $0x1918] sm:$0xff]
                %960 = vst [vmem:[%s152 + $0xc98] sm:$0xff] %v959
                %v961 = vld [vmem:[%s151 + $0x1920] sm:$0xff]
                %962 = vst [vmem:[%s152 + $0xca0] sm:$0xff] %v961
                %v963 = vld [vmem:[%s151 + $0x1928] sm:$0xff]
                %964 = vst [vmem:[%s152 + $0xca8] sm:$0xff] %v963
                %v965 = vld [vmem:[%s151 + $0x1930] sm:$0xff]
                %966 = vst [vmem:[%s152 + $0xcb0] sm:$0xff] %v965
                %v967 = vld [vmem:[%s151 + $0x1938] sm:$0xff]
                %968 = vst [vmem:[%s152 + $0xcb8] sm:$0xff] %v967
                %v969 = vld [vmem:[%s151 + $0x1940] sm:$0xff]
                %970 = vst [vmem:[%s152 + $0xcc0] sm:$0xff] %v969
                %v971 = vld [vmem:[%s151 + $0x1948] sm:$0xff]
                %972 = vst [vmem:[%s152 + $0xcc8] sm:$0xff] %v971
                %v973 = vld [vmem:[%s151 + $0x1950] sm:$0xff]
                %974 = vst [vmem:[%s152 + $0xcd0] sm:$0xff] %v973
                %v975 = vld [vmem:[%s151 + $0x1958] sm:$0xff]
                %976 = vst [vmem:[%s152 + $0xcd8] sm:$0xff] %v975
                %v977 = vld [vmem:[%s151 + $0x1960] sm:$0xff]
                %978 = vst [vmem:[%s152 + $0xce0] sm:$0xff] %v977
                %v979 = vld [vmem:[%s151 + $0x1968] sm:$0xff]
                %980 = vst [vmem:[%s152 + $0xce8] sm:$0xff] %v979
                %v981 = vld [vmem:[%s151 + $0x1970] sm:$0xff]
                %982 = vst [vmem:[%s152 + $0xcf0] sm:$0xff] %v981
                %v983 = vld [vmem:[%s151 + $0x1978] sm:$0xff]
                %984 = vst [vmem:[%s152 + $0xcf8] sm:$0xff] %v983
                %v985 = vld [vmem:[%s151 + $0x1980] sm:$0xff]
                %986 = vst [vmem:[%s152 + $0xd00] sm:$0xff] %v985
                %v987 = vld [vmem:[%s151 + $0x1988] sm:$0xff]
                %988 = vst [vmem:[%s152 + $0xd08] sm:$0xff] %v987
                %v989 = vld [vmem:[%s151 + $0x1990] sm:$0xff]
                %990 = vst [vmem:[%s152 + $0xd10] sm:$0xff] %v989
                %v991 = vld [vmem:[%s151 + $0x1998] sm:$0xff]
                %992 = vst [vmem:[%s152 + $0xd18] sm:$0xff] %v991
                %v993 = vld [vmem:[%s151 + $0x19a0] sm:$0xff]
                %994 = vst [vmem:[%s152 + $0xd20] sm:$0xff] %v993
                %v995 = vld [vmem:[%s151 + $0x19a8] sm:$0xff]
                %996 = vst [vmem:[%s152 + $0xd28] sm:$0xff] %v995
                %v997 = vld [vmem:[%s151 + $0x19b0] sm:$0xff]
                %998 = vst [vmem:[%s152 + $0xd30] sm:$0xff] %v997
                %v999 = vld [vmem:[%s151 + $0x19b8] sm:$0xff]
                %1000 = vst [vmem:[%s152 + $0xd38] sm:$0xff] %v999
                %v1001 = vld [vmem:[%s151 + $0x19c0] sm:$0xff]
                %1002 = vst [vmem:[%s152 + $0xd40] sm:$0xff] %v1001
                %v1003 = vld [vmem:[%s151 + $0x19c8] sm:$0xff]
                %1004 = vst [vmem:[%s152 + $0xd48] sm:$0xff] %v1003
                %v1005 = vld [vmem:[%s151 + $0x19d0] sm:$0xff]
                %1006 = vst [vmem:[%s152 + $0xd50] sm:$0xff] %v1005
                %v1007 = vld [vmem:[%s151 + $0x19d8] sm:$0xff]
                %1008 = vst [vmem:[%s152 + $0xd58] sm:$0xff] %v1007
                %v1009 = vld [vmem:[%s151 + $0x19e0] sm:$0xff]
                %1010 = vst [vmem:[%s152 + $0xd60] sm:$0xff] %v1009
                %v1011 = vld [vmem:[%s151 + $0x19e8] sm:$0xff]
                %1012 = vst [vmem:[%s152 + $0xd68] sm:$0xff] %v1011
                %v1013 = vld [vmem:[%s151 + $0x19f0] sm:$0xff]
                %1014 = vst [vmem:[%s152 + $0xd70] sm:$0xff] %v1013
                %v1015 = vld [vmem:[%s151 + $0x19f8] sm:$0xff]
                %1016 = vst [vmem:[%s152 + $0xd78] sm:$0xff] %v1015
                %v1017 = vld [vmem:[%s151 + $0x1a00] sm:$0xff]
                %1018 = vst [vmem:[%s152 + $0xd80] sm:$0xff] %v1017
                %v1019 = vld [vmem:[%s151 + $0x1a08] sm:$0xff]
                %1020 = vst [vmem:[%s152 + $0xd88] sm:$0xff] %v1019
                %v1021 = vld [vmem:[%s151 + $0x1a10] sm:$0xff]
                %1022 = vst [vmem:[%s152 + $0xd90] sm:$0xff] %v1021
                %v1023 = vld [vmem:[%s151 + $0x1a18] sm:$0xff]
                %1024 = vst [vmem:[%s152 + $0xd98] sm:$0xff] %v1023
                %v1025 = vld [vmem:[%s151 + $0x1a20] sm:$0xff]
                %1026 = vst [vmem:[%s152 + $0xda0] sm:$0xff] %v1025
                %v1027 = vld [vmem:[%s151 + $0x1a28] sm:$0xff]
                %1028 = vst [vmem:[%s152 + $0xda8] sm:$0xff] %v1027
                %v1029 = vld [vmem:[%s151 + $0x1a30] sm:$0xff]
                %1030 = vst [vmem:[%s152 + $0xdb0] sm:$0xff] %v1029
                %v1031 = vld [vmem:[%s151 + $0x1a38] sm:$0xff]
                %1032 = vst [vmem:[%s152 + $0xdb8] sm:$0xff] %v1031
                %v1033 = vld [vmem:[%s151 + $0x1a40] sm:$0xff]
                %1034 = vst [vmem:[%s152 + $0xdc0] sm:$0xff] %v1033
                %v1035 = vld [vmem:[%s151 + $0x1a48] sm:$0xff]
                %1036 = vst [vmem:[%s152 + $0xdc8] sm:$0xff] %v1035
                %v1037 = vld [vmem:[%s151 + $0x1a50] sm:$0xff]
                %1038 = vst [vmem:[%s152 + $0xdd0] sm:$0xff] %v1037
                %v1039 = vld [vmem:[%s151 + $0x1a58] sm:$0xff]
                %1040 = vst [vmem:[%s152 + $0xdd8] sm:$0xff] %v1039
                %v1041 = vld [vmem:[%s151 + $0x1a60] sm:$0xff]
                %1042 = vst [vmem:[%s152 + $0xde0] sm:$0xff] %v1041
                %v1043 = vld [vmem:[%s151 + $0x1a68] sm:$0xff]
                %1044 = vst [vmem:[%s152 + $0xde8] sm:$0xff] %v1043
                %v1045 = vld [vmem:[%s151 + $0x1a70] sm:$0xff]
                %1046 = vst [vmem:[%s152 + $0xdf0] sm:$0xff] %v1045
                %v1047 = vld [vmem:[%s151 + $0x1a78] sm:$0xff]
                %1048 = vst [vmem:[%s152 + $0xdf8] sm:$0xff] %v1047
                %v1049 = vld [vmem:[%s151 + $0x1a80] sm:$0xff]
                %1050 = vst [vmem:[%s152 + $0xe00] sm:$0xff] %v1049
                %v1051 = vld [vmem:[%s151 + $0x1a88] sm:$0xff]
                %1052 = vst [vmem:[%s152 + $0xe08] sm:$0xff] %v1051
              $region45: #{simple_net_dropout_forward.3} parent=39 // loop_footer
                %s150 = sadd.s32 1, %s146
              $region46: #{simple_net_dropout_forward.3} parent=39 // loop_footer_branch
                %145 = sbr.rel target = $region42
              $region47: #{simple_net_dropout_forward.3} parent=39 // loop_exit
                _
            $region40: #{simple_net_dropout_forward.3} parent=31 // pred_fallthru
              _
          $region32: #{simple_net_dropout_forward.3} parent=27 // pred_fallthru
            _
          %1965 = vnop
        $region28: #{simple_net_dropout_forward.3} parent=23 // pred_fallthru
          _
      $region24: #{simple_net_dropout_forward.3} parent=5 // pred_fallthru
        _
      %p1966 = scmp.le.s32.totalorder 1, %s9
      %p1967 = scmp.lt.s32.totalorder %s9, 3
      %p1968 = pnand %p1966, %p1967
      %p1969 = pneg %p1968
      // Predicated region
      $region63: #{simple_net_dropout_forward.3} parent=5 // pred_check
        _
      $region64: #{simple_net_dropout_forward.3} parent=5 // pred_check_branch
        %1971 = sbr.rel (%p1968) target = $region66
      $region65: #{simple_net_dropout_forward.3} parent=5 // pred_region
        %s1972 = ssub.s32 %s9, 1
        %s1973 = sand.u32 %s22, 1
        %s1974 = sand.u32 %s22, 1
        %s1975 = smul.addr %s1974, 3600
        %s1976 = scalar_lea.vmem [#allocation2], %s1975
        // Predicated region
        $region67: #{simple_net_dropout_forward.3} parent=65 // pred_check
          %p1977 = pneg %p35
        $region68: #{simple_net_dropout_forward.3} parent=65 // pred_check_branch
          %1979 = sbr.rel (%p1977) target = $region70
        $region69: #{simple_net_dropout_forward.3} parent=65 // pred_region
          _
        $region70: #{simple_net_dropout_forward.3} parent=65 // pred_fallthru
          _
        %s1980 = sand.u32 %s22, 1
        %s1981 = sand.u32 %s22, 1
        %s1982 = smul.addr %s1981, 3600
        %s1983 = scalar_lea.vmem [#allocation2], %s1982
        %p1984 = pneg %p35
        %p1985 = pneg %p32
        %p1986 = pneg %p56
        %p1987 = pneg %p53
        %p1988 = pneg %p77
        %p1989 = pneg %p74
        %p1990 = pneg %p103
        %p1991 = pneg %p100
        %s1992 = smul.u32 50, %s14
        %p1993 = scmp.lt.s32.totalorder %s1992, 99
        %s1994 = scalar_select %p1993, %s1992, 99
        %s1995 = smul.addr %s1994, 8
        %s1996 = scalar_lea.vmem %s3, %s1995
        %s1997 = smul.u32 50, %s14
        %s1998 = smul.u32 50, %s14
        %p1999 = scmp.lt.s32.totalorder %s1998, 99
        %s2000 = scalar_select %p1999, %s1998, 99
        %s2001 = smul.addr %s2000, 8
        %s2002 = scalar_lea.vmem %s3, %s2001
        %s2003 = smul.u32 50, %s14
        %v2004 = vld [vmem:[%s1976] sm:$0xff]
        %v2005 = vld [vmem:[%s1976 + $0x8] sm:$0xff]
        %v2006 = vld [vmem:[%s1976 + $0x10] sm:$0xff]
        %v2007 = vld [vmem:[%s1976 + $0x18] sm:$0xff]
        %v2008 = vld [vmem:[%s1976 + $0x20] sm:$0xff]
        %v2009 = vld [vmem:[%s1976 + $0x28] sm:$0xff]
        %v2010 = vld [vmem:[%s1976 + $0x30] sm:$0xff]
        %v2011 = vld [vmem:[%s1976 + $0x38] sm:$0xff]
        %v2012 = vld [vmem:[%s1976 + $0x40] sm:$0xff]
        %v2013 = vld [vmem:[%s1976 + $0x48] sm:$0xff]
        %v2014 = vld [vmem:[%s1976 + $0x50] sm:$0xff]
        %v2015 = vld [vmem:[%s1976 + $0x58] sm:$0xff]
        %v2016 = vld [vmem:[%s1976 + $0x60] sm:$0xff]
        %v2017 = vld [vmem:[%s1976 + $0x68] sm:$0xff]
        %v2018 = vld [vmem:[%s1976 + $0x70] sm:$0xff]
        %v2019 = vld [vmem:[%s1976 + $0x78] sm:$0xff]
        %v2020 = vld [vmem:[%s1976 + $0x80] sm:$0xff]
        %v2021 = vld [vmem:[%s1976 + $0x88] sm:$0xff]
        %v2022 = vld [vmem:[%s1976 + $0x90] sm:$0xff]
        %v2023 = vld [vmem:[%s1976 + $0x98] sm:$0xff]
        %v2024 = vld [vmem:[%s1976 + $0xa0] sm:$0xff]
        %v2025 = vld [vmem:[%s1976 + $0xa8] sm:$0xff]
        %v2026 = vld [vmem:[%s1976 + $0xb0] sm:$0xff]
        %v2027 = vld [vmem:[%s1976 + $0xb8] sm:$0xff]
        %v2028 = vld [vmem:[%s1976 + $0xc0] sm:$0xff]
        %v2029 = vld [vmem:[%s1976 + $0xc8] sm:$0xff]
        %v2030 = vld [vmem:[%s1976 + $0xd0] sm:$0xff]
        %v2031 = vld [vmem:[%s1976 + $0xd8] sm:$0xff]
        %v2032 = vld [vmem:[%s1976 + $0xe0] sm:$0xff]
        %v2033 = vld [vmem:[%s1976 + $0xe8] sm:$0xff]
        %v2034 = vld [vmem:[%s1976 + $0xf0] sm:$0xff]
        %v2035 = vld [vmem:[%s1976 + $0xf8] sm:$0xff]
        %v2036 = vld [vmem:[%s1976 + $0x100] sm:$0xff]
        %v2037 = vld [vmem:[%s1976 + $0x108] sm:$0xff]
        %v2038 = vld [vmem:[%s1976 + $0x110] sm:$0xff]
        %v2039 = vld [vmem:[%s1976 + $0x118] sm:$0xff]
        %v2040 = vld [vmem:[%s1976 + $0x120] sm:$0xff]
        %v2041 = vld [vmem:[%s1976 + $0x128] sm:$0xff]
        %v2042 = vld [vmem:[%s1976 + $0x130] sm:$0xff]
        %v2043 = vld [vmem:[%s1976 + $0x138] sm:$0xff]
        %v2044 = vld [vmem:[%s1976 + $0x140] sm:$0xff]
        %v2045 = vld [vmem:[%s1976 + $0x148] sm:$0xff]
        %v2046 = vld [vmem:[%s1976 + $0x150] sm:$0xff]
        %v2047 = vld [vmem:[%s1976 + $0x158] sm:$0xff]
        %v2048 = vld [vmem:[%s1976 + $0x160] sm:$0xff]
        %v2049 = vld [vmem:[%s1976 + $0x168] sm:$0xff]
        %v2050 = vld [vmem:[%s1976 + $0x170] sm:$0xff]
        %v2051 = vld [vmem:[%s1976 + $0x178] sm:$0xff]
        %v2052 = vld [vmem:[%s1976 + $0x180] sm:$0xff]
        %v2053 = vld [vmem:[%s1976 + $0x188] sm:$0xff]
        %v2054 = vld [vmem:[%s1] sm:$0xff]
        %v2055 = vld [vmem:[%s1 + $0x8] sm:$0x1]
        %vm2056 = vcmask 72704
        %v2058 = vsel %vm2056, %v2004, 0
        %v2061 = vsel %vm2056, %v2005, 0
        %v2064 = vsel %vm2056, %v2006, 0
        %v2067 = vsel %vm2056, %v2007, 0
        %v2070 = vsel %vm2056, %v2008, 0
        %v2073 = vsel %vm2056, %v2009, 0
        %v2076 = vsel %vm2056, %v2010, 0
        %v2079 = vsel %vm2056, %v2011, 0
        %v2082 = vsel %vm2056, %v2012, 0
        %v2085 = vsel %vm2056, %v2013, 0
        %v2088 = vsel %vm2056, %v2014, 0
        %v2091 = vsel %vm2056, %v2015, 0
        %v2094 = vsel %vm2056, %v2016, 0
        %v2097 = vsel %vm2056, %v2017, 0
        %v2100 = vsel %vm2056, %v2018, 0
        %v2103 = vsel %vm2056, %v2019, 0
        %v2106 = vsel %vm2056, %v2020, 0
        %v2109 = vsel %vm2056, %v2021, 0
        %v2112 = vsel %vm2056, %v2022, 0
        %v2115 = vsel %vm2056, %v2023, 0
        %v2118 = vsel %vm2056, %v2024, 0
        %v2121 = vsel %vm2056, %v2025, 0
        %v2124 = vsel %vm2056, %v2026, 0
        %v2127 = vsel %vm2056, %v2027, 0
        %v2130 = vsel %vm2056, %v2028, 0
        %v2133 = vsel %vm2056, %v2029, 0
        %v2136 = vsel %vm2056, %v2030, 0
        %v2139 = vsel %vm2056, %v2031, 0
        %v2142 = vsel %vm2056, %v2032, 0
        %v2145 = vsel %vm2056, %v2033, 0
        %v2148 = vsel %vm2056, %v2034, 0
        %v2151 = vsel %vm2056, %v2035, 0
        %v2154 = vsel %vm2056, %v2036, 0
        %v2157 = vsel %vm2056, %v2037, 0
        %v2160 = vsel %vm2056, %v2038, 0
        %v2163 = vsel %vm2056, %v2039, 0
        %v2166 = vsel %vm2056, %v2040, 0
        %v2169 = vsel %vm2056, %v2041, 0
        %v2172 = vsel %vm2056, %v2042, 0
        %v2175 = vsel %vm2056, %v2043, 0
        %v2178 = vsel %vm2056, %v2044, 0
        %v2181 = vsel %vm2056, %v2045, 0
        %v2184 = vsel %vm2056, %v2046, 0
        %v2187 = vsel %vm2056, %v2047, 0
        %v2190 = vsel %vm2056, %v2048, 0
        %v2193 = vsel %vm2056, %v2049, 0
        %v2196 = vsel %vm2056, %v2050, 0
        %v2199 = vsel %vm2056, %v2051, 0
        %v2202 = vsel %vm2056, %v2052, 0
        %v2205 = vsel %vm2056, %v2053, 0
        %vm2207 = vcmask 1040384
        %v2209 = vsel %vm2207, %v2055, 0
        %2211 = vmatprep.subr.mxu0 0.0
        %2212 = vmatpush1.msra.mxu0 %v2054
        %2213 = vmatprep.subr.mxu0 0.0
        %2214 = vmatpush1.msra.mxu0 %v2209
        %2215 = vmatprep.subr.mxu0 0.0
        %2216 = vmatpush1.msra.mxu0 0.0
        %2217 = vmatprep.subr.mxu0 0.0
        %2218 = vmatpush1.msra.mxu0 0.0
        %2219 = vmatprep.subr.mxu0 0.0
        %2220 = vmatpush1.msra.mxu0 0.0
        %2221 = vmatprep.subr.mxu0 0.0
        %2222 = vmatpush1.msra.mxu0 0.0
        %2223 = vmatprep.subr.mxu0 0.0
        %2224 = vmatpush1.msra.mxu0 0.0
        %2225 = vmatprep.subr.mxu0 0.0
        %2226 = vmatpush1.msra.mxu0 0.0
        %2227 = vmatprep.subr.mxu0 0.0
        %2228 = vmatpush1.msra.mxu0 0.0
        %2229 = vmatprep.subr.mxu0 0.0
        %2230 = vmatpush1.msra.mxu0 0.0
        %2231 = vmatprep.subr.mxu0 0.0
        %2232 = vmatpush1.msra.mxu0 0.0
        %2233 = vmatprep.subr.mxu0 0.0
        %2234 = vmatpush1.msra.mxu0 0.0
        %2235 = vmatprep.subr.mxu0 0.0
        %2236 = vmatpush1.msra.mxu0 0.0
        %2237 = vmatprep.subr.mxu0 0.0
        %2238 = vmatpush1.msra.mxu0 0.0
        %2239 = vmatprep.subr.mxu0 0.0
        %2240 = vmatpush1.msra.mxu0 0.0
        %2241 = vmatprep.subr.mxu0 0.0
        %2242 = vmatpush1.msra.mxu0 0.0
        %2243 = vmatprep.subr.mxu0 0.0
        %2244 = vmatpush1.msra.mxu0 0.0
        %2245 = vmatprep.subr.mxu0 0.0
        %2246 = vmatpush1.msra.mxu0 0.0
        %2247 = vmatprep.subr.mxu0 0.0
        %2248 = vmatpush1.msra.mxu0 0.0
        %2249 = vmatprep.subr.mxu0 0.0
        %2250 = vmatpush1.msra.mxu0 0.0
        %2251 = vmatprep.subr.mxu0 0.0
        %2252 = vmatpush1.msra.mxu0 0.0
        %2253 = vmatprep.subr.mxu0 0.0
        %2254 = vmatpush1.msra.mxu0 0.0
        %2255 = vmatprep.subr.mxu0 0.0
        %2256 = vmatpush1.msra.mxu0 0.0
        %2257 = vmatprep.subr.mxu0 0.0
        %2258 = vmatpush1.msra.mxu0 0.0
        %2259 = vmatprep.subr.mxu0 0.0
        %2260 = vmatpush1.msra.mxu0 0.0
        %2261 = vmatprep.subr.mxu0 0.0
        %2262 = vmatpush1.msra.mxu0 0.0
        %2263 = vmatprep.subr.mxu0 0.0
        %2264 = vmatpush1.msra.mxu0 0.0
        %2265 = vmatprep.subr.mxu0 0.0
        %2266 = vmatpush1.msra.mxu0 0.0
        %2267 = vmatprep.subr.mxu0 0.0
        %2268 = vmatpush1.msra.mxu0 0.0
        %2269 = vmatprep.subr.mxu0 0.0
        %2270 = vmatpush1.msra.mxu0 0.0
        %2271 = vmatprep.subr.mxu0 0.0
        %2272 = vmatpush1.msra.mxu0 0.0
        %2273 = vmatprep.subr.mxu0 0.0
        %2274 = vmatpush1.msra.mxu0 0.0
        %2275 = vmatprep.mubr.f32.mxu0 0.0
        %2276 = vmatmul.mubr.f32.gmra.mrb[0].mxu0 %v2058
        %v2277 = vpop.f32.mrb[0].mxu0
        %v2278 = vadd.f32 0.0, %v2277
        %v2279 = vpop.f32.mrb[0].mxu0
        %2280 = vmatprep.mubr.f32.mxu0 0.0
        %2281 = vmatmul.mubr.f32.gmra.mrb[0].mxu0 %v2061
        %v2282 = vpop.f32.mrb[0].mxu0
        %v2283 = vadd.f32 0.0, %v2282
        %v2284 = vpop.f32.mrb[0].mxu0
        %2285 = vmatprep.mubr.f32.mxu0 0.0
        %2286 = vmatmul.mubr.f32.gmra.mrb[0].mxu0 %v2064
        %v2287 = vpop.f32.mrb[0].mxu0
        %v2288 = vadd.f32 0.0, %v2287
        %v2289 = vpop.f32.mrb[0].mxu0
        %2290 = vmatprep.mubr.f32.mxu0 0.0
        %2291 = vmatmul.mubr.f32.gmra.mrb[0].mxu0 %v2067
        %v2292 = vpop.f32.mrb[0].mxu0
        %v2293 = vadd.f32 0.0, %v2292
        %v2294 = vpop.f32.mrb[0].mxu0
        %2295 = vmatprep.mubr.f32.mxu0 0.0
        %2296 = vmatmul.mubr.f32.gmra.mrb[0].mxu0 %v2070
        %v2297 = vpop.f32.mrb[0].mxu0
        %v2298 = vadd.f32 0.0, %v2297
        %v2299 = vpop.f32.mrb[0].mxu0
        %2300 = vmatprep.mubr.f32.mxu0 0.0
        %2301 = vmatmul.mubr.f32.gmra.mrb[0].mxu0 %v2073
        %v2302 = vpop.f32.mrb[0].mxu0
        %v2303 = vadd.f32 0.0, %v2302
        %v2304 = vpop.f32.mrb[0].mxu0
        %2305 = vmatprep.mubr.f32.mxu0 0.0
        %2306 = vmatmul.mubr.f32.gmra.mrb[0].mxu0 %v2076
        %v2307 = vpop.f32.mrb[0].mxu0
        %v2308 = vadd.f32 0.0, %v2307
        %v2309 = vpop.f32.mrb[0].mxu0
        %2310 = vmatprep.mubr.f32.mxu0 0.0
        %2311 = vmatmul.mubr.f32.gmra.mrb[0].mxu0 %v2079
        %v2312 = vpop.f32.mrb[0].mxu0
        %v2313 = vadd.f32 0.0, %v2312
        %v2314 = vpop.f32.mrb[0].mxu0
        %2315 = vmatprep.mubr.f32.mxu0 0.0
        %2316 = vmatmul.mubr.f32.gmra.mrb[0].mxu0 %v2082
        %v2317 = vpop.f32.mrb[0].mxu0
        %v2318 = vadd.f32 0.0, %v2317
        %v2319 = vpop.f32.mrb[0].mxu0
        %2320 = vmatprep.mubr.f32.mxu0 0.0
        %2321 = vmatmul.mubr.f32.gmra.mrb[0].mxu0 %v2085
        %v2322 = vpop.f32.mrb[0].mxu0
        %v2323 = vadd.f32 0.0, %v2322
        %v2324 = vpop.f32.mrb[0].mxu0
        %2325 = vmatprep.mubr.f32.mxu0 0.0
        %2326 = vmatmul.mubr.f32.gmra.mrb[0].mxu0 %v2088
        %v2327 = vpop.f32.mrb[0].mxu0
        %v2328 = vadd.f32 0.0, %v2327
        %v2329 = vpop.f32.mrb[0].mxu0
        %2330 = vmatprep.mubr.f32.mxu0 0.0
        %2331 = vmatmul.mubr.f32.gmra.mrb[0].mxu0 %v2091
        %v2332 = vpop.f32.mrb[0].mxu0
        %v2333 = vadd.f32 0.0, %v2332
        %v2334 = vpop.f32.mrb[0].mxu0
        %2335 = vmatprep.mubr.f32.mxu0 0.0
        %2336 = vmatmul.mubr.f32.gmra.mrb[0].mxu0 %v2094
        %v2337 = vpop.f32.mrb[0].mxu0
        %v2338 = vadd.f32 0.0, %v2337
        %v2339 = vpop.f32.mrb[0].mxu0
        %2340 = vmatprep.mubr.f32.mxu0 0.0
        %2341 = vmatmul.mubr.f32.gmra.mrb[0].mxu0 %v2097
        %v2342 = vpop.f32.mrb[0].mxu0
        %v2343 = vadd.f32 0.0, %v2342
        %v2344 = vpop.f32.mrb[0].mxu0
        %2345 = vmatprep.mubr.f32.mxu0 0.0
        %2346 = vmatmul.mubr.f32.gmra.mrb[0].mxu0 %v2100
        %v2347 = vpop.f32.mrb[0].mxu0
        %v2348 = vadd.f32 0.0, %v2347
        %v2349 = vpop.f32.mrb[0].mxu0
        %2350 = vmatprep.mubr.f32.mxu0 0.0
        %2351 = vmatmul.mubr.f32.gmra.mrb[0].mxu0 %v2103
        %v2352 = vpop.f32.mrb[0].mxu0
        %v2353 = vadd.f32 0.0, %v2352
        %v2354 = vpop.f32.mrb[0].mxu0
        %2355 = vmatprep.mubr.f32.mxu0 0.0
        %2356 = vmatmul.mubr.f32.gmra.mrb[0].mxu0 %v2106
        %v2357 = vpop.f32.mrb[0].mxu0
        %v2358 = vadd.f32 0.0, %v2357
        %v2359 = vpop.f32.mrb[0].mxu0
        %2360 = vmatprep.mubr.f32.mxu0 0.0
        %2361 = vmatmul.mubr.f32.gmra.mrb[0].mxu0 %v2109
        %v2362 = vpop.f32.mrb[0].mxu0
        %v2363 = vadd.f32 0.0, %v2362
        %v2364 = vpop.f32.mrb[0].mxu0
        %2365 = vmatprep.mubr.f32.mxu0 0.0
        %2366 = vmatmul.mubr.f32.gmra.mrb[0].mxu0 %v2112
        %v2367 = vpop.f32.mrb[0].mxu0
        %v2368 = vadd.f32 0.0, %v2367
        %v2369 = vpop.f32.mrb[0].mxu0
        %2370 = vmatprep.mubr.f32.mxu0 0.0
        %2371 = vmatmul.mubr.f32.gmra.mrb[0].mxu0 %v2115
        %v2372 = vpop.f32.mrb[0].mxu0
        %v2373 = vadd.f32 0.0, %v2372
        %v2374 = vpop.f32.mrb[0].mxu0
        %2375 = vmatprep.mubr.f32.mxu0 0.0
        %2376 = vmatmul.mubr.f32.gmra.mrb[0].mxu0 %v2118
        %v2377 = vpop.f32.mrb[0].mxu0
        %v2378 = vadd.f32 0.0, %v2377
        %v2379 = vpop.f32.mrb[0].mxu0
        %2380 = vmatprep.mubr.f32.mxu0 0.0
        %2381 = vmatmul.mubr.f32.gmra.mrb[0].mxu0 %v2121
        %v2382 = vpop.f32.mrb[0].mxu0
        %v2383 = vadd.f32 0.0, %v2382
        %v2384 = vpop.f32.mrb[0].mxu0
        %2385 = vmatprep.mubr.f32.mxu0 0.0
        %2386 = vmatmul.mubr.f32.gmra.mrb[0].mxu0 %v2124
        %v2387 = vpop.f32.mrb[0].mxu0
        %v2388 = vadd.f32 0.0, %v2387
        %v2389 = vpop.f32.mrb[0].mxu0
        %2390 = vmatprep.mubr.f32.mxu0 0.0
        %2391 = vmatmul.mubr.f32.gmra.mrb[0].mxu0 %v2127
        %v2392 = vpop.f32.mrb[0].mxu0
        %v2393 = vadd.f32 0.0, %v2392
        %v2394 = vpop.f32.mrb[0].mxu0
        %2395 = vmatprep.mubr.f32.mxu0 0.0
        %2396 = vmatmul.mubr.f32.gmra.mrb[0].mxu0 %v2130
        %v2397 = vpop.f32.mrb[0].mxu0
        %v2398 = vadd.f32 0.0, %v2397
        %v2399 = vpop.f32.mrb[0].mxu0
        %2400 = vmatprep.mubr.f32.mxu0 0.0
        %2401 = vmatmul.mubr.f32.gmra.mrb[0].mxu0 %v2133
        %v2402 = vpop.f32.mrb[0].mxu0
        %v2403 = vadd.f32 0.0, %v2402
        %v2404 = vpop.f32.mrb[0].mxu0
        %2405 = vmatprep.mubr.f32.mxu0 0.0
        %2406 = vmatmul.mubr.f32.gmra.mrb[0].mxu0 %v2136
        %v2407 = vpop.f32.mrb[0].mxu0
        %v2408 = vadd.f32 0.0, %v2407
        %v2409 = vpop.f32.mrb[0].mxu0
        %2410 = vmatprep.mubr.f32.mxu0 0.0
        %2411 = vmatmul.mubr.f32.gmra.mrb[0].mxu0 %v2139
        %v2412 = vpop.f32.mrb[0].mxu0
        %v2413 = vadd.f32 0.0, %v2412
        %v2414 = vpop.f32.mrb[0].mxu0
        %2415 = vmatprep.mubr.f32.mxu0 0.0
        %2416 = vmatmul.mubr.f32.gmra.mrb[0].mxu0 %v2142
        %v2417 = vpop.f32.mrb[0].mxu0
        %v2418 = vadd.f32 0.0, %v2417
        %v2419 = vpop.f32.mrb[0].mxu0
        %2420 = vmatprep.mubr.f32.mxu0 0.0
        %2421 = vmatmul.mubr.f32.gmra.mrb[0].mxu0 %v2145
        %v2422 = vpop.f32.mrb[0].mxu0
        %v2423 = vadd.f32 0.0, %v2422
        %v2424 = vpop.f32.mrb[0].mxu0
        %2425 = vmatprep.mubr.f32.mxu0 0.0
        %2426 = vmatmul.mubr.f32.gmra.mrb[0].mxu0 %v2148
        %v2427 = vpop.f32.mrb[0].mxu0
        %v2428 = vadd.f32 0.0, %v2427
        %v2429 = vpop.f32.mrb[0].mxu0
        %2430 = vmatprep.mubr.f32.mxu0 0.0
        %2431 = vmatmul.mubr.f32.gmra.mrb[0].mxu0 %v2151
        %v2432 = vpop.f32.mrb[0].mxu0
        %v2433 = vadd.f32 0.0, %v2432
        %v2434 = vpop.f32.mrb[0].mxu0
        %2435 = vmatprep.mubr.f32.mxu0 0.0
        %2436 = vmatmul.mubr.f32.gmra.mrb[0].mxu0 %v2154
        %v2437 = vpop.f32.mrb[0].mxu0
        %v2438 = vadd.f32 0.0, %v2437
        %v2439 = vpop.f32.mrb[0].mxu0
        %2440 = vmatprep.mubr.f32.mxu0 0.0
        %2441 = vmatmul.mubr.f32.gmra.mrb[0].mxu0 %v2157
        %v2442 = vpop.f32.mrb[0].mxu0
        %v2443 = vadd.f32 0.0, %v2442
        %v2444 = vpop.f32.mrb[0].mxu0
        %2445 = vmatprep.mubr.f32.mxu0 0.0
        %2446 = vmatmul.mubr.f32.gmra.mrb[0].mxu0 %v2160
        %v2447 = vpop.f32.mrb[0].mxu0
        %v2448 = vadd.f32 0.0, %v2447
        %v2449 = vpop.f32.mrb[0].mxu0
        %2450 = vmatprep.mubr.f32.mxu0 0.0
        %2451 = vmatmul.mubr.f32.gmra.mrb[0].mxu0 %v2163
        %v2452 = vpop.f32.mrb[0].mxu0
        %v2453 = vadd.f32 0.0, %v2452
        %v2454 = vpop.f32.mrb[0].mxu0
        %2455 = vmatprep.mubr.f32.mxu0 0.0
        %2456 = vmatmul.mubr.f32.gmra.mrb[0].mxu0 %v2166
        %v2457 = vpop.f32.mrb[0].mxu0
        %v2458 = vadd.f32 0.0, %v2457
        %v2459 = vpop.f32.mrb[0].mxu0
        %2460 = vmatprep.mubr.f32.mxu0 0.0
        %2461 = vmatmul.mubr.f32.gmra.mrb[0].mxu0 %v2169
        %v2462 = vpop.f32.mrb[0].mxu0
        %v2463 = vadd.f32 0.0, %v2462
        %v2464 = vpop.f32.mrb[0].mxu0
        %2465 = vmatprep.mubr.f32.mxu0 0.0
        %2466 = vmatmul.mubr.f32.gmra.mrb[0].mxu0 %v2172
        %v2467 = vpop.f32.mrb[0].mxu0
        %v2468 = vadd.f32 0.0, %v2467
        %v2469 = vpop.f32.mrb[0].mxu0
        %2470 = vmatprep.mubr.f32.mxu0 0.0
        %2471 = vmatmul.mubr.f32.gmra.mrb[0].mxu0 %v2175
        %v2472 = vpop.f32.mrb[0].mxu0
        %v2473 = vadd.f32 0.0, %v2472
        %v2474 = vpop.f32.mrb[0].mxu0
        %2475 = vmatprep.mubr.f32.mxu0 0.0
        %2476 = vmatmul.mubr.f32.gmra.mrb[0].mxu0 %v2178
        %v2477 = vpop.f32.mrb[0].mxu0
        %v2478 = vadd.f32 0.0, %v2477
        %v2479 = vpop.f32.mrb[0].mxu0
        %2480 = vmatprep.mubr.f32.mxu0 0.0
        %2481 = vmatmul.mubr.f32.gmra.mrb[0].mxu0 %v2181
        %v2482 = vpop.f32.mrb[0].mxu0
        %v2483 = vadd.f32 0.0, %v2482
        %v2484 = vpop.f32.mrb[0].mxu0
        %2485 = vmatprep.mubr.f32.mxu0 0.0
        %2486 = vmatmul.mubr.f32.gmra.mrb[0].mxu0 %v2184
        %v2487 = vpop.f32.mrb[0].mxu0
        %v2488 = vadd.f32 0.0, %v2487
        %v2489 = vpop.f32.mrb[0].mxu0
        %2490 = vmatprep.mubr.f32.mxu0 0.0
        %2491 = vmatmul.mubr.f32.gmra.mrb[0].mxu0 %v2187
        %v2492 = vpop.f32.mrb[0].mxu0
        %v2493 = vadd.f32 0.0, %v2492
        %v2494 = vpop.f32.mrb[0].mxu0
        %2495 = vmatprep.mubr.f32.mxu0 0.0
        %2496 = vmatmul.mubr.f32.gmra.mrb[0].mxu0 %v2190
        %v2497 = vpop.f32.mrb[0].mxu0
        %v2498 = vadd.f32 0.0, %v2497
        %v2499 = vpop.f32.mrb[0].mxu0
        %2500 = vmatprep.mubr.f32.mxu0 0.0
        %2501 = vmatmul.mubr.f32.gmra.mrb[0].mxu0 %v2193
        %v2502 = vpop.f32.mrb[0].mxu0
        %v2503 = vadd.f32 0.0, %v2502
        %v2504 = vpop.f32.mrb[0].mxu0
        %2505 = vmatprep.mubr.f32.mxu0 0.0
        %2506 = vmatmul.mubr.f32.gmra.mrb[0].mxu0 %v2196
        %v2507 = vpop.f32.mrb[0].mxu0
        %v2508 = vadd.f32 0.0, %v2507
        %v2509 = vpop.f32.mrb[0].mxu0
        %2510 = vmatprep.mubr.f32.mxu0 0.0
        %2511 = vmatmul.mubr.f32.gmra.mrb[0].mxu0 %v2199
        %v2512 = vpop.f32.mrb[0].mxu0
        %v2513 = vadd.f32 0.0, %v2512
        %v2514 = vpop.f32.mrb[0].mxu0
        %2515 = vmatprep.mubr.f32.mxu0 0.0
        %2516 = vmatmul.mubr.f32.gmra.mrb[0].mxu0 %v2202
        %v2517 = vpop.f32.mrb[0].mxu0
        %v2518 = vadd.f32 0.0, %v2517
        %v2519 = vpop.f32.mrb[0].mxu0
        %2520 = vmatprep.mubr.f32.mxu0 0.0
        %2521 = vmatmul.mubr.f32.gmra.mrb[0].mxu0 %v2205
        %v2522 = vpop.f32.mrb[0].mxu0
        %v2523 = vadd.f32 0.0, %v2522
        %v2524 = vpop.f32.mrb[0].mxu0
        %2525 = vdwg.mxu0
        %s2526 = scalar_lea.vmem %s1976, 400 [#allocation2]
        %v2527 = vld [vmem:[%s2526] sm:$0xff]
        %v2528 = vld [vmem:[%s2526 + $0x8] sm:$0xff]
        %v2529 = vld [vmem:[%s2526 + $0x10] sm:$0xff]
        %v2530 = vld [vmem:[%s2526 + $0x18] sm:$0xff]
        %v2531 = vld [vmem:[%s2526 + $0x20] sm:$0xff]
        %v2532 = vld [vmem:[%s2526 + $0x28] sm:$0xff]
        %v2533 = vld [vmem:[%s2526 + $0x30] sm:$0xff]
        %v2534 = vld [vmem:[%s2526 + $0x38] sm:$0xff]
        %v2535 = vld [vmem:[%s2526 + $0x40] sm:$0xff]
        %v2536 = vld [vmem:[%s2526 + $0x48] sm:$0xff]
        %v2537 = vld [vmem:[%s2526 + $0x50] sm:$0xff]
        %v2538 = vld [vmem:[%s2526 + $0x58] sm:$0xff]
        %v2539 = vld [vmem:[%s2526 + $0x60] sm:$0xff]
        %v2540 = vld [vmem:[%s2526 + $0x68] sm:$0xff]
        %v2541 = vld [vmem:[%s2526 + $0x70] sm:$0xff]
        %v2542 = vld [vmem:[%s2526 + $0x78] sm:$0xff]
        %v2543 = vld [vmem:[%s2526 + $0x80] sm:$0xff]
        %v2544 = vld [vmem:[%s2526 + $0x88] sm:$0xff]
        %v2545 = vld [vmem:[%s2526 + $0x90] sm:$0xff]
        %v2546 = vld [vmem:[%s2526 + $0x98] sm:$0xff]
        %v2547 = vld [vmem:[%s2526 + $0xa0] sm:$0xff]
        %v2548 = vld [vmem:[%s2526 + $0xa8] sm:$0xff]
        %v2549 = vld [vmem:[%s2526 + $0xb0] sm:$0xff]
        %v2550 = vld [vmem:[%s2526 + $0xb8] sm:$0xff]
        %v2551 = vld [vmem:[%s2526 + $0xc0] sm:$0xff]
        %v2552 = vld [vmem:[%s2526 + $0xc8] sm:$0xff]
        %v2553 = vld [vmem:[%s2526 + $0xd0] sm:$0xff]
        %v2554 = vld [vmem:[%s2526 + $0xd8] sm:$0xff]
        %v2555 = vld [vmem:[%s2526 + $0xe0] sm:$0xff]
        %v2556 = vld [vmem:[%s2526 + $0xe8] sm:$0xff]
        %v2557 = vld [vmem:[%s2526 + $0xf0] sm:$0xff]
        %v2558 = vld [vmem:[%s2526 + $0xf8] sm:$0xff]
        %v2559 = vld [vmem:[%s2526 + $0x100] sm:$0xff]
        %v2560 = vld [vmem:[%s2526 + $0x108] sm:$0xff]
        %v2561 = vld [vmem:[%s2526 + $0x110] sm:$0xff]
        %v2562 = vld [vmem:[%s2526 + $0x118] sm:$0xff]
        %v2563 = vld [vmem:[%s2526 + $0x120] sm:$0xff]
        %v2564 = vld [vmem:[%s2526 + $0x128] sm:$0xff]
        %v2565 = vld [vmem:[%s2526 + $0x130] sm:$0xff]
        %v2566 = vld [vmem:[%s2526 + $0x138] sm:$0xff]
        %v2567 = vld [vmem:[%s2526 + $0x140] sm:$0xff]
        %v2568 = vld [vmem:[%s2526 + $0x148] sm:$0xff]
        %v2569 = vld [vmem:[%s2526 + $0x150] sm:$0xff]
        %v2570 = vld [vmem:[%s2526 + $0x158] sm:$0xff]
        %v2571 = vld [vmem:[%s2526 + $0x160] sm:$0xff]
        %v2572 = vld [vmem:[%s2526 + $0x168] sm:$0xff]
        %v2573 = vld [vmem:[%s2526 + $0x170] sm:$0xff]
        %v2574 = vld [vmem:[%s2526 + $0x178] sm:$0xff]
        %v2575 = vld [vmem:[%s2526 + $0x180] sm:$0xff]
        %v2576 = vld [vmem:[%s2526 + $0x188] sm:$0xff]
        %v2578 = vsel %vm2056, %v2527, 0
        %v2581 = vsel %vm2056, %v2528, 0
        %v2584 = vsel %vm2056, %v2529, 0
        %v2587 = vsel %vm2056, %v2530, 0
        %v2590 = vsel %vm2056, %v2531, 0
        %v2593 = vsel %vm2056, %v2532, 0
        %v2596 = vsel %vm2056, %v2533, 0
        %v2599 = vsel %vm2056, %v2534, 0
        %v2602 = vsel %vm2056, %v2535, 0
        %v2605 = vsel %vm2056, %v2536, 0
        %v2608 = vsel %vm2056, %v2537, 0
        %v2611 = vsel %vm2056, %v2538, 0
        %v2614 = vsel %vm2056, %v2539, 0
        %v2617 = vsel %vm2056, %v2540, 0
        %v2620 = vsel %vm2056, %v2541, 0
        %v2623 = vsel %vm2056, %v2542, 0
        %v2626 = vsel %vm2056, %v2543, 0
        %v2629 = vsel %vm2056, %v2544, 0
        %v2632 = vsel %vm2056, %v2545, 0
        %v2635 = vsel %vm2056, %v2546, 0
        %v2638 = vsel %vm2056, %v2547, 0
        %v2641 = vsel %vm2056, %v2548, 0
        %v2644 = vsel %vm2056, %v2549, 0
        %v2647 = vsel %vm2056, %v2550, 0
        %v2650 = vsel %vm2056, %v2551, 0
        %v2653 = vsel %vm2056, %v2552, 0
        %v2656 = vsel %vm2056, %v2553, 0
        %v2659 = vsel %vm2056, %v2554, 0
        %v2662 = vsel %vm2056, %v2555, 0
        %v2665 = vsel %vm2056, %v2556, 0
        %v2668 = vsel %vm2056, %v2557, 0
        %v2671 = vsel %vm2056, %v2558, 0
        %v2674 = vsel %vm2056, %v2559, 0
        %v2677 = vsel %vm2056, %v2560, 0
        %v2680 = vsel %vm2056, %v2561, 0
        %v2683 = vsel %vm2056, %v2562, 0
        %v2686 = vsel %vm2056, %v2563, 0
        %v2689 = vsel %vm2056, %v2564, 0
        %v2692 = vsel %vm2056, %v2565, 0
        %v2695 = vsel %vm2056, %v2566, 0
        %v2698 = vsel %vm2056, %v2567, 0
        %v2701 = vsel %vm2056, %v2568, 0
        %v2704 = vsel %vm2056, %v2569, 0
        %v2707 = vsel %vm2056, %v2570, 0
        %v2710 = vsel %vm2056, %v2571, 0
        %v2713 = vsel %vm2056, %v2572, 0
        %v2716 = vsel %vm2056, %v2573, 0
        %v2719 = vsel %vm2056, %v2574, 0
        %v2722 = vsel %vm2056, %v2575, 0
        %v2725 = vsel %vm2056, %v2576, 0
        %2727 = vmatprep.subr.mxu0 0.0
        %2728 = vmatpush1.msra.mxu0 %v2054
        %2729 = vmatprep.subr.mxu0 0.0
        %2730 = vmatpush1.msra.mxu0 %v2209
        %2731 = vmatprep.subr.mxu0 0.0
        %2732 = vmatpush1.msra.mxu0 0.0
        %2733 = vmatprep.subr.mxu0 0.0
        %2734 = vmatpush1.msra.mxu0 0.0
        %2735 = vmatprep.subr.mxu0 0.0
        %2736 = vmatpush1.msra.mxu0 0.0
        %2737 = vmatprep.subr.mxu0 0.0
        %2738 = vmatpush1.msra.mxu0 0.0
        %2739 = vmatprep.subr.mxu0 0.0
        %2740 = vmatpush1.msra.mxu0 0.0
        %2741 = vmatprep.subr.mxu0 0.0
        %2742 = vmatpush1.msra.mxu0 0.0
        %2743 = vmatprep.subr.mxu0 0.0
        %2744 = vmatpush1.msra.mxu0 0.0
        %2745 = vmatprep.subr.mxu0 0.0
        %2746 = vmatpush1.msra.mxu0 0.0
        %2747 = vmatprep.subr.mxu0 0.0
        %2748 = vmatpush1.msra.mxu0 0.0
        %2749 = vmatprep.subr.mxu0 0.0
        %2750 = vmatpush1.msra.mxu0 0.0
        %2751 = vmatprep.subr.mxu0 0.0
        %2752 = vmatpush1.msra.mxu0 0.0
        %2753 = vmatprep.subr.mxu0 0.0
        %2754 = vmatpush1.msra.mxu0 0.0
        %2755 = vmatprep.subr.mxu0 0.0
        %2756 = vmatpush1.msra.mxu0 0.0
        %2757 = vmatprep.subr.mxu0 0.0
        %2758 = vmatpush1.msra.mxu0 0.0
        %2759 = vmatprep.subr.mxu0 0.0
        %2760 = vmatpush1.msra.mxu0 0.0
        %2761 = vmatprep.subr.mxu0 0.0
        %2762 = vmatpush1.msra.mxu0 0.0
        %2763 = vmatprep.subr.mxu0 0.0
        %2764 = vmatpush1.msra.mxu0 0.0
        %2765 = vmatprep.subr.mxu0 0.0
        %2766 = vmatpush1.msra.mxu0 0.0
        %2767 = vmatprep.subr.mxu0 0.0
        %2768 = vmatpush1.msra.mxu0 0.0
        %2769 = vmatprep.subr.mxu0 0.0
        %2770 = vmatpush1.msra.mxu0 0.0
        %2771 = vmatprep.subr.mxu0 0.0
        %2772 = vmatpush1.msra.mxu0 0.0
        %2773 = vmatprep.subr.mxu0 0.0
        %2774 = vmatpush1.msra.mxu0 0.0
        %2775 = vmatprep.subr.mxu0 0.0
        %2776 = vmatpush1.msra.mxu0 0.0
        %2777 = vmatprep.subr.mxu0 0.0
        %2778 = vmatpush1.msra.mxu0 0.0
        %2779 = vmatprep.subr.mxu0 0.0
        %2780 = vmatpush1.msra.mxu0 0.0
        %2781 = vmatprep.subr.mxu0 0.0
        %2782 = vmatpush1.msra.mxu0 0.0
        %2783 = vmatprep.subr.mxu0 0.0
        %2784 = vmatpush1.msra.mxu0 0.0
        %2785 = vmatprep.subr.mxu0 0.0
        %2786 = vmatpush1.msra.mxu0 0.0
        %2787 = vmatprep.subr.mxu0 0.0
        %2788 = vmatpush1.msra.mxu0 0.0
        %2789 = vmatprep.subr.mxu0 0.0
        %2790 = vmatpush1.msra.mxu0 0.0
        %2791 = vmatprep.mubr.f32.mxu0 0.0
        %2792 = vmatmul.mubr.f32.gmra.mrb[0].mxu0 %v2578
        %v2793 = vpop.f32.mrb[0].mxu0
        %v2794 = vadd.f32 0.0, %v2793
        %v2795 = vpop.f32.mrb[0].mxu0
        %2796 = vmatprep.mubr.f32.mxu0 0.0
        %2797 = vmatmul.mubr.f32.gmra.mrb[0].mxu0 %v2581
        %v2798 = vpop.f32.mrb[0].mxu0
        %v2799 = vadd.f32 0.0, %v2798
        %v2800 = vpop.f32.mrb[0].mxu0
        %2801 = vmatprep.mubr.f32.mxu0 0.0
        %2802 = vmatmul.mubr.f32.gmra.mrb[0].mxu0 %v2584
        %v2803 = vpop.f32.mrb[0].mxu0
        %v2804 = vadd.f32 0.0, %v2803
        %v2805 = vpop.f32.mrb[0].mxu0
        %2806 = vmatprep.mubr.f32.mxu0 0.0
        %2807 = vmatmul.mubr.f32.gmra.mrb[0].mxu0 %v2587
        %v2808 = vpop.f32.mrb[0].mxu0
        %v2809 = vadd.f32 0.0, %v2808
        %v2810 = vpop.f32.mrb[0].mxu0
        %2811 = vmatprep.mubr.f32.mxu0 0.0
        %2812 = vmatmul.mubr.f32.gmra.mrb[0].mxu0 %v2590
        %v2813 = vpop.f32.mrb[0].mxu0
        %v2814 = vadd.f32 0.0, %v2813
        %v2815 = vpop.f32.mrb[0].mxu0
        %2816 = vmatprep.mubr.f32.mxu0 0.0
        %2817 = vmatmul.mubr.f32.gmra.mrb[0].mxu0 %v2593
        %v2818 = vpop.f32.mrb[0].mxu0
        %v2819 = vadd.f32 0.0, %v2818
        %v2820 = vpop.f32.mrb[0].mxu0
        %2821 = vmatprep.mubr.f32.mxu0 0.0
        %2822 = vmatmul.mubr.f32.gmra.mrb[0].mxu0 %v2596
        %v2823 = vpop.f32.mrb[0].mxu0
        %v2824 = vadd.f32 0.0, %v2823
        %v2825 = vpop.f32.mrb[0].mxu0
        %2826 = vmatprep.mubr.f32.mxu0 0.0
        %2827 = vmatmul.mubr.f32.gmra.mrb[0].mxu0 %v2599
        %v2828 = vpop.f32.mrb[0].mxu0
        %v2829 = vadd.f32 0.0, %v2828
        %v2830 = vpop.f32.mrb[0].mxu0
        %2831 = vmatprep.mubr.f32.mxu0 0.0
        %2832 = vmatmul.mubr.f32.gmra.mrb[0].mxu0 %v2602
        %v2833 = vpop.f32.mrb[0].mxu0
        %v2834 = vadd.f32 0.0, %v2833
        %v2835 = vpop.f32.mrb[0].mxu0
        %2836 = vmatprep.mubr.f32.mxu0 0.0
        %2837 = vmatmul.mubr.f32.gmra.mrb[0].mxu0 %v2605
        %v2838 = vpop.f32.mrb[0].mxu0
        %v2839 = vadd.f32 0.0, %v2838
        %v2840 = vpop.f32.mrb[0].mxu0
        %2841 = vmatprep.mubr.f32.mxu0 0.0
        %2842 = vmatmul.mubr.f32.gmra.mrb[0].mxu0 %v2608
        %v2843 = vpop.f32.mrb[0].mxu0
        %v2844 = vadd.f32 0.0, %v2843
        %v2845 = vpop.f32.mrb[0].mxu0
        %2846 = vmatprep.mubr.f32.mxu0 0.0
        %2847 = vmatmul.mubr.f32.gmra.mrb[0].mxu0 %v2611
        %v2848 = vpop.f32.mrb[0].mxu0
        %v2849 = vadd.f32 0.0, %v2848
        %v2850 = vpop.f32.mrb[0].mxu0
        %2851 = vmatprep.mubr.f32.mxu0 0.0
        %2852 = vmatmul.mubr.f32.gmra.mrb[0].mxu0 %v2614
        %v2853 = vpop.f32.mrb[0].mxu0
        %v2854 = vadd.f32 0.0, %v2853
        %v2855 = vpop.f32.mrb[0].mxu0
        %2856 = vmatprep.mubr.f32.mxu0 0.0
        %2857 = vmatmul.mubr.f32.gmra.mrb[0].mxu0 %v2617
        %v2858 = vpop.f32.mrb[0].mxu0
        %v2859 = vadd.f32 0.0, %v2858
        %v2860 = vpop.f32.mrb[0].mxu0
        %2861 = vmatprep.mubr.f32.mxu0 0.0
        %2862 = vmatmul.mubr.f32.gmra.mrb[0].mxu0 %v2620
        %v2863 = vpop.f32.mrb[0].mxu0
        %v2864 = vadd.f32 0.0, %v2863
        %v2865 = vpop.f32.mrb[0].mxu0
        %2866 = vmatprep.mubr.f32.mxu0 0.0
        %2867 = vmatmul.mubr.f32.gmra.mrb[0].mxu0 %v2623
        %v2868 = vpop.f32.mrb[0].mxu0
        %v2869 = vadd.f32 0.0, %v2868
        %v2870 = vpop.f32.mrb[0].mxu0
        %2871 = vmatprep.mubr.f32.mxu0 0.0
        %2872 = vmatmul.mubr.f32.gmra.mrb[0].mxu0 %v2626
        %v2873 = vpop.f32.mrb[0].mxu0
        %v2874 = vadd.f32 0.0, %v2873
        %v2875 = vpop.f32.mrb[0].mxu0
        %2876 = vmatprep.mubr.f32.mxu0 0.0
        %2877 = vmatmul.mubr.f32.gmra.mrb[0].mxu0 %v2629
        %v2878 = vpop.f32.mrb[0].mxu0
        %v2879 = vadd.f32 0.0, %v2878
        %v2880 = vpop.f32.mrb[0].mxu0
        %2881 = vmatprep.mubr.f32.mxu0 0.0
        %2882 = vmatmul.mubr.f32.gmra.mrb[0].mxu0 %v2632
        %v2883 = vpop.f32.mrb[0].mxu0
        %v2884 = vadd.f32 0.0, %v2883
        %v2885 = vpop.f32.mrb[0].mxu0
        %2886 = vmatprep.mubr.f32.mxu0 0.0
        %2887 = vmatmul.mubr.f32.gmra.mrb[0].mxu0 %v2635
        %v2888 = vpop.f32.mrb[0].mxu0
        %v2889 = vadd.f32 0.0, %v2888
        %v2890 = vpop.f32.mrb[0].mxu0
        %2891 = vmatprep.mubr.f32.mxu0 0.0
        %2892 = vmatmul.mubr.f32.gmra.mrb[0].mxu0 %v2638
        %v2893 = vpop.f32.mrb[0].mxu0
        %v2894 = vadd.f32 0.0, %v2893
        %v2895 = vpop.f32.mrb[0].mxu0
        %2896 = vmatprep.mubr.f32.mxu0 0.0
        %2897 = vmatmul.mubr.f32.gmra.mrb[0].mxu0 %v2641
        %v2898 = vpop.f32.mrb[0].mxu0
        %v2899 = vadd.f32 0.0, %v2898
        %v2900 = vpop.f32.mrb[0].mxu0
        %2901 = vmatprep.mubr.f32.mxu0 0.0
        %2902 = vmatmul.mubr.f32.gmra.mrb[0].mxu0 %v2644
        %v2903 = vpop.f32.mrb[0].mxu0
        %v2904 = vadd.f32 0.0, %v2903
        %v2905 = vpop.f32.mrb[0].mxu0
        %2906 = vmatprep.mubr.f32.mxu0 0.0
        %2907 = vmatmul.mubr.f32.gmra.mrb[0].mxu0 %v2647
        %v2908 = vpop.f32.mrb[0].mxu0
        %v2909 = vadd.f32 0.0, %v2908
        %v2910 = vpop.f32.mrb[0].mxu0
        %2911 = vmatprep.mubr.f32.mxu0 0.0
        %2912 = vmatmul.mubr.f32.gmra.mrb[0].mxu0 %v2650
        %v2913 = vpop.f32.mrb[0].mxu0
        %v2914 = vadd.f32 0.0, %v2913
        %v2915 = vpop.f32.mrb[0].mxu0
        %2916 = vmatprep.mubr.f32.mxu0 0.0
        %2917 = vmatmul.mubr.f32.gmra.mrb[0].mxu0 %v2653
        %v2918 = vpop.f32.mrb[0].mxu0
        %v2919 = vadd.f32 0.0, %v2918
        %v2920 = vpop.f32.mrb[0].mxu0
        %2921 = vmatprep.mubr.f32.mxu0 0.0
        %2922 = vmatmul.mubr.f32.gmra.mrb[0].mxu0 %v2656
        %v2923 = vpop.f32.mrb[0].mxu0
        %v2924 = vadd.f32 0.0, %v2923
        %v2925 = vpop.f32.mrb[0].mxu0
        %2926 = vmatprep.mubr.f32.mxu0 0.0
        %2927 = vmatmul.mubr.f32.gmra.mrb[0].mxu0 %v2659
        %v2928 = vpop.f32.mrb[0].mxu0
        %v2929 = vadd.f32 0.0, %v2928
        %v2930 = vpop.f32.mrb[0].mxu0
        %2931 = vmatprep.mubr.f32.mxu0 0.0
        %2932 = vmatmul.mubr.f32.gmra.mrb[0].mxu0 %v2662
        %v2933 = vpop.f32.mrb[0].mxu0
        %v2934 = vadd.f32 0.0, %v2933
        %v2935 = vpop.f32.mrb[0].mxu0
        %2936 = vmatprep.mubr.f32.mxu0 0.0
        %2937 = vmatmul.mubr.f32.gmra.mrb[0].mxu0 %v2665
        %v2938 = vpop.f32.mrb[0].mxu0
        %v2939 = vadd.f32 0.0, %v2938
        %v2940 = vpop.f32.mrb[0].mxu0
        %2941 = vmatprep.mubr.f32.mxu0 0.0
        %2942 = vmatmul.mubr.f32.gmra.mrb[0].mxu0 %v2668
        %v2943 = vpop.f32.mrb[0].mxu0
        %v2944 = vadd.f32 0.0, %v2943
        %v2945 = vpop.f32.mrb[0].mxu0
        %2946 = vmatprep.mubr.f32.mxu0 0.0
        %2947 = vmatmul.mubr.f32.gmra.mrb[0].mxu0 %v2671
        %v2948 = vpop.f32.mrb[0].mxu0
        %v2949 = vadd.f32 0.0, %v2948
        %v2950 = vpop.f32.mrb[0].mxu0
        %2951 = vmatprep.mubr.f32.mxu0 0.0
        %2952 = vmatmul.mubr.f32.gmra.mrb[0].mxu0 %v2674
        %v2953 = vpop.f32.mrb[0].mxu0
        %v2954 = vadd.f32 0.0, %v2953
        %v2955 = vpop.f32.mrb[0].mxu0
        %2956 = vmatprep.mubr.f32.mxu0 0.0
        %2957 = vmatmul.mubr.f32.gmra.mrb[0].mxu0 %v2677
        %v2958 = vpop.f32.mrb[0].mxu0
        %v2959 = vadd.f32 0.0, %v2958
        %v2960 = vpop.f32.mrb[0].mxu0
        %2961 = vmatprep.mubr.f32.mxu0 0.0
        %2962 = vmatmul.mubr.f32.gmra.mrb[0].mxu0 %v2680
        %v2963 = vpop.f32.mrb[0].mxu0
        %v2964 = vadd.f32 0.0, %v2963
        %v2965 = vpop.f32.mrb[0].mxu0
        %2966 = vmatprep.mubr.f32.mxu0 0.0
        %2967 = vmatmul.mubr.f32.gmra.mrb[0].mxu0 %v2683
        %v2968 = vpop.f32.mrb[0].mxu0
        %v2969 = vadd.f32 0.0, %v2968
        %v2970 = vpop.f32.mrb[0].mxu0
        %2971 = vmatprep.mubr.f32.mxu0 0.0
        %2972 = vmatmul.mubr.f32.gmra.mrb[0].mxu0 %v2686
        %v2973 = vpop.f32.mrb[0].mxu0
        %v2974 = vadd.f32 0.0, %v2973
        %v2975 = vpop.f32.mrb[0].mxu0
        %2976 = vmatprep.mubr.f32.mxu0 0.0
        %2977 = vmatmul.mubr.f32.gmra.mrb[0].mxu0 %v2689
        %v2978 = vpop.f32.mrb[0].mxu0
        %v2979 = vadd.f32 0.0, %v2978
        %v2980 = vpop.f32.mrb[0].mxu0
        %2981 = vmatprep.mubr.f32.mxu0 0.0
        %2982 = vmatmul.mubr.f32.gmra.mrb[0].mxu0 %v2692
        %v2983 = vpop.f32.mrb[0].mxu0
        %v2984 = vadd.f32 0.0, %v2983
        %v2985 = vpop.f32.mrb[0].mxu0
        %2986 = vmatprep.mubr.f32.mxu0 0.0
        %2987 = vmatmul.mubr.f32.gmra.mrb[0].mxu0 %v2695
        %v2988 = vpop.f32.mrb[0].mxu0
        %v2989 = vadd.f32 0.0, %v2988
        %v2990 = vpop.f32.mrb[0].mxu0
        %2991 = vmatprep.mubr.f32.mxu0 0.0
        %2992 = vmatmul.mubr.f32.gmra.mrb[0].mxu0 %v2698
        %v2993 = vpop.f32.mrb[0].mxu0
        %v2994 = vadd.f32 0.0, %v2993
        %v2995 = vpop.f32.mrb[0].mxu0
        %2996 = vmatprep.mubr.f32.mxu0 0.0
        %2997 = vmatmul.mubr.f32.gmra.mrb[0].mxu0 %v2701
        %v2998 = vpop.f32.mrb[0].mxu0
        %v2999 = vadd.f32 0.0, %v2998
        %v3000 = vpop.f32.mrb[0].mxu0
        %3001 = vmatprep.mubr.f32.mxu0 0.0
        %3002 = vmatmul.mubr.f32.gmra.mrb[0].mxu0 %v2704
        %v3003 = vpop.f32.mrb[0].mxu0
        %v3004 = vadd.f32 0.0, %v3003
        %v3005 = vpop.f32.mrb[0].mxu0
        %3006 = vmatprep.mubr.f32.mxu0 0.0
        %3007 = vmatmul.mubr.f32.gmra.mrb[0].mxu0 %v2707
        %v3008 = vpop.f32.mrb[0].mxu0
        %v3009 = vadd.f32 0.0, %v3008
        %v3010 = vpop.f32.mrb[0].mxu0
        %3011 = vmatprep.mubr.f32.mxu0 0.0
        %3012 = vmatmul.mubr.f32.gmra.mrb[0].mxu0 %v2710
        %v3013 = vpop.f32.mrb[0].mxu0
        %v3014 = vadd.f32 0.0, %v3013
        %v3015 = vpop.f32.mrb[0].mxu0
        %3016 = vmatprep.mubr.f32.mxu0 0.0
        %3017 = vmatmul.mubr.f32.gmra.mrb[0].mxu0 %v2713
        %v3018 = vpop.f32.mrb[0].mxu0
        %v3019 = vadd.f32 0.0, %v3018
        %v3020 = vpop.f32.mrb[0].mxu0
        %3021 = vmatprep.mubr.f32.mxu0 0.0
        %3022 = vmatmul.mubr.f32.gmra.mrb[0].mxu0 %v2716
        %v3023 = vpop.f32.mrb[0].mxu0
        %v3024 = vadd.f32 0.0, %v3023
        %v3025 = vpop.f32.mrb[0].mxu0
        %3026 = vmatprep.mubr.f32.mxu0 0.0
        %3027 = vmatmul.mubr.f32.gmra.mrb[0].mxu0 %v2719
        %v3028 = vpop.f32.mrb[0].mxu0
        %v3029 = vadd.f32 0.0, %v3028
        %v3030 = vpop.f32.mrb[0].mxu0
        %3031 = vmatprep.mubr.f32.mxu0 0.0
        %3032 = vmatmul.mubr.f32.gmra.mrb[0].mxu0 %v2722
        %v3033 = vpop.f32.mrb[0].mxu0
        %v3034 = vadd.f32 0.0, %v3033
        %v3035 = vpop.f32.mrb[0].mxu0
        %3036 = vmatprep.mubr.f32.mxu0 0.0
        %3037 = vmatmul.mubr.f32.gmra.mrb[0].mxu0 %v2725
        %v3038 = vpop.f32.mrb[0].mxu0
        %v3039 = vadd.f32 0.0, %v3038
        %v3040 = vpop.f32.mrb[0].mxu0
        %3041 = vdwg.mxu0
        %v3042 = vmax.f32 %v2278, %v2794
        %v3043 = vmax.f32 %v2283, %v2799
        %v3044 = vmax.f32 %v2288, %v2804
        %v3045 = vmax.f32 %v2293, %v2809
        %v3046 = vmax.f32 %v2298, %v2814
        %v3047 = vmax.f32 %v2303, %v2819
        %v3048 = vmax.f32 %v2308, %v2824
        %v3049 = vmax.f32 %v2313, %v2829
        %v3050 = vmax.f32 %v2318, %v2834
        %v3051 = vmax.f32 %v2323, %v2839
        %v3052 = vmax.f32 %v2328, %v2844
        %v3053 = vmax.f32 %v2333, %v2849
        %v3054 = vmax.f32 %v2338, %v2854
        %v3055 = vmax.f32 %v2343, %v2859
        %v3056 = vmax.f32 %v2348, %v2864
        %v3057 = vmax.f32 %v2353, %v2869
        %v3058 = vmax.f32 %v2358, %v2874
        %v3059 = vmax.f32 %v2363, %v2879
        %v3060 = vmax.f32 %v2368, %v2884
        %v3061 = vmax.f32 %v2373, %v2889
        %v3062 = vmax.f32 %v2378, %v2894
        %v3063 = vmax.f32 %v2383, %v2899
        %v3064 = vmax.f32 %v2388, %v2904
        %v3065 = vmax.f32 %v2393, %v2909
        %v3066 = vmax.f32 %v2398, %v2914
        %v3067 = vmax.f32 %v2403, %v2919
        %v3068 = vmax.f32 %v2408, %v2924
        %v3069 = vmax.f32 %v2413, %v2929
        %v3070 = vmax.f32 %v2418, %v2934
        %v3071 = vmax.f32 %v2423, %v2939
        %v3072 = vmax.f32 %v2428, %v2944
        %v3073 = vmax.f32 %v2433, %v2949
        %v3074 = vmax.f32 %v2438, %v2954
        %v3075 = vmax.f32 %v2443, %v2959
        %v3076 = vmax.f32 %v2448, %v2964
        %v3077 = vmax.f32 %v2453, %v2969
        %v3078 = vmax.f32 %v2458, %v2974
        %v3079 = vmax.f32 %v2463, %v2979
        %v3080 = vmax.f32 %v2468, %v2984
        %v3081 = vmax.f32 %v2473, %v2989
        %v3082 = vmax.f32 %v2478, %v2994
        %v3083 = vmax.f32 %v2483, %v2999
        %v3084 = vmax.f32 %v2488, %v3004
        %v3085 = vmax.f32 %v2493, %v3009
        %v3086 = vmax.f32 %v2498, %v3014
        %v3087 = vmax.f32 %v2503, %v3019
        %v3088 = vmax.f32 %v2508, %v3024
        %v3089 = vmax.f32 %v2513, %v3029
        %v3090 = vmax.f32 %v2518, %v3034
        %v3091 = vmax.f32 %v2523, %v3039
        %s3092 = scalar_lea.vmem %s1976, 800 [#allocation2]
        %v3093 = vld [vmem:[%s3092] sm:$0xff]
        %v3094 = vld [vmem:[%s3092 + $0x8] sm:$0xff]
        %v3095 = vld [vmem:[%s3092 + $0x10] sm:$0xff]
        %v3096 = vld [vmem:[%s3092 + $0x18] sm:$0xff]
        %v3097 = vld [vmem:[%s3092 + $0x20] sm:$0xff]
        %v3098 = vld [vmem:[%s3092 + $0x28] sm:$0xff]
        %v3099 = vld [vmem:[%s3092 + $0x30] sm:$0xff]
        %v3100 = vld [vmem:[%s3092 + $0x38] sm:$0xff]
        %v3101 = vld [vmem:[%s3092 + $0x40] sm:$0xff]
        %v3102 = vld [vmem:[%s3092 + $0x48] sm:$0xff]
        %v3103 = vld [vmem:[%s3092 + $0x50] sm:$0xff]
        %v3104 = vld [vmem:[%s3092 + $0x58] sm:$0xff]
        %v3105 = vld [vmem:[%s3092 + $0x60] sm:$0xff]
        %v3106 = vld [vmem:[%s3092 + $0x68] sm:$0xff]
        %v3107 = vld [vmem:[%s3092 + $0x70] sm:$0xff]
        %v3108 = vld [vmem:[%s3092 + $0x78] sm:$0xff]
        %v3109 = vld [vmem:[%s3092 + $0x80] sm:$0xff]
        %v3110 = vld [vmem:[%s3092 + $0x88] sm:$0xff]
        %v3111 = vld [vmem:[%s3092 + $0x90] sm:$0xff]
        %v3112 = vld [vmem:[%s3092 + $0x98] sm:$0xff]
        %v3113 = vld [vmem:[%s3092 + $0xa0] sm:$0xff]
        %v3114 = vld [vmem:[%s3092 + $0xa8] sm:$0xff]
        %v3115 = vld [vmem:[%s3092 + $0xb0] sm:$0xff]
        %v3116 = vld [vmem:[%s3092 + $0xb8] sm:$0xff]
        %v3117 = vld [vmem:[%s3092 + $0xc0] sm:$0xff]
        %v3118 = vld [vmem:[%s3092 + $0xc8] sm:$0xff]
        %v3119 = vld [vmem:[%s3092 + $0xd0] sm:$0xff]
        %v3120 = vld [vmem:[%s3092 + $0xd8] sm:$0xff]
        %v3121 = vld [vmem:[%s3092 + $0xe0] sm:$0xff]
        %v3122 = vld [vmem:[%s3092 + $0xe8] sm:$0xff]
        %v3123 = vld [vmem:[%s3092 + $0xf0] sm:$0xff]
        %v3124 = vld [vmem:[%s3092 + $0xf8] sm:$0xff]
        %v3125 = vld [vmem:[%s3092 + $0x100] sm:$0xff]
        %v3126 = vld [vmem:[%s3092 + $0x108] sm:$0xff]
        %v3127 = vld [vmem:[%s3092 + $0x110] sm:$0xff]
        %v3128 = vld [vmem:[%s3092 + $0x118] sm:$0xff]
        %v3129 = vld [vmem:[%s3092 + $0x120] sm:$0xff]
        %v3130 = vld [vmem:[%s3092 + $0x128] sm:$0xff]
        %v3131 = vld [vmem:[%s3092 + $0x130] sm:$0xff]
        %v3132 = vld [vmem:[%s3092 + $0x138] sm:$0xff]
        %v3133 = vld [vmem:[%s3092 + $0x140] sm:$0xff]
        %v3134 = vld [vmem:[%s3092 + $0x148] sm:$0xff]
        %v3135 = vld [vmem:[%s3092 + $0x150] sm:$0xff]
        %v3136 = vld [vmem:[%s3092 + $0x158] sm:$0xff]
        %v3137 = vld [vmem:[%s3092 + $0x160] sm:$0xff]
        %v3138 = vld [vmem:[%s3092 + $0x168] sm:$0xff]
        %v3139 = vld [vmem:[%s3092 + $0x170] sm:$0xff]
        %v3140 = vld [vmem:[%s3092 + $0x178] sm:$0xff]
        %v3141 = vld [vmem:[%s3092 + $0x180] sm:$0xff]
        %v3142 = vld [vmem:[%s3092 + $0x188] sm:$0xff]
        %v3144 = vsel %vm2056, %v3093, 0
        %v3147 = vsel %vm2056, %v3094, 0
        %v3150 = vsel %vm2056, %v3095, 0
        %v3153 = vsel %vm2056, %v3096, 0
        %v3156 = vsel %vm2056, %v3097, 0
        %v3159 = vsel %vm2056, %v3098, 0
        %v3162 = vsel %vm2056, %v3099, 0
        %v3165 = vsel %vm2056, %v3100, 0
        %v3168 = vsel %vm2056, %v3101, 0
        %v3171 = vsel %vm2056, %v3102, 0
        %v3174 = vsel %vm2056, %v3103, 0
        %v3177 = vsel %vm2056, %v3104, 0
        %v3180 = vsel %vm2056, %v3105, 0
        %v3183 = vsel %vm2056, %v3106, 0
        %v3186 = vsel %vm2056, %v3107, 0
        %v3189 = vsel %vm2056, %v3108, 0
        %v3192 = vsel %vm2056, %v3109, 0
        %v3195 = vsel %vm2056, %v3110, 0
        %v3198 = vsel %vm2056, %v3111, 0
        %v3201 = vsel %vm2056, %v3112, 0
        %v3204 = vsel %vm2056, %v3113, 0
        %v3207 = vsel %vm2056, %v3114, 0
        %v3210 = vsel %vm2056, %v3115, 0
        %v3213 = vsel %vm2056, %v3116, 0
        %v3216 = vsel %vm2056, %v3117, 0
        %v3219 = vsel %vm2056, %v3118, 0
        %v3222 = vsel %vm2056, %v3119, 0
        %v3225 = vsel %vm2056, %v3120, 0
        %v3228 = vsel %vm2056, %v3121, 0
        %v3231 = vsel %vm2056, %v3122, 0
        %v3234 = vsel %vm2056, %v3123, 0
        %v3237 = vsel %vm2056, %v3124, 0
        %v3240 = vsel %vm2056, %v3125, 0
        %v3243 = vsel %vm2056, %v3126, 0
        %v3246 = vsel %vm2056, %v3127, 0
        %v3249 = vsel %vm2056, %v3128, 0
        %v3252 = vsel %vm2056, %v3129, 0
        %v3255 = vsel %vm2056, %v3130, 0
        %v3258 = vsel %vm2056, %v3131, 0
        %v3261 = vsel %vm2056, %v3132, 0
        %v3264 = vsel %vm2056, %v3133, 0
        %v3267 = vsel %vm2056, %v3134, 0
        %v3270 = vsel %vm2056, %v3135, 0
        %v3273 = vsel %vm2056, %v3136, 0
        %v3276 = vsel %vm2056, %v3137, 0
        %v3279 = vsel %vm2056, %v3138, 0
        %v3282 = vsel %vm2056, %v3139, 0
        %v3285 = vsel %vm2056, %v3140, 0
        %v3288 = vsel %vm2056, %v3141, 0
        %v3291 = vsel %vm2056, %v3142, 0
        %3293 = vmatprep.subr.mxu0 0.0
        %3294 = vmatpush1.msra.mxu0 %v2054
        %3295 = vmatprep.subr.mxu0 0.0
        %3296 = vmatpush1.msra.mxu0 %v2209
        %3297 = vmatprep.subr.mxu0 0.0
        %3298 = vmatpush1.msra.mxu0 0.0
        %3299 = vmatprep.subr.mxu0 0.0
        %3300 = vmatpush1.msra.mxu0 0.0
        %3301 = vmatprep.subr.mxu0 0.0
        %3302 = vmatpush1.msra.mxu0 0.0
        %3303 = vmatprep.subr.mxu0 0.0
        %3304 = vmatpush1.msra.mxu0 0.0
        %3305 = vmatprep.subr.mxu0 0.0
        %3306 = vmatpush1.msra.mxu0 0.0
        %3307 = vmatprep.subr.mxu0 0.0
        %3308 = vmatpush1.msra.mxu0 0.0
        %3309 = vmatprep.subr.mxu0 0.0
        %3310 = vmatpush1.msra.mxu0 0.0
        %3311 = vmatprep.subr.mxu0 0.0
        %3312 = vmatpush1.msra.mxu0 0.0
        %3313 = vmatprep.subr.mxu0 0.0
        %3314 = vmatpush1.msra.mxu0 0.0
        %3315 = vmatprep.subr.mxu0 0.0
        %3316 = vmatpush1.msra.mxu0 0.0
        %3317 = vmatprep.subr.mxu0 0.0
        %3318 = vmatpush1.msra.mxu0 0.0
        %3319 = vmatprep.subr.mxu0 0.0
        %3320 = vmatpush1.msra.mxu0 0.0
        %3321 = vmatprep.subr.mxu0 0.0
        %3322 = vmatpush1.msra.mxu0 0.0
        %3323 = vmatprep.subr.mxu0 0.0
        %3324 = vmatpush1.msra.mxu0 0.0
        %3325 = vmatprep.subr.mxu0 0.0
        %3326 = vmatpush1.msra.mxu0 0.0
        %3327 = vmatprep.subr.mxu0 0.0
        %3328 = vmatpush1.msra.mxu0 0.0
        %3329 = vmatprep.subr.mxu0 0.0
        %3330 = vmatpush1.msra.mxu0 0.0
        %3331 = vmatprep.subr.mxu0 0.0
        %3332 = vmatpush1.msra.mxu0 0.0
        %3333 = vmatprep.subr.mxu0 0.0
        %3334 = vmatpush1.msra.mxu0 0.0
        %3335 = vmatprep.subr.mxu0 0.0
        %3336 = vmatpush1.msra.mxu0 0.0
        %3337 = vmatprep.subr.mxu0 0.0
        %3338 = vmatpush1.msra.mxu0 0.0
        %3339 = vmatprep.subr.mxu0 0.0
        %3340 = vmatpush1.msra.mxu0 0.0
        %3341 = vmatprep.subr.mxu0 0.0
        %3342 = vmatpush1.msra.mxu0 0.0
        %3343 = vmatprep.subr.mxu0 0.0
        %3344 = vmatpush1.msra.mxu0 0.0
        %3345 = vmatprep.subr.mxu0 0.0
        %3346 = vmatpush1.msra.mxu0 0.0
        %3347 = vmatprep.subr.mxu0 0.0
        %3348 = vmatpush1.msra.mxu0 0.0
        %3349 = vmatprep.subr.mxu0 0.0
        %3350 = vmatpush1.msra.mxu0 0.0
        %3351 = vmatprep.subr.mxu0 0.0
        %3352 = vmatpush1.msra.mxu0 0.0
        %3353 = vmatprep.subr.mxu0 0.0
        %3354 = vmatpush1.msra.mxu0 0.0
        %3355 = vmatprep.subr.mxu0 0.0
        %3356 = vmatpush1.msra.mxu0 0.0
        %3357 = vmatprep.mubr.f32.mxu0 0.0
        %3358 = vmatmul.mubr.f32.gmra.mrb[0].mxu0 %v3144
        %v3359 = vpop.f32.mrb[0].mxu0
        %v3360 = vadd.f32 0.0, %v3359
        %v3361 = vpop.f32.mrb[0].mxu0
        %3362 = vmatprep.mubr.f32.mxu0 0.0
        %3363 = vmatmul.mubr.f32.gmra.mrb[0].mxu0 %v3147
        %v3364 = vpop.f32.mrb[0].mxu0
        %v3365 = vadd.f32 0.0, %v3364
        %v3366 = vpop.f32.mrb[0].mxu0
        %3367 = vmatprep.mubr.f32.mxu0 0.0
        %3368 = vmatmul.mubr.f32.gmra.mrb[0].mxu0 %v3150
        %v3369 = vpop.f32.mrb[0].mxu0
        %v3370 = vadd.f32 0.0, %v3369
        %v3371 = vpop.f32.mrb[0].mxu0
        %3372 = vmatprep.mubr.f32.mxu0 0.0
        %3373 = vmatmul.mubr.f32.gmra.mrb[0].mxu0 %v3153
        %v3374 = vpop.f32.mrb[0].mxu0
        %v3375 = vadd.f32 0.0, %v3374
        %v3376 = vpop.f32.mrb[0].mxu0
        %3377 = vmatprep.mubr.f32.mxu0 0.0
        %3378 = vmatmul.mubr.f32.gmra.mrb[0].mxu0 %v3156
        %v3379 = vpop.f32.mrb[0].mxu0
        %v3380 = vadd.f32 0.0, %v3379
        %v3381 = vpop.f32.mrb[0].mxu0
        %3382 = vmatprep.mubr.f32.mxu0 0.0
        %3383 = vmatmul.mubr.f32.gmra.mrb[0].mxu0 %v3159
        %v3384 = vpop.f32.mrb[0].mxu0
        %v3385 = vadd.f32 0.0, %v3384
        %v3386 = vpop.f32.mrb[0].mxu0
        %3387 = vmatprep.mubr.f32.mxu0 0.0
        %3388 = vmatmul.mubr.f32.gmra.mrb[0].mxu0 %v3162
        %v3389 = vpop.f32.mrb[0].mxu0
        %v3390 = vadd.f32 0.0, %v3389
        %v3391 = vpop.f32.mrb[0].mxu0
        %3392 = vmatprep.mubr.f32.mxu0 0.0
        %3393 = vmatmul.mubr.f32.gmra.mrb[0].mxu0 %v3165
        %v3394 = vpop.f32.mrb[0].mxu0
        %v3395 = vadd.f32 0.0, %v3394
        %v3396 = vpop.f32.mrb[0].mxu0
        %3397 = vmatprep.mubr.f32.mxu0 0.0
        %3398 = vmatmul.mubr.f32.gmra.mrb[0].mxu0 %v3168
        %v3399 = vpop.f32.mrb[0].mxu0
        %v3400 = vadd.f32 0.0, %v3399
        %v3401 = vpop.f32.mrb[0].mxu0
        %3402 = vmatprep.mubr.f32.mxu0 0.0
        %3403 = vmatmul.mubr.f32.gmra.mrb[0].mxu0 %v3171
        %v3404 = vpop.f32.mrb[0].mxu0
        %v3405 = vadd.f32 0.0, %v3404
        %v3406 = vpop.f32.mrb[0].mxu0
        %3407 = vmatprep.mubr.f32.mxu0 0.0
        %3408 = vmatmul.mubr.f32.gmra.mrb[0].mxu0 %v3174
        %v3409 = vpop.f32.mrb[0].mxu0
        %v3410 = vadd.f32 0.0, %v3409
        %v3411 = vpop.f32.mrb[0].mxu0
        %3412 = vmatprep.mubr.f32.mxu0 0.0
        %3413 = vmatmul.mubr.f32.gmra.mrb[0].mxu0 %v3177
        %v3414 = vpop.f32.mrb[0].mxu0
        %v3415 = vadd.f32 0.0, %v3414
        %v3416 = vpop.f32.mrb[0].mxu0
        %3417 = vmatprep.mubr.f32.mxu0 0.0
        %3418 = vmatmul.mubr.f32.gmra.mrb[0].mxu0 %v3180
        %v3419 = vpop.f32.mrb[0].mxu0
        %v3420 = vadd.f32 0.0, %v3419
        %v3421 = vpop.f32.mrb[0].mxu0
        %3422 = vmatprep.mubr.f32.mxu0 0.0
        %3423 = vmatmul.mubr.f32.gmra.mrb[0].mxu0 %v3183
        %v3424 = vpop.f32.mrb[0].mxu0
        %v3425 = vadd.f32 0.0, %v3424
        %v3426 = vpop.f32.mrb[0].mxu0
        %3427 = vmatprep.mubr.f32.mxu0 0.0
        %3428 = vmatmul.mubr.f32.gmra.mrb[0].mxu0 %v3186
        %v3429 = vpop.f32.mrb[0].mxu0
        %v3430 = vadd.f32 0.0, %v3429
        %v3431 = vpop.f32.mrb[0].mxu0
        %3432 = vmatprep.mubr.f32.mxu0 0.0
        %3433 = vmatmul.mubr.f32.gmra.mrb[0].mxu0 %v3189
        %v3434 = vpop.f32.mrb[0].mxu0
        %v3435 = vadd.f32 0.0, %v3434
        %v3436 = vpop.f32.mrb[0].mxu0
        %3437 = vmatprep.mubr.f32.mxu0 0.0
        %3438 = vmatmul.mubr.f32.gmra.mrb[0].mxu0 %v3192
        %v3439 = vpop.f32.mrb[0].mxu0
        %v3440 = vadd.f32 0.0, %v3439
        %v3441 = vpop.f32.mrb[0].mxu0
        %3442 = vmatprep.mubr.f32.mxu0 0.0
        %3443 = vmatmul.mubr.f32.gmra.mrb[0].mxu0 %v3195
        %v3444 = vpop.f32.mrb[0].mxu0
        %v3445 = vadd.f32 0.0, %v3444
        %v3446 = vpop.f32.mrb[0].mxu0
        %3447 = vmatprep.mubr.f32.mxu0 0.0
        %3448 = vmatmul.mubr.f32.gmra.mrb[0].mxu0 %v3198
        %v3449 = vpop.f32.mrb[0].mxu0
        %v3450 = vadd.f32 0.0, %v3449
        %v3451 = vpop.f32.mrb[0].mxu0
        %3452 = vmatprep.mubr.f32.mxu0 0.0
        %3453 = vmatmul.mubr.f32.gmra.mrb[0].mxu0 %v3201
        %v3454 = vpop.f32.mrb[0].mxu0
        %v3455 = vadd.f32 0.0, %v3454
        %v3456 = vpop.f32.mrb[0].mxu0
        %3457 = vmatprep.mubr.f32.mxu0 0.0
        %3458 = vmatmul.mubr.f32.gmra.mrb[0].mxu0 %v3204
        %v3459 = vpop.f32.mrb[0].mxu0
        %v3460 = vadd.f32 0.0, %v3459
        %v3461 = vpop.f32.mrb[0].mxu0
        %3462 = vmatprep.mubr.f32.mxu0 0.0
        %3463 = vmatmul.mubr.f32.gmra.mrb[0].mxu0 %v3207
        %v3464 = vpop.f32.mrb[0].mxu0
        %v3465 = vadd.f32 0.0, %v3464
        %v3466 = vpop.f32.mrb[0].mxu0
        %3467 = vmatprep.mubr.f32.mxu0 0.0
        %3468 = vmatmul.mubr.f32.gmra.mrb[0].mxu0 %v3210
        %v3469 = vpop.f32.mrb[0].mxu0
        %v3470 = vadd.f32 0.0, %v3469
        %v3471 = vpop.f32.mrb[0].mxu0
        %3472 = vmatprep.mubr.f32.mxu0 0.0
        %3473 = vmatmul.mubr.f32.gmra.mrb[0].mxu0 %v3213
        %v3474 = vpop.f32.mrb[0].mxu0
        %v3475 = vadd.f32 0.0, %v3474
        %v3476 = vpop.f32.mrb[0].mxu0
        %3477 = vmatprep.mubr.f32.mxu0 0.0
        %3478 = vmatmul.mubr.f32.gmra.mrb[0].mxu0 %v3216
        %v3479 = vpop.f32.mrb[0].mxu0
        %v3480 = vadd.f32 0.0, %v3479
        %v3481 = vpop.f32.mrb[0].mxu0
        %3482 = vmatprep.mubr.f32.mxu0 0.0
        %3483 = vmatmul.mubr.f32.gmra.mrb[0].mxu0 %v3219
        %v3484 = vpop.f32.mrb[0].mxu0
        %v3485 = vadd.f32 0.0, %v3484
        %v3486 = vpop.f32.mrb[0].mxu0
        %3487 = vmatprep.mubr.f32.mxu0 0.0
        %3488 = vmatmul.mubr.f32.gmra.mrb[0].mxu0 %v3222
        %v3489 = vpop.f32.mrb[0].mxu0
        %v3490 = vadd.f32 0.0, %v3489
        %v3491 = vpop.f32.mrb[0].mxu0
        %3492 = vmatprep.mubr.f32.mxu0 0.0
        %3493 = vmatmul.mubr.f32.gmra.mrb[0].mxu0 %v3225
        %v3494 = vpop.f32.mrb[0].mxu0
        %v3495 = vadd.f32 0.0, %v3494
        %v3496 = vpop.f32.mrb[0].mxu0
        %3497 = vmatprep.mubr.f32.mxu0 0.0
        %3498 = vmatmul.mubr.f32.gmra.mrb[0].mxu0 %v3228
        %v3499 = vpop.f32.mrb[0].mxu0
        %v3500 = vadd.f32 0.0, %v3499
        %v3501 = vpop.f32.mrb[0].mxu0
        %3502 = vmatprep.mubr.f32.mxu0 0.0
        %3503 = vmatmul.mubr.f32.gmra.mrb[0].mxu0 %v3231
        %v3504 = vpop.f32.mrb[0].mxu0
        %v3505 = vadd.f32 0.0, %v3504
        %v3506 = vpop.f32.mrb[0].mxu0
        %3507 = vmatprep.mubr.f32.mxu0 0.0
        %3508 = vmatmul.mubr.f32.gmra.mrb[0].mxu0 %v3234
        %v3509 = vpop.f32.mrb[0].mxu0
        %v3510 = vadd.f32 0.0, %v3509
        %v3511 = vpop.f32.mrb[0].mxu0
        %3512 = vmatprep.mubr.f32.mxu0 0.0
        %3513 = vmatmul.mubr.f32.gmra.mrb[0].mxu0 %v3237
        %v3514 = vpop.f32.mrb[0].mxu0
        %v3515 = vadd.f32 0.0, %v3514
        %v3516 = vpop.f32.mrb[0].mxu0
        %3517 = vmatprep.mubr.f32.mxu0 0.0
        %3518 = vmatmul.mubr.f32.gmra.mrb[0].mxu0 %v3240
        %v3519 = vpop.f32.mrb[0].mxu0
        %v3520 = vadd.f32 0.0, %v3519
        %v3521 = vpop.f32.mrb[0].mxu0
        %3522 = vmatprep.mubr.f32.mxu0 0.0
        %3523 = vmatmul.mubr.f32.gmra.mrb[0].mxu0 %v3243
        %v3524 = vpop.f32.mrb[0].mxu0
        %v3525 = vadd.f32 0.0, %v3524
        %v3526 = vpop.f32.mrb[0].mxu0
        %3527 = vmatprep.mubr.f32.mxu0 0.0
        %3528 = vmatmul.mubr.f32.gmra.mrb[0].mxu0 %v3246
        %v3529 = vpop.f32.mrb[0].mxu0
        %v3530 = vadd.f32 0.0, %v3529
        %v3531 = vpop.f32.mrb[0].mxu0
        %3532 = vmatprep.mubr.f32.mxu0 0.0
        %3533 = vmatmul.mubr.f32.gmra.mrb[0].mxu0 %v3249
        %v3534 = vpop.f32.mrb[0].mxu0
        %v3535 = vadd.f32 0.0, %v3534
        %v3536 = vpop.f32.mrb[0].mxu0
        %3537 = vmatprep.mubr.f32.mxu0 0.0
        %3538 = vmatmul.mubr.f32.gmra.mrb[0].mxu0 %v3252
        %v3539 = vpop.f32.mrb[0].mxu0
        %v3540 = vadd.f32 0.0, %v3539
        %v3541 = vpop.f32.mrb[0].mxu0
        %3542 = vmatprep.mubr.f32.mxu0 0.0
        %3543 = vmatmul.mubr.f32.gmra.mrb[0].mxu0 %v3255
        %v3544 = vpop.f32.mrb[0].mxu0
        %v3545 = vadd.f32 0.0, %v3544
        %v3546 = vpop.f32.mrb[0].mxu0
        %3547 = vmatprep.mubr.f32.mxu0 0.0
        %3548 = vmatmul.mubr.f32.gmra.mrb[0].mxu0 %v3258
        %v3549 = vpop.f32.mrb[0].mxu0
        %v3550 = vadd.f32 0.0, %v3549
        %v3551 = vpop.f32.mrb[0].mxu0
        %3552 = vmatprep.mubr.f32.mxu0 0.0
        %3553 = vmatmul.mubr.f32.gmra.mrb[0].mxu0 %v3261
        %v3554 = vpop.f32.mrb[0].mxu0
        %v3555 = vadd.f32 0.0, %v3554
        %v3556 = vpop.f32.mrb[0].mxu0
        %3557 = vmatprep.mubr.f32.mxu0 0.0
        %3558 = vmatmul.mubr.f32.gmra.mrb[0].mxu0 %v3264
        %v3559 = vpop.f32.mrb[0].mxu0
        %v3560 = vadd.f32 0.0, %v3559
        %v3561 = vpop.f32.mrb[0].mxu0
        %3562 = vmatprep.mubr.f32.mxu0 0.0
        %3563 = vmatmul.mubr.f32.gmra.mrb[0].mxu0 %v3267
        %v3564 = vpop.f32.mrb[0].mxu0
        %v3565 = vadd.f32 0.0, %v3564
        %v3566 = vpop.f32.mrb[0].mxu0
        %3567 = vmatprep.mubr.f32.mxu0 0.0
        %3568 = vmatmul.mubr.f32.gmra.mrb[0].mxu0 %v3270
        %v3569 = vpop.f32.mrb[0].mxu0
        %v3570 = vadd.f32 0.0, %v3569
        %v3571 = vpop.f32.mrb[0].mxu0
        %3572 = vmatprep.mubr.f32.mxu0 0.0
        %3573 = vmatmul.mubr.f32.gmra.mrb[0].mxu0 %v3273
        %v3574 = vpop.f32.mrb[0].mxu0
        %v3575 = vadd.f32 0.0, %v3574
        %v3576 = vpop.f32.mrb[0].mxu0
        %3577 = vmatprep.mubr.f32.mxu0 0.0
        %3578 = vmatmul.mubr.f32.gmra.mrb[0].mxu0 %v3276
        %v3579 = vpop.f32.mrb[0].mxu0
        %v3580 = vadd.f32 0.0, %v3579
        %v3581 = vpop.f32.mrb[0].mxu0
        %3582 = vmatprep.mubr.f32.mxu0 0.0
        %3583 = vmatmul.mubr.f32.gmra.mrb[0].mxu0 %v3279
        %v3584 = vpop.f32.mrb[0].mxu0
        %v3585 = vadd.f32 0.0, %v3584
        %v3586 = vpop.f32.mrb[0].mxu0
        %3587 = vmatprep.mubr.f32.mxu0 0.0
        %3588 = vmatmul.mubr.f32.gmra.mrb[0].mxu0 %v3282
        %v3589 = vpop.f32.mrb[0].mxu0
        %v3590 = vadd.f32 0.0, %v3589
        %v3591 = vpop.f32.mrb[0].mxu0
        %3592 = vmatprep.mubr.f32.mxu0 0.0
        %3593 = vmatmul.mubr.f32.gmra.mrb[0].mxu0 %v3285
        %v3594 = vpop.f32.mrb[0].mxu0
        %v3595 = vadd.f32 0.0, %v3594
        %v3596 = vpop.f32.mrb[0].mxu0
        %3597 = vmatprep.mubr.f32.mxu0 0.0
        %3598 = vmatmul.mubr.f32.gmra.mrb[0].mxu0 %v3288
        %v3599 = vpop.f32.mrb[0].mxu0
        %v3600 = vadd.f32 0.0, %v3599
        %v3601 = vpop.f32.mrb[0].mxu0
        %3602 = vmatprep.mubr.f32.mxu0 0.0
        %3603 = vmatmul.mubr.f32.gmra.mrb[0].mxu0 %v3291
        %v3604 = vpop.f32.mrb[0].mxu0
        %v3605 = vadd.f32 0.0, %v3604
        %v3606 = vpop.f32.mrb[0].mxu0
        %3607 = vdwg.mxu0
        %v3608 = vmax.f32 %v3042, %v3360
        %v3609 = vmax.f32 %v3043, %v3365
        %v3610 = vmax.f32 %v3044, %v3370
        %v3611 = vmax.f32 %v3045, %v3375
        %v3612 = vmax.f32 %v3046, %v3380
        %v3613 = vmax.f32 %v3047, %v3385
        %v3614 = vmax.f32 %v3048, %v3390
        %v3615 = vmax.f32 %v3049, %v3395
        %v3616 = vmax.f32 %v3050, %v3400
        %v3617 = vmax.f32 %v3051, %v3405
        %v3618 = vmax.f32 %v3052, %v3410
        %v3619 = vmax.f32 %v3053, %v3415
        %v3620 = vmax.f32 %v3054, %v3420
        %v3621 = vmax.f32 %v3055, %v3425
        %v3622 = vmax.f32 %v3056, %v3430
        %v3623 = vmax.f32 %v3057, %v3435
        %v3624 = vmax.f32 %v3058, %v3440
        %v3625 = vmax.f32 %v3059, %v3445
        %v3626 = vmax.f32 %v3060, %v3450
        %v3627 = vmax.f32 %v3061, %v3455
        %v3628 = vmax.f32 %v3062, %v3460
        %v3629 = vmax.f32 %v3063, %v3465
        %v3630 = vmax.f32 %v3064, %v3470
        %v3631 = vmax.f32 %v3065, %v3475
        %v3632 = vmax.f32 %v3066, %v3480
        %v3633 = vmax.f32 %v3067, %v3485
        %v3634 = vmax.f32 %v3068, %v3490
        %v3635 = vmax.f32 %v3069, %v3495
        %v3636 = vmax.f32 %v3070, %v3500
        %v3637 = vmax.f32 %v3071, %v3505
        %v3638 = vmax.f32 %v3072, %v3510
        %v3639 = vmax.f32 %v3073, %v3515
        %v3640 = vmax.f32 %v3074, %v3520
        %v3641 = vmax.f32 %v3075, %v3525
        %v3642 = vmax.f32 %v3076, %v3530
        %v3643 = vmax.f32 %v3077, %v3535
        %v3644 = vmax.f32 %v3078, %v3540
        %v3645 = vmax.f32 %v3079, %v3545
        %v3646 = vmax.f32 %v3080, %v3550
        %v3647 = vmax.f32 %v3081, %v3555
        %v3648 = vmax.f32 %v3082, %v3560
        %v3649 = vmax.f32 %v3083, %v3565
        %v3650 = vmax.f32 %v3084, %v3570
        %v3651 = vmax.f32 %v3085, %v3575
        %v3652 = vmax.f32 %v3086, %v3580
        %v3653 = vmax.f32 %v3087, %v3585
        %v3654 = vmax.f32 %v3088, %v3590
        %v3655 = vmax.f32 %v3089, %v3595
        %v3656 = vmax.f32 %v3090, %v3600
        %v3657 = vmax.f32 %v3091, %v3605
        %s3658 = scalar_lea.vmem %s1976, 1200 [#allocation2]
        %v3659 = vld [vmem:[%s3658] sm:$0xff]
        %v3660 = vld [vmem:[%s3658 + $0x8] sm:$0xff]
        %v3661 = vld [vmem:[%s3658 + $0x10] sm:$0xff]
        %v3662 = vld [vmem:[%s3658 + $0x18] sm:$0xff]
        %v3663 = vld [vmem:[%s3658 + $0x20] sm:$0xff]
        %v3664 = vld [vmem:[%s3658 + $0x28] sm:$0xff]
        %v3665 = vld [vmem:[%s3658 + $0x30] sm:$0xff]
        %v3666 = vld [vmem:[%s3658 + $0x38] sm:$0xff]
        %v3667 = vld [vmem:[%s3658 + $0x40] sm:$0xff]
        %v3668 = vld [vmem:[%s3658 + $0x48] sm:$0xff]
        %v3669 = vld [vmem:[%s3658 + $0x50] sm:$0xff]
        %v3670 = vld [vmem:[%s3658 + $0x58] sm:$0xff]
        %v3671 = vld [vmem:[%s3658 + $0x60] sm:$0xff]
        %v3672 = vld [vmem:[%s3658 + $0x68] sm:$0xff]
        %v3673 = vld [vmem:[%s3658 + $0x70] sm:$0xff]
        %v3674 = vld [vmem:[%s3658 + $0x78] sm:$0xff]
        %v3675 = vld [vmem:[%s3658 + $0x80] sm:$0xff]
        %v3676 = vld [vmem:[%s3658 + $0x88] sm:$0xff]
        %v3677 = vld [vmem:[%s3658 + $0x90] sm:$0xff]
        %v3678 = vld [vmem:[%s3658 + $0x98] sm:$0xff]
        %v3679 = vld [vmem:[%s3658 + $0xa0] sm:$0xff]
        %v3680 = vld [vmem:[%s3658 + $0xa8] sm:$0xff]
        %v3681 = vld [vmem:[%s3658 + $0xb0] sm:$0xff]
        %v3682 = vld [vmem:[%s3658 + $0xb8] sm:$0xff]
        %v3683 = vld [vmem:[%s3658 + $0xc0] sm:$0xff]
        %v3684 = vld [vmem:[%s3658 + $0xc8] sm:$0xff]
        %v3685 = vld [vmem:[%s3658 + $0xd0] sm:$0xff]
        %v3686 = vld [vmem:[%s3658 + $0xd8] sm:$0xff]
        %v3687 = vld [vmem:[%s3658 + $0xe0] sm:$0xff]
        %v3688 = vld [vmem:[%s3658 + $0xe8] sm:$0xff]
        %v3689 = vld [vmem:[%s3658 + $0xf0] sm:$0xff]
        %v3690 = vld [vmem:[%s3658 + $0xf8] sm:$0xff]
        %v3691 = vld [vmem:[%s3658 + $0x100] sm:$0xff]
        %v3692 = vld [vmem:[%s3658 + $0x108] sm:$0xff]
        %v3693 = vld [vmem:[%s3658 + $0x110] sm:$0xff]
        %v3694 = vld [vmem:[%s3658 + $0x118] sm:$0xff]
        %v3695 = vld [vmem:[%s3658 + $0x120] sm:$0xff]
        %v3696 = vld [vmem:[%s3658 + $0x128] sm:$0xff]
        %v3697 = vld [vmem:[%s3658 + $0x130] sm:$0xff]
        %v3698 = vld [vmem:[%s3658 + $0x138] sm:$0xff]
        %v3699 = vld [vmem:[%s3658 + $0x140] sm:$0xff]
        %v3700 = vld [vmem:[%s3658 + $0x148] sm:$0xff]
        %v3701 = vld [vmem:[%s3658 + $0x150] sm:$0xff]
        %v3702 = vld [vmem:[%s3658 + $0x158] sm:$0xff]
        %v3703 = vld [vmem:[%s3658 + $0x160] sm:$0xff]
        %v3704 = vld [vmem:[%s3658 + $0x168] sm:$0xff]
        %v3705 = vld [vmem:[%s3658 + $0x170] sm:$0xff]
        %v3706 = vld [vmem:[%s3658 + $0x178] sm:$0xff]
        %v3707 = vld [vmem:[%s3658 + $0x180] sm:$0xff]
        %v3708 = vld [vmem:[%s3658 + $0x188] sm:$0xff]
        %v3710 = vsel %vm2056, %v3659, 0
        %v3713 = vsel %vm2056, %v3660, 0
        %v3716 = vsel %vm2056, %v3661, 0
        %v3719 = vsel %vm2056, %v3662, 0
        %v3722 = vsel %vm2056, %v3663, 0
        %v3725 = vsel %vm2056, %v3664, 0
        %v3728 = vsel %vm2056, %v3665, 0
        %v3731 = vsel %vm2056, %v3666, 0
        %v3734 = vsel %vm2056, %v3667, 0
        %v3737 = vsel %vm2056, %v3668, 0
        %v3740 = vsel %vm2056, %v3669, 0
        %v3743 = vsel %vm2056, %v3670, 0
        %v3746 = vsel %vm2056, %v3671, 0
        %v3749 = vsel %vm2056, %v3672, 0
        %v3752 = vsel %vm2056, %v3673, 0
        %v3755 = vsel %vm2056, %v3674, 0
        %v3758 = vsel %vm2056, %v3675, 0
        %v3761 = vsel %vm2056, %v3676, 0
        %v3764 = vsel %vm2056, %v3677, 0
        %v3767 = vsel %vm2056, %v3678, 0
        %v3770 = vsel %vm2056, %v3679, 0
        %v3773 = vsel %vm2056, %v3680, 0
        %v3776 = vsel %vm2056, %v3681, 0
        %v3779 = vsel %vm2056, %v3682, 0
        %v3782 = vsel %vm2056, %v3683, 0
        %v3785 = vsel %vm2056, %v3684, 0
        %v3788 = vsel %vm2056, %v3685, 0
        %v3791 = vsel %vm2056, %v3686, 0
        %v3794 = vsel %vm2056, %v3687, 0
        %v3797 = vsel %vm2056, %v3688, 0
        %v3800 = vsel %vm2056, %v3689, 0
        %v3803 = vsel %vm2056, %v3690, 0
        %v3806 = vsel %vm2056, %v3691, 0
        %v3809 = vsel %vm2056, %v3692, 0
        %v3812 = vsel %vm2056, %v3693, 0
        %v3815 = vsel %vm2056, %v3694, 0
        %v3818 = vsel %vm2056, %v3695, 0
        %v3821 = vsel %vm2056, %v3696, 0
        %v3824 = vsel %vm2056, %v3697, 0
        %v3827 = vsel %vm2056, %v3698, 0
        %v3830 = vsel %vm2056, %v3699, 0
        %v3833 = vsel %vm2056, %v3700, 0
        %v3836 = vsel %vm2056, %v3701, 0
        %v3839 = vsel %vm2056, %v3702, 0
        %v3842 = vsel %vm2056, %v3703, 0
        %v3845 = vsel %vm2056, %v3704, 0
        %v3848 = vsel %vm2056, %v3705, 0
        %v3851 = vsel %vm2056, %v3706, 0
        %v3854 = vsel %vm2056, %v3707, 0
        %v3857 = vsel %vm2056, %v3708, 0
        %3859 = vmatprep.subr.mxu0 0.0
        %3860 = vmatpush1.msra.mxu0 %v2054
        %3861 = vmatprep.subr.mxu0 0.0
        %3862 = vmatpush1.msra.mxu0 %v2209
        %3863 = vmatprep.subr.mxu0 0.0
        %3864 = vmatpush1.msra.mxu0 0.0
        %3865 = vmatprep.subr.mxu0 0.0
        %3866 = vmatpush1.msra.mxu0 0.0
        %3867 = vmatprep.subr.mxu0 0.0
        %3868 = vmatpush1.msra.mxu0 0.0
        %3869 = vmatprep.subr.mxu0 0.0
        %3870 = vmatpush1.msra.mxu0 0.0
        %3871 = vmatprep.subr.mxu0 0.0
        %3872 = vmatpush1.msra.mxu0 0.0
        %3873 = vmatprep.subr.mxu0 0.0
        %3874 = vmatpush1.msra.mxu0 0.0
        %3875 = vmatprep.subr.mxu0 0.0
        %3876 = vmatpush1.msra.mxu0 0.0
        %3877 = vmatprep.subr.mxu0 0.0
        %3878 = vmatpush1.msra.mxu0 0.0
        %3879 = vmatprep.subr.mxu0 0.0
        %3880 = vmatpush1.msra.mxu0 0.0
        %3881 = vmatprep.subr.mxu0 0.0
        %3882 = vmatpush1.msra.mxu0 0.0
        %3883 = vmatprep.subr.mxu0 0.0
        %3884 = vmatpush1.msra.mxu0 0.0
        %3885 = vmatprep.subr.mxu0 0.0
        %3886 = vmatpush1.msra.mxu0 0.0
        %3887 = vmatprep.subr.mxu0 0.0
        %3888 = vmatpush1.msra.mxu0 0.0
        %3889 = vmatprep.subr.mxu0 0.0
        %3890 = vmatpush1.msra.mxu0 0.0
        %3891 = vmatprep.subr.mxu0 0.0
        %3892 = vmatpush1.msra.mxu0 0.0
        %3893 = vmatprep.subr.mxu0 0.0
        %3894 = vmatpush1.msra.mxu0 0.0
        %3895 = vmatprep.subr.mxu0 0.0
        %3896 = vmatpush1.msra.mxu0 0.0
        %3897 = vmatprep.subr.mxu0 0.0
        %3898 = vmatpush1.msra.mxu0 0.0
        %3899 = vmatprep.subr.mxu0 0.0
        %3900 = vmatpush1.msra.mxu0 0.0
        %3901 = vmatprep.subr.mxu0 0.0
        %3902 = vmatpush1.msra.mxu0 0.0
        %3903 = vmatprep.subr.mxu0 0.0
        %3904 = vmatpush1.msra.mxu0 0.0
        %3905 = vmatprep.subr.mxu0 0.0
        %3906 = vmatpush1.msra.mxu0 0.0
        %3907 = vmatprep.subr.mxu0 0.0
        %3908 = vmatpush1.msra.mxu0 0.0
        %3909 = vmatprep.subr.mxu0 0.0
        %3910 = vmatpush1.msra.mxu0 0.0
        %3911 = vmatprep.subr.mxu0 0.0
        %3912 = vmatpush1.msra.mxu0 0.0
        %3913 = vmatprep.subr.mxu0 0.0
        %3914 = vmatpush1.msra.mxu0 0.0
        %3915 = vmatprep.subr.mxu0 0.0
        %3916 = vmatpush1.msra.mxu0 0.0
        %3917 = vmatprep.subr.mxu0 0.0
        %3918 = vmatpush1.msra.mxu0 0.0
        %3919 = vmatprep.subr.mxu0 0.0
        %3920 = vmatpush1.msra.mxu0 0.0
        %3921 = vmatprep.subr.mxu0 0.0
        %3922 = vmatpush1.msra.mxu0 0.0
        %3923 = vmatprep.mubr.f32.mxu0 0.0
        %3924 = vmatmul.mubr.f32.gmra.mrb[0].mxu0 %v3710
        %v3925 = vpop.f32.mrb[0].mxu0
        %v3926 = vadd.f32 0.0, %v3925
        %v3927 = vpop.f32.mrb[0].mxu0
        %3928 = vmatprep.mubr.f32.mxu0 0.0
        %3929 = vmatmul.mubr.f32.gmra.mrb[0].mxu0 %v3713
        %v3930 = vpop.f32.mrb[0].mxu0
        %v3931 = vadd.f32 0.0, %v3930
        %v3932 = vpop.f32.mrb[0].mxu0
        %3933 = vmatprep.mubr.f32.mxu0 0.0
        %3934 = vmatmul.mubr.f32.gmra.mrb[0].mxu0 %v3716
        %v3935 = vpop.f32.mrb[0].mxu0
        %v3936 = vadd.f32 0.0, %v3935
        %v3937 = vpop.f32.mrb[0].mxu0
        %3938 = vmatprep.mubr.f32.mxu0 0.0
        %3939 = vmatmul.mubr.f32.gmra.mrb[0].mxu0 %v3719
        %v3940 = vpop.f32.mrb[0].mxu0
        %v3941 = vadd.f32 0.0, %v3940
        %v3942 = vpop.f32.mrb[0].mxu0
        %3943 = vmatprep.mubr.f32.mxu0 0.0
        %3944 = vmatmul.mubr.f32.gmra.mrb[0].mxu0 %v3722
        %v3945 = vpop.f32.mrb[0].mxu0
        %v3946 = vadd.f32 0.0, %v3945
        %v3947 = vpop.f32.mrb[0].mxu0
        %3948 = vmatprep.mubr.f32.mxu0 0.0
        %3949 = vmatmul.mubr.f32.gmra.mrb[0].mxu0 %v3725
        %v3950 = vpop.f32.mrb[0].mxu0
        %v3951 = vadd.f32 0.0, %v3950
        %v3952 = vpop.f32.mrb[0].mxu0
        %3953 = vmatprep.mubr.f32.mxu0 0.0
        %3954 = vmatmul.mubr.f32.gmra.mrb[0].mxu0 %v3728
        %v3955 = vpop.f32.mrb[0].mxu0
        %v3956 = vadd.f32 0.0, %v3955
        %v3957 = vpop.f32.mrb[0].mxu0
        %3958 = vmatprep.mubr.f32.mxu0 0.0
        %3959 = vmatmul.mubr.f32.gmra.mrb[0].mxu0 %v3731
        %v3960 = vpop.f32.mrb[0].mxu0
        %v3961 = vadd.f32 0.0, %v3960
        %v3962 = vpop.f32.mrb[0].mxu0
        %3963 = vmatprep.mubr.f32.mxu0 0.0
        %3964 = vmatmul.mubr.f32.gmra.mrb[0].mxu0 %v3734
        %v3965 = vpop.f32.mrb[0].mxu0
        %v3966 = vadd.f32 0.0, %v3965
        %v3967 = vpop.f32.mrb[0].mxu0
        %3968 = vmatprep.mubr.f32.mxu0 0.0
        %3969 = vmatmul.mubr.f32.gmra.mrb[0].mxu0 %v3737
        %v3970 = vpop.f32.mrb[0].mxu0
        %v3971 = vadd.f32 0.0, %v3970
        %v3972 = vpop.f32.mrb[0].mxu0
        %3973 = vmatprep.mubr.f32.mxu0 0.0
        %3974 = vmatmul.mubr.f32.gmra.mrb[0].mxu0 %v3740
        %v3975 = vpop.f32.mrb[0].mxu0
        %v3976 = vadd.f32 0.0, %v3975
        %v3977 = vpop.f32.mrb[0].mxu0
        %3978 = vmatprep.mubr.f32.mxu0 0.0
        %3979 = vmatmul.mubr.f32.gmra.mrb[0].mxu0 %v3743
        %v3980 = vpop.f32.mrb[0].mxu0
        %v3981 = vadd.f32 0.0, %v3980
        %v3982 = vpop.f32.mrb[0].mxu0
        %3983 = vmatprep.mubr.f32.mxu0 0.0
        %3984 = vmatmul.mubr.f32.gmra.mrb[0].mxu0 %v3746
        %v3985 = vpop.f32.mrb[0].mxu0
        %v3986 = vadd.f32 0.0, %v3985
        %v3987 = vpop.f32.mrb[0].mxu0
        %3988 = vmatprep.mubr.f32.mxu0 0.0
        %3989 = vmatmul.mubr.f32.gmra.mrb[0].mxu0 %v3749
        %v3990 = vpop.f32.mrb[0].mxu0
        %v3991 = vadd.f32 0.0, %v3990
        %v3992 = vpop.f32.mrb[0].mxu0
        %3993 = vmatprep.mubr.f32.mxu0 0.0
        %3994 = vmatmul.mubr.f32.gmra.mrb[0].mxu0 %v3752
        %v3995 = vpop.f32.mrb[0].mxu0
        %v3996 = vadd.f32 0.0, %v3995
        %v3997 = vpop.f32.mrb[0].mxu0
        %3998 = vmatprep.mubr.f32.mxu0 0.0
        %3999 = vmatmul.mubr.f32.gmra.mrb[0].mxu0 %v3755
        %v4000 = vpop.f32.mrb[0].mxu0
        %v4001 = vadd.f32 0.0, %v4000
        %v4002 = vpop.f32.mrb[0].mxu0
        %4003 = vmatprep.mubr.f32.mxu0 0.0
        %4004 = vmatmul.mubr.f32.gmra.mrb[0].mxu0 %v3758
        %v4005 = vpop.f32.mrb[0].mxu0
        %v4006 = vadd.f32 0.0, %v4005
        %v4007 = vpop.f32.mrb[0].mxu0
        %4008 = vmatprep.mubr.f32.mxu0 0.0
        %4009 = vmatmul.mubr.f32.gmra.mrb[0].mxu0 %v3761
        %v4010 = vpop.f32.mrb[0].mxu0
        %v4011 = vadd.f32 0.0, %v4010
        %v4012 = vpop.f32.mrb[0].mxu0
        %4013 = vmatprep.mubr.f32.mxu0 0.0
        %4014 = vmatmul.mubr.f32.gmra.mrb[0].mxu0 %v3764
        %v4015 = vpop.f32.mrb[0].mxu0
        %v4016 = vadd.f32 0.0, %v4015
        %v4017 = vpop.f32.mrb[0].mxu0
        %4018 = vmatprep.mubr.f32.mxu0 0.0
        %4019 = vmatmul.mubr.f32.gmra.mrb[0].mxu0 %v3767
        %v4020 = vpop.f32.mrb[0].mxu0
        %v4021 = vadd.f32 0.0, %v4020
        %v4022 = vpop.f32.mrb[0].mxu0
        %4023 = vmatprep.mubr.f32.mxu0 0.0
        %4024 = vmatmul.mubr.f32.gmra.mrb[0].mxu0 %v3770
        %v4025 = vpop.f32.mrb[0].mxu0
        %v4026 = vadd.f32 0.0, %v4025
        %v4027 = vpop.f32.mrb[0].mxu0
        %4028 = vmatprep.mubr.f32.mxu0 0.0
        %4029 = vmatmul.mubr.f32.gmra.mrb[0].mxu0 %v3773
        %v4030 = vpop.f32.mrb[0].mxu0
        %v4031 = vadd.f32 0.0, %v4030
        %v4032 = vpop.f32.mrb[0].mxu0
        %4033 = vmatprep.mubr.f32.mxu0 0.0
        %4034 = vmatmul.mubr.f32.gmra.mrb[0].mxu0 %v3776
        %v4035 = vpop.f32.mrb[0].mxu0
        %v4036 = vadd.f32 0.0, %v4035
        %v4037 = vpop.f32.mrb[0].mxu0
        %4038 = vmatprep.mubr.f32.mxu0 0.0
        %4039 = vmatmul.mubr.f32.gmra.mrb[0].mxu0 %v3779
        %v4040 = vpop.f32.mrb[0].mxu0
        %v4041 = vadd.f32 0.0, %v4040
        %v4042 = vpop.f32.mrb[0].mxu0
        %4043 = vmatprep.mubr.f32.mxu0 0.0
        %4044 = vmatmul.mubr.f32.gmra.mrb[0].mxu0 %v3782
        %v4045 = vpop.f32.mrb[0].mxu0
        %v4046 = vadd.f32 0.0, %v4045
        %v4047 = vpop.f32.mrb[0].mxu0
        %4048 = vmatprep.mubr.f32.mxu0 0.0
        %4049 = vmatmul.mubr.f32.gmra.mrb[0].mxu0 %v3785
        %v4050 = vpop.f32.mrb[0].mxu0
        %v4051 = vadd.f32 0.0, %v4050
        %v4052 = vpop.f32.mrb[0].mxu0
        %4053 = vmatprep.mubr.f32.mxu0 0.0
        %4054 = vmatmul.mubr.f32.gmra.mrb[0].mxu0 %v3788
        %v4055 = vpop.f32.mrb[0].mxu0
        %v4056 = vadd.f32 0.0, %v4055
        %v4057 = vpop.f32.mrb[0].mxu0
        %4058 = vmatprep.mubr.f32.mxu0 0.0
        %4059 = vmatmul.mubr.f32.gmra.mrb[0].mxu0 %v3791
        %v4060 = vpop.f32.mrb[0].mxu0
        %v4061 = vadd.f32 0.0, %v4060
        %v4062 = vpop.f32.mrb[0].mxu0
        %4063 = vmatprep.mubr.f32.mxu0 0.0
        %4064 = vmatmul.mubr.f32.gmra.mrb[0].mxu0 %v3794
        %v4065 = vpop.f32.mrb[0].mxu0
        %v4066 = vadd.f32 0.0, %v4065
        %v4067 = vpop.f32.mrb[0].mxu0
        %4068 = vmatprep.mubr.f32.mxu0 0.0
        %4069 = vmatmul.mubr.f32.gmra.mrb[0].mxu0 %v3797
        %v4070 = vpop.f32.mrb[0].mxu0
        %v4071 = vadd.f32 0.0, %v4070
        %v4072 = vpop.f32.mrb[0].mxu0
        %4073 = vmatprep.mubr.f32.mxu0 0.0
        %4074 = vmatmul.mubr.f32.gmra.mrb[0].mxu0 %v3800
        %v4075 = vpop.f32.mrb[0].mxu0
        %v4076 = vadd.f32 0.0, %v4075
        %v4077 = vpop.f32.mrb[0].mxu0
        %4078 = vmatprep.mubr.f32.mxu0 0.0
        %4079 = vmatmul.mubr.f32.gmra.mrb[0].mxu0 %v3803
        %v4080 = vpop.f32.mrb[0].mxu0
        %v4081 = vadd.f32 0.0, %v4080
        %v4082 = vpop.f32.mrb[0].mxu0
        %4083 = vmatprep.mubr.f32.mxu0 0.0
        %4084 = vmatmul.mubr.f32.gmra.mrb[0].mxu0 %v3806
        %v4085 = vpop.f32.mrb[0].mxu0
        %v4086 = vadd.f32 0.0, %v4085
        %v4087 = vpop.f32.mrb[0].mxu0
        %4088 = vmatprep.mubr.f32.mxu0 0.0
        %4089 = vmatmul.mubr.f32.gmra.mrb[0].mxu0 %v3809
        %v4090 = vpop.f32.mrb[0].mxu0
        %v4091 = vadd.f32 0.0, %v4090
        %v4092 = vpop.f32.mrb[0].mxu0
        %4093 = vmatprep.mubr.f32.mxu0 0.0
        %4094 = vmatmul.mubr.f32.gmra.mrb[0].mxu0 %v3812
        %v4095 = vpop.f32.mrb[0].mxu0
        %v4096 = vadd.f32 0.0, %v4095
        %v4097 = vpop.f32.mrb[0].mxu0
        %4098 = vmatprep.mubr.f32.mxu0 0.0
        %4099 = vmatmul.mubr.f32.gmra.mrb[0].mxu0 %v3815
        %v4100 = vpop.f32.mrb[0].mxu0
        %v4101 = vadd.f32 0.0, %v4100
        %v4102 = vpop.f32.mrb[0].mxu0
        %4103 = vmatprep.mubr.f32.mxu0 0.0
        %4104 = vmatmul.mubr.f32.gmra.mrb[0].mxu0 %v3818
        %v4105 = vpop.f32.mrb[0].mxu0
        %v4106 = vadd.f32 0.0, %v4105
        %v4107 = vpop.f32.mrb[0].mxu0
        %4108 = vmatprep.mubr.f32.mxu0 0.0
        %4109 = vmatmul.mubr.f32.gmra.mrb[0].mxu0 %v3821
        %v4110 = vpop.f32.mrb[0].mxu0
        %v4111 = vadd.f32 0.0, %v4110
        %v4112 = vpop.f32.mrb[0].mxu0
        %4113 = vmatprep.mubr.f32.mxu0 0.0
        %4114 = vmatmul.mubr.f32.gmra.mrb[0].mxu0 %v3824
        %v4115 = vpop.f32.mrb[0].mxu0
        %v4116 = vadd.f32 0.0, %v4115
        %v4117 = vpop.f32.mrb[0].mxu0
        %4118 = vmatprep.mubr.f32.mxu0 0.0
        %4119 = vmatmul.mubr.f32.gmra.mrb[0].mxu0 %v3827
        %v4120 = vpop.f32.mrb[0].mxu0
        %v4121 = vadd.f32 0.0, %v4120
        %v4122 = vpop.f32.mrb[0].mxu0
        %4123 = vmatprep.mubr.f32.mxu0 0.0
        %4124 = vmatmul.mubr.f32.gmra.mrb[0].mxu0 %v3830
        %v4125 = vpop.f32.mrb[0].mxu0
        %v4126 = vadd.f32 0.0, %v4125
        %v4127 = vpop.f32.mrb[0].mxu0
        %4128 = vmatprep.mubr.f32.mxu0 0.0
        %4129 = vmatmul.mubr.f32.gmra.mrb[0].mxu0 %v3833
        %v4130 = vpop.f32.mrb[0].mxu0
        %v4131 = vadd.f32 0.0, %v4130
        %v4132 = vpop.f32.mrb[0].mxu0
        %4133 = vmatprep.mubr.f32.mxu0 0.0
        %4134 = vmatmul.mubr.f32.gmra.mrb[0].mxu0 %v3836
        %v4135 = vpop.f32.mrb[0].mxu0
        %v4136 = vadd.f32 0.0, %v4135
        %v4137 = vpop.f32.mrb[0].mxu0
        %4138 = vmatprep.mubr.f32.mxu0 0.0
        %4139 = vmatmul.mubr.f32.gmra.mrb[0].mxu0 %v3839
        %v4140 = vpop.f32.mrb[0].mxu0
        %v4141 = vadd.f32 0.0, %v4140
        %v4142 = vpop.f32.mrb[0].mxu0
        %4143 = vmatprep.mubr.f32.mxu0 0.0
        %4144 = vmatmul.mubr.f32.gmra.mrb[0].mxu0 %v3842
        %v4145 = vpop.f32.mrb[0].mxu0
        %v4146 = vadd.f32 0.0, %v4145
        %v4147 = vpop.f32.mrb[0].mxu0
        %4148 = vmatprep.mubr.f32.mxu0 0.0
        %4149 = vmatmul.mubr.f32.gmra.mrb[0].mxu0 %v3845
        %v4150 = vpop.f32.mrb[0].mxu0
        %v4151 = vadd.f32 0.0, %v4150
        %v4152 = vpop.f32.mrb[0].mxu0
        %4153 = vmatprep.mubr.f32.mxu0 0.0
        %4154 = vmatmul.mubr.f32.gmra.mrb[0].mxu0 %v3848
        %v4155 = vpop.f32.mrb[0].mxu0
        %v4156 = vadd.f32 0.0, %v4155
        %v4157 = vpop.f32.mrb[0].mxu0
        %4158 = vmatprep.mubr.f32.mxu0 0.0
        %4159 = vmatmul.mubr.f32.gmra.mrb[0].mxu0 %v3851
        %v4160 = vpop.f32.mrb[0].mxu0
        %v4161 = vadd.f32 0.0, %v4160
        %v4162 = vpop.f32.mrb[0].mxu0
        %4163 = vmatprep.mubr.f32.mxu0 0.0
        %4164 = vmatmul.mubr.f32.gmra.mrb[0].mxu0 %v3854
        %v4165 = vpop.f32.mrb[0].mxu0
        %v4166 = vadd.f32 0.0, %v4165
        %v4167 = vpop.f32.mrb[0].mxu0
        %4168 = vmatprep.mubr.f32.mxu0 0.0
        %4169 = vmatmul.mubr.f32.gmra.mrb[0].mxu0 %v3857
        %v4170 = vpop.f32.mrb[0].mxu0
        %v4171 = vadd.f32 0.0, %v4170
        %v4172 = vpop.f32.mrb[0].mxu0
        %4173 = vdwg.mxu0
        %v4174 = vmax.f32 %v3608, %v3926
        %v4175 = vmax.f32 %v3609, %v3931
        %v4176 = vmax.f32 %v3610, %v3936
        %v4177 = vmax.f32 %v3611, %v3941
        %v4178 = vmax.f32 %v3612, %v3946
        %v4179 = vmax.f32 %v3613, %v3951
        %v4180 = vmax.f32 %v3614, %v3956
        %v4181 = vmax.f32 %v3615, %v3961
        %v4182 = vmax.f32 %v3616, %v3966
        %v4183 = vmax.f32 %v3617, %v3971
        %v4184 = vmax.f32 %v3618, %v3976
        %v4185 = vmax.f32 %v3619, %v3981
        %v4186 = vmax.f32 %v3620, %v3986
        %v4187 = vmax.f32 %v3621, %v3991
        %v4188 = vmax.f32 %v3622, %v3996
        %v4189 = vmax.f32 %v3623, %v4001
        %v4190 = vmax.f32 %v3624, %v4006
        %v4191 = vmax.f32 %v3625, %v4011
        %v4192 = vmax.f32 %v3626, %v4016
        %v4193 = vmax.f32 %v3627, %v4021
        %v4194 = vmax.f32 %v3628, %v4026
        %v4195 = vmax.f32 %v3629, %v4031
        %v4196 = vmax.f32 %v3630, %v4036
        %v4197 = vmax.f32 %v3631, %v4041
        %v4198 = vmax.f32 %v3632, %v4046
        %v4199 = vmax.f32 %v3633, %v4051
        %v4200 = vmax.f32 %v3634, %v4056
        %v4201 = vmax.f32 %v3635, %v4061
        %v4202 = vmax.f32 %v3636, %v4066
        %v4203 = vmax.f32 %v3637, %v4071
        %v4204 = vmax.f32 %v3638, %v4076
        %v4205 = vmax.f32 %v3639, %v4081
        %v4206 = vmax.f32 %v3640, %v4086
        %v4207 = vmax.f32 %v3641, %v4091
        %v4208 = vmax.f32 %v3642, %v4096
        %v4209 = vmax.f32 %v3643, %v4101
        %v4210 = vmax.f32 %v3644, %v4106
        %v4211 = vmax.f32 %v3645, %v4111
        %v4212 = vmax.f32 %v3646, %v4116
        %v4213 = vmax.f32 %v3647, %v4121
        %v4214 = vmax.f32 %v3648, %v4126
        %v4215 = vmax.f32 %v3649, %v4131
        %v4216 = vmax.f32 %v3650, %v4136
        %v4217 = vmax.f32 %v3651, %v4141
        %v4218 = vmax.f32 %v3652, %v4146
        %v4219 = vmax.f32 %v3653, %v4151
        %v4220 = vmax.f32 %v3654, %v4156
        %v4221 = vmax.f32 %v3655, %v4161
        %v4222 = vmax.f32 %v3656, %v4166
        %v4223 = vmax.f32 %v3657, %v4171
        %s4224 = scalar_lea.vmem %s1976, 1600 [#allocation2]
        %v4225 = vld [vmem:[%s4224] sm:$0xff]
        %v4226 = vld [vmem:[%s4224 + $0x8] sm:$0xff]
        %v4227 = vld [vmem:[%s4224 + $0x10] sm:$0xff]
        %v4228 = vld [vmem:[%s4224 + $0x18] sm:$0xff]
        %v4229 = vld [vmem:[%s4224 + $0x20] sm:$0xff]
        %v4230 = vld [vmem:[%s4224 + $0x28] sm:$0xff]
        %v4231 = vld [vmem:[%s4224 + $0x30] sm:$0xff]
        %v4232 = vld [vmem:[%s4224 + $0x38] sm:$0xff]
        %v4233 = vld [vmem:[%s4224 + $0x40] sm:$0xff]
        %v4234 = vld [vmem:[%s4224 + $0x48] sm:$0xff]
        %v4235 = vld [vmem:[%s4224 + $0x50] sm:$0xff]
        %v4236 = vld [vmem:[%s4224 + $0x58] sm:$0xff]
        %v4237 = vld [vmem:[%s4224 + $0x60] sm:$0xff]
        %v4238 = vld [vmem:[%s4224 + $0x68] sm:$0xff]
        %v4239 = vld [vmem:[%s4224 + $0x70] sm:$0xff]
        %v4240 = vld [vmem:[%s4224 + $0x78] sm:$0xff]
        %v4241 = vld [vmem:[%s4224 + $0x80] sm:$0xff]
        %v4242 = vld [vmem:[%s4224 + $0x88] sm:$0xff]
        %v4243 = vld [vmem:[%s4224 + $0x90] sm:$0xff]
        %v4244 = vld [vmem:[%s4224 + $0x98] sm:$0xff]
        %v4245 = vld [vmem:[%s4224 + $0xa0] sm:$0xff]
        %v4246 = vld [vmem:[%s4224 + $0xa8] sm:$0xff]
        %v4247 = vld [vmem:[%s4224 + $0xb0] sm:$0xff]
        %v4248 = vld [vmem:[%s4224 + $0xb8] sm:$0xff]
        %v4249 = vld [vmem:[%s4224 + $0xc0] sm:$0xff]
        %v4250 = vld [vmem:[%s4224 + $0xc8] sm:$0xff]
        %v4251 = vld [vmem:[%s4224 + $0xd0] sm:$0xff]
        %v4252 = vld [vmem:[%s4224 + $0xd8] sm:$0xff]
        %v4253 = vld [vmem:[%s4224 + $0xe0] sm:$0xff]
        %v4254 = vld [vmem:[%s4224 + $0xe8] sm:$0xff]
        %v4255 = vld [vmem:[%s4224 + $0xf0] sm:$0xff]
        %v4256 = vld [vmem:[%s4224 + $0xf8] sm:$0xff]
        %v4257 = vld [vmem:[%s4224 + $0x100] sm:$0xff]
        %v4258 = vld [vmem:[%s4224 + $0x108] sm:$0xff]
        %v4259 = vld [vmem:[%s4224 + $0x110] sm:$0xff]
        %v4260 = vld [vmem:[%s4224 + $0x118] sm:$0xff]
        %v4261 = vld [vmem:[%s4224 + $0x120] sm:$0xff]
        %v4262 = vld [vmem:[%s4224 + $0x128] sm:$0xff]
        %v4263 = vld [vmem:[%s4224 + $0x130] sm:$0xff]
        %v4264 = vld [vmem:[%s4224 + $0x138] sm:$0xff]
        %v4265 = vld [vmem:[%s4224 + $0x140] sm:$0xff]
        %v4266 = vld [vmem:[%s4224 + $0x148] sm:$0xff]
        %v4267 = vld [vmem:[%s4224 + $0x150] sm:$0xff]
        %v4268 = vld [vmem:[%s4224 + $0x158] sm:$0xff]
        %v4269 = vld [vmem:[%s4224 + $0x160] sm:$0xff]
        %v4270 = vld [vmem:[%s4224 + $0x168] sm:$0xff]
        %v4271 = vld [vmem:[%s4224 + $0x170] sm:$0xff]
        %v4272 = vld [vmem:[%s4224 + $0x178] sm:$0xff]
        %v4273 = vld [vmem:[%s4224 + $0x180] sm:$0xff]
        %v4274 = vld [vmem:[%s4224 + $0x188] sm:$0xff]
        %v4276 = vsel %vm2056, %v4225, 0
        %v4279 = vsel %vm2056, %v4226, 0
        %v4282 = vsel %vm2056, %v4227, 0
        %v4285 = vsel %vm2056, %v4228, 0
        %v4288 = vsel %vm2056, %v4229, 0
        %v4291 = vsel %vm2056, %v4230, 0
        %v4294 = vsel %vm2056, %v4231, 0
        %v4297 = vsel %vm2056, %v4232, 0
        %v4300 = vsel %vm2056, %v4233, 0
        %v4303 = vsel %vm2056, %v4234, 0
        %v4306 = vsel %vm2056, %v4235, 0
        %v4309 = vsel %vm2056, %v4236, 0
        %v4312 = vsel %vm2056, %v4237, 0
        %v4315 = vsel %vm2056, %v4238, 0
        %v4318 = vsel %vm2056, %v4239, 0
        %v4321 = vsel %vm2056, %v4240, 0
        %v4324 = vsel %vm2056, %v4241, 0
        %v4327 = vsel %vm2056, %v4242, 0
        %v4330 = vsel %vm2056, %v4243, 0
        %v4333 = vsel %vm2056, %v4244, 0
        %v4336 = vsel %vm2056, %v4245, 0
        %v4339 = vsel %vm2056, %v4246, 0
        %v4342 = vsel %vm2056, %v4247, 0
        %v4345 = vsel %vm2056, %v4248, 0
        %v4348 = vsel %vm2056, %v4249, 0
        %v4351 = vsel %vm2056, %v4250, 0
        %v4354 = vsel %vm2056, %v4251, 0
        %v4357 = vsel %vm2056, %v4252, 0
        %v4360 = vsel %vm2056, %v4253, 0
        %v4363 = vsel %vm2056, %v4254, 0
        %v4366 = vsel %vm2056, %v4255, 0
        %v4369 = vsel %vm2056, %v4256, 0
        %v4372 = vsel %vm2056, %v4257, 0
        %v4375 = vsel %vm2056, %v4258, 0
        %v4378 = vsel %vm2056, %v4259, 0
        %v4381 = vsel %vm2056, %v4260, 0
        %v4384 = vsel %vm2056, %v4261, 0
        %v4387 = vsel %vm2056, %v4262, 0
        %v4390 = vsel %vm2056, %v4263, 0
        %v4393 = vsel %vm2056, %v4264, 0
        %v4396 = vsel %vm2056, %v4265, 0
        %v4399 = vsel %vm2056, %v4266, 0
        %v4402 = vsel %vm2056, %v4267, 0
        %v4405 = vsel %vm2056, %v4268, 0
        %v4408 = vsel %vm2056, %v4269, 0
        %v4411 = vsel %vm2056, %v4270, 0
        %v4414 = vsel %vm2056, %v4271, 0
        %v4417 = vsel %vm2056, %v4272, 0
        %v4420 = vsel %vm2056, %v4273, 0
        %v4423 = vsel %vm2056, %v4274, 0
        %4425 = vmatprep.subr.mxu0 0.0
        %4426 = vmatpush1.msra.mxu0 %v2054
        %4427 = vmatprep.subr.mxu0 0.0
        %4428 = vmatpush1.msra.mxu0 %v2209
        %4429 = vmatprep.subr.mxu0 0.0
        %4430 = vmatpush1.msra.mxu0 0.0
        %4431 = vmatprep.subr.mxu0 0.0
        %4432 = vmatpush1.msra.mxu0 0.0
        %4433 = vmatprep.subr.mxu0 0.0
        %4434 = vmatpush1.msra.mxu0 0.0
        %4435 = vmatprep.subr.mxu0 0.0
        %4436 = vmatpush1.msra.mxu0 0.0
        %4437 = vmatprep.subr.mxu0 0.0
        %4438 = vmatpush1.msra.mxu0 0.0
        %4439 = vmatprep.subr.mxu0 0.0
        %4440 = vmatpush1.msra.mxu0 0.0
        %4441 = vmatprep.subr.mxu0 0.0
        %4442 = vmatpush1.msra.mxu0 0.0
        %4443 = vmatprep.subr.mxu0 0.0
        %4444 = vmatpush1.msra.mxu0 0.0
        %4445 = vmatprep.subr.mxu0 0.0
        %4446 = vmatpush1.msra.mxu0 0.0
        %4447 = vmatprep.subr.mxu0 0.0
        %4448 = vmatpush1.msra.mxu0 0.0
        %4449 = vmatprep.subr.mxu0 0.0
        %4450 = vmatpush1.msra.mxu0 0.0
        %4451 = vmatprep.subr.mxu0 0.0
        %4452 = vmatpush1.msra.mxu0 0.0
        %4453 = vmatprep.subr.mxu0 0.0
        %4454 = vmatpush1.msra.mxu0 0.0
        %4455 = vmatprep.subr.mxu0 0.0
        %4456 = vmatpush1.msra.mxu0 0.0
        %4457 = vmatprep.subr.mxu0 0.0
        %4458 = vmatpush1.msra.mxu0 0.0
        %4459 = vmatprep.subr.mxu0 0.0
        %4460 = vmatpush1.msra.mxu0 0.0
        %4461 = vmatprep.subr.mxu0 0.0
        %4462 = vmatpush1.msra.mxu0 0.0
        %4463 = vmatprep.subr.mxu0 0.0
        %4464 = vmatpush1.msra.mxu0 0.0
        %4465 = vmatprep.subr.mxu0 0.0
        %4466 = vmatpush1.msra.mxu0 0.0
        %4467 = vmatprep.subr.mxu0 0.0
        %4468 = vmatpush1.msra.mxu0 0.0
        %4469 = vmatprep.subr.mxu0 0.0
        %4470 = vmatpush1.msra.mxu0 0.0
        %4471 = vmatprep.subr.mxu0 0.0
        %4472 = vmatpush1.msra.mxu0 0.0
        %4473 = vmatprep.subr.mxu0 0.0
        %4474 = vmatpush1.msra.mxu0 0.0
        %4475 = vmatprep.subr.mxu0 0.0
        %4476 = vmatpush1.msra.mxu0 0.0
        %4477 = vmatprep.subr.mxu0 0.0
        %4478 = vmatpush1.msra.mxu0 0.0
        %4479 = vmatprep.subr.mxu0 0.0
        %4480 = vmatpush1.msra.mxu0 0.0
        %4481 = vmatprep.subr.mxu0 0.0
        %4482 = vmatpush1.msra.mxu0 0.0
        %4483 = vmatprep.subr.mxu0 0.0
        %4484 = vmatpush1.msra.mxu0 0.0
        %4485 = vmatprep.subr.mxu0 0.0
        %4486 = vmatpush1.msra.mxu0 0.0
        %4487 = vmatprep.subr.mxu0 0.0
        %4488 = vmatpush1.msra.mxu0 0.0
        %4489 = vmatprep.mubr.f32.mxu0 0.0
        %4490 = vmatmul.mubr.f32.gmra.mrb[0].mxu0 %v4276
        %v4491 = vpop.f32.mrb[0].mxu0
        %v4492 = vadd.f32 0.0, %v4491
        %v4493 = vpop.f32.mrb[0].mxu0
        %4494 = vmatprep.mubr.f32.mxu0 0.0
        %4495 = vmatmul.mubr.f32.gmra.mrb[0].mxu0 %v4279
        %v4496 = vpop.f32.mrb[0].mxu0
        %v4497 = vadd.f32 0.0, %v4496
        %v4498 = vpop.f32.mrb[0].mxu0
        %4499 = vmatprep.mubr.f32.mxu0 0.0
        %4500 = vmatmul.mubr.f32.gmra.mrb[0].mxu0 %v4282
        %v4501 = vpop.f32.mrb[0].mxu0
        %v4502 = vadd.f32 0.0, %v4501
        %v4503 = vpop.f32.mrb[0].mxu0
        %4504 = vmatprep.mubr.f32.mxu0 0.0
        %4505 = vmatmul.mubr.f32.gmra.mrb[0].mxu0 %v4285
        %v4506 = vpop.f32.mrb[0].mxu0
        %v4507 = vadd.f32 0.0, %v4506
        %v4508 = vpop.f32.mrb[0].mxu0
        %4509 = vmatprep.mubr.f32.mxu0 0.0
        %4510 = vmatmul.mubr.f32.gmra.mrb[0].mxu0 %v4288
        %v4511 = vpop.f32.mrb[0].mxu0
        %v4512 = vadd.f32 0.0, %v4511
        %v4513 = vpop.f32.mrb[0].mxu0
        %4514 = vmatprep.mubr.f32.mxu0 0.0
        %4515 = vmatmul.mubr.f32.gmra.mrb[0].mxu0 %v4291
        %v4516 = vpop.f32.mrb[0].mxu0
        %v4517 = vadd.f32 0.0, %v4516
        %v4518 = vpop.f32.mrb[0].mxu0
        %4519 = vmatprep.mubr.f32.mxu0 0.0
        %4520 = vmatmul.mubr.f32.gmra.mrb[0].mxu0 %v4294
        %v4521 = vpop.f32.mrb[0].mxu0
        %v4522 = vadd.f32 0.0, %v4521
        %v4523 = vpop.f32.mrb[0].mxu0
        %4524 = vmatprep.mubr.f32.mxu0 0.0
        %4525 = vmatmul.mubr.f32.gmra.mrb[0].mxu0 %v4297
        %v4526 = vpop.f32.mrb[0].mxu0
        %v4527 = vadd.f32 0.0, %v4526
        %v4528 = vpop.f32.mrb[0].mxu0
        %4529 = vmatprep.mubr.f32.mxu0 0.0
        %4530 = vmatmul.mubr.f32.gmra.mrb[0].mxu0 %v4300
        %v4531 = vpop.f32.mrb[0].mxu0
        %v4532 = vadd.f32 0.0, %v4531
        %v4533 = vpop.f32.mrb[0].mxu0
        %4534 = vmatprep.mubr.f32.mxu0 0.0
        %4535 = vmatmul.mubr.f32.gmra.mrb[0].mxu0 %v4303
        %v4536 = vpop.f32.mrb[0].mxu0
        %v4537 = vadd.f32 0.0, %v4536
        %v4538 = vpop.f32.mrb[0].mxu0
        %4539 = vmatprep.mubr.f32.mxu0 0.0
        %4540 = vmatmul.mubr.f32.gmra.mrb[0].mxu0 %v4306
        %v4541 = vpop.f32.mrb[0].mxu0
        %v4542 = vadd.f32 0.0, %v4541
        %v4543 = vpop.f32.mrb[0].mxu0
        %4544 = vmatprep.mubr.f32.mxu0 0.0
        %4545 = vmatmul.mubr.f32.gmra.mrb[0].mxu0 %v4309
        %v4546 = vpop.f32.mrb[0].mxu0
        %v4547 = vadd.f32 0.0, %v4546
        %v4548 = vpop.f32.mrb[0].mxu0
        %4549 = vmatprep.mubr.f32.mxu0 0.0
        %4550 = vmatmul.mubr.f32.gmra.mrb[0].mxu0 %v4312
        %v4551 = vpop.f32.mrb[0].mxu0
        %v4552 = vadd.f32 0.0, %v4551
        %v4553 = vpop.f32.mrb[0].mxu0
        %4554 = vmatprep.mubr.f32.mxu0 0.0
        %4555 = vmatmul.mubr.f32.gmra.mrb[0].mxu0 %v4315
        %v4556 = vpop.f32.mrb[0].mxu0
        %v4557 = vadd.f32 0.0, %v4556
        %v4558 = vpop.f32.mrb[0].mxu0
        %4559 = vmatprep.mubr.f32.mxu0 0.0
        %4560 = vmatmul.mubr.f32.gmra.mrb[0].mxu0 %v4318
        %v4561 = vpop.f32.mrb[0].mxu0
        %v4562 = vadd.f32 0.0, %v4561
        %v4563 = vpop.f32.mrb[0].mxu0
        %4564 = vmatprep.mubr.f32.mxu0 0.0
        %4565 = vmatmul.mubr.f32.gmra.mrb[0].mxu0 %v4321
        %v4566 = vpop.f32.mrb[0].mxu0
        %v4567 = vadd.f32 0.0, %v4566
        %v4568 = vpop.f32.mrb[0].mxu0
        %4569 = vmatprep.mubr.f32.mxu0 0.0
        %4570 = vmatmul.mubr.f32.gmra.mrb[0].mxu0 %v4324
        %v4571 = vpop.f32.mrb[0].mxu0
        %v4572 = vadd.f32 0.0, %v4571
        %v4573 = vpop.f32.mrb[0].mxu0
        %4574 = vmatprep.mubr.f32.mxu0 0.0
        %4575 = vmatmul.mubr.f32.gmra.mrb[0].mxu0 %v4327
        %v4576 = vpop.f32.mrb[0].mxu0
        %v4577 = vadd.f32 0.0, %v4576
        %v4578 = vpop.f32.mrb[0].mxu0
        %4579 = vmatprep.mubr.f32.mxu0 0.0
        %4580 = vmatmul.mubr.f32.gmra.mrb[0].mxu0 %v4330
        %v4581 = vpop.f32.mrb[0].mxu0
        %v4582 = vadd.f32 0.0, %v4581
        %v4583 = vpop.f32.mrb[0].mxu0
        %4584 = vmatprep.mubr.f32.mxu0 0.0
        %4585 = vmatmul.mubr.f32.gmra.mrb[0].mxu0 %v4333
        %v4586 = vpop.f32.mrb[0].mxu0
        %v4587 = vadd.f32 0.0, %v4586
        %v4588 = vpop.f32.mrb[0].mxu0
        %4589 = vmatprep.mubr.f32.mxu0 0.0
        %4590 = vmatmul.mubr.f32.gmra.mrb[0].mxu0 %v4336
        %v4591 = vpop.f32.mrb[0].mxu0
        %v4592 = vadd.f32 0.0, %v4591
        %v4593 = vpop.f32.mrb[0].mxu0
        %4594 = vmatprep.mubr.f32.mxu0 0.0
        %4595 = vmatmul.mubr.f32.gmra.mrb[0].mxu0 %v4339
        %v4596 = vpop.f32.mrb[0].mxu0
        %v4597 = vadd.f32 0.0, %v4596
        %v4598 = vpop.f32.mrb[0].mxu0
        %4599 = vmatprep.mubr.f32.mxu0 0.0
        %4600 = vmatmul.mubr.f32.gmra.mrb[0].mxu0 %v4342
        %v4601 = vpop.f32.mrb[0].mxu0
        %v4602 = vadd.f32 0.0, %v4601
        %v4603 = vpop.f32.mrb[0].mxu0
        %4604 = vmatprep.mubr.f32.mxu0 0.0
        %4605 = vmatmul.mubr.f32.gmra.mrb[0].mxu0 %v4345
        %v4606 = vpop.f32.mrb[0].mxu0
        %v4607 = vadd.f32 0.0, %v4606
        %v4608 = vpop.f32.mrb[0].mxu0
        %4609 = vmatprep.mubr.f32.mxu0 0.0
        %4610 = vmatmul.mubr.f32.gmra.mrb[0].mxu0 %v4348
        %v4611 = vpop.f32.mrb[0].mxu0
        %v4612 = vadd.f32 0.0, %v4611
        %v4613 = vpop.f32.mrb[0].mxu0
        %4614 = vmatprep.mubr.f32.mxu0 0.0
        %4615 = vmatmul.mubr.f32.gmra.mrb[0].mxu0 %v4351
        %v4616 = vpop.f32.mrb[0].mxu0
        %v4617 = vadd.f32 0.0, %v4616
        %v4618 = vpop.f32.mrb[0].mxu0
        %4619 = vmatprep.mubr.f32.mxu0 0.0
        %4620 = vmatmul.mubr.f32.gmra.mrb[0].mxu0 %v4354
        %v4621 = vpop.f32.mrb[0].mxu0
        %v4622 = vadd.f32 0.0, %v4621
        %v4623 = vpop.f32.mrb[0].mxu0
        %4624 = vmatprep.mubr.f32.mxu0 0.0
        %4625 = vmatmul.mubr.f32.gmra.mrb[0].mxu0 %v4357
        %v4626 = vpop.f32.mrb[0].mxu0
        %v4627 = vadd.f32 0.0, %v4626
        %v4628 = vpop.f32.mrb[0].mxu0
        %4629 = vmatprep.mubr.f32.mxu0 0.0
        %4630 = vmatmul.mubr.f32.gmra.mrb[0].mxu0 %v4360
        %v4631 = vpop.f32.mrb[0].mxu0
        %v4632 = vadd.f32 0.0, %v4631
        %v4633 = vpop.f32.mrb[0].mxu0
        %4634 = vmatprep.mubr.f32.mxu0 0.0
        %4635 = vmatmul.mubr.f32.gmra.mrb[0].mxu0 %v4363
        %v4636 = vpop.f32.mrb[0].mxu0
        %v4637 = vadd.f32 0.0, %v4636
        %v4638 = vpop.f32.mrb[0].mxu0
        %4639 = vmatprep.mubr.f32.mxu0 0.0
        %4640 = vmatmul.mubr.f32.gmra.mrb[0].mxu0 %v4366
        %v4641 = vpop.f32.mrb[0].mxu0
        %v4642 = vadd.f32 0.0, %v4641
        %v4643 = vpop.f32.mrb[0].mxu0
        %4644 = vmatprep.mubr.f32.mxu0 0.0
        %4645 = vmatmul.mubr.f32.gmra.mrb[0].mxu0 %v4369
        %v4646 = vpop.f32.mrb[0].mxu0
        %v4647 = vadd.f32 0.0, %v4646
        %v4648 = vpop.f32.mrb[0].mxu0
        %4649 = vmatprep.mubr.f32.mxu0 0.0
        %4650 = vmatmul.mubr.f32.gmra.mrb[0].mxu0 %v4372
        %v4651 = vpop.f32.mrb[0].mxu0
        %v4652 = vadd.f32 0.0, %v4651
        %v4653 = vpop.f32.mrb[0].mxu0
        %4654 = vmatprep.mubr.f32.mxu0 0.0
        %4655 = vmatmul.mubr.f32.gmra.mrb[0].mxu0 %v4375
        %v4656 = vpop.f32.mrb[0].mxu0
        %v4657 = vadd.f32 0.0, %v4656
        %v4658 = vpop.f32.mrb[0].mxu0
        %4659 = vmatprep.mubr.f32.mxu0 0.0
        %4660 = vmatmul.mubr.f32.gmra.mrb[0].mxu0 %v4378
        %v4661 = vpop.f32.mrb[0].mxu0
        %v4662 = vadd.f32 0.0, %v4661
        %v4663 = vpop.f32.mrb[0].mxu0
        %4664 = vmatprep.mubr.f32.mxu0 0.0
        %4665 = vmatmul.mubr.f32.gmra.mrb[0].mxu0 %v4381
        %v4666 = vpop.f32.mrb[0].mxu0
        %v4667 = vadd.f32 0.0, %v4666
        %v4668 = vpop.f32.mrb[0].mxu0
        %4669 = vmatprep.mubr.f32.mxu0 0.0
        %4670 = vmatmul.mubr.f32.gmra.mrb[0].mxu0 %v4384
        %v4671 = vpop.f32.mrb[0].mxu0
        %v4672 = vadd.f32 0.0, %v4671
        %v4673 = vpop.f32.mrb[0].mxu0
        %4674 = vmatprep.mubr.f32.mxu0 0.0
        %4675 = vmatmul.mubr.f32.gmra.mrb[0].mxu0 %v4387
        %v4676 = vpop.f32.mrb[0].mxu0
        %v4677 = vadd.f32 0.0, %v4676
        %v4678 = vpop.f32.mrb[0].mxu0
        %4679 = vmatprep.mubr.f32.mxu0 0.0
        %4680 = vmatmul.mubr.f32.gmra.mrb[0].mxu0 %v4390
        %v4681 = vpop.f32.mrb[0].mxu0
        %v4682 = vadd.f32 0.0, %v4681
        %v4683 = vpop.f32.mrb[0].mxu0
        %4684 = vmatprep.mubr.f32.mxu0 0.0
        %4685 = vmatmul.mubr.f32.gmra.mrb[0].mxu0 %v4393
        %v4686 = vpop.f32.mrb[0].mxu0
        %v4687 = vadd.f32 0.0, %v4686
        %v4688 = vpop.f32.mrb[0].mxu0
        %4689 = vmatprep.mubr.f32.mxu0 0.0
        %4690 = vmatmul.mubr.f32.gmra.mrb[0].mxu0 %v4396
        %v4691 = vpop.f32.mrb[0].mxu0
        %v4692 = vadd.f32 0.0, %v4691
        %v4693 = vpop.f32.mrb[0].mxu0
        %4694 = vmatprep.mubr.f32.mxu0 0.0
        %4695 = vmatmul.mubr.f32.gmra.mrb[0].mxu0 %v4399
        %v4696 = vpop.f32.mrb[0].mxu0
        %v4697 = vadd.f32 0.0, %v4696
        %v4698 = vpop.f32.mrb[0].mxu0
        %4699 = vmatprep.mubr.f32.mxu0 0.0
        %4700 = vmatmul.mubr.f32.gmra.mrb[0].mxu0 %v4402
        %v4701 = vpop.f32.mrb[0].mxu0
        %v4702 = vadd.f32 0.0, %v4701
        %v4703 = vpop.f32.mrb[0].mxu0
        %4704 = vmatprep.mubr.f32.mxu0 0.0
        %4705 = vmatmul.mubr.f32.gmra.mrb[0].mxu0 %v4405
        %v4706 = vpop.f32.mrb[0].mxu0
        %v4707 = vadd.f32 0.0, %v4706
        %v4708 = vpop.f32.mrb[0].mxu0
        %4709 = vmatprep.mubr.f32.mxu0 0.0
        %4710 = vmatmul.mubr.f32.gmra.mrb[0].mxu0 %v4408
        %v4711 = vpop.f32.mrb[0].mxu0
        %v4712 = vadd.f32 0.0, %v4711
        %v4713 = vpop.f32.mrb[0].mxu0
        %4714 = vmatprep.mubr.f32.mxu0 0.0
        %4715 = vmatmul.mubr.f32.gmra.mrb[0].mxu0 %v4411
        %v4716 = vpop.f32.mrb[0].mxu0
        %v4717 = vadd.f32 0.0, %v4716
        %v4718 = vpop.f32.mrb[0].mxu0
        %4719 = vmatprep.mubr.f32.mxu0 0.0
        %4720 = vmatmul.mubr.f32.gmra.mrb[0].mxu0 %v4414
        %v4721 = vpop.f32.mrb[0].mxu0
        %v4722 = vadd.f32 0.0, %v4721
        %v4723 = vpop.f32.mrb[0].mxu0
        %4724 = vmatprep.mubr.f32.mxu0 0.0
        %4725 = vmatmul.mubr.f32.gmra.mrb[0].mxu0 %v4417
        %v4726 = vpop.f32.mrb[0].mxu0
        %v4727 = vadd.f32 0.0, %v4726
        %v4728 = vpop.f32.mrb[0].mxu0
        %4729 = vmatprep.mubr.f32.mxu0 0.0
        %4730 = vmatmul.mubr.f32.gmra.mrb[0].mxu0 %v4420
        %v4731 = vpop.f32.mrb[0].mxu0
        %v4732 = vadd.f32 0.0, %v4731
        %v4733 = vpop.f32.mrb[0].mxu0
        %4734 = vmatprep.mubr.f32.mxu0 0.0
        %4735 = vmatmul.mubr.f32.gmra.mrb[0].mxu0 %v4423
        %v4736 = vpop.f32.mrb[0].mxu0
        %v4737 = vadd.f32 0.0, %v4736
        %v4738 = vpop.f32.mrb[0].mxu0
        %4739 = vdwg.mxu0
        %v4740 = vmax.f32 %v4174, %v4492
        %v4741 = vmax.f32 %v4175, %v4497
        %v4742 = vmax.f32 %v4176, %v4502
        %v4743 = vmax.f32 %v4177, %v4507
        %v4744 = vmax.f32 %v4178, %v4512
        %v4745 = vmax.f32 %v4179, %v4517
        %v4746 = vmax.f32 %v4180, %v4522
        %v4747 = vmax.f32 %v4181, %v4527
        %v4748 = vmax.f32 %v4182, %v4532
        %v4749 = vmax.f32 %v4183, %v4537
        %v4750 = vmax.f32 %v4184, %v4542
        %v4751 = vmax.f32 %v4185, %v4547
        %v4752 = vmax.f32 %v4186, %v4552
        %v4753 = vmax.f32 %v4187, %v4557
        %v4754 = vmax.f32 %v4188, %v4562
        %v4755 = vmax.f32 %v4189, %v4567
        %v4756 = vmax.f32 %v4190, %v4572
        %v4757 = vmax.f32 %v4191, %v4577
        %v4758 = vmax.f32 %v4192, %v4582
        %v4759 = vmax.f32 %v4193, %v4587
        %v4760 = vmax.f32 %v4194, %v4592
        %v4761 = vmax.f32 %v4195, %v4597
        %v4762 = vmax.f32 %v4196, %v4602
        %v4763 = vmax.f32 %v4197, %v4607
        %v4764 = vmax.f32 %v4198, %v4612
        %v4765 = vmax.f32 %v4199, %v4617
        %v4766 = vmax.f32 %v4200, %v4622
        %v4767 = vmax.f32 %v4201, %v4627
        %v4768 = vmax.f32 %v4202, %v4632
        %v4769 = vmax.f32 %v4203, %v4637
        %v4770 = vmax.f32 %v4204, %v4642
        %v4771 = vmax.f32 %v4205, %v4647
        %v4772 = vmax.f32 %v4206, %v4652
        %v4773 = vmax.f32 %v4207, %v4657
        %v4774 = vmax.f32 %v4208, %v4662
        %v4775 = vmax.f32 %v4209, %v4667
        %v4776 = vmax.f32 %v4210, %v4672
        %v4777 = vmax.f32 %v4211, %v4677
        %v4778 = vmax.f32 %v4212, %v4682
        %v4779 = vmax.f32 %v4213, %v4687
        %v4780 = vmax.f32 %v4214, %v4692
        %v4781 = vmax.f32 %v4215, %v4697
        %v4782 = vmax.f32 %v4216, %v4702
        %v4783 = vmax.f32 %v4217, %v4707
        %v4784 = vmax.f32 %v4218, %v4712
        %v4785 = vmax.f32 %v4219, %v4717
        %v4786 = vmax.f32 %v4220, %v4722
        %v4787 = vmax.f32 %v4221, %v4727
        %v4788 = vmax.f32 %v4222, %v4732
        %v4789 = vmax.f32 %v4223, %v4737
        %s4790 = scalar_lea.vmem %s1976, 2000 [#allocation2]
        %v4791 = vld [vmem:[%s4790] sm:$0xff]
        %v4792 = vld [vmem:[%s4790 + $0x8] sm:$0xff]
        %v4793 = vld [vmem:[%s4790 + $0x10] sm:$0xff]
        %v4794 = vld [vmem:[%s4790 + $0x18] sm:$0xff]
        %v4795 = vld [vmem:[%s4790 + $0x20] sm:$0xff]
        %v4796 = vld [vmem:[%s4790 + $0x28] sm:$0xff]
        %v4797 = vld [vmem:[%s4790 + $0x30] sm:$0xff]
        %v4798 = vld [vmem:[%s4790 + $0x38] sm:$0xff]
        %v4799 = vld [vmem:[%s4790 + $0x40] sm:$0xff]
        %v4800 = vld [vmem:[%s4790 + $0x48] sm:$0xff]
        %v4801 = vld [vmem:[%s4790 + $0x50] sm:$0xff]
        %v4802 = vld [vmem:[%s4790 + $0x58] sm:$0xff]
        %v4803 = vld [vmem:[%s4790 + $0x60] sm:$0xff]
        %v4804 = vld [vmem:[%s4790 + $0x68] sm:$0xff]
        %v4805 = vld [vmem:[%s4790 + $0x70] sm:$0xff]
        %v4806 = vld [vmem:[%s4790 + $0x78] sm:$0xff]
        %v4807 = vld [vmem:[%s4790 + $0x80] sm:$0xff]
        %v4808 = vld [vmem:[%s4790 + $0x88] sm:$0xff]
        %v4809 = vld [vmem:[%s4790 + $0x90] sm:$0xff]
        %v4810 = vld [vmem:[%s4790 + $0x98] sm:$0xff]
        %v4811 = vld [vmem:[%s4790 + $0xa0] sm:$0xff]
        %v4812 = vld [vmem:[%s4790 + $0xa8] sm:$0xff]
        %v4813 = vld [vmem:[%s4790 + $0xb0] sm:$0xff]
        %v4814 = vld [vmem:[%s4790 + $0xb8] sm:$0xff]
        %v4815 = vld [vmem:[%s4790 + $0xc0] sm:$0xff]
        %v4816 = vld [vmem:[%s4790 + $0xc8] sm:$0xff]
        %v4817 = vld [vmem:[%s4790 + $0xd0] sm:$0xff]
        %v4818 = vld [vmem:[%s4790 + $0xd8] sm:$0xff]
        %v4819 = vld [vmem:[%s4790 + $0xe0] sm:$0xff]
        %v4820 = vld [vmem:[%s4790 + $0xe8] sm:$0xff]
        %v4821 = vld [vmem:[%s4790 + $0xf0] sm:$0xff]
        %v4822 = vld [vmem:[%s4790 + $0xf8] sm:$0xff]
        %v4823 = vld [vmem:[%s4790 + $0x100] sm:$0xff]
        %v4824 = vld [vmem:[%s4790 + $0x108] sm:$0xff]
        %v4825 = vld [vmem:[%s4790 + $0x110] sm:$0xff]
        %v4826 = vld [vmem:[%s4790 + $0x118] sm:$0xff]
        %v4827 = vld [vmem:[%s4790 + $0x120] sm:$0xff]
        %v4828 = vld [vmem:[%s4790 + $0x128] sm:$0xff]
        %v4829 = vld [vmem:[%s4790 + $0x130] sm:$0xff]
        %v4830 = vld [vmem:[%s4790 + $0x138] sm:$0xff]
        %v4831 = vld [vmem:[%s4790 + $0x140] sm:$0xff]
        %v4832 = vld [vmem:[%s4790 + $0x148] sm:$0xff]
        %v4833 = vld [vmem:[%s4790 + $0x150] sm:$0xff]
        %v4834 = vld [vmem:[%s4790 + $0x158] sm:$0xff]
        %v4835 = vld [vmem:[%s4790 + $0x160] sm:$0xff]
        %v4836 = vld [vmem:[%s4790 + $0x168] sm:$0xff]
        %v4837 = vld [vmem:[%s4790 + $0x170] sm:$0xff]
        %v4838 = vld [vmem:[%s4790 + $0x178] sm:$0xff]
        %v4839 = vld [vmem:[%s4790 + $0x180] sm:$0xff]
        %v4840 = vld [vmem:[%s4790 + $0x188] sm:$0xff]
        %v4842 = vsel %vm2056, %v4791, 0
        %v4845 = vsel %vm2056, %v4792, 0
        %v4848 = vsel %vm2056, %v4793, 0
        %v4851 = vsel %vm2056, %v4794, 0
        %v4854 = vsel %vm2056, %v4795, 0
        %v4857 = vsel %vm2056, %v4796, 0
        %v4860 = vsel %vm2056, %v4797, 0
        %v4863 = vsel %vm2056, %v4798, 0
        %v4866 = vsel %vm2056, %v4799, 0
        %v4869 = vsel %vm2056, %v4800, 0
        %v4872 = vsel %vm2056, %v4801, 0
        %v4875 = vsel %vm2056, %v4802, 0
        %v4878 = vsel %vm2056, %v4803, 0
        %v4881 = vsel %vm2056, %v4804, 0
        %v4884 = vsel %vm2056, %v4805, 0
        %v4887 = vsel %vm2056, %v4806, 0
        %v4890 = vsel %vm2056, %v4807, 0
        %v4893 = vsel %vm2056, %v4808, 0
        %v4896 = vsel %vm2056, %v4809, 0
        %v4899 = vsel %vm2056, %v4810, 0
        %v4902 = vsel %vm2056, %v4811, 0
        %v4905 = vsel %vm2056, %v4812, 0
        %v4908 = vsel %vm2056, %v4813, 0
        %v4911 = vsel %vm2056, %v4814, 0
        %v4914 = vsel %vm2056, %v4815, 0
        %v4917 = vsel %vm2056, %v4816, 0
        %v4920 = vsel %vm2056, %v4817, 0
        %v4923 = vsel %vm2056, %v4818, 0
        %v4926 = vsel %vm2056, %v4819, 0
        %v4929 = vsel %vm2056, %v4820, 0
        %v4932 = vsel %vm2056, %v4821, 0
        %v4935 = vsel %vm2056, %v4822, 0
        %v4938 = vsel %vm2056, %v4823, 0
        %v4941 = vsel %vm2056, %v4824, 0
        %v4944 = vsel %vm2056, %v4825, 0
        %v4947 = vsel %vm2056, %v4826, 0
        %v4950 = vsel %vm2056, %v4827, 0
        %v4953 = vsel %vm2056, %v4828, 0
        %v4956 = vsel %vm2056, %v4829, 0
        %v4959 = vsel %vm2056, %v4830, 0
        %v4962 = vsel %vm2056, %v4831, 0
        %v4965 = vsel %vm2056, %v4832, 0
        %v4968 = vsel %vm2056, %v4833, 0
        %v4971 = vsel %vm2056, %v4834, 0
        %v4974 = vsel %vm2056, %v4835, 0
        %v4977 = vsel %vm2056, %v4836, 0
        %v4980 = vsel %vm2056, %v4837, 0
        %v4983 = vsel %vm2056, %v4838, 0
        %v4986 = vsel %vm2056, %v4839, 0
        %v4989 = vsel %vm2056, %v4840, 0
        %4991 = vmatprep.subr.mxu0 0.0
        %4992 = vmatpush1.msra.mxu0 %v2054
        %4993 = vmatprep.subr.mxu0 0.0
        %4994 = vmatpush1.msra.mxu0 %v2209
        %4995 = vmatprep.subr.mxu0 0.0
        %4996 = vmatpush1.msra.mxu0 0.0
        %4997 = vmatprep.subr.mxu0 0.0
        %4998 = vmatpush1.msra.mxu0 0.0
        %4999 = vmatprep.subr.mxu0 0.0
        %5000 = vmatpush1.msra.mxu0 0.0
        %5001 = vmatprep.subr.mxu0 0.0
        %5002 = vmatpush1.msra.mxu0 0.0
        %5003 = vmatprep.subr.mxu0 0.0
        %5004 = vmatpush1.msra.mxu0 0.0
        %5005 = vmatprep.subr.mxu0 0.0
        %5006 = vmatpush1.msra.mxu0 0.0
        %5007 = vmatprep.subr.mxu0 0.0
        %5008 = vmatpush1.msra.mxu0 0.0
        %5009 = vmatprep.subr.mxu0 0.0
        %5010 = vmatpush1.msra.mxu0 0.0
        %5011 = vmatprep.subr.mxu0 0.0
        %5012 = vmatpush1.msra.mxu0 0.0
        %5013 = vmatprep.subr.mxu0 0.0
        %5014 = vmatpush1.msra.mxu0 0.0
        %5015 = vmatprep.subr.mxu0 0.0
        %5016 = vmatpush1.msra.mxu0 0.0
        %5017 = vmatprep.subr.mxu0 0.0
        %5018 = vmatpush1.msra.mxu0 0.0
        %5019 = vmatprep.subr.mxu0 0.0
        %5020 = vmatpush1.msra.mxu0 0.0
        %5021 = vmatprep.subr.mxu0 0.0
        %5022 = vmatpush1.msra.mxu0 0.0
        %5023 = vmatprep.subr.mxu0 0.0
        %5024 = vmatpush1.msra.mxu0 0.0
        %5025 = vmatprep.subr.mxu0 0.0
        %5026 = vmatpush1.msra.mxu0 0.0
        %5027 = vmatprep.subr.mxu0 0.0
        %5028 = vmatpush1.msra.mxu0 0.0
        %5029 = vmatprep.subr.mxu0 0.0
        %5030 = vmatpush1.msra.mxu0 0.0
        %5031 = vmatprep.subr.mxu0 0.0
        %5032 = vmatpush1.msra.mxu0 0.0
        %5033 = vmatprep.subr.mxu0 0.0
        %5034 = vmatpush1.msra.mxu0 0.0
        %5035 = vmatprep.subr.mxu0 0.0
        %5036 = vmatpush1.msra.mxu0 0.0
        %5037 = vmatprep.subr.mxu0 0.0
        %5038 = vmatpush1.msra.mxu0 0.0
        %5039 = vmatprep.subr.mxu0 0.0
        %5040 = vmatpush1.msra.mxu0 0.0
        %5041 = vmatprep.subr.mxu0 0.0
        %5042 = vmatpush1.msra.mxu0 0.0
        %5043 = vmatprep.subr.mxu0 0.0
        %5044 = vmatpush1.msra.mxu0 0.0
        %5045 = vmatprep.subr.mxu0 0.0
        %5046 = vmatpush1.msra.mxu0 0.0
        %5047 = vmatprep.subr.mxu0 0.0
        %5048 = vmatpush1.msra.mxu0 0.0
        %5049 = vmatprep.subr.mxu0 0.0
        %5050 = vmatpush1.msra.mxu0 0.0
        %5051 = vmatprep.subr.mxu0 0.0
        %5052 = vmatpush1.msra.mxu0 0.0
        %5053 = vmatprep.subr.mxu0 0.0
        %5054 = vmatpush1.msra.mxu0 0.0
        %5055 = vmatprep.mubr.f32.mxu0 0.0
        %5056 = vmatmul.mubr.f32.gmra.mrb[0].mxu0 %v4842
        %v5057 = vpop.f32.mrb[0].mxu0
        %v5058 = vadd.f32 0.0, %v5057
        %v5059 = vpop.f32.mrb[0].mxu0
        %5060 = vmatprep.mubr.f32.mxu0 0.0
        %5061 = vmatmul.mubr.f32.gmra.mrb[0].mxu0 %v4845
        %v5062 = vpop.f32.mrb[0].mxu0
        %v5063 = vadd.f32 0.0, %v5062
        %v5064 = vpop.f32.mrb[0].mxu0
        %5065 = vmatprep.mubr.f32.mxu0 0.0
        %5066 = vmatmul.mubr.f32.gmra.mrb[0].mxu0 %v4848
        %v5067 = vpop.f32.mrb[0].mxu0
        %v5068 = vadd.f32 0.0, %v5067
        %v5069 = vpop.f32.mrb[0].mxu0
        %5070 = vmatprep.mubr.f32.mxu0 0.0
        %5071 = vmatmul.mubr.f32.gmra.mrb[0].mxu0 %v4851
        %v5072 = vpop.f32.mrb[0].mxu0
        %v5073 = vadd.f32 0.0, %v5072
        %v5074 = vpop.f32.mrb[0].mxu0
        %5075 = vmatprep.mubr.f32.mxu0 0.0
        %5076 = vmatmul.mubr.f32.gmra.mrb[0].mxu0 %v4854
        %v5077 = vpop.f32.mrb[0].mxu0
        %v5078 = vadd.f32 0.0, %v5077
        %v5079 = vpop.f32.mrb[0].mxu0
        %5080 = vmatprep.mubr.f32.mxu0 0.0
        %5081 = vmatmul.mubr.f32.gmra.mrb[0].mxu0 %v4857
        %v5082 = vpop.f32.mrb[0].mxu0
        %v5083 = vadd.f32 0.0, %v5082
        %v5084 = vpop.f32.mrb[0].mxu0
        %5085 = vmatprep.mubr.f32.mxu0 0.0
        %5086 = vmatmul.mubr.f32.gmra.mrb[0].mxu0 %v4860
        %v5087 = vpop.f32.mrb[0].mxu0
        %v5088 = vadd.f32 0.0, %v5087
        %v5089 = vpop.f32.mrb[0].mxu0
        %5090 = vmatprep.mubr.f32.mxu0 0.0
        %5091 = vmatmul.mubr.f32.gmra.mrb[0].mxu0 %v4863
        %v5092 = vpop.f32.mrb[0].mxu0
        %v5093 = vadd.f32 0.0, %v5092
        %v5094 = vpop.f32.mrb[0].mxu0
        %5095 = vmatprep.mubr.f32.mxu0 0.0
        %5096 = vmatmul.mubr.f32.gmra.mrb[0].mxu0 %v4866
        %v5097 = vpop.f32.mrb[0].mxu0
        %v5098 = vadd.f32 0.0, %v5097
        %v5099 = vpop.f32.mrb[0].mxu0
        %5100 = vmatprep.mubr.f32.mxu0 0.0
        %5101 = vmatmul.mubr.f32.gmra.mrb[0].mxu0 %v4869
        %v5102 = vpop.f32.mrb[0].mxu0
        %v5103 = vadd.f32 0.0, %v5102
        %v5104 = vpop.f32.mrb[0].mxu0
        %5105 = vmatprep.mubr.f32.mxu0 0.0
        %5106 = vmatmul.mubr.f32.gmra.mrb[0].mxu0 %v4872
        %v5107 = vpop.f32.mrb[0].mxu0
        %v5108 = vadd.f32 0.0, %v5107
        %v5109 = vpop.f32.mrb[0].mxu0
        %5110 = vmatprep.mubr.f32.mxu0 0.0
        %5111 = vmatmul.mubr.f32.gmra.mrb[0].mxu0 %v4875
        %v5112 = vpop.f32.mrb[0].mxu0
        %v5113 = vadd.f32 0.0, %v5112
        %v5114 = vpop.f32.mrb[0].mxu0
        %5115 = vmatprep.mubr.f32.mxu0 0.0
        %5116 = vmatmul.mubr.f32.gmra.mrb[0].mxu0 %v4878
        %v5117 = vpop.f32.mrb[0].mxu0
        %v5118 = vadd.f32 0.0, %v5117
        %v5119 = vpop.f32.mrb[0].mxu0
        %5120 = vmatprep.mubr.f32.mxu0 0.0
        %5121 = vmatmul.mubr.f32.gmra.mrb[0].mxu0 %v4881
        %v5122 = vpop.f32.mrb[0].mxu0
        %v5123 = vadd.f32 0.0, %v5122
        %v5124 = vpop.f32.mrb[0].mxu0
        %5125 = vmatprep.mubr.f32.mxu0 0.0
        %5126 = vmatmul.mubr.f32.gmra.mrb[0].mxu0 %v4884
        %v5127 = vpop.f32.mrb[0].mxu0
        %v5128 = vadd.f32 0.0, %v5127
        %v5129 = vpop.f32.mrb[0].mxu0
        %5130 = vmatprep.mubr.f32.mxu0 0.0
        %5131 = vmatmul.mubr.f32.gmra.mrb[0].mxu0 %v4887
        %v5132 = vpop.f32.mrb[0].mxu0
        %v5133 = vadd.f32 0.0, %v5132
        %v5134 = vpop.f32.mrb[0].mxu0
        %5135 = vmatprep.mubr.f32.mxu0 0.0
        %5136 = vmatmul.mubr.f32.gmra.mrb[0].mxu0 %v4890
        %v5137 = vpop.f32.mrb[0].mxu0
        %v5138 = vadd.f32 0.0, %v5137
        %v5139 = vpop.f32.mrb[0].mxu0
        %5140 = vmatprep.mubr.f32.mxu0 0.0
        %5141 = vmatmul.mubr.f32.gmra.mrb[0].mxu0 %v4893
        %v5142 = vpop.f32.mrb[0].mxu0
        %v5143 = vadd.f32 0.0, %v5142
        %v5144 = vpop.f32.mrb[0].mxu0
        %5145 = vmatprep.mubr.f32.mxu0 0.0
        %5146 = vmatmul.mubr.f32.gmra.mrb[0].mxu0 %v4896
        %v5147 = vpop.f32.mrb[0].mxu0
        %v5148 = vadd.f32 0.0, %v5147
        %v5149 = vpop.f32.mrb[0].mxu0
        %5150 = vmatprep.mubr.f32.mxu0 0.0
        %5151 = vmatmul.mubr.f32.gmra.mrb[0].mxu0 %v4899
        %v5152 = vpop.f32.mrb[0].mxu0
        %v5153 = vadd.f32 0.0, %v5152
        %v5154 = vpop.f32.mrb[0].mxu0
        %5155 = vmatprep.mubr.f32.mxu0 0.0
        %5156 = vmatmul.mubr.f32.gmra.mrb[0].mxu0 %v4902
        %v5157 = vpop.f32.mrb[0].mxu0
        %v5158 = vadd.f32 0.0, %v5157
        %v5159 = vpop.f32.mrb[0].mxu0
        %5160 = vmatprep.mubr.f32.mxu0 0.0
        %5161 = vmatmul.mubr.f32.gmra.mrb[0].mxu0 %v4905
        %v5162 = vpop.f32.mrb[0].mxu0
        %v5163 = vadd.f32 0.0, %v5162
        %v5164 = vpop.f32.mrb[0].mxu0
        %5165 = vmatprep.mubr.f32.mxu0 0.0
        %5166 = vmatmul.mubr.f32.gmra.mrb[0].mxu0 %v4908
        %v5167 = vpop.f32.mrb[0].mxu0
        %v5168 = vadd.f32 0.0, %v5167
        %v5169 = vpop.f32.mrb[0].mxu0
        %5170 = vmatprep.mubr.f32.mxu0 0.0
        %5171 = vmatmul.mubr.f32.gmra.mrb[0].mxu0 %v4911
        %v5172 = vpop.f32.mrb[0].mxu0
        %v5173 = vadd.f32 0.0, %v5172
        %v5174 = vpop.f32.mrb[0].mxu0
        %5175 = vmatprep.mubr.f32.mxu0 0.0
        %5176 = vmatmul.mubr.f32.gmra.mrb[0].mxu0 %v4914
        %v5177 = vpop.f32.mrb[0].mxu0
        %v5178 = vadd.f32 0.0, %v5177
        %v5179 = vpop.f32.mrb[0].mxu0
        %5180 = vmatprep.mubr.f32.mxu0 0.0
        %5181 = vmatmul.mubr.f32.gmra.mrb[0].mxu0 %v4917
        %v5182 = vpop.f32.mrb[0].mxu0
        %v5183 = vadd.f32 0.0, %v5182
        %v5184 = vpop.f32.mrb[0].mxu0
        %5185 = vmatprep.mubr.f32.mxu0 0.0
        %5186 = vmatmul.mubr.f32.gmra.mrb[0].mxu0 %v4920
        %v5187 = vpop.f32.mrb[0].mxu0
        %v5188 = vadd.f32 0.0, %v5187
        %v5189 = vpop.f32.mrb[0].mxu0
        %5190 = vmatprep.mubr.f32.mxu0 0.0
        %5191 = vmatmul.mubr.f32.gmra.mrb[0].mxu0 %v4923
        %v5192 = vpop.f32.mrb[0].mxu0
        %v5193 = vadd.f32 0.0, %v5192
        %v5194 = vpop.f32.mrb[0].mxu0
        %5195 = vmatprep.mubr.f32.mxu0 0.0
        %5196 = vmatmul.mubr.f32.gmra.mrb[0].mxu0 %v4926
        %v5197 = vpop.f32.mrb[0].mxu0
        %v5198 = vadd.f32 0.0, %v5197
        %v5199 = vpop.f32.mrb[0].mxu0
        %5200 = vmatprep.mubr.f32.mxu0 0.0
        %5201 = vmatmul.mubr.f32.gmra.mrb[0].mxu0 %v4929
        %v5202 = vpop.f32.mrb[0].mxu0
        %v5203 = vadd.f32 0.0, %v5202
        %v5204 = vpop.f32.mrb[0].mxu0
        %5205 = vmatprep.mubr.f32.mxu0 0.0
        %5206 = vmatmul.mubr.f32.gmra.mrb[0].mxu0 %v4932
        %v5207 = vpop.f32.mrb[0].mxu0
        %v5208 = vadd.f32 0.0, %v5207
        %v5209 = vpop.f32.mrb[0].mxu0
        %5210 = vmatprep.mubr.f32.mxu0 0.0
        %5211 = vmatmul.mubr.f32.gmra.mrb[0].mxu0 %v4935
        %v5212 = vpop.f32.mrb[0].mxu0
        %v5213 = vadd.f32 0.0, %v5212
        %v5214 = vpop.f32.mrb[0].mxu0
        %5215 = vmatprep.mubr.f32.mxu0 0.0
        %5216 = vmatmul.mubr.f32.gmra.mrb[0].mxu0 %v4938
        %v5217 = vpop.f32.mrb[0].mxu0
        %v5218 = vadd.f32 0.0, %v5217
        %v5219 = vpop.f32.mrb[0].mxu0
        %5220 = vmatprep.mubr.f32.mxu0 0.0
        %5221 = vmatmul.mubr.f32.gmra.mrb[0].mxu0 %v4941
        %v5222 = vpop.f32.mrb[0].mxu0
        %v5223 = vadd.f32 0.0, %v5222
        %v5224 = vpop.f32.mrb[0].mxu0
        %5225 = vmatprep.mubr.f32.mxu0 0.0
        %5226 = vmatmul.mubr.f32.gmra.mrb[0].mxu0 %v4944
        %v5227 = vpop.f32.mrb[0].mxu0
        %v5228 = vadd.f32 0.0, %v5227
        %v5229 = vpop.f32.mrb[0].mxu0
        %5230 = vmatprep.mubr.f32.mxu0 0.0
        %5231 = vmatmul.mubr.f32.gmra.mrb[0].mxu0 %v4947
        %v5232 = vpop.f32.mrb[0].mxu0
        %v5233 = vadd.f32 0.0, %v5232
        %v5234 = vpop.f32.mrb[0].mxu0
        %5235 = vmatprep.mubr.f32.mxu0 0.0
        %5236 = vmatmul.mubr.f32.gmra.mrb[0].mxu0 %v4950
        %v5237 = vpop.f32.mrb[0].mxu0
        %v5238 = vadd.f32 0.0, %v5237
        %v5239 = vpop.f32.mrb[0].mxu0
        %5240 = vmatprep.mubr.f32.mxu0 0.0
        %5241 = vmatmul.mubr.f32.gmra.mrb[0].mxu0 %v4953
        %v5242 = vpop.f32.mrb[0].mxu0
        %v5243 = vadd.f32 0.0, %v5242
        %v5244 = vpop.f32.mrb[0].mxu0
        %5245 = vmatprep.mubr.f32.mxu0 0.0
        %5246 = vmatmul.mubr.f32.gmra.mrb[0].mxu0 %v4956
        %v5247 = vpop.f32.mrb[0].mxu0
        %v5248 = vadd.f32 0.0, %v5247
        %v5249 = vpop.f32.mrb[0].mxu0
        %5250 = vmatprep.mubr.f32.mxu0 0.0
        %5251 = vmatmul.mubr.f32.gmra.mrb[0].mxu0 %v4959
        %v5252 = vpop.f32.mrb[0].mxu0
        %v5253 = vadd.f32 0.0, %v5252
        %v5254 = vpop.f32.mrb[0].mxu0
        %5255 = vmatprep.mubr.f32.mxu0 0.0
        %5256 = vmatmul.mubr.f32.gmra.mrb[0].mxu0 %v4962
        %v5257 = vpop.f32.mrb[0].mxu0
        %v5258 = vadd.f32 0.0, %v5257
        %v5259 = vpop.f32.mrb[0].mxu0
        %5260 = vmatprep.mubr.f32.mxu0 0.0
        %5261 = vmatmul.mubr.f32.gmra.mrb[0].mxu0 %v4965
        %v5262 = vpop.f32.mrb[0].mxu0
        %v5263 = vadd.f32 0.0, %v5262
        %v5264 = vpop.f32.mrb[0].mxu0
        %5265 = vmatprep.mubr.f32.mxu0 0.0
        %5266 = vmatmul.mubr.f32.gmra.mrb[0].mxu0 %v4968
        %v5267 = vpop.f32.mrb[0].mxu0
        %v5268 = vadd.f32 0.0, %v5267
        %v5269 = vpop.f32.mrb[0].mxu0
        %5270 = vmatprep.mubr.f32.mxu0 0.0
        %5271 = vmatmul.mubr.f32.gmra.mrb[0].mxu0 %v4971
        %v5272 = vpop.f32.mrb[0].mxu0
        %v5273 = vadd.f32 0.0, %v5272
        %v5274 = vpop.f32.mrb[0].mxu0
        %5275 = vmatprep.mubr.f32.mxu0 0.0
        %5276 = vmatmul.mubr.f32.gmra.mrb[0].mxu0 %v4974
        %v5277 = vpop.f32.mrb[0].mxu0
        %v5278 = vadd.f32 0.0, %v5277
        %v5279 = vpop.f32.mrb[0].mxu0
        %5280 = vmatprep.mubr.f32.mxu0 0.0
        %5281 = vmatmul.mubr.f32.gmra.mrb[0].mxu0 %v4977
        %v5282 = vpop.f32.mrb[0].mxu0
        %v5283 = vadd.f32 0.0, %v5282
        %v5284 = vpop.f32.mrb[0].mxu0
        %5285 = vmatprep.mubr.f32.mxu0 0.0
        %5286 = vmatmul.mubr.f32.gmra.mrb[0].mxu0 %v4980
        %v5287 = vpop.f32.mrb[0].mxu0
        %v5288 = vadd.f32 0.0, %v5287
        %v5289 = vpop.f32.mrb[0].mxu0
        %5290 = vmatprep.mubr.f32.mxu0 0.0
        %5291 = vmatmul.mubr.f32.gmra.mrb[0].mxu0 %v4983
        %v5292 = vpop.f32.mrb[0].mxu0
        %v5293 = vadd.f32 0.0, %v5292
        %v5294 = vpop.f32.mrb[0].mxu0
        %5295 = vmatprep.mubr.f32.mxu0 0.0
        %5296 = vmatmul.mubr.f32.gmra.mrb[0].mxu0 %v4986
        %v5297 = vpop.f32.mrb[0].mxu0
        %v5298 = vadd.f32 0.0, %v5297
        %v5299 = vpop.f32.mrb[0].mxu0
        %5300 = vmatprep.mubr.f32.mxu0 0.0
        %5301 = vmatmul.mubr.f32.gmra.mrb[0].mxu0 %v4989
        %v5302 = vpop.f32.mrb[0].mxu0
        %v5303 = vadd.f32 0.0, %v5302
        %v5304 = vpop.f32.mrb[0].mxu0
        %5305 = vdwg.mxu0
        %v5306 = vmax.f32 %v4740, %v5058
        %v5307 = vmax.f32 %v4741, %v5063
        %v5308 = vmax.f32 %v4742, %v5068
        %v5309 = vmax.f32 %v4743, %v5073
        %v5310 = vmax.f32 %v4744, %v5078
        %v5311 = vmax.f32 %v4745, %v5083
        %v5312 = vmax.f32 %v4746, %v5088
        %v5313 = vmax.f32 %v4747, %v5093
        %v5314 = vmax.f32 %v4748, %v5098
        %v5315 = vmax.f32 %v4749, %v5103
        %v5316 = vmax.f32 %v4750, %v5108
        %v5317 = vmax.f32 %v4751, %v5113
        %v5318 = vmax.f32 %v4752, %v5118
        %v5319 = vmax.f32 %v4753, %v5123
        %v5320 = vmax.f32 %v4754, %v5128
        %v5321 = vmax.f32 %v4755, %v5133
        %v5322 = vmax.f32 %v4756, %v5138
        %v5323 = vmax.f32 %v4757, %v5143
        %v5324 = vmax.f32 %v4758, %v5148
        %v5325 = vmax.f32 %v4759, %v5153
        %v5326 = vmax.f32 %v4760, %v5158
        %v5327 = vmax.f32 %v4761, %v5163
        %v5328 = vmax.f32 %v4762, %v5168
        %v5329 = vmax.f32 %v4763, %v5173
        %v5330 = vmax.f32 %v4764, %v5178
        %v5331 = vmax.f32 %v4765, %v5183
        %v5332 = vmax.f32 %v4766, %v5188
        %v5333 = vmax.f32 %v4767, %v5193
        %v5334 = vmax.f32 %v4768, %v5198
        %v5335 = vmax.f32 %v4769, %v5203
        %v5336 = vmax.f32 %v4770, %v5208
        %v5337 = vmax.f32 %v4771, %v5213
        %v5338 = vmax.f32 %v4772, %v5218
        %v5339 = vmax.f32 %v4773, %v5223
        %v5340 = vmax.f32 %v4774, %v5228
        %v5341 = vmax.f32 %v4775, %v5233
        %v5342 = vmax.f32 %v4776, %v5238
        %v5343 = vmax.f32 %v4777, %v5243
        %v5344 = vmax.f32 %v4778, %v5248
        %v5345 = vmax.f32 %v4779, %v5253
        %v5346 = vmax.f32 %v4780, %v5258
        %v5347 = vmax.f32 %v4781, %v5263
        %v5348 = vmax.f32 %v4782, %v5268
        %v5349 = vmax.f32 %v4783, %v5273
        %v5350 = vmax.f32 %v4784, %v5278
        %v5351 = vmax.f32 %v4785, %v5283
        %v5352 = vmax.f32 %v4786, %v5288
        %v5353 = vmax.f32 %v4787, %v5293
        %v5354 = vmax.f32 %v4788, %v5298
        %v5355 = vmax.f32 %v4789, %v5303
        %s5356 = scalar_lea.vmem %s1976, 2400 [#allocation2]
        %v5357 = vld [vmem:[%s5356] sm:$0xff]
        %v5358 = vld [vmem:[%s5356 + $0x8] sm:$0xff]
        %v5359 = vld [vmem:[%s5356 + $0x10] sm:$0xff]
        %v5360 = vld [vmem:[%s5356 + $0x18] sm:$0xff]
        %v5361 = vld [vmem:[%s5356 + $0x20] sm:$0xff]
        %v5362 = vld [vmem:[%s5356 + $0x28] sm:$0xff]
        %v5363 = vld [vmem:[%s5356 + $0x30] sm:$0xff]
        %v5364 = vld [vmem:[%s5356 + $0x38] sm:$0xff]
        %v5365 = vld [vmem:[%s5356 + $0x40] sm:$0xff]
        %v5366 = vld [vmem:[%s5356 + $0x48] sm:$0xff]
        %v5367 = vld [vmem:[%s5356 + $0x50] sm:$0xff]
        %v5368 = vld [vmem:[%s5356 + $0x58] sm:$0xff]
        %v5369 = vld [vmem:[%s5356 + $0x60] sm:$0xff]
        %v5370 = vld [vmem:[%s5356 + $0x68] sm:$0xff]
        %v5371 = vld [vmem:[%s5356 + $0x70] sm:$0xff]
        %v5372 = vld [vmem:[%s5356 + $0x78] sm:$0xff]
        %v5373 = vld [vmem:[%s5356 + $0x80] sm:$0xff]
        %v5374 = vld [vmem:[%s5356 + $0x88] sm:$0xff]
        %v5375 = vld [vmem:[%s5356 + $0x90] sm:$0xff]
        %v5376 = vld [vmem:[%s5356 + $0x98] sm:$0xff]
        %v5377 = vld [vmem:[%s5356 + $0xa0] sm:$0xff]
        %v5378 = vld [vmem:[%s5356 + $0xa8] sm:$0xff]
        %v5379 = vld [vmem:[%s5356 + $0xb0] sm:$0xff]
        %v5380 = vld [vmem:[%s5356 + $0xb8] sm:$0xff]
        %v5381 = vld [vmem:[%s5356 + $0xc0] sm:$0xff]
        %v5382 = vld [vmem:[%s5356 + $0xc8] sm:$0xff]
        %v5383 = vld [vmem:[%s5356 + $0xd0] sm:$0xff]
        %v5384 = vld [vmem:[%s5356 + $0xd8] sm:$0xff]
        %v5385 = vld [vmem:[%s5356 + $0xe0] sm:$0xff]
        %v5386 = vld [vmem:[%s5356 + $0xe8] sm:$0xff]
        %v5387 = vld [vmem:[%s5356 + $0xf0] sm:$0xff]
        %v5388 = vld [vmem:[%s5356 + $0xf8] sm:$0xff]
        %v5389 = vld [vmem:[%s5356 + $0x100] sm:$0xff]
        %v5390 = vld [vmem:[%s5356 + $0x108] sm:$0xff]
        %v5391 = vld [vmem:[%s5356 + $0x110] sm:$0xff]
        %v5392 = vld [vmem:[%s5356 + $0x118] sm:$0xff]
        %v5393 = vld [vmem:[%s5356 + $0x120] sm:$0xff]
        %v5394 = vld [vmem:[%s5356 + $0x128] sm:$0xff]
        %v5395 = vld [vmem:[%s5356 + $0x130] sm:$0xff]
        %v5396 = vld [vmem:[%s5356 + $0x138] sm:$0xff]
        %v5397 = vld [vmem:[%s5356 + $0x140] sm:$0xff]
        %v5398 = vld [vmem:[%s5356 + $0x148] sm:$0xff]
        %v5399 = vld [vmem:[%s5356 + $0x150] sm:$0xff]
        %v5400 = vld [vmem:[%s5356 + $0x158] sm:$0xff]
        %v5401 = vld [vmem:[%s5356 + $0x160] sm:$0xff]
        %v5402 = vld [vmem:[%s5356 + $0x168] sm:$0xff]
        %v5403 = vld [vmem:[%s5356 + $0x170] sm:$0xff]
        %v5404 = vld [vmem:[%s5356 + $0x178] sm:$0xff]
        %v5405 = vld [vmem:[%s5356 + $0x180] sm:$0xff]
        %v5406 = vld [vmem:[%s5356 + $0x188] sm:$0xff]
        %v5408 = vsel %vm2056, %v5357, 0
        %v5411 = vsel %vm2056, %v5358, 0
        %v5414 = vsel %vm2056, %v5359, 0
        %v5417 = vsel %vm2056, %v5360, 0
        %v5420 = vsel %vm2056, %v5361, 0
        %v5423 = vsel %vm2056, %v5362, 0
        %v5426 = vsel %vm2056, %v5363, 0
        %v5429 = vsel %vm2056, %v5364, 0
        %v5432 = vsel %vm2056, %v5365, 0
        %v5435 = vsel %vm2056, %v5366, 0
        %v5438 = vsel %vm2056, %v5367, 0
        %v5441 = vsel %vm2056, %v5368, 0
        %v5444 = vsel %vm2056, %v5369, 0
        %v5447 = vsel %vm2056, %v5370, 0
        %v5450 = vsel %vm2056, %v5371, 0
        %v5453 = vsel %vm2056, %v5372, 0
        %v5456 = vsel %vm2056, %v5373, 0
        %v5459 = vsel %vm2056, %v5374, 0
        %v5462 = vsel %vm2056, %v5375, 0
        %v5465 = vsel %vm2056, %v5376, 0
        %v5468 = vsel %vm2056, %v5377, 0
        %v5471 = vsel %vm2056, %v5378, 0
        %v5474 = vsel %vm2056, %v5379, 0
        %v5477 = vsel %vm2056, %v5380, 0
        %v5480 = vsel %vm2056, %v5381, 0
        %v5483 = vsel %vm2056, %v5382, 0
        %v5486 = vsel %vm2056, %v5383, 0
        %v5489 = vsel %vm2056, %v5384, 0
        %v5492 = vsel %vm2056, %v5385, 0
        %v5495 = vsel %vm2056, %v5386, 0
        %v5498 = vsel %vm2056, %v5387, 0
        %v5501 = vsel %vm2056, %v5388, 0
        %v5504 = vsel %vm2056, %v5389, 0
        %v5507 = vsel %vm2056, %v5390, 0
        %v5510 = vsel %vm2056, %v5391, 0
        %v5513 = vsel %vm2056, %v5392, 0
        %v5516 = vsel %vm2056, %v5393, 0
        %v5519 = vsel %vm2056, %v5394, 0
        %v5522 = vsel %vm2056, %v5395, 0
        %v5525 = vsel %vm2056, %v5396, 0
        %v5528 = vsel %vm2056, %v5397, 0
        %v5531 = vsel %vm2056, %v5398, 0
        %v5534 = vsel %vm2056, %v5399, 0
        %v5537 = vsel %vm2056, %v5400, 0
        %v5540 = vsel %vm2056, %v5401, 0
        %v5543 = vsel %vm2056, %v5402, 0
        %v5546 = vsel %vm2056, %v5403, 0
        %v5549 = vsel %vm2056, %v5404, 0
        %v5552 = vsel %vm2056, %v5405, 0
        %v5555 = vsel %vm2056, %v5406, 0
        %5557 = vmatprep.subr.mxu0 0.0
        %5558 = vmatpush1.msra.mxu0 %v2054
        %5559 = vmatprep.subr.mxu0 0.0
        %5560 = vmatpush1.msra.mxu0 %v2209
        %5561 = vmatprep.subr.mxu0 0.0
        %5562 = vmatpush1.msra.mxu0 0.0
        %5563 = vmatprep.subr.mxu0 0.0
        %5564 = vmatpush1.msra.mxu0 0.0
        %5565 = vmatprep.subr.mxu0 0.0
        %5566 = vmatpush1.msra.mxu0 0.0
        %5567 = vmatprep.subr.mxu0 0.0
        %5568 = vmatpush1.msra.mxu0 0.0
        %5569 = vmatprep.subr.mxu0 0.0
        %5570 = vmatpush1.msra.mxu0 0.0
        %5571 = vmatprep.subr.mxu0 0.0
        %5572 = vmatpush1.msra.mxu0 0.0
        %5573 = vmatprep.subr.mxu0 0.0
        %5574 = vmatpush1.msra.mxu0 0.0
        %5575 = vmatprep.subr.mxu0 0.0
        %5576 = vmatpush1.msra.mxu0 0.0
        %5577 = vmatprep.subr.mxu0 0.0
        %5578 = vmatpush1.msra.mxu0 0.0
        %5579 = vmatprep.subr.mxu0 0.0
        %5580 = vmatpush1.msra.mxu0 0.0
        %5581 = vmatprep.subr.mxu0 0.0
        %5582 = vmatpush1.msra.mxu0 0.0
        %5583 = vmatprep.subr.mxu0 0.0
        %5584 = vmatpush1.msra.mxu0 0.0
        %5585 = vmatprep.subr.mxu0 0.0
        %5586 = vmatpush1.msra.mxu0 0.0
        %5587 = vmatprep.subr.mxu0 0.0
        %5588 = vmatpush1.msra.mxu0 0.0
        %5589 = vmatprep.subr.mxu0 0.0
        %5590 = vmatpush1.msra.mxu0 0.0
        %5591 = vmatprep.subr.mxu0 0.0
        %5592 = vmatpush1.msra.mxu0 0.0
        %5593 = vmatprep.subr.mxu0 0.0
        %5594 = vmatpush1.msra.mxu0 0.0
        %5595 = vmatprep.subr.mxu0 0.0
        %5596 = vmatpush1.msra.mxu0 0.0
        %5597 = vmatprep.subr.mxu0 0.0
        %5598 = vmatpush1.msra.mxu0 0.0
        %5599 = vmatprep.subr.mxu0 0.0
        %5600 = vmatpush1.msra.mxu0 0.0
        %5601 = vmatprep.subr.mxu0 0.0
        %5602 = vmatpush1.msra.mxu0 0.0
        %5603 = vmatprep.subr.mxu0 0.0
        %5604 = vmatpush1.msra.mxu0 0.0
        %5605 = vmatprep.subr.mxu0 0.0
        %5606 = vmatpush1.msra.mxu0 0.0
        %5607 = vmatprep.subr.mxu0 0.0
        %5608 = vmatpush1.msra.mxu0 0.0
        %5609 = vmatprep.subr.mxu0 0.0
        %5610 = vmatpush1.msra.mxu0 0.0
        %5611 = vmatprep.subr.mxu0 0.0
        %5612 = vmatpush1.msra.mxu0 0.0
        %5613 = vmatprep.subr.mxu0 0.0
        %5614 = vmatpush1.msra.mxu0 0.0
        %5615 = vmatprep.subr.mxu0 0.0
        %5616 = vmatpush1.msra.mxu0 0.0
        %5617 = vmatprep.subr.mxu0 0.0
        %5618 = vmatpush1.msra.mxu0 0.0
        %5619 = vmatprep.subr.mxu0 0.0
        %5620 = vmatpush1.msra.mxu0 0.0
        %5621 = vmatprep.mubr.f32.mxu0 0.0
        %5622 = vmatmul.mubr.f32.gmra.mrb[0].mxu0 %v5408
        %v5623 = vpop.f32.mrb[0].mxu0
        %v5624 = vadd.f32 0.0, %v5623
        %v5625 = vpop.f32.mrb[0].mxu0
        %5626 = vmatprep.mubr.f32.mxu0 0.0
        %5627 = vmatmul.mubr.f32.gmra.mrb[0].mxu0 %v5411
        %v5628 = vpop.f32.mrb[0].mxu0
        %v5629 = vadd.f32 0.0, %v5628
        %v5630 = vpop.f32.mrb[0].mxu0
        %5631 = vmatprep.mubr.f32.mxu0 0.0
        %5632 = vmatmul.mubr.f32.gmra.mrb[0].mxu0 %v5414
        %v5633 = vpop.f32.mrb[0].mxu0
        %v5634 = vadd.f32 0.0, %v5633
        %v5635 = vpop.f32.mrb[0].mxu0
        %5636 = vmatprep.mubr.f32.mxu0 0.0
        %5637 = vmatmul.mubr.f32.gmra.mrb[0].mxu0 %v5417
        %v5638 = vpop.f32.mrb[0].mxu0
        %v5639 = vadd.f32 0.0, %v5638
        %v5640 = vpop.f32.mrb[0].mxu0
        %5641 = vmatprep.mubr.f32.mxu0 0.0
        %5642 = vmatmul.mubr.f32.gmra.mrb[0].mxu0 %v5420
        %v5643 = vpop.f32.mrb[0].mxu0
        %v5644 = vadd.f32 0.0, %v5643
        %v5645 = vpop.f32.mrb[0].mxu0
        %5646 = vmatprep.mubr.f32.mxu0 0.0
        %5647 = vmatmul.mubr.f32.gmra.mrb[0].mxu0 %v5423
        %v5648 = vpop.f32.mrb[0].mxu0
        %v5649 = vadd.f32 0.0, %v5648
        %v5650 = vpop.f32.mrb[0].mxu0
        %5651 = vmatprep.mubr.f32.mxu0 0.0
        %5652 = vmatmul.mubr.f32.gmra.mrb[0].mxu0 %v5426
        %v5653 = vpop.f32.mrb[0].mxu0
        %v5654 = vadd.f32 0.0, %v5653
        %v5655 = vpop.f32.mrb[0].mxu0
        %5656 = vmatprep.mubr.f32.mxu0 0.0
        %5657 = vmatmul.mubr.f32.gmra.mrb[0].mxu0 %v5429
        %v5658 = vpop.f32.mrb[0].mxu0
        %v5659 = vadd.f32 0.0, %v5658
        %v5660 = vpop.f32.mrb[0].mxu0
        %5661 = vmatprep.mubr.f32.mxu0 0.0
        %5662 = vmatmul.mubr.f32.gmra.mrb[0].mxu0 %v5432
        %v5663 = vpop.f32.mrb[0].mxu0
        %v5664 = vadd.f32 0.0, %v5663
        %v5665 = vpop.f32.mrb[0].mxu0
        %5666 = vmatprep.mubr.f32.mxu0 0.0
        %5667 = vmatmul.mubr.f32.gmra.mrb[0].mxu0 %v5435
        %v5668 = vpop.f32.mrb[0].mxu0
        %v5669 = vadd.f32 0.0, %v5668
        %v5670 = vpop.f32.mrb[0].mxu0
        %5671 = vmatprep.mubr.f32.mxu0 0.0
        %5672 = vmatmul.mubr.f32.gmra.mrb[0].mxu0 %v5438
        %v5673 = vpop.f32.mrb[0].mxu0
        %v5674 = vadd.f32 0.0, %v5673
        %v5675 = vpop.f32.mrb[0].mxu0
        %5676 = vmatprep.mubr.f32.mxu0 0.0
        %5677 = vmatmul.mubr.f32.gmra.mrb[0].mxu0 %v5441
        %v5678 = vpop.f32.mrb[0].mxu0
        %v5679 = vadd.f32 0.0, %v5678
        %v5680 = vpop.f32.mrb[0].mxu0
        %5681 = vmatprep.mubr.f32.mxu0 0.0
        %5682 = vmatmul.mubr.f32.gmra.mrb[0].mxu0 %v5444
        %v5683 = vpop.f32.mrb[0].mxu0
        %v5684 = vadd.f32 0.0, %v5683
        %v5685 = vpop.f32.mrb[0].mxu0
        %5686 = vmatprep.mubr.f32.mxu0 0.0
        %5687 = vmatmul.mubr.f32.gmra.mrb[0].mxu0 %v5447
        %v5688 = vpop.f32.mrb[0].mxu0
        %v5689 = vadd.f32 0.0, %v5688
        %v5690 = vpop.f32.mrb[0].mxu0
        %5691 = vmatprep.mubr.f32.mxu0 0.0
        %5692 = vmatmul.mubr.f32.gmra.mrb[0].mxu0 %v5450
        %v5693 = vpop.f32.mrb[0].mxu0
        %v5694 = vadd.f32 0.0, %v5693
        %v5695 = vpop.f32.mrb[0].mxu0
        %5696 = vmatprep.mubr.f32.mxu0 0.0
        %5697 = vmatmul.mubr.f32.gmra.mrb[0].mxu0 %v5453
        %v5698 = vpop.f32.mrb[0].mxu0
        %v5699 = vadd.f32 0.0, %v5698
        %v5700 = vpop.f32.mrb[0].mxu0
        %5701 = vmatprep.mubr.f32.mxu0 0.0
        %5702 = vmatmul.mubr.f32.gmra.mrb[0].mxu0 %v5456
        %v5703 = vpop.f32.mrb[0].mxu0
        %v5704 = vadd.f32 0.0, %v5703
        %v5705 = vpop.f32.mrb[0].mxu0
        %5706 = vmatprep.mubr.f32.mxu0 0.0
        %5707 = vmatmul.mubr.f32.gmra.mrb[0].mxu0 %v5459
        %v5708 = vpop.f32.mrb[0].mxu0
        %v5709 = vadd.f32 0.0, %v5708
        %v5710 = vpop.f32.mrb[0].mxu0
        %5711 = vmatprep.mubr.f32.mxu0 0.0
        %5712 = vmatmul.mubr.f32.gmra.mrb[0].mxu0 %v5462
        %v5713 = vpop.f32.mrb[0].mxu0
        %v5714 = vadd.f32 0.0, %v5713
        %v5715 = vpop.f32.mrb[0].mxu0
        %5716 = vmatprep.mubr.f32.mxu0 0.0
        %5717 = vmatmul.mubr.f32.gmra.mrb[0].mxu0 %v5465
        %v5718 = vpop.f32.mrb[0].mxu0
        %v5719 = vadd.f32 0.0, %v5718
        %v5720 = vpop.f32.mrb[0].mxu0
        %5721 = vmatprep.mubr.f32.mxu0 0.0
        %5722 = vmatmul.mubr.f32.gmra.mrb[0].mxu0 %v5468
        %v5723 = vpop.f32.mrb[0].mxu0
        %v5724 = vadd.f32 0.0, %v5723
        %v5725 = vpop.f32.mrb[0].mxu0
        %5726 = vmatprep.mubr.f32.mxu0 0.0
        %5727 = vmatmul.mubr.f32.gmra.mrb[0].mxu0 %v5471
        %v5728 = vpop.f32.mrb[0].mxu0
        %v5729 = vadd.f32 0.0, %v5728
        %v5730 = vpop.f32.mrb[0].mxu0
        %5731 = vmatprep.mubr.f32.mxu0 0.0
        %5732 = vmatmul.mubr.f32.gmra.mrb[0].mxu0 %v5474
        %v5733 = vpop.f32.mrb[0].mxu0
        %v5734 = vadd.f32 0.0, %v5733
        %v5735 = vpop.f32.mrb[0].mxu0
        %5736 = vmatprep.mubr.f32.mxu0 0.0
        %5737 = vmatmul.mubr.f32.gmra.mrb[0].mxu0 %v5477
        %v5738 = vpop.f32.mrb[0].mxu0
        %v5739 = vadd.f32 0.0, %v5738
        %v5740 = vpop.f32.mrb[0].mxu0
        %5741 = vmatprep.mubr.f32.mxu0 0.0
        %5742 = vmatmul.mubr.f32.gmra.mrb[0].mxu0 %v5480
        %v5743 = vpop.f32.mrb[0].mxu0
        %v5744 = vadd.f32 0.0, %v5743
        %v5745 = vpop.f32.mrb[0].mxu0
        %5746 = vmatprep.mubr.f32.mxu0 0.0
        %5747 = vmatmul.mubr.f32.gmra.mrb[0].mxu0 %v5483
        %v5748 = vpop.f32.mrb[0].mxu0
        %v5749 = vadd.f32 0.0, %v5748
        %v5750 = vpop.f32.mrb[0].mxu0
        %5751 = vmatprep.mubr.f32.mxu0 0.0
        %5752 = vmatmul.mubr.f32.gmra.mrb[0].mxu0 %v5486
        %v5753 = vpop.f32.mrb[0].mxu0
        %v5754 = vadd.f32 0.0, %v5753
        %v5755 = vpop.f32.mrb[0].mxu0
        %5756 = vmatprep.mubr.f32.mxu0 0.0
        %5757 = vmatmul.mubr.f32.gmra.mrb[0].mxu0 %v5489
        %v5758 = vpop.f32.mrb[0].mxu0
        %v5759 = vadd.f32 0.0, %v5758
        %v5760 = vpop.f32.mrb[0].mxu0
        %5761 = vmatprep.mubr.f32.mxu0 0.0
        %5762 = vmatmul.mubr.f32.gmra.mrb[0].mxu0 %v5492
        %v5763 = vpop.f32.mrb[0].mxu0
        %v5764 = vadd.f32 0.0, %v5763
        %v5765 = vpop.f32.mrb[0].mxu0
        %5766 = vmatprep.mubr.f32.mxu0 0.0
        %5767 = vmatmul.mubr.f32.gmra.mrb[0].mxu0 %v5495
        %v5768 = vpop.f32.mrb[0].mxu0
        %v5769 = vadd.f32 0.0, %v5768
        %v5770 = vpop.f32.mrb[0].mxu0
        %5771 = vmatprep.mubr.f32.mxu0 0.0
        %5772 = vmatmul.mubr.f32.gmra.mrb[0].mxu0 %v5498
        %v5773 = vpop.f32.mrb[0].mxu0
        %v5774 = vadd.f32 0.0, %v5773
        %v5775 = vpop.f32.mrb[0].mxu0
        %5776 = vmatprep.mubr.f32.mxu0 0.0
        %5777 = vmatmul.mubr.f32.gmra.mrb[0].mxu0 %v5501
        %v5778 = vpop.f32.mrb[0].mxu0
        %v5779 = vadd.f32 0.0, %v5778
        %v5780 = vpop.f32.mrb[0].mxu0
        %5781 = vmatprep.mubr.f32.mxu0 0.0
        %5782 = vmatmul.mubr.f32.gmra.mrb[0].mxu0 %v5504
        %v5783 = vpop.f32.mrb[0].mxu0
        %v5784 = vadd.f32 0.0, %v5783
        %v5785 = vpop.f32.mrb[0].mxu0
        %5786 = vmatprep.mubr.f32.mxu0 0.0
        %5787 = vmatmul.mubr.f32.gmra.mrb[0].mxu0 %v5507
        %v5788 = vpop.f32.mrb[0].mxu0
        %v5789 = vadd.f32 0.0, %v5788
        %v5790 = vpop.f32.mrb[0].mxu0
        %5791 = vmatprep.mubr.f32.mxu0 0.0
        %5792 = vmatmul.mubr.f32.gmra.mrb[0].mxu0 %v5510
        %v5793 = vpop.f32.mrb[0].mxu0
        %v5794 = vadd.f32 0.0, %v5793
        %v5795 = vpop.f32.mrb[0].mxu0
        %5796 = vmatprep.mubr.f32.mxu0 0.0
        %5797 = vmatmul.mubr.f32.gmra.mrb[0].mxu0 %v5513
        %v5798 = vpop.f32.mrb[0].mxu0
        %v5799 = vadd.f32 0.0, %v5798
        %v5800 = vpop.f32.mrb[0].mxu0
        %5801 = vmatprep.mubr.f32.mxu0 0.0
        %5802 = vmatmul.mubr.f32.gmra.mrb[0].mxu0 %v5516
        %v5803 = vpop.f32.mrb[0].mxu0
        %v5804 = vadd.f32 0.0, %v5803
        %v5805 = vpop.f32.mrb[0].mxu0
        %5806 = vmatprep.mubr.f32.mxu0 0.0
        %5807 = vmatmul.mubr.f32.gmra.mrb[0].mxu0 %v5519
        %v5808 = vpop.f32.mrb[0].mxu0
        %v5809 = vadd.f32 0.0, %v5808
        %v5810 = vpop.f32.mrb[0].mxu0
        %5811 = vmatprep.mubr.f32.mxu0 0.0
        %5812 = vmatmul.mubr.f32.gmra.mrb[0].mxu0 %v5522
        %v5813 = vpop.f32.mrb[0].mxu0
        %v5814 = vadd.f32 0.0, %v5813
        %v5815 = vpop.f32.mrb[0].mxu0
        %5816 = vmatprep.mubr.f32.mxu0 0.0
        %5817 = vmatmul.mubr.f32.gmra.mrb[0].mxu0 %v5525
        %v5818 = vpop.f32.mrb[0].mxu0
        %v5819 = vadd.f32 0.0, %v5818
        %v5820 = vpop.f32.mrb[0].mxu0
        %5821 = vmatprep.mubr.f32.mxu0 0.0
        %5822 = vmatmul.mubr.f32.gmra.mrb[0].mxu0 %v5528
        %v5823 = vpop.f32.mrb[0].mxu0
        %v5824 = vadd.f32 0.0, %v5823
        %v5825 = vpop.f32.mrb[0].mxu0
        %5826 = vmatprep.mubr.f32.mxu0 0.0
        %5827 = vmatmul.mubr.f32.gmra.mrb[0].mxu0 %v5531
        %v5828 = vpop.f32.mrb[0].mxu0
        %v5829 = vadd.f32 0.0, %v5828
        %v5830 = vpop.f32.mrb[0].mxu0
        %5831 = vmatprep.mubr.f32.mxu0 0.0
        %5832 = vmatmul.mubr.f32.gmra.mrb[0].mxu0 %v5534
        %v5833 = vpop.f32.mrb[0].mxu0
        %v5834 = vadd.f32 0.0, %v5833
        %v5835 = vpop.f32.mrb[0].mxu0
        %5836 = vmatprep.mubr.f32.mxu0 0.0
        %5837 = vmatmul.mubr.f32.gmra.mrb[0].mxu0 %v5537
        %v5838 = vpop.f32.mrb[0].mxu0
        %v5839 = vadd.f32 0.0, %v5838
        %v5840 = vpop.f32.mrb[0].mxu0
        %5841 = vmatprep.mubr.f32.mxu0 0.0
        %5842 = vmatmul.mubr.f32.gmra.mrb[0].mxu0 %v5540
        %v5843 = vpop.f32.mrb[0].mxu0
        %v5844 = vadd.f32 0.0, %v5843
        %v5845 = vpop.f32.mrb[0].mxu0
        %5846 = vmatprep.mubr.f32.mxu0 0.0
        %5847 = vmatmul.mubr.f32.gmra.mrb[0].mxu0 %v5543
        %v5848 = vpop.f32.mrb[0].mxu0
        %v5849 = vadd.f32 0.0, %v5848
        %v5850 = vpop.f32.mrb[0].mxu0
        %5851 = vmatprep.mubr.f32.mxu0 0.0
        %5852 = vmatmul.mubr.f32.gmra.mrb[0].mxu0 %v5546
        %v5853 = vpop.f32.mrb[0].mxu0
        %v5854 = vadd.f32 0.0, %v5853
        %v5855 = vpop.f32.mrb[0].mxu0
        %5856 = vmatprep.mubr.f32.mxu0 0.0
        %5857 = vmatmul.mubr.f32.gmra.mrb[0].mxu0 %v5549
        %v5858 = vpop.f32.mrb[0].mxu0
        %v5859 = vadd.f32 0.0, %v5858
        %v5860 = vpop.f32.mrb[0].mxu0
        %5861 = vmatprep.mubr.f32.mxu0 0.0
        %5862 = vmatmul.mubr.f32.gmra.mrb[0].mxu0 %v5552
        %v5863 = vpop.f32.mrb[0].mxu0
        %v5864 = vadd.f32 0.0, %v5863
        %v5865 = vpop.f32.mrb[0].mxu0
        %5866 = vmatprep.mubr.f32.mxu0 0.0
        %5867 = vmatmul.mubr.f32.gmra.mrb[0].mxu0 %v5555
        %v5868 = vpop.f32.mrb[0].mxu0
        %v5869 = vadd.f32 0.0, %v5868
        %v5870 = vpop.f32.mrb[0].mxu0
        %5871 = vdwg.mxu0
        %v5872 = vmax.f32 %v5306, %v5624
        %v5873 = vmax.f32 %v5307, %v5629
        %v5874 = vmax.f32 %v5308, %v5634
        %v5875 = vmax.f32 %v5309, %v5639
        %v5876 = vmax.f32 %v5310, %v5644
        %v5877 = vmax.f32 %v5311, %v5649
        %v5878 = vmax.f32 %v5312, %v5654
        %v5879 = vmax.f32 %v5313, %v5659
        %v5880 = vmax.f32 %v5314, %v5664
        %v5881 = vmax.f32 %v5315, %v5669
        %v5882 = vmax.f32 %v5316, %v5674
        %v5883 = vmax.f32 %v5317, %v5679
        %v5884 = vmax.f32 %v5318, %v5684
        %v5885 = vmax.f32 %v5319, %v5689
        %v5886 = vmax.f32 %v5320, %v5694
        %v5887 = vmax.f32 %v5321, %v5699
        %v5888 = vmax.f32 %v5322, %v5704
        %v5889 = vmax.f32 %v5323, %v5709
        %v5890 = vmax.f32 %v5324, %v5714
        %v5891 = vmax.f32 %v5325, %v5719
        %v5892 = vmax.f32 %v5326, %v5724
        %v5893 = vmax.f32 %v5327, %v5729
        %v5894 = vmax.f32 %v5328, %v5734
        %v5895 = vmax.f32 %v5329, %v5739
        %v5896 = vmax.f32 %v5330, %v5744
        %v5897 = vmax.f32 %v5331, %v5749
        %v5898 = vmax.f32 %v5332, %v5754
        %v5899 = vmax.f32 %v5333, %v5759
        %v5900 = vmax.f32 %v5334, %v5764
        %v5901 = vmax.f32 %v5335, %v5769
        %v5902 = vmax.f32 %v5336, %v5774
        %v5903 = vmax.f32 %v5337, %v5779
        %v5904 = vmax.f32 %v5338, %v5784
        %v5905 = vmax.f32 %v5339, %v5789
        %v5906 = vmax.f32 %v5340, %v5794
        %v5907 = vmax.f32 %v5341, %v5799
        %v5908 = vmax.f32 %v5342, %v5804
        %v5909 = vmax.f32 %v5343, %v5809
        %v5910 = vmax.f32 %v5344, %v5814
        %v5911 = vmax.f32 %v5345, %v5819
        %v5912 = vmax.f32 %v5346, %v5824
        %v5913 = vmax.f32 %v5347, %v5829
        %v5914 = vmax.f32 %v5348, %v5834
        %v5915 = vmax.f32 %v5349, %v5839
        %v5916 = vmax.f32 %v5350, %v5844
        %v5917 = vmax.f32 %v5351, %v5849
        %v5918 = vmax.f32 %v5352, %v5854
        %v5919 = vmax.f32 %v5353, %v5859
        %v5920 = vmax.f32 %v5354, %v5864
        %v5921 = vmax.f32 %v5355, %v5869
        %s5922 = scalar_lea.vmem %s1976, 2800 [#allocation2]
        %v5923 = vld [vmem:[%s5922] sm:$0xff]
        %v5924 = vld [vmem:[%s5922 + $0x8] sm:$0xff]
        %v5925 = vld [vmem:[%s5922 + $0x10] sm:$0xff]
        %v5926 = vld [vmem:[%s5922 + $0x18] sm:$0xff]
        %v5927 = vld [vmem:[%s5922 + $0x20] sm:$0xff]
        %v5928 = vld [vmem:[%s5922 + $0x28] sm:$0xff]
        %v5929 = vld [vmem:[%s5922 + $0x30] sm:$0xff]
        %v5930 = vld [vmem:[%s5922 + $0x38] sm:$0xff]
        %v5931 = vld [vmem:[%s5922 + $0x40] sm:$0xff]
        %v5932 = vld [vmem:[%s5922 + $0x48] sm:$0xff]
        %v5933 = vld [vmem:[%s5922 + $0x50] sm:$0xff]
        %v5934 = vld [vmem:[%s5922 + $0x58] sm:$0xff]
        %v5935 = vld [vmem:[%s5922 + $0x60] sm:$0xff]
        %v5936 = vld [vmem:[%s5922 + $0x68] sm:$0xff]
        %v5937 = vld [vmem:[%s5922 + $0x70] sm:$0xff]
        %v5938 = vld [vmem:[%s5922 + $0x78] sm:$0xff]
        %v5939 = vld [vmem:[%s5922 + $0x80] sm:$0xff]
        %v5940 = vld [vmem:[%s5922 + $0x88] sm:$0xff]
        %v5941 = vld [vmem:[%s5922 + $0x90] sm:$0xff]
        %v5942 = vld [vmem:[%s5922 + $0x98] sm:$0xff]
        %v5943 = vld [vmem:[%s5922 + $0xa0] sm:$0xff]
        %v5944 = vld [vmem:[%s5922 + $0xa8] sm:$0xff]
        %v5945 = vld [vmem:[%s5922 + $0xb0] sm:$0xff]
        %v5946 = vld [vmem:[%s5922 + $0xb8] sm:$0xff]
        %v5947 = vld [vmem:[%s5922 + $0xc0] sm:$0xff]
        %v5948 = vld [vmem:[%s5922 + $0xc8] sm:$0xff]
        %v5949 = vld [vmem:[%s5922 + $0xd0] sm:$0xff]
        %v5950 = vld [vmem:[%s5922 + $0xd8] sm:$0xff]
        %v5951 = vld [vmem:[%s5922 + $0xe0] sm:$0xff]
        %v5952 = vld [vmem:[%s5922 + $0xe8] sm:$0xff]
        %v5953 = vld [vmem:[%s5922 + $0xf0] sm:$0xff]
        %v5954 = vld [vmem:[%s5922 + $0xf8] sm:$0xff]
        %v5955 = vld [vmem:[%s5922 + $0x100] sm:$0xff]
        %v5956 = vld [vmem:[%s5922 + $0x108] sm:$0xff]
        %v5957 = vld [vmem:[%s5922 + $0x110] sm:$0xff]
        %v5958 = vld [vmem:[%s5922 + $0x118] sm:$0xff]
        %v5959 = vld [vmem:[%s5922 + $0x120] sm:$0xff]
        %v5960 = vld [vmem:[%s5922 + $0x128] sm:$0xff]
        %v5961 = vld [vmem:[%s5922 + $0x130] sm:$0xff]
        %v5962 = vld [vmem:[%s5922 + $0x138] sm:$0xff]
        %v5963 = vld [vmem:[%s5922 + $0x140] sm:$0xff]
        %v5964 = vld [vmem:[%s5922 + $0x148] sm:$0xff]
        %v5965 = vld [vmem:[%s5922 + $0x150] sm:$0xff]
        %v5966 = vld [vmem:[%s5922 + $0x158] sm:$0xff]
        %v5967 = vld [vmem:[%s5922 + $0x160] sm:$0xff]
        %v5968 = vld [vmem:[%s5922 + $0x168] sm:$0xff]
        %v5969 = vld [vmem:[%s5922 + $0x170] sm:$0xff]
        %v5970 = vld [vmem:[%s5922 + $0x178] sm:$0xff]
        %v5971 = vld [vmem:[%s5922 + $0x180] sm:$0xff]
        %v5972 = vld [vmem:[%s5922 + $0x188] sm:$0xff]
        %v5974 = vsel %vm2056, %v5923, 0
        %v5977 = vsel %vm2056, %v5924, 0
        %v5980 = vsel %vm2056, %v5925, 0
        %v5983 = vsel %vm2056, %v5926, 0
        %v5986 = vsel %vm2056, %v5927, 0
        %v5989 = vsel %vm2056, %v5928, 0
        %v5992 = vsel %vm2056, %v5929, 0
        %v5995 = vsel %vm2056, %v5930, 0
        %v5998 = vsel %vm2056, %v5931, 0
        %v6001 = vsel %vm2056, %v5932, 0
        %v6004 = vsel %vm2056, %v5933, 0
        %v6007 = vsel %vm2056, %v5934, 0
        %v6010 = vsel %vm2056, %v5935, 0
        %v6013 = vsel %vm2056, %v5936, 0
        %v6016 = vsel %vm2056, %v5937, 0
        %v6019 = vsel %vm2056, %v5938, 0
        %v6022 = vsel %vm2056, %v5939, 0
        %v6025 = vsel %vm2056, %v5940, 0
        %v6028 = vsel %vm2056, %v5941, 0
        %v6031 = vsel %vm2056, %v5942, 0
        %v6034 = vsel %vm2056, %v5943, 0
        %v6037 = vsel %vm2056, %v5944, 0
        %v6040 = vsel %vm2056, %v5945, 0
        %v6043 = vsel %vm2056, %v5946, 0
        %v6046 = vsel %vm2056, %v5947, 0
        %v6049 = vsel %vm2056, %v5948, 0
        %v6052 = vsel %vm2056, %v5949, 0
        %v6055 = vsel %vm2056, %v5950, 0
        %v6058 = vsel %vm2056, %v5951, 0
        %v6061 = vsel %vm2056, %v5952, 0
        %v6064 = vsel %vm2056, %v5953, 0
        %v6067 = vsel %vm2056, %v5954, 0
        %v6070 = vsel %vm2056, %v5955, 0
        %v6073 = vsel %vm2056, %v5956, 0
        %v6076 = vsel %vm2056, %v5957, 0
        %v6079 = vsel %vm2056, %v5958, 0
        %v6082 = vsel %vm2056, %v5959, 0
        %v6085 = vsel %vm2056, %v5960, 0
        %v6088 = vsel %vm2056, %v5961, 0
        %v6091 = vsel %vm2056, %v5962, 0
        %v6094 = vsel %vm2056, %v5963, 0
        %v6097 = vsel %vm2056, %v5964, 0
        %v6100 = vsel %vm2056, %v5965, 0
        %v6103 = vsel %vm2056, %v5966, 0
        %v6106 = vsel %vm2056, %v5967, 0
        %v6109 = vsel %vm2056, %v5968, 0
        %v6112 = vsel %vm2056, %v5969, 0
        %v6115 = vsel %vm2056, %v5970, 0
        %v6118 = vsel %vm2056, %v5971, 0
        %v6121 = vsel %vm2056, %v5972, 0
        %6123 = vmatprep.subr.mxu0 0.0
        %6124 = vmatpush1.msra.mxu0 %v2054
        %6125 = vmatprep.subr.mxu0 0.0
        %6126 = vmatpush1.msra.mxu0 %v2209
        %6127 = vmatprep.subr.mxu0 0.0
        %6128 = vmatpush1.msra.mxu0 0.0
        %6129 = vmatprep.subr.mxu0 0.0
        %6130 = vmatpush1.msra.mxu0 0.0
        %6131 = vmatprep.subr.mxu0 0.0
        %6132 = vmatpush1.msra.mxu0 0.0
        %6133 = vmatprep.subr.mxu0 0.0
        %6134 = vmatpush1.msra.mxu0 0.0
        %6135 = vmatprep.subr.mxu0 0.0
        %6136 = vmatpush1.msra.mxu0 0.0
        %6137 = vmatprep.subr.mxu0 0.0
        %6138 = vmatpush1.msra.mxu0 0.0
        %6139 = vmatprep.subr.mxu0 0.0
        %6140 = vmatpush1.msra.mxu0 0.0
        %6141 = vmatprep.subr.mxu0 0.0
        %6142 = vmatpush1.msra.mxu0 0.0
        %6143 = vmatprep.subr.mxu0 0.0
        %6144 = vmatpush1.msra.mxu0 0.0
        %6145 = vmatprep.subr.mxu0 0.0
        %6146 = vmatpush1.msra.mxu0 0.0
        %6147 = vmatprep.subr.mxu0 0.0
        %6148 = vmatpush1.msra.mxu0 0.0
        %6149 = vmatprep.subr.mxu0 0.0
        %6150 = vmatpush1.msra.mxu0 0.0
        %6151 = vmatprep.subr.mxu0 0.0
        %6152 = vmatpush1.msra.mxu0 0.0
        %6153 = vmatprep.subr.mxu0 0.0
        %6154 = vmatpush1.msra.mxu0 0.0
        %6155 = vmatprep.subr.mxu0 0.0
        %6156 = vmatpush1.msra.mxu0 0.0
        %6157 = vmatprep.subr.mxu0 0.0
        %6158 = vmatpush1.msra.mxu0 0.0
        %6159 = vmatprep.subr.mxu0 0.0
        %6160 = vmatpush1.msra.mxu0 0.0
        %6161 = vmatprep.subr.mxu0 0.0
        %6162 = vmatpush1.msra.mxu0 0.0
        %6163 = vmatprep.subr.mxu0 0.0
        %6164 = vmatpush1.msra.mxu0 0.0
        %6165 = vmatprep.subr.mxu0 0.0
        %6166 = vmatpush1.msra.mxu0 0.0
        %6167 = vmatprep.subr.mxu0 0.0
        %6168 = vmatpush1.msra.mxu0 0.0
        %6169 = vmatprep.subr.mxu0 0.0
        %6170 = vmatpush1.msra.mxu0 0.0
        %6171 = vmatprep.subr.mxu0 0.0
        %6172 = vmatpush1.msra.mxu0 0.0
        %6173 = vmatprep.subr.mxu0 0.0
        %6174 = vmatpush1.msra.mxu0 0.0
        %6175 = vmatprep.subr.mxu0 0.0
        %6176 = vmatpush1.msra.mxu0 0.0
        %6177 = vmatprep.subr.mxu0 0.0
        %6178 = vmatpush1.msra.mxu0 0.0
        %6179 = vmatprep.subr.mxu0 0.0
        %6180 = vmatpush1.msra.mxu0 0.0
        %6181 = vmatprep.subr.mxu0 0.0
        %6182 = vmatpush1.msra.mxu0 0.0
        %6183 = vmatprep.subr.mxu0 0.0
        %6184 = vmatpush1.msra.mxu0 0.0
        %6185 = vmatprep.subr.mxu0 0.0
        %6186 = vmatpush1.msra.mxu0 0.0
        %6187 = vmatprep.mubr.f32.mxu0 0.0
        %6188 = vmatmul.mubr.f32.gmra.mrb[0].mxu0 %v5974
        %v6189 = vpop.f32.mrb[0].mxu0
        %v6190 = vadd.f32 0.0, %v6189
        %v6191 = vpop.f32.mrb[0].mxu0
        %6192 = vmatprep.mubr.f32.mxu0 0.0
        %6193 = vmatmul.mubr.f32.gmra.mrb[0].mxu0 %v5977
        %v6194 = vpop.f32.mrb[0].mxu0
        %v6195 = vadd.f32 0.0, %v6194
        %v6196 = vpop.f32.mrb[0].mxu0
        %6197 = vmatprep.mubr.f32.mxu0 0.0
        %6198 = vmatmul.mubr.f32.gmra.mrb[0].mxu0 %v5980
        %v6199 = vpop.f32.mrb[0].mxu0
        %v6200 = vadd.f32 0.0, %v6199
        %v6201 = vpop.f32.mrb[0].mxu0
        %6202 = vmatprep.mubr.f32.mxu0 0.0
        %6203 = vmatmul.mubr.f32.gmra.mrb[0].mxu0 %v5983
        %v6204 = vpop.f32.mrb[0].mxu0
        %v6205 = vadd.f32 0.0, %v6204
        %v6206 = vpop.f32.mrb[0].mxu0
        %6207 = vmatprep.mubr.f32.mxu0 0.0
        %6208 = vmatmul.mubr.f32.gmra.mrb[0].mxu0 %v5986
        %v6209 = vpop.f32.mrb[0].mxu0
        %v6210 = vadd.f32 0.0, %v6209
        %v6211 = vpop.f32.mrb[0].mxu0
        %6212 = vmatprep.mubr.f32.mxu0 0.0
        %6213 = vmatmul.mubr.f32.gmra.mrb[0].mxu0 %v5989
        %v6214 = vpop.f32.mrb[0].mxu0
        %v6215 = vadd.f32 0.0, %v6214
        %v6216 = vpop.f32.mrb[0].mxu0
        %6217 = vmatprep.mubr.f32.mxu0 0.0
        %6218 = vmatmul.mubr.f32.gmra.mrb[0].mxu0 %v5992
        %v6219 = vpop.f32.mrb[0].mxu0
        %v6220 = vadd.f32 0.0, %v6219
        %v6221 = vpop.f32.mrb[0].mxu0
        %6222 = vmatprep.mubr.f32.mxu0 0.0
        %6223 = vmatmul.mubr.f32.gmra.mrb[0].mxu0 %v5995
        %v6224 = vpop.f32.mrb[0].mxu0
        %v6225 = vadd.f32 0.0, %v6224
        %v6226 = vpop.f32.mrb[0].mxu0
        %6227 = vmatprep.mubr.f32.mxu0 0.0
        %6228 = vmatmul.mubr.f32.gmra.mrb[0].mxu0 %v5998
        %v6229 = vpop.f32.mrb[0].mxu0
        %v6230 = vadd.f32 0.0, %v6229
        %v6231 = vpop.f32.mrb[0].mxu0
        %6232 = vmatprep.mubr.f32.mxu0 0.0
        %6233 = vmatmul.mubr.f32.gmra.mrb[0].mxu0 %v6001
        %v6234 = vpop.f32.mrb[0].mxu0
        %v6235 = vadd.f32 0.0, %v6234
        %v6236 = vpop.f32.mrb[0].mxu0
        %6237 = vmatprep.mubr.f32.mxu0 0.0
        %6238 = vmatmul.mubr.f32.gmra.mrb[0].mxu0 %v6004
        %v6239 = vpop.f32.mrb[0].mxu0
        %v6240 = vadd.f32 0.0, %v6239
        %v6241 = vpop.f32.mrb[0].mxu0
        %6242 = vmatprep.mubr.f32.mxu0 0.0
        %6243 = vmatmul.mubr.f32.gmra.mrb[0].mxu0 %v6007
        %v6244 = vpop.f32.mrb[0].mxu0
        %v6245 = vadd.f32 0.0, %v6244
        %v6246 = vpop.f32.mrb[0].mxu0
        %6247 = vmatprep.mubr.f32.mxu0 0.0
        %6248 = vmatmul.mubr.f32.gmra.mrb[0].mxu0 %v6010
        %v6249 = vpop.f32.mrb[0].mxu0
        %v6250 = vadd.f32 0.0, %v6249
        %v6251 = vpop.f32.mrb[0].mxu0
        %6252 = vmatprep.mubr.f32.mxu0 0.0
        %6253 = vmatmul.mubr.f32.gmra.mrb[0].mxu0 %v6013
        %v6254 = vpop.f32.mrb[0].mxu0
        %v6255 = vadd.f32 0.0, %v6254
        %v6256 = vpop.f32.mrb[0].mxu0
        %6257 = vmatprep.mubr.f32.mxu0 0.0
        %6258 = vmatmul.mubr.f32.gmra.mrb[0].mxu0 %v6016
        %v6259 = vpop.f32.mrb[0].mxu0
        %v6260 = vadd.f32 0.0, %v6259
        %v6261 = vpop.f32.mrb[0].mxu0
        %6262 = vmatprep.mubr.f32.mxu0 0.0
        %6263 = vmatmul.mubr.f32.gmra.mrb[0].mxu0 %v6019
        %v6264 = vpop.f32.mrb[0].mxu0
        %v6265 = vadd.f32 0.0, %v6264
        %v6266 = vpop.f32.mrb[0].mxu0
        %6267 = vmatprep.mubr.f32.mxu0 0.0
        %6268 = vmatmul.mubr.f32.gmra.mrb[0].mxu0 %v6022
        %v6269 = vpop.f32.mrb[0].mxu0
        %v6270 = vadd.f32 0.0, %v6269
        %v6271 = vpop.f32.mrb[0].mxu0
        %6272 = vmatprep.mubr.f32.mxu0 0.0
        %6273 = vmatmul.mubr.f32.gmra.mrb[0].mxu0 %v6025
        %v6274 = vpop.f32.mrb[0].mxu0
        %v6275 = vadd.f32 0.0, %v6274
        %v6276 = vpop.f32.mrb[0].mxu0
        %6277 = vmatprep.mubr.f32.mxu0 0.0
        %6278 = vmatmul.mubr.f32.gmra.mrb[0].mxu0 %v6028
        %v6279 = vpop.f32.mrb[0].mxu0
        %v6280 = vadd.f32 0.0, %v6279
        %v6281 = vpop.f32.mrb[0].mxu0
        %6282 = vmatprep.mubr.f32.mxu0 0.0
        %6283 = vmatmul.mubr.f32.gmra.mrb[0].mxu0 %v6031
        %v6284 = vpop.f32.mrb[0].mxu0
        %v6285 = vadd.f32 0.0, %v6284
        %v6286 = vpop.f32.mrb[0].mxu0
        %6287 = vmatprep.mubr.f32.mxu0 0.0
        %6288 = vmatmul.mubr.f32.gmra.mrb[0].mxu0 %v6034
        %v6289 = vpop.f32.mrb[0].mxu0
        %v6290 = vadd.f32 0.0, %v6289
        %v6291 = vpop.f32.mrb[0].mxu0
        %6292 = vmatprep.mubr.f32.mxu0 0.0
        %6293 = vmatmul.mubr.f32.gmra.mrb[0].mxu0 %v6037
        %v6294 = vpop.f32.mrb[0].mxu0
        %v6295 = vadd.f32 0.0, %v6294
        %v6296 = vpop.f32.mrb[0].mxu0
        %6297 = vmatprep.mubr.f32.mxu0 0.0
        %6298 = vmatmul.mubr.f32.gmra.mrb[0].mxu0 %v6040
        %v6299 = vpop.f32.mrb[0].mxu0
        %v6300 = vadd.f32 0.0, %v6299
        %v6301 = vpop.f32.mrb[0].mxu0
        %6302 = vmatprep.mubr.f32.mxu0 0.0
        %6303 = vmatmul.mubr.f32.gmra.mrb[0].mxu0 %v6043
        %v6304 = vpop.f32.mrb[0].mxu0
        %v6305 = vadd.f32 0.0, %v6304
        %v6306 = vpop.f32.mrb[0].mxu0
        %6307 = vmatprep.mubr.f32.mxu0 0.0
        %6308 = vmatmul.mubr.f32.gmra.mrb[0].mxu0 %v6046
        %v6309 = vpop.f32.mrb[0].mxu0
        %v6310 = vadd.f32 0.0, %v6309
        %v6311 = vpop.f32.mrb[0].mxu0
        %6312 = vmatprep.mubr.f32.mxu0 0.0
        %6313 = vmatmul.mubr.f32.gmra.mrb[0].mxu0 %v6049
        %v6314 = vpop.f32.mrb[0].mxu0
        %v6315 = vadd.f32 0.0, %v6314
        %v6316 = vpop.f32.mrb[0].mxu0
        %6317 = vmatprep.mubr.f32.mxu0 0.0
        %6318 = vmatmul.mubr.f32.gmra.mrb[0].mxu0 %v6052
        %v6319 = vpop.f32.mrb[0].mxu0
        %v6320 = vadd.f32 0.0, %v6319
        %v6321 = vpop.f32.mrb[0].mxu0
        %6322 = vmatprep.mubr.f32.mxu0 0.0
        %6323 = vmatmul.mubr.f32.gmra.mrb[0].mxu0 %v6055
        %v6324 = vpop.f32.mrb[0].mxu0
        %v6325 = vadd.f32 0.0, %v6324
        %v6326 = vpop.f32.mrb[0].mxu0
        %6327 = vmatprep.mubr.f32.mxu0 0.0
        %6328 = vmatmul.mubr.f32.gmra.mrb[0].mxu0 %v6058
        %v6329 = vpop.f32.mrb[0].mxu0
        %v6330 = vadd.f32 0.0, %v6329
        %v6331 = vpop.f32.mrb[0].mxu0
        %6332 = vmatprep.mubr.f32.mxu0 0.0
        %6333 = vmatmul.mubr.f32.gmra.mrb[0].mxu0 %v6061
        %v6334 = vpop.f32.mrb[0].mxu0
        %v6335 = vadd.f32 0.0, %v6334
        %v6336 = vpop.f32.mrb[0].mxu0
        %6337 = vmatprep.mubr.f32.mxu0 0.0
        %6338 = vmatmul.mubr.f32.gmra.mrb[0].mxu0 %v6064
        %v6339 = vpop.f32.mrb[0].mxu0
        %v6340 = vadd.f32 0.0, %v6339
        %v6341 = vpop.f32.mrb[0].mxu0
        %6342 = vmatprep.mubr.f32.mxu0 0.0
        %6343 = vmatmul.mubr.f32.gmra.mrb[0].mxu0 %v6067
        %v6344 = vpop.f32.mrb[0].mxu0
        %v6345 = vadd.f32 0.0, %v6344
        %v6346 = vpop.f32.mrb[0].mxu0
        %6347 = vmatprep.mubr.f32.mxu0 0.0
        %6348 = vmatmul.mubr.f32.gmra.mrb[0].mxu0 %v6070
        %v6349 = vpop.f32.mrb[0].mxu0
        %v6350 = vadd.f32 0.0, %v6349
        %v6351 = vpop.f32.mrb[0].mxu0
        %6352 = vmatprep.mubr.f32.mxu0 0.0
        %6353 = vmatmul.mubr.f32.gmra.mrb[0].mxu0 %v6073
        %v6354 = vpop.f32.mrb[0].mxu0
        %v6355 = vadd.f32 0.0, %v6354
        %v6356 = vpop.f32.mrb[0].mxu0
        %6357 = vmatprep.mubr.f32.mxu0 0.0
        %6358 = vmatmul.mubr.f32.gmra.mrb[0].mxu0 %v6076
        %v6359 = vpop.f32.mrb[0].mxu0
        %v6360 = vadd.f32 0.0, %v6359
        %v6361 = vpop.f32.mrb[0].mxu0
        %6362 = vmatprep.mubr.f32.mxu0 0.0
        %6363 = vmatmul.mubr.f32.gmra.mrb[0].mxu0 %v6079
        %v6364 = vpop.f32.mrb[0].mxu0
        %v6365 = vadd.f32 0.0, %v6364
        %v6366 = vpop.f32.mrb[0].mxu0
        %6367 = vmatprep.mubr.f32.mxu0 0.0
        %6368 = vmatmul.mubr.f32.gmra.mrb[0].mxu0 %v6082
        %v6369 = vpop.f32.mrb[0].mxu0
        %v6370 = vadd.f32 0.0, %v6369
        %v6371 = vpop.f32.mrb[0].mxu0
        %6372 = vmatprep.mubr.f32.mxu0 0.0
        %6373 = vmatmul.mubr.f32.gmra.mrb[0].mxu0 %v6085
        %v6374 = vpop.f32.mrb[0].mxu0
        %v6375 = vadd.f32 0.0, %v6374
        %v6376 = vpop.f32.mrb[0].mxu0
        %6377 = vmatprep.mubr.f32.mxu0 0.0
        %6378 = vmatmul.mubr.f32.gmra.mrb[0].mxu0 %v6088
        %v6379 = vpop.f32.mrb[0].mxu0
        %v6380 = vadd.f32 0.0, %v6379
        %v6381 = vpop.f32.mrb[0].mxu0
        %6382 = vmatprep.mubr.f32.mxu0 0.0
        %6383 = vmatmul.mubr.f32.gmra.mrb[0].mxu0 %v6091
        %v6384 = vpop.f32.mrb[0].mxu0
        %v6385 = vadd.f32 0.0, %v6384
        %v6386 = vpop.f32.mrb[0].mxu0
        %6387 = vmatprep.mubr.f32.mxu0 0.0
        %6388 = vmatmul.mubr.f32.gmra.mrb[0].mxu0 %v6094
        %v6389 = vpop.f32.mrb[0].mxu0
        %v6390 = vadd.f32 0.0, %v6389
        %v6391 = vpop.f32.mrb[0].mxu0
        %6392 = vmatprep.mubr.f32.mxu0 0.0
        %6393 = vmatmul.mubr.f32.gmra.mrb[0].mxu0 %v6097
        %v6394 = vpop.f32.mrb[0].mxu0
        %v6395 = vadd.f32 0.0, %v6394
        %v6396 = vpop.f32.mrb[0].mxu0
        %6397 = vmatprep.mubr.f32.mxu0 0.0
        %6398 = vmatmul.mubr.f32.gmra.mrb[0].mxu0 %v6100
        %v6399 = vpop.f32.mrb[0].mxu0
        %v6400 = vadd.f32 0.0, %v6399
        %v6401 = vpop.f32.mrb[0].mxu0
        %6402 = vmatprep.mubr.f32.mxu0 0.0
        %6403 = vmatmul.mubr.f32.gmra.mrb[0].mxu0 %v6103
        %v6404 = vpop.f32.mrb[0].mxu0
        %v6405 = vadd.f32 0.0, %v6404
        %v6406 = vpop.f32.mrb[0].mxu0
        %6407 = vmatprep.mubr.f32.mxu0 0.0
        %6408 = vmatmul.mubr.f32.gmra.mrb[0].mxu0 %v6106
        %v6409 = vpop.f32.mrb[0].mxu0
        %v6410 = vadd.f32 0.0, %v6409
        %v6411 = vpop.f32.mrb[0].mxu0
        %6412 = vmatprep.mubr.f32.mxu0 0.0
        %6413 = vmatmul.mubr.f32.gmra.mrb[0].mxu0 %v6109
        %v6414 = vpop.f32.mrb[0].mxu0
        %v6415 = vadd.f32 0.0, %v6414
        %v6416 = vpop.f32.mrb[0].mxu0
        %6417 = vmatprep.mubr.f32.mxu0 0.0
        %6418 = vmatmul.mubr.f32.gmra.mrb[0].mxu0 %v6112
        %v6419 = vpop.f32.mrb[0].mxu0
        %v6420 = vadd.f32 0.0, %v6419
        %v6421 = vpop.f32.mrb[0].mxu0
        %6422 = vmatprep.mubr.f32.mxu0 0.0
        %6423 = vmatmul.mubr.f32.gmra.mrb[0].mxu0 %v6115
        %v6424 = vpop.f32.mrb[0].mxu0
        %v6425 = vadd.f32 0.0, %v6424
        %v6426 = vpop.f32.mrb[0].mxu0
        %6427 = vmatprep.mubr.f32.mxu0 0.0
        %6428 = vmatmul.mubr.f32.gmra.mrb[0].mxu0 %v6118
        %v6429 = vpop.f32.mrb[0].mxu0
        %v6430 = vadd.f32 0.0, %v6429
        %v6431 = vpop.f32.mrb[0].mxu0
        %6432 = vmatprep.mubr.f32.mxu0 0.0
        %6433 = vmatmul.mubr.f32.gmra.mrb[0].mxu0 %v6121
        %v6434 = vpop.f32.mrb[0].mxu0
        %v6435 = vadd.f32 0.0, %v6434
        %v6436 = vpop.f32.mrb[0].mxu0
        %6437 = vdwg.mxu0
        %v6438 = vmax.f32 %v5872, %v6190
        %v6439 = vmax.f32 %v5873, %v6195
        %v6440 = vmax.f32 %v5874, %v6200
        %v6441 = vmax.f32 %v5875, %v6205
        %v6442 = vmax.f32 %v5876, %v6210
        %v6443 = vmax.f32 %v5877, %v6215
        %v6444 = vmax.f32 %v5878, %v6220
        %v6445 = vmax.f32 %v5879, %v6225
        %v6446 = vmax.f32 %v5880, %v6230
        %v6447 = vmax.f32 %v5881, %v6235
        %v6448 = vmax.f32 %v5882, %v6240
        %v6449 = vmax.f32 %v5883, %v6245
        %v6450 = vmax.f32 %v5884, %v6250
        %v6451 = vmax.f32 %v5885, %v6255
        %v6452 = vmax.f32 %v5886, %v6260
        %v6453 = vmax.f32 %v5887, %v6265
        %v6454 = vmax.f32 %v5888, %v6270
        %v6455 = vmax.f32 %v5889, %v6275
        %v6456 = vmax.f32 %v5890, %v6280
        %v6457 = vmax.f32 %v5891, %v6285
        %v6458 = vmax.f32 %v5892, %v6290
        %v6459 = vmax.f32 %v5893, %v6295
        %v6460 = vmax.f32 %v5894, %v6300
        %v6461 = vmax.f32 %v5895, %v6305
        %v6462 = vmax.f32 %v5896, %v6310
        %v6463 = vmax.f32 %v5897, %v6315
        %v6464 = vmax.f32 %v5898, %v6320
        %v6465 = vmax.f32 %v5899, %v6325
        %v6466 = vmax.f32 %v5900, %v6330
        %v6467 = vmax.f32 %v5901, %v6335
        %v6468 = vmax.f32 %v5902, %v6340
        %v6469 = vmax.f32 %v5903, %v6345
        %v6470 = vmax.f32 %v5904, %v6350
        %v6471 = vmax.f32 %v5905, %v6355
        %v6472 = vmax.f32 %v5906, %v6360
        %v6473 = vmax.f32 %v5907, %v6365
        %v6474 = vmax.f32 %v5908, %v6370
        %v6475 = vmax.f32 %v5909, %v6375
        %v6476 = vmax.f32 %v5910, %v6380
        %v6477 = vmax.f32 %v5911, %v6385
        %v6478 = vmax.f32 %v5912, %v6390
        %v6479 = vmax.f32 %v5913, %v6395
        %v6480 = vmax.f32 %v5914, %v6400
        %v6481 = vmax.f32 %v5915, %v6405
        %v6482 = vmax.f32 %v5916, %v6410
        %v6483 = vmax.f32 %v5917, %v6415
        %v6484 = vmax.f32 %v5918, %v6420
        %v6485 = vmax.f32 %v5919, %v6425
        %v6486 = vmax.f32 %v5920, %v6430
        %v6487 = vmax.f32 %v5921, %v6435
        %s6488 = scalar_lea.vmem %s1976, 3200 [#allocation2]
        %v6489 = vld [vmem:[%s6488] sm:$0xff]
        %v6490 = vld [vmem:[%s6488 + $0x8] sm:$0xff]
        %v6491 = vld [vmem:[%s6488 + $0x10] sm:$0xff]
        %v6492 = vld [vmem:[%s6488 + $0x18] sm:$0xff]
        %v6493 = vld [vmem:[%s6488 + $0x20] sm:$0xff]
        %v6494 = vld [vmem:[%s6488 + $0x28] sm:$0xff]
        %v6495 = vld [vmem:[%s6488 + $0x30] sm:$0xff]
        %v6496 = vld [vmem:[%s6488 + $0x38] sm:$0xff]
        %v6497 = vld [vmem:[%s6488 + $0x40] sm:$0xff]
        %v6498 = vld [vmem:[%s6488 + $0x48] sm:$0xff]
        %v6499 = vld [vmem:[%s6488 + $0x50] sm:$0xff]
        %v6500 = vld [vmem:[%s6488 + $0x58] sm:$0xff]
        %v6501 = vld [vmem:[%s6488 + $0x60] sm:$0xff]
        %v6502 = vld [vmem:[%s6488 + $0x68] sm:$0xff]
        %v6503 = vld [vmem:[%s6488 + $0x70] sm:$0xff]
        %v6504 = vld [vmem:[%s6488 + $0x78] sm:$0xff]
        %v6505 = vld [vmem:[%s6488 + $0x80] sm:$0xff]
        %v6506 = vld [vmem:[%s6488 + $0x88] sm:$0xff]
        %v6507 = vld [vmem:[%s6488 + $0x90] sm:$0xff]
        %v6508 = vld [vmem:[%s6488 + $0x98] sm:$0xff]
        %v6509 = vld [vmem:[%s6488 + $0xa0] sm:$0xff]
        %v6510 = vld [vmem:[%s6488 + $0xa8] sm:$0xff]
        %v6511 = vld [vmem:[%s6488 + $0xb0] sm:$0xff]
        %v6512 = vld [vmem:[%s6488 + $0xb8] sm:$0xff]
        %v6513 = vld [vmem:[%s6488 + $0xc0] sm:$0xff]
        %v6514 = vld [vmem:[%s6488 + $0xc8] sm:$0xff]
        %v6515 = vld [vmem:[%s6488 + $0xd0] sm:$0xff]
        %v6516 = vld [vmem:[%s6488 + $0xd8] sm:$0xff]
        %v6517 = vld [vmem:[%s6488 + $0xe0] sm:$0xff]
        %v6518 = vld [vmem:[%s6488 + $0xe8] sm:$0xff]
        %v6519 = vld [vmem:[%s6488 + $0xf0] sm:$0xff]
        %v6520 = vld [vmem:[%s6488 + $0xf8] sm:$0xff]
        %v6521 = vld [vmem:[%s6488 + $0x100] sm:$0xff]
        %v6522 = vld [vmem:[%s6488 + $0x108] sm:$0xff]
        %v6523 = vld [vmem:[%s6488 + $0x110] sm:$0xff]
        %v6524 = vld [vmem:[%s6488 + $0x118] sm:$0xff]
        %v6525 = vld [vmem:[%s6488 + $0x120] sm:$0xff]
        %v6526 = vld [vmem:[%s6488 + $0x128] sm:$0xff]
        %v6527 = vld [vmem:[%s6488 + $0x130] sm:$0xff]
        %v6528 = vld [vmem:[%s6488 + $0x138] sm:$0xff]
        %v6529 = vld [vmem:[%s6488 + $0x140] sm:$0xff]
        %v6530 = vld [vmem:[%s6488 + $0x148] sm:$0xff]
        %v6531 = vld [vmem:[%s6488 + $0x150] sm:$0xff]
        %v6532 = vld [vmem:[%s6488 + $0x158] sm:$0xff]
        %v6533 = vld [vmem:[%s6488 + $0x160] sm:$0xff]
        %v6534 = vld [vmem:[%s6488 + $0x168] sm:$0xff]
        %v6535 = vld [vmem:[%s6488 + $0x170] sm:$0xff]
        %v6536 = vld [vmem:[%s6488 + $0x178] sm:$0xff]
        %v6537 = vld [vmem:[%s6488 + $0x180] sm:$0xff]
        %v6538 = vld [vmem:[%s6488 + $0x188] sm:$0xff]
        %v6540 = vsel %vm2056, %v6489, 0
        %v6543 = vsel %vm2056, %v6490, 0
        %v6546 = vsel %vm2056, %v6491, 0
        %v6549 = vsel %vm2056, %v6492, 0
        %v6552 = vsel %vm2056, %v6493, 0
        %v6555 = vsel %vm2056, %v6494, 0
        %v6558 = vsel %vm2056, %v6495, 0
        %v6561 = vsel %vm2056, %v6496, 0
        %v6564 = vsel %vm2056, %v6497, 0
        %v6567 = vsel %vm2056, %v6498, 0
        %v6570 = vsel %vm2056, %v6499, 0
        %v6573 = vsel %vm2056, %v6500, 0
        %v6576 = vsel %vm2056, %v6501, 0
        %v6579 = vsel %vm2056, %v6502, 0
        %v6582 = vsel %vm2056, %v6503, 0
        %v6585 = vsel %vm2056, %v6504, 0
        %v6588 = vsel %vm2056, %v6505, 0
        %v6591 = vsel %vm2056, %v6506, 0
        %v6594 = vsel %vm2056, %v6507, 0
        %v6597 = vsel %vm2056, %v6508, 0
        %v6600 = vsel %vm2056, %v6509, 0
        %v6603 = vsel %vm2056, %v6510, 0
        %v6606 = vsel %vm2056, %v6511, 0
        %v6609 = vsel %vm2056, %v6512, 0
        %v6612 = vsel %vm2056, %v6513, 0
        %v6615 = vsel %vm2056, %v6514, 0
        %v6618 = vsel %vm2056, %v6515, 0
        %v6621 = vsel %vm2056, %v6516, 0
        %v6624 = vsel %vm2056, %v6517, 0
        %v6627 = vsel %vm2056, %v6518, 0
        %v6630 = vsel %vm2056, %v6519, 0
        %v6633 = vsel %vm2056, %v6520, 0
        %v6636 = vsel %vm2056, %v6521, 0
        %v6639 = vsel %vm2056, %v6522, 0
        %v6642 = vsel %vm2056, %v6523, 0
        %v6645 = vsel %vm2056, %v6524, 0
        %v6648 = vsel %vm2056, %v6525, 0
        %v6651 = vsel %vm2056, %v6526, 0
        %v6654 = vsel %vm2056, %v6527, 0
        %v6657 = vsel %vm2056, %v6528, 0
        %v6660 = vsel %vm2056, %v6529, 0
        %v6663 = vsel %vm2056, %v6530, 0
        %v6666 = vsel %vm2056, %v6531, 0
        %v6669 = vsel %vm2056, %v6532, 0
        %v6672 = vsel %vm2056, %v6533, 0
        %v6675 = vsel %vm2056, %v6534, 0
        %v6678 = vsel %vm2056, %v6535, 0
        %v6681 = vsel %vm2056, %v6536, 0
        %v6684 = vsel %vm2056, %v6537, 0
        %v6687 = vsel %vm2056, %v6538, 0
        %6689 = vmatprep.subr.mxu0 0.0
        %6690 = vmatpush1.msra.mxu0 %v2054
        %6691 = vmatprep.subr.mxu0 0.0
        %6692 = vmatpush1.msra.mxu0 %v2209
        %6693 = vmatprep.subr.mxu0 0.0
        %6694 = vmatpush1.msra.mxu0 0.0
        %6695 = vmatprep.subr.mxu0 0.0
        %6696 = vmatpush1.msra.mxu0 0.0
        %6697 = vmatprep.subr.mxu0 0.0
        %6698 = vmatpush1.msra.mxu0 0.0
        %6699 = vmatprep.subr.mxu0 0.0
        %6700 = vmatpush1.msra.mxu0 0.0
        %6701 = vmatprep.subr.mxu0 0.0
        %6702 = vmatpush1.msra.mxu0 0.0
        %6703 = vmatprep.subr.mxu0 0.0
        %6704 = vmatpush1.msra.mxu0 0.0
        %6705 = vmatprep.subr.mxu0 0.0
        %6706 = vmatpush1.msra.mxu0 0.0
        %6707 = vmatprep.subr.mxu0 0.0
        %6708 = vmatpush1.msra.mxu0 0.0
        %6709 = vmatprep.subr.mxu0 0.0
        %6710 = vmatpush1.msra.mxu0 0.0
        %6711 = vmatprep.subr.mxu0 0.0
        %6712 = vmatpush1.msra.mxu0 0.0
        %6713 = vmatprep.subr.mxu0 0.0
        %6714 = vmatpush1.msra.mxu0 0.0
        %6715 = vmatprep.subr.mxu0 0.0
        %6716 = vmatpush1.msra.mxu0 0.0
        %6717 = vmatprep.subr.mxu0 0.0
        %6718 = vmatpush1.msra.mxu0 0.0
        %6719 = vmatprep.subr.mxu0 0.0
        %6720 = vmatpush1.msra.mxu0 0.0
        %6721 = vmatprep.subr.mxu0 0.0
        %6722 = vmatpush1.msra.mxu0 0.0
        %6723 = vmatprep.subr.mxu0 0.0
        %6724 = vmatpush1.msra.mxu0 0.0
        %6725 = vmatprep.subr.mxu0 0.0
        %6726 = vmatpush1.msra.mxu0 0.0
        %6727 = vmatprep.subr.mxu0 0.0
        %6728 = vmatpush1.msra.mxu0 0.0
        %6729 = vmatprep.subr.mxu0 0.0
        %6730 = vmatpush1.msra.mxu0 0.0
        %6731 = vmatprep.subr.mxu0 0.0
        %6732 = vmatpush1.msra.mxu0 0.0
        %6733 = vmatprep.subr.mxu0 0.0
        %6734 = vmatpush1.msra.mxu0 0.0
        %6735 = vmatprep.subr.mxu0 0.0
        %6736 = vmatpush1.msra.mxu0 0.0
        %6737 = vmatprep.subr.mxu0 0.0
        %6738 = vmatpush1.msra.mxu0 0.0
        %6739 = vmatprep.subr.mxu0 0.0
        %6740 = vmatpush1.msra.mxu0 0.0
        %6741 = vmatprep.subr.mxu0 0.0
        %6742 = vmatpush1.msra.mxu0 0.0
        %6743 = vmatprep.subr.mxu0 0.0
        %6744 = vmatpush1.msra.mxu0 0.0
        %6745 = vmatprep.subr.mxu0 0.0
        %6746 = vmatpush1.msra.mxu0 0.0
        %6747 = vmatprep.subr.mxu0 0.0
        %6748 = vmatpush1.msra.mxu0 0.0
        %6749 = vmatprep.subr.mxu0 0.0
        %6750 = vmatpush1.msra.mxu0 0.0
        %6751 = vmatprep.subr.mxu0 0.0
        %6752 = vmatpush1.msra.mxu0 0.0
        %6753 = vmatprep.mubr.f32.mxu0 0.0
        %6754 = vmatmul.mubr.f32.gmra.mrb[0].mxu0 %v6540
        %v6755 = vpop.f32.mrb[0].mxu0
        %v6756 = vadd.f32 0.0, %v6755
        %v6757 = vpop.f32.mrb[0].mxu0
        %6758 = vmatprep.mubr.f32.mxu0 0.0
        %6759 = vmatmul.mubr.f32.gmra.mrb[0].mxu0 %v6543
        %v6760 = vpop.f32.mrb[0].mxu0
        %v6761 = vadd.f32 0.0, %v6760
        %v6762 = vpop.f32.mrb[0].mxu0
        %6763 = vmatprep.mubr.f32.mxu0 0.0
        %6764 = vmatmul.mubr.f32.gmra.mrb[0].mxu0 %v6546
        %v6765 = vpop.f32.mrb[0].mxu0
        %v6766 = vadd.f32 0.0, %v6765
        %v6767 = vpop.f32.mrb[0].mxu0
        %6768 = vmatprep.mubr.f32.mxu0 0.0
        %6769 = vmatmul.mubr.f32.gmra.mrb[0].mxu0 %v6549
        %v6770 = vpop.f32.mrb[0].mxu0
        %v6771 = vadd.f32 0.0, %v6770
        %v6772 = vpop.f32.mrb[0].mxu0
        %6773 = vmatprep.mubr.f32.mxu0 0.0
        %6774 = vmatmul.mubr.f32.gmra.mrb[0].mxu0 %v6552
        %v6775 = vpop.f32.mrb[0].mxu0
        %v6776 = vadd.f32 0.0, %v6775
        %v6777 = vpop.f32.mrb[0].mxu0
        %6778 = vmatprep.mubr.f32.mxu0 0.0
        %6779 = vmatmul.mubr.f32.gmra.mrb[0].mxu0 %v6555
        %v6780 = vpop.f32.mrb[0].mxu0
        %v6781 = vadd.f32 0.0, %v6780
        %v6782 = vpop.f32.mrb[0].mxu0
        %6783 = vmatprep.mubr.f32.mxu0 0.0
        %6784 = vmatmul.mubr.f32.gmra.mrb[0].mxu0 %v6558
        %v6785 = vpop.f32.mrb[0].mxu0
        %v6786 = vadd.f32 0.0, %v6785
        %v6787 = vpop.f32.mrb[0].mxu0
        %6788 = vmatprep.mubr.f32.mxu0 0.0
        %6789 = vmatmul.mubr.f32.gmra.mrb[0].mxu0 %v6561
        %v6790 = vpop.f32.mrb[0].mxu0
        %v6791 = vadd.f32 0.0, %v6790
        %v6792 = vpop.f32.mrb[0].mxu0
        %6793 = vmatprep.mubr.f32.mxu0 0.0
        %6794 = vmatmul.mubr.f32.gmra.mrb[0].mxu0 %v6564
        %v6795 = vpop.f32.mrb[0].mxu0
        %v6796 = vadd.f32 0.0, %v6795
        %v6797 = vpop.f32.mrb[0].mxu0
        %6798 = vmatprep.mubr.f32.mxu0 0.0
        %6799 = vmatmul.mubr.f32.gmra.mrb[0].mxu0 %v6567
        %v6800 = vpop.f32.mrb[0].mxu0
        %v6801 = vadd.f32 0.0, %v6800
        %v6802 = vpop.f32.mrb[0].mxu0
        %6803 = vmatprep.mubr.f32.mxu0 0.0
        %6804 = vmatmul.mubr.f32.gmra.mrb[0].mxu0 %v6570
        %v6805 = vpop.f32.mrb[0].mxu0
        %v6806 = vadd.f32 0.0, %v6805
        %v6807 = vpop.f32.mrb[0].mxu0
        %6808 = vmatprep.mubr.f32.mxu0 0.0
        %6809 = vmatmul.mubr.f32.gmra.mrb[0].mxu0 %v6573
        %v6810 = vpop.f32.mrb[0].mxu0
        %v6811 = vadd.f32 0.0, %v6810
        %v6812 = vpop.f32.mrb[0].mxu0
        %6813 = vmatprep.mubr.f32.mxu0 0.0
        %6814 = vmatmul.mubr.f32.gmra.mrb[0].mxu0 %v6576
        %v6815 = vpop.f32.mrb[0].mxu0
        %v6816 = vadd.f32 0.0, %v6815
        %v6817 = vpop.f32.mrb[0].mxu0
        %6818 = vmatprep.mubr.f32.mxu0 0.0
        %6819 = vmatmul.mubr.f32.gmra.mrb[0].mxu0 %v6579
        %v6820 = vpop.f32.mrb[0].mxu0
        %v6821 = vadd.f32 0.0, %v6820
        %v6822 = vpop.f32.mrb[0].mxu0
        %6823 = vmatprep.mubr.f32.mxu0 0.0
        %6824 = vmatmul.mubr.f32.gmra.mrb[0].mxu0 %v6582
        %v6825 = vpop.f32.mrb[0].mxu0
        %v6826 = vadd.f32 0.0, %v6825
        %v6827 = vpop.f32.mrb[0].mxu0
        %6828 = vmatprep.mubr.f32.mxu0 0.0
        %6829 = vmatmul.mubr.f32.gmra.mrb[0].mxu0 %v6585
        %v6830 = vpop.f32.mrb[0].mxu0
        %v6831 = vadd.f32 0.0, %v6830
        %v6832 = vpop.f32.mrb[0].mxu0
        %6833 = vmatprep.mubr.f32.mxu0 0.0
        %6834 = vmatmul.mubr.f32.gmra.mrb[0].mxu0 %v6588
        %v6835 = vpop.f32.mrb[0].mxu0
        %v6836 = vadd.f32 0.0, %v6835
        %v6837 = vpop.f32.mrb[0].mxu0
        %6838 = vmatprep.mubr.f32.mxu0 0.0
        %6839 = vmatmul.mubr.f32.gmra.mrb[0].mxu0 %v6591
        %v6840 = vpop.f32.mrb[0].mxu0
        %v6841 = vadd.f32 0.0, %v6840
        %v6842 = vpop.f32.mrb[0].mxu0
        %6843 = vmatprep.mubr.f32.mxu0 0.0
        %6844 = vmatmul.mubr.f32.gmra.mrb[0].mxu0 %v6594
        %v6845 = vpop.f32.mrb[0].mxu0
        %v6846 = vadd.f32 0.0, %v6845
        %v6847 = vpop.f32.mrb[0].mxu0
        %6848 = vmatprep.mubr.f32.mxu0 0.0
        %6849 = vmatmul.mubr.f32.gmra.mrb[0].mxu0 %v6597
        %v6850 = vpop.f32.mrb[0].mxu0
        %v6851 = vadd.f32 0.0, %v6850
        %v6852 = vpop.f32.mrb[0].mxu0
        %6853 = vmatprep.mubr.f32.mxu0 0.0
        %6854 = vmatmul.mubr.f32.gmra.mrb[0].mxu0 %v6600
        %v6855 = vpop.f32.mrb[0].mxu0
        %v6856 = vadd.f32 0.0, %v6855
        %v6857 = vpop.f32.mrb[0].mxu0
        %6858 = vmatprep.mubr.f32.mxu0 0.0
        %6859 = vmatmul.mubr.f32.gmra.mrb[0].mxu0 %v6603
        %v6860 = vpop.f32.mrb[0].mxu0
        %v6861 = vadd.f32 0.0, %v6860
        %v6862 = vpop.f32.mrb[0].mxu0
        %6863 = vmatprep.mubr.f32.mxu0 0.0
        %6864 = vmatmul.mubr.f32.gmra.mrb[0].mxu0 %v6606
        %v6865 = vpop.f32.mrb[0].mxu0
        %v6866 = vadd.f32 0.0, %v6865
        %v6867 = vpop.f32.mrb[0].mxu0
        %6868 = vmatprep.mubr.f32.mxu0 0.0
        %6869 = vmatmul.mubr.f32.gmra.mrb[0].mxu0 %v6609
        %v6870 = vpop.f32.mrb[0].mxu0
        %v6871 = vadd.f32 0.0, %v6870
        %v6872 = vpop.f32.mrb[0].mxu0
        %6873 = vmatprep.mubr.f32.mxu0 0.0
        %6874 = vmatmul.mubr.f32.gmra.mrb[0].mxu0 %v6612
        %v6875 = vpop.f32.mrb[0].mxu0
        %v6876 = vadd.f32 0.0, %v6875
        %v6877 = vpop.f32.mrb[0].mxu0
        %6878 = vmatprep.mubr.f32.mxu0 0.0
        %6879 = vmatmul.mubr.f32.gmra.mrb[0].mxu0 %v6615
        %v6880 = vpop.f32.mrb[0].mxu0
        %v6881 = vadd.f32 0.0, %v6880
        %v6882 = vpop.f32.mrb[0].mxu0
        %6883 = vmatprep.mubr.f32.mxu0 0.0
        %6884 = vmatmul.mubr.f32.gmra.mrb[0].mxu0 %v6618
        %v6885 = vpop.f32.mrb[0].mxu0
        %v6886 = vadd.f32 0.0, %v6885
        %v6887 = vpop.f32.mrb[0].mxu0
        %6888 = vmatprep.mubr.f32.mxu0 0.0
        %6889 = vmatmul.mubr.f32.gmra.mrb[0].mxu0 %v6621
        %v6890 = vpop.f32.mrb[0].mxu0
        %v6891 = vadd.f32 0.0, %v6890
        %v6892 = vpop.f32.mrb[0].mxu0
        %6893 = vmatprep.mubr.f32.mxu0 0.0
        %6894 = vmatmul.mubr.f32.gmra.mrb[0].mxu0 %v6624
        %v6895 = vpop.f32.mrb[0].mxu0
        %v6896 = vadd.f32 0.0, %v6895
        %v6897 = vpop.f32.mrb[0].mxu0
        %6898 = vmatprep.mubr.f32.mxu0 0.0
        %6899 = vmatmul.mubr.f32.gmra.mrb[0].mxu0 %v6627
        %v6900 = vpop.f32.mrb[0].mxu0
        %v6901 = vadd.f32 0.0, %v6900
        %v6902 = vpop.f32.mrb[0].mxu0
        %6903 = vmatprep.mubr.f32.mxu0 0.0
        %6904 = vmatmul.mubr.f32.gmra.mrb[0].mxu0 %v6630
        %v6905 = vpop.f32.mrb[0].mxu0
        %v6906 = vadd.f32 0.0, %v6905
        %v6907 = vpop.f32.mrb[0].mxu0
        %6908 = vmatprep.mubr.f32.mxu0 0.0
        %6909 = vmatmul.mubr.f32.gmra.mrb[0].mxu0 %v6633
        %v6910 = vpop.f32.mrb[0].mxu0
        %v6911 = vadd.f32 0.0, %v6910
        %v6912 = vpop.f32.mrb[0].mxu0
        %6913 = vmatprep.mubr.f32.mxu0 0.0
        %6914 = vmatmul.mubr.f32.gmra.mrb[0].mxu0 %v6636
        %v6915 = vpop.f32.mrb[0].mxu0
        %v6916 = vadd.f32 0.0, %v6915
        %v6917 = vpop.f32.mrb[0].mxu0
        %6918 = vmatprep.mubr.f32.mxu0 0.0
        %6919 = vmatmul.mubr.f32.gmra.mrb[0].mxu0 %v6639
        %v6920 = vpop.f32.mrb[0].mxu0
        %v6921 = vadd.f32 0.0, %v6920
        %v6922 = vpop.f32.mrb[0].mxu0
        %6923 = vmatprep.mubr.f32.mxu0 0.0
        %6924 = vmatmul.mubr.f32.gmra.mrb[0].mxu0 %v6642
        %v6925 = vpop.f32.mrb[0].mxu0
        %v6926 = vadd.f32 0.0, %v6925
        %v6927 = vpop.f32.mrb[0].mxu0
        %6928 = vmatprep.mubr.f32.mxu0 0.0
        %6929 = vmatmul.mubr.f32.gmra.mrb[0].mxu0 %v6645
        %v6930 = vpop.f32.mrb[0].mxu0
        %v6931 = vadd.f32 0.0, %v6930
        %v6932 = vpop.f32.mrb[0].mxu0
        %6933 = vmatprep.mubr.f32.mxu0 0.0
        %6934 = vmatmul.mubr.f32.gmra.mrb[0].mxu0 %v6648
        %v6935 = vpop.f32.mrb[0].mxu0
        %v6936 = vadd.f32 0.0, %v6935
        %v6937 = vpop.f32.mrb[0].mxu0
        %6938 = vmatprep.mubr.f32.mxu0 0.0
        %6939 = vmatmul.mubr.f32.gmra.mrb[0].mxu0 %v6651
        %v6940 = vpop.f32.mrb[0].mxu0
        %v6941 = vadd.f32 0.0, %v6940
        %v6942 = vpop.f32.mrb[0].mxu0
        %6943 = vmatprep.mubr.f32.mxu0 0.0
        %6944 = vmatmul.mubr.f32.gmra.mrb[0].mxu0 %v6654
        %v6945 = vpop.f32.mrb[0].mxu0
        %v6946 = vadd.f32 0.0, %v6945
        %v6947 = vpop.f32.mrb[0].mxu0
        %6948 = vmatprep.mubr.f32.mxu0 0.0
        %6949 = vmatmul.mubr.f32.gmra.mrb[0].mxu0 %v6657
        %v6950 = vpop.f32.mrb[0].mxu0
        %v6951 = vadd.f32 0.0, %v6950
        %v6952 = vpop.f32.mrb[0].mxu0
        %6953 = vmatprep.mubr.f32.mxu0 0.0
        %6954 = vmatmul.mubr.f32.gmra.mrb[0].mxu0 %v6660
        %v6955 = vpop.f32.mrb[0].mxu0
        %v6956 = vadd.f32 0.0, %v6955
        %v6957 = vpop.f32.mrb[0].mxu0
        %6958 = vmatprep.mubr.f32.mxu0 0.0
        %6959 = vmatmul.mubr.f32.gmra.mrb[0].mxu0 %v6663
        %v6960 = vpop.f32.mrb[0].mxu0
        %v6961 = vadd.f32 0.0, %v6960
        %v6962 = vpop.f32.mrb[0].mxu0
        %6963 = vmatprep.mubr.f32.mxu0 0.0
        %6964 = vmatmul.mubr.f32.gmra.mrb[0].mxu0 %v6666
        %v6965 = vpop.f32.mrb[0].mxu0
        %v6966 = vadd.f32 0.0, %v6965
        %v6967 = vpop.f32.mrb[0].mxu0
        %6968 = vmatprep.mubr.f32.mxu0 0.0
        %6969 = vmatmul.mubr.f32.gmra.mrb[0].mxu0 %v6669
        %v6970 = vpop.f32.mrb[0].mxu0
        %v6971 = vadd.f32 0.0, %v6970
        %v6972 = vpop.f32.mrb[0].mxu0
        %6973 = vmatprep.mubr.f32.mxu0 0.0
        %6974 = vmatmul.mubr.f32.gmra.mrb[0].mxu0 %v6672
        %v6975 = vpop.f32.mrb[0].mxu0
        %v6976 = vadd.f32 0.0, %v6975
        %v6977 = vpop.f32.mrb[0].mxu0
        %6978 = vmatprep.mubr.f32.mxu0 0.0
        %6979 = vmatmul.mubr.f32.gmra.mrb[0].mxu0 %v6675
        %v6980 = vpop.f32.mrb[0].mxu0
        %v6981 = vadd.f32 0.0, %v6980
        %v6982 = vpop.f32.mrb[0].mxu0
        %6983 = vmatprep.mubr.f32.mxu0 0.0
        %6984 = vmatmul.mubr.f32.gmra.mrb[0].mxu0 %v6678
        %v6985 = vpop.f32.mrb[0].mxu0
        %v6986 = vadd.f32 0.0, %v6985
        %v6987 = vpop.f32.mrb[0].mxu0
        %6988 = vmatprep.mubr.f32.mxu0 0.0
        %6989 = vmatmul.mubr.f32.gmra.mrb[0].mxu0 %v6681
        %v6990 = vpop.f32.mrb[0].mxu0
        %v6991 = vadd.f32 0.0, %v6990
        %v6992 = vpop.f32.mrb[0].mxu0
        %6993 = vmatprep.mubr.f32.mxu0 0.0
        %6994 = vmatmul.mubr.f32.gmra.mrb[0].mxu0 %v6684
        %v6995 = vpop.f32.mrb[0].mxu0
        %v6996 = vadd.f32 0.0, %v6995
        %v6997 = vpop.f32.mrb[0].mxu0
        %6998 = vmatprep.mubr.f32.mxu0 0.0
        %6999 = vmatmul.mubr.f32.gmra.mrb[0].mxu0 %v6687
        %v7000 = vpop.f32.mrb[0].mxu0
        %v7001 = vadd.f32 0.0, %v7000
        %v7002 = vpop.f32.mrb[0].mxu0
        %7003 = vdwg.mxu0
        %v7004 = vmax.f32 %v6438, %v6756
        %v7005 = vmax.f32 %v6439, %v6761
        %v7006 = vmax.f32 %v6440, %v6766
        %v7007 = vmax.f32 %v6441, %v6771
        %v7008 = vmax.f32 %v6442, %v6776
        %v7009 = vmax.f32 %v6443, %v6781
        %v7010 = vmax.f32 %v6444, %v6786
        %v7011 = vmax.f32 %v6445, %v6791
        %v7012 = vmax.f32 %v6446, %v6796
        %v7013 = vmax.f32 %v6447, %v6801
        %v7014 = vmax.f32 %v6448, %v6806
        %v7015 = vmax.f32 %v6449, %v6811
        %v7016 = vmax.f32 %v6450, %v6816
        %v7017 = vmax.f32 %v6451, %v6821
        %v7018 = vmax.f32 %v6452, %v6826
        %v7019 = vmax.f32 %v6453, %v6831
        %v7020 = vmax.f32 %v6454, %v6836
        %v7021 = vmax.f32 %v6455, %v6841
        %v7022 = vmax.f32 %v6456, %v6846
        %v7023 = vmax.f32 %v6457, %v6851
        %v7024 = vmax.f32 %v6458, %v6856
        %v7025 = vmax.f32 %v6459, %v6861
        %v7026 = vmax.f32 %v6460, %v6866
        %v7027 = vmax.f32 %v6461, %v6871
        %v7028 = vmax.f32 %v6462, %v6876
        %v7029 = vmax.f32 %v6463, %v6881
        %v7030 = vmax.f32 %v6464, %v6886
        %v7031 = vmax.f32 %v6465, %v6891
        %v7032 = vmax.f32 %v6466, %v6896
        %v7033 = vmax.f32 %v6467, %v6901
        %v7034 = vmax.f32 %v6468, %v6906
        %v7035 = vmax.f32 %v6469, %v6911
        %v7036 = vmax.f32 %v6470, %v6916
        %v7037 = vmax.f32 %v6471, %v6921
        %v7038 = vmax.f32 %v6472, %v6926
        %v7039 = vmax.f32 %v6473, %v6931
        %v7040 = vmax.f32 %v6474, %v6936
        %v7041 = vmax.f32 %v6475, %v6941
        %v7042 = vmax.f32 %v6476, %v6946
        %v7043 = vmax.f32 %v6477, %v6951
        %v7044 = vmax.f32 %v6478, %v6956
        %v7045 = vmax.f32 %v6479, %v6961
        %v7046 = vmax.f32 %v6480, %v6966
        %v7047 = vmax.f32 %v6481, %v6971
        %v7048 = vmax.f32 %v6482, %v6976
        %v7049 = vmax.f32 %v6483, %v6981
        %v7050 = vmax.f32 %v6484, %v6986
        %v7051 = vmax.f32 %v6485, %v6991
        %v7052 = vmax.f32 %v6486, %v6996
        %v7053 = vmax.f32 %v6487, %v7001
        %v7054 = vld [vmem:[%s2] sm:$0x1]
        %v7056 = vlaneseq
        %v7057 = vshrl.u32 %v7056, 7
        %v7058 = vsub.s32 0, %v7057
        %v7059 = vrot.slane %v7054, %v7058
        %v7061 = vadd.f32 %v7004, %v7059
        %v7062 = vadd.f32 %v7005, %v7059
        %v7063 = vadd.f32 %v7006, %v7059
        %v7064 = vadd.f32 %v7007, %v7059
        %v7065 = vadd.f32 %v7008, %v7059
        %v7066 = vadd.f32 %v7009, %v7059
        %v7067 = vadd.f32 %v7010, %v7059
        %v7068 = vadd.f32 %v7011, %v7059
        %v7069 = vadd.f32 %v7012, %v7059
        %v7070 = vadd.f32 %v7013, %v7059
        %v7071 = vadd.f32 %v7014, %v7059
        %v7072 = vadd.f32 %v7015, %v7059
        %v7073 = vadd.f32 %v7016, %v7059
        %v7074 = vadd.f32 %v7017, %v7059
        %v7075 = vadd.f32 %v7018, %v7059
        %v7076 = vadd.f32 %v7019, %v7059
        %v7077 = vadd.f32 %v7020, %v7059
        %v7078 = vadd.f32 %v7021, %v7059
        %v7079 = vadd.f32 %v7022, %v7059
        %v7080 = vadd.f32 %v7023, %v7059
        %v7081 = vadd.f32 %v7024, %v7059
        %v7082 = vadd.f32 %v7025, %v7059
        %v7083 = vadd.f32 %v7026, %v7059
        %v7084 = vadd.f32 %v7027, %v7059
        %v7085 = vadd.f32 %v7028, %v7059
        %v7086 = vadd.f32 %v7029, %v7059
        %v7087 = vadd.f32 %v7030, %v7059
        %v7088 = vadd.f32 %v7031, %v7059
        %v7089 = vadd.f32 %v7032, %v7059
        %v7090 = vadd.f32 %v7033, %v7059
        %v7091 = vadd.f32 %v7034, %v7059
        %v7092 = vadd.f32 %v7035, %v7059
        %v7093 = vadd.f32 %v7036, %v7059
        %v7094 = vadd.f32 %v7037, %v7059
        %v7095 = vadd.f32 %v7038, %v7059
        %v7096 = vadd.f32 %v7039, %v7059
        %v7097 = vadd.f32 %v7040, %v7059
        %v7098 = vadd.f32 %v7041, %v7059
        %v7099 = vadd.f32 %v7042, %v7059
        %v7100 = vadd.f32 %v7043, %v7059
        %v7101 = vadd.f32 %v7044, %v7059
        %v7102 = vadd.f32 %v7045, %v7059
        %v7103 = vadd.f32 %v7046, %v7059
        %v7104 = vadd.f32 %v7047, %v7059
        %v7105 = vadd.f32 %v7048, %v7059
        %v7106 = vadd.f32 %v7049, %v7059
        %v7107 = vadd.f32 %v7050, %v7059
        %v7108 = vadd.f32 %v7051, %v7059
        %v7109 = vadd.f32 %v7052, %v7059
        %v7110 = vadd.f32 %v7053, %v7059
        %v7111 = vmax.f32 %v7061, 0.0
        %v7112 = vmax.f32 %v7062, 0.0
        %v7113 = vmax.f32 %v7063, 0.0
        %v7114 = vmax.f32 %v7064, 0.0
        %v7115 = vmax.f32 %v7065, 0.0
        %v7116 = vmax.f32 %v7066, 0.0
        %v7117 = vmax.f32 %v7067, 0.0
        %v7118 = vmax.f32 %v7068, 0.0
        %v7119 = vmax.f32 %v7069, 0.0
        %v7120 = vmax.f32 %v7070, 0.0
        %v7121 = vmax.f32 %v7071, 0.0
        %v7122 = vmax.f32 %v7072, 0.0
        %v7123 = vmax.f32 %v7073, 0.0
        %v7124 = vmax.f32 %v7074, 0.0
        %v7125 = vmax.f32 %v7075, 0.0
        %v7126 = vmax.f32 %v7076, 0.0
        %v7127 = vmax.f32 %v7077, 0.0
        %v7128 = vmax.f32 %v7078, 0.0
        %v7129 = vmax.f32 %v7079, 0.0
        %v7130 = vmax.f32 %v7080, 0.0
        %v7131 = vmax.f32 %v7081, 0.0
        %v7132 = vmax.f32 %v7082, 0.0
        %v7133 = vmax.f32 %v7083, 0.0
        %v7134 = vmax.f32 %v7084, 0.0
        %v7135 = vmax.f32 %v7085, 0.0
        %v7136 = vmax.f32 %v7086, 0.0
        %v7137 = vmax.f32 %v7087, 0.0
        %v7138 = vmax.f32 %v7088, 0.0
        %v7139 = vmax.f32 %v7089, 0.0
        %v7140 = vmax.f32 %v7090, 0.0
        %v7141 = vmax.f32 %v7091, 0.0
        %v7142 = vmax.f32 %v7092, 0.0
        %v7143 = vmax.f32 %v7093, 0.0
        %v7144 = vmax.f32 %v7094, 0.0
        %v7145 = vmax.f32 %v7095, 0.0
        %v7146 = vmax.f32 %v7096, 0.0
        %v7147 = vmax.f32 %v7097, 0.0
        %v7148 = vmax.f32 %v7098, 0.0
        %v7149 = vmax.f32 %v7099, 0.0
        %v7150 = vmax.f32 %v7100, 0.0
        %v7151 = vmax.f32 %v7101, 0.0
        %v7152 = vmax.f32 %v7102, 0.0
        %v7153 = vmax.f32 %v7103, 0.0
        %v7154 = vmax.f32 %v7104, 0.0
        %v7155 = vmax.f32 %v7105, 0.0
        %v7156 = vmax.f32 %v7106, 0.0
        %v7157 = vmax.f32 %v7107, 0.0
        %v7158 = vmax.f32 %v7108, 0.0
        %v7159 = vmax.f32 %v7109, 0.0
        %v7160 = vmax.f32 %v7110, 0.0
        %vm7161 = vcmask 244736
        %7162 = vst.msk [vmem:[%s2002] sm:$0xff] %vm7161, %v7111
        %7163 = vst.msk [vmem:[%s2002 + $0x8] sm:$0xff] %vm7161, %v7112
        %7164 = vst.msk [vmem:[%s2002 + $0x10] sm:$0xff] %vm7161, %v7113
        %7165 = vst.msk [vmem:[%s2002 + $0x18] sm:$0xff] %vm7161, %v7114
        %7166 = vst.msk [vmem:[%s2002 + $0x20] sm:$0xff] %vm7161, %v7115
        %7167 = vst.msk [vmem:[%s2002 + $0x28] sm:$0xff] %vm7161, %v7116
        %7168 = vst.msk [vmem:[%s2002 + $0x30] sm:$0xff] %vm7161, %v7117
        %7169 = vst.msk [vmem:[%s2002 + $0x38] sm:$0xff] %vm7161, %v7118
        %7170 = vst.msk [vmem:[%s2002 + $0x40] sm:$0xff] %vm7161, %v7119
        %7171 = vst.msk [vmem:[%s2002 + $0x48] sm:$0xff] %vm7161, %v7120
        %7172 = vst.msk [vmem:[%s2002 + $0x50] sm:$0xff] %vm7161, %v7121
        %7173 = vst.msk [vmem:[%s2002 + $0x58] sm:$0xff] %vm7161, %v7122
        %7174 = vst.msk [vmem:[%s2002 + $0x60] sm:$0xff] %vm7161, %v7123
        %7175 = vst.msk [vmem:[%s2002 + $0x68] sm:$0xff] %vm7161, %v7124
        %7176 = vst.msk [vmem:[%s2002 + $0x70] sm:$0xff] %vm7161, %v7125
        %7177 = vst.msk [vmem:[%s2002 + $0x78] sm:$0xff] %vm7161, %v7126
        %7178 = vst.msk [vmem:[%s2002 + $0x80] sm:$0xff] %vm7161, %v7127
        %7179 = vst.msk [vmem:[%s2002 + $0x88] sm:$0xff] %vm7161, %v7128
        %7180 = vst.msk [vmem:[%s2002 + $0x90] sm:$0xff] %vm7161, %v7129
        %7181 = vst.msk [vmem:[%s2002 + $0x98] sm:$0xff] %vm7161, %v7130
        %7182 = vst.msk [vmem:[%s2002 + $0xa0] sm:$0xff] %vm7161, %v7131
        %7183 = vst.msk [vmem:[%s2002 + $0xa8] sm:$0xff] %vm7161, %v7132
        %7184 = vst.msk [vmem:[%s2002 + $0xb0] sm:$0xff] %vm7161, %v7133
        %7185 = vst.msk [vmem:[%s2002 + $0xb8] sm:$0xff] %vm7161, %v7134
        %7186 = vst.msk [vmem:[%s2002 + $0xc0] sm:$0xff] %vm7161, %v7135
        %7187 = vst.msk [vmem:[%s2002 + $0xc8] sm:$0xff] %vm7161, %v7136
        %7188 = vst.msk [vmem:[%s2002 + $0xd0] sm:$0xff] %vm7161, %v7137
        %7189 = vst.msk [vmem:[%s2002 + $0xd8] sm:$0xff] %vm7161, %v7138
        %7190 = vst.msk [vmem:[%s2002 + $0xe0] sm:$0xff] %vm7161, %v7139
        %7191 = vst.msk [vmem:[%s2002 + $0xe8] sm:$0xff] %vm7161, %v7140
        %7192 = vst.msk [vmem:[%s2002 + $0xf0] sm:$0xff] %vm7161, %v7141
        %7193 = vst.msk [vmem:[%s2002 + $0xf8] sm:$0xff] %vm7161, %v7142
        %7194 = vst.msk [vmem:[%s2002 + $0x100] sm:$0xff] %vm7161, %v7143
        %7195 = vst.msk [vmem:[%s2002 + $0x108] sm:$0xff] %vm7161, %v7144
        %7196 = vst.msk [vmem:[%s2002 + $0x110] sm:$0xff] %vm7161, %v7145
        %7197 = vst.msk [vmem:[%s2002 + $0x118] sm:$0xff] %vm7161, %v7146
        %7198 = vst.msk [vmem:[%s2002 + $0x120] sm:$0xff] %vm7161, %v7147
        %7199 = vst.msk [vmem:[%s2002 + $0x128] sm:$0xff] %vm7161, %v7148
        %7200 = vst.msk [vmem:[%s2002 + $0x130] sm:$0xff] %vm7161, %v7149
        %7201 = vst.msk [vmem:[%s2002 + $0x138] sm:$0xff] %vm7161, %v7150
        %7202 = vst.msk [vmem:[%s2002 + $0x140] sm:$0xff] %vm7161, %v7151
        %7203 = vst.msk [vmem:[%s2002 + $0x148] sm:$0xff] %vm7161, %v7152
        %7204 = vst.msk [vmem:[%s2002 + $0x150] sm:$0xff] %vm7161, %v7153
        %7205 = vst.msk [vmem:[%s2002 + $0x158] sm:$0xff] %vm7161, %v7154
        %7206 = vst.msk [vmem:[%s2002 + $0x160] sm:$0xff] %vm7161, %v7155
        %7207 = vst.msk [vmem:[%s2002 + $0x168] sm:$0xff] %vm7161, %v7156
        %7208 = vst.msk [vmem:[%s2002 + $0x170] sm:$0xff] %vm7161, %v7157
        %7209 = vst.msk [vmem:[%s2002 + $0x178] sm:$0xff] %vm7161, %v7158
        %7210 = vst.msk [vmem:[%s2002 + $0x180] sm:$0xff] %vm7161, %v7159
        %7211 = vst.msk [vmem:[%s2002 + $0x188] sm:$0xff] %vm7161, %v7160
        %s7212 = smul.u32 50, %s14
        %p7213 = scmp.lt.s32.totalorder %s7212, 99
        %s7214 = scalar_select %p7213, %s7212, 99
        %s7215 = smul.addr %s7214, 8
        %s7216 = scalar_lea.vmem %s3, %s7215
        // Predicated region
        $region71: #{simple_net_dropout_forward.3} parent=65 // pred_check
          %p7217 = pneg %p100
        $region72: #{simple_net_dropout_forward.3} parent=65 // pred_check_branch
          %7219 = sbr.rel (%p7217) target = $region74
        $region73: #{simple_net_dropout_forward.3} parent=65 // pred_region
          %s7220 = smul.u32 50, %s14
        $region74: #{simple_net_dropout_forward.3} parent=65 // pred_fallthru
          _
      $region66: #{simple_net_dropout_forward.3} parent=5 // pred_fallthru
        _
      %p7221 = scmp.le.s32.totalorder 2, %s9
      // Predicated region
      $region75: #{simple_net_dropout_forward.3} parent=5 // pred_check
        %p7222 = pneg %p7221
      $region76: #{simple_net_dropout_forward.3} parent=5 // pred_check_branch
        %7224 = sbr.rel (%p7222) target = $region78
      $region77: #{simple_net_dropout_forward.3} parent=5 // pred_region
        %s7225 = ssub.s32 %s9, 2
        // Predicated region
        $region79: #{simple_net_dropout_forward.3} parent=77 // pred_check
          %p7226 = pneg %p106
        $region80: #{simple_net_dropout_forward.3} parent=77 // pred_check_branch
          %7228 = sbr.rel (%p7226) target = $region82
        $region81: #{simple_net_dropout_forward.3} parent=77 // pred_region
          %s7229 = smul.u32 50, %s15
          %p7230 = scmp.lt.s32.totalorder %s7229, 99
          %s7231 = scalar_select %p7230, %s7229, 99
          %s7232 = smul.addr %s7231, 8
          %s7233 = scalar_lea.vmem %s3, %s7232
        $region82: #{simple_net_dropout_forward.3} parent=77 // pred_fallthru
          _
      $region78: #{simple_net_dropout_forward.3} parent=5 // pred_fallthru
        _
    $region6: #{simple_net_dropout_forward.3} parent=1 // loop_footer
      %s13 = sadd.s32 1, %s9
    $region7: #{simple_net_dropout_forward.3} parent=1 // loop_footer_branch
      %8 = sbr.rel target = $region3
    $region8: #{simple_net_dropout_forward.3} parent=1 // loop_exit
      _

// kernel: simple_net_dropout_forward.4
$region0: #{simple_net_dropout_forward.4}
  #allocation0 [shape = 'u32[]', space=smem, size = 0x4, offset = 0x4, fixed_abs, tag = 'smem constant byte address 0x4 - core index']
  #allocation1 [shape = 'u32[144,128]{1,0:T(1,128)}', space=vmem, size = 0x12000, scoped, tag = 'internal scratch']
  %s0 = inlined_call_operand.vmem [shape: f32[9,72,270], index: 0, kind: input, shape index: {}]
  %s1 = inlined_call_operand.vmem [shape: f32[270,30], index: 1, kind: input, shape index: {}]
  %s2 = inlined_call_operand.vmem [shape: f32[1,30], index: 2, kind: input, shape index: {}]
  %s3 = inlined_call_operand.vmem [shape: f32[72,30], index: 3, kind: output, shape index: {}]
  %s4 = sld [smem:[#allocation0]]
  $region22: #{simple_net_dropout_forward.4} parent=0
    _
  %s6 = ssub.s32 1, %s4
  %s7 = scalar_select 0, %s6, %s4
  // Predicated region
  $region2: #{simple_net_dropout_forward.4} parent=0 // pred_check
    _
  $region3: #{simple_net_dropout_forward.4} parent=0 // pred_check_branch
    %9 = sbr.rel (0) target = $region5
  $region4: #{simple_net_dropout_forward.4} parent=0 // pred_region
    _
  $region5: #{simple_net_dropout_forward.4} parent=0 // pred_fallthru
    _
  // Predicated region
  $region6: #{simple_net_dropout_forward.4} parent=0 // pred_check
    _
  $region7: #{simple_net_dropout_forward.4} parent=0 // pred_check_branch
    %11 = sbr.rel (0) target = $region9
  $region8: #{simple_net_dropout_forward.4} parent=0 // pred_region
    _
  $region9: #{simple_net_dropout_forward.4} parent=0 // pred_fallthru
    _
  // Predicated region
  $region10: #{simple_net_dropout_forward.4} parent=0 // pred_check
    _
  $region11: #{simple_net_dropout_forward.4} parent=0 // pred_check_branch
    %13 = sbr.rel (0) target = $region13
  $region12: #{simple_net_dropout_forward.4} parent=0 // pred_region
    _
  $region13: #{simple_net_dropout_forward.4} parent=0 // pred_fallthru
    _
  %v14 = vld [vmem:[%s0] sm:$0xff]
  %v15 = vld [vmem:[%s0 + $0x8] sm:$0xff]
  %v16 = vld [vmem:[%s0 + $0x10] sm:$0xff]
  %v17 = vld [vmem:[%s0 + $0x18] sm:$0xff]
  %v18 = vld [vmem:[%s0 + $0x20] sm:$0xff]
  %v19 = vld [vmem:[%s0 + $0x28] sm:$0xff]
  %v20 = vld [vmem:[%s0 + $0x30] sm:$0xff]
  %v21 = vld [vmem:[%s0 + $0x38] sm:$0xff]
  %v22 = vld [vmem:[%s0 + $0x40] sm:$0xff]
  %v23 = vld [vmem:[%s0 + $0x48] sm:$0xff]
  %v24 = vld [vmem:[%s0 + $0x50] sm:$0xff]
  %v25 = vld [vmem:[%s0 + $0x58] sm:$0xff]
  %v26 = vld [vmem:[%s0 + $0x60] sm:$0xff]
  %v27 = vld [vmem:[%s0 + $0x68] sm:$0xff]
  %v28 = vld [vmem:[%s0 + $0x70] sm:$0xff]
  %v29 = vld [vmem:[%s0 + $0x78] sm:$0xff]
  %v30 = vld [vmem:[%s0 + $0x80] sm:$0xff]
  %v31 = vld [vmem:[%s0 + $0x88] sm:$0xff]
  %v32 = vld [vmem:[%s0 + $0x90] sm:$0xff]
  %v33 = vld [vmem:[%s0 + $0x98] sm:$0xff]
  %v34 = vld [vmem:[%s0 + $0xa0] sm:$0xff]
  %v35 = vld [vmem:[%s0 + $0xa8] sm:$0xff]
  %v36 = vld [vmem:[%s0 + $0xb0] sm:$0xff]
  %v37 = vld [vmem:[%s0 + $0xb8] sm:$0xff]
  %v38 = vld [vmem:[%s0 + $0xc0] sm:$0xff]
  %v39 = vld [vmem:[%s0 + $0xc8] sm:$0xff]
  %v40 = vld [vmem:[%s0 + $0xd0] sm:$0xff]
  %v41 = vld [vmem:[%s1] sm:$0xff]
  %v42 = vld [vmem:[%s1 + $0x8] sm:$0xff]
  %v43 = vld [vmem:[%s1 + $0x10] sm:$0xff]
  %v44 = vld [vmem:[%s1 + $0x18] sm:$0xff]
  %v45 = vld [vmem:[%s1 + $0x20] sm:$0xff]
  %v46 = vld [vmem:[%s1 + $0x28] sm:$0xff]
  %v47 = vld [vmem:[%s1 + $0x30] sm:$0xff]
  %v48 = vld [vmem:[%s1 + $0x38] sm:$0xff]
  %v49 = vld [vmem:[%s1 + $0x40] sm:$0xff]
  %v50 = vld [vmem:[%s1 + $0x48] sm:$0xff]
  %v51 = vld [vmem:[%s1 + $0x50] sm:$0xff]
  %v52 = vld [vmem:[%s1 + $0x58] sm:$0xff]
  %v53 = vld [vmem:[%s1 + $0x60] sm:$0xff]
  %v54 = vld [vmem:[%s1 + $0x68] sm:$0xff]
  %v55 = vld [vmem:[%s1 + $0x70] sm:$0xff]
  %v56 = vld [vmem:[%s1 + $0x78] sm:$0xff]
  %v57 = vld [vmem:[%s1 + $0x80] sm:$0xff]
  %v58 = vld [vmem:[%s1 + $0x88] sm:$0xff]
  %v59 = vld [vmem:[%s1 + $0x90] sm:$0xff]
  %v60 = vld [vmem:[%s1 + $0x98] sm:$0xff]
  %v61 = vld [vmem:[%s1 + $0xa0] sm:$0xff]
  %v62 = vld [vmem:[%s1 + $0xa8] sm:$0xff]
  %v63 = vld [vmem:[%s1 + $0xb0] sm:$0xff]
  %v64 = vld [vmem:[%s1 + $0xb8] sm:$0xff]
  %v65 = vld [vmem:[%s1 + $0xc0] sm:$0xff]
  %v66 = vld [vmem:[%s1 + $0xc8] sm:$0xff]
  %v67 = vld [vmem:[%s1 + $0xd0] sm:$0xff]
  %v68 = vld [vmem:[%s1 + $0xd8] sm:$0xff]
  %v69 = vld [vmem:[%s1 + $0xe0] sm:$0xff]
  %v70 = vld [vmem:[%s1 + $0xe8] sm:$0xff]
  %v71 = vld [vmem:[%s1 + $0xf0] sm:$0xff]
  %v72 = vld [vmem:[%s1 + $0xf8] sm:$0xff]
  %v73 = vld [vmem:[%s1 + $0x100] sm:$0xff]
  %v74 = vld [vmem:[%s1 + $0x108] sm:$0x3f]
  %vm75 = vcmask 113664
  %v77 = vsel %vm75, %v16, 0
  %v80 = vsel %vm75, %v19, 0
  %v83 = vsel %vm75, %v22, 0
  %v86 = vsel %vm75, %v25, 0
  %v89 = vsel %vm75, %v28, 0
  %v92 = vsel %vm75, %v31, 0
  %v95 = vsel %vm75, %v34, 0
  %v98 = vsel %vm75, %v37, 0
  %v101 = vsel %vm75, %v40, 0
  %vm103 = vcmask 1045504
  %v105 = vsel %vm103, %v74, 0
  %107 = vmatprep.subr.mxu0 0.0
  %108 = vmatpush1.msra.mxu0 %v41
  %109 = vmatprep.subr.mxu0 0.0
  %110 = vmatpush1.msra.mxu0 %v42
  %111 = vmatprep.subr.mxu0 0.0
  %112 = vmatpush1.msra.mxu0 %v43
  %113 = vmatprep.subr.mxu0 0.0
  %114 = vmatpush1.msra.mxu0 %v44
  %115 = vmatprep.subr.mxu0 0.0
  %116 = vmatpush1.msra.mxu0 %v45
  %117 = vmatprep.subr.mxu0 0.0
  %118 = vmatpush1.msra.mxu0 %v46
  %119 = vmatprep.subr.mxu0 0.0
  %120 = vmatpush1.msra.mxu0 %v47
  %121 = vmatprep.subr.mxu0 0.0
  %122 = vmatpush1.msra.mxu0 %v48
  %123 = vmatprep.subr.mxu0 0.0
  %124 = vmatpush1.msra.mxu0 %v49
  %125 = vmatprep.subr.mxu0 0.0
  %126 = vmatpush1.msra.mxu0 %v50
  %127 = vmatprep.subr.mxu0 0.0
  %128 = vmatpush1.msra.mxu0 %v51
  %129 = vmatprep.subr.mxu0 0.0
  %130 = vmatpush1.msra.mxu0 %v52
  %131 = vmatprep.subr.mxu0 0.0
  %132 = vmatpush1.msra.mxu0 %v53
  %133 = vmatprep.subr.mxu0 0.0
  %134 = vmatpush1.msra.mxu0 %v54
  %135 = vmatprep.subr.mxu0 0.0
  %136 = vmatpush1.msra.mxu0 %v55
  %137 = vmatprep.subr.mxu0 0.0
  %138 = vmatpush1.msra.mxu0 %v56
  %139 = vmatprep.subr.mxu0 0.0
  %140 = vmatpush1.msra.mxu0 %v57
  %141 = vmatprep.subr.mxu0 0.0
  %142 = vmatpush1.msra.mxu0 %v58
  %143 = vmatprep.subr.mxu0 0.0
  %144 = vmatpush1.msra.mxu0 %v59
  %145 = vmatprep.subr.mxu0 0.0
  %146 = vmatpush1.msra.mxu0 %v60
  %147 = vmatprep.subr.mxu0 0.0
  %148 = vmatpush1.msra.mxu0 %v61
  %149 = vmatprep.subr.mxu0 0.0
  %150 = vmatpush1.msra.mxu0 %v62
  %151 = vmatprep.subr.mxu0 0.0
  %152 = vmatpush1.msra.mxu0 %v63
  %153 = vmatprep.subr.mxu0 0.0
  %154 = vmatpush1.msra.mxu0 %v64
  %155 = vmatprep.subr.mxu0 0.0
  %156 = vmatpush1.msra.mxu0 %v65
  %157 = vmatprep.subr.mxu0 0.0
  %158 = vmatpush1.msra.mxu0 %v66
  %159 = vmatprep.subr.mxu0 0.0
  %160 = vmatpush1.msra.mxu0 %v67
  %161 = vmatprep.subr.mxu0 0.0
  %162 = vmatpush1.msra.mxu0 %v68
  %163 = vmatprep.subr.mxu0 0.0
  %164 = vmatpush1.msra.mxu0 %v69
  %165 = vmatprep.subr.mxu0 0.0
  %166 = vmatpush1.msra.mxu0 %v70
  %167 = vmatprep.subr.mxu0 0.0
  %168 = vmatpush1.msra.mxu0 %v71
  %169 = vmatprep.subr.mxu0 0.0
  %170 = vmatpush1.msra.mxu0 %v72
  %171 = vmatprep.mubr.f32.mxu0 %v15
  %172 = vmatmul.mubr.f32.gmra.mrb[0].mxu0 %v14
  %v173 = vpop.f32.mrb[0].mxu0
  %v174 = vadd.f32 0.0, %v173
  %v175 = vpop.f32.mrb[0].mxu0
  %176 = vmatprep.mubr.f32.mxu0 %v18
  %177 = vmatmul.mubr.f32.gmra.mrb[0].mxu0 %v17
  %v178 = vpop.f32.mrb[0].mxu0
  %v179 = vadd.f32 0.0, %v178
  %v180 = vpop.f32.mrb[0].mxu0
  %181 = vmatprep.mubr.f32.mxu0 %v21
  %182 = vmatmul.mubr.f32.gmra.mrb[0].mxu0 %v20
  %v183 = vpop.f32.mrb[0].mxu0
  %v184 = vadd.f32 0.0, %v183
  %v185 = vpop.f32.mrb[0].mxu0
  %186 = vmatprep.mubr.f32.mxu0 %v24
  %187 = vmatmul.mubr.f32.gmra.mrb[0].mxu0 %v23
  %v188 = vpop.f32.mrb[0].mxu0
  %v189 = vadd.f32 0.0, %v188
  %v190 = vpop.f32.mrb[0].mxu0
  %191 = vmatprep.mubr.f32.mxu0 %v27
  %192 = vmatmul.mubr.f32.gmra.mrb[0].mxu0 %v26
  %v193 = vpop.f32.mrb[0].mxu0
  %v194 = vadd.f32 0.0, %v193
  %v195 = vpop.f32.mrb[0].mxu0
  %196 = vmatprep.mubr.f32.mxu0 %v30
  %197 = vmatmul.mubr.f32.gmra.mrb[0].mxu0 %v29
  %v198 = vpop.f32.mrb[0].mxu0
  %v199 = vadd.f32 0.0, %v198
  %v200 = vpop.f32.mrb[0].mxu0
  %201 = vmatprep.mubr.f32.mxu0 %v33
  %202 = vmatmul.mubr.f32.gmra.mrb[0].mxu0 %v32
  %v203 = vpop.f32.mrb[0].mxu0
  %v204 = vadd.f32 0.0, %v203
  %v205 = vpop.f32.mrb[0].mxu0
  %206 = vmatprep.mubr.f32.mxu0 %v36
  %207 = vmatmul.mubr.f32.gmra.mrb[0].mxu0 %v35
  %v208 = vpop.f32.mrb[0].mxu0
  %v209 = vadd.f32 0.0, %v208
  %v210 = vpop.f32.mrb[0].mxu0
  %211 = vmatprep.mubr.f32.mxu0 %v39
  %212 = vmatmul.mubr.f32.gmra.mrb[0].mxu0 %v38
  %v213 = vpop.f32.mrb[0].mxu0
  %v214 = vadd.f32 0.0, %v213
  %v215 = vpop.f32.mrb[0].mxu0
  %216 = vdwg.mxu0
  %217 = vmatprep.subr.mxu0 0.0
  %218 = vmatpush1.msra.mxu0 %v73
  %219 = vmatprep.subr.mxu0 0.0
  %220 = vmatpush1.msra.mxu0 %v105
  %221 = vmatprep.subr.mxu0 0.0
  %222 = vmatpush1.msra.mxu0 0.0
  %223 = vmatprep.subr.mxu0 0.0
  %224 = vmatpush1.msra.mxu0 0.0
  %225 = vmatprep.subr.mxu0 0.0
  %226 = vmatpush1.msra.mxu0 0.0
  %227 = vmatprep.subr.mxu0 0.0
  %228 = vmatpush1.msra.mxu0 0.0
  %229 = vmatprep.subr.mxu0 0.0
  %230 = vmatpush1.msra.mxu0 0.0
  %231 = vmatprep.subr.mxu0 0.0
  %232 = vmatpush1.msra.mxu0 0.0
  %233 = vmatprep.subr.mxu0 0.0
  %234 = vmatpush1.msra.mxu0 0.0
  %235 = vmatprep.subr.mxu0 0.0
  %236 = vmatpush1.msra.mxu0 0.0
  %237 = vmatprep.subr.mxu0 0.0
  %238 = vmatpush1.msra.mxu0 0.0
  %239 = vmatprep.subr.mxu0 0.0
  %240 = vmatpush1.msra.mxu0 0.0
  %241 = vmatprep.subr.mxu0 0.0
  %242 = vmatpush1.msra.mxu0 0.0
  %243 = vmatprep.subr.mxu0 0.0
  %244 = vmatpush1.msra.mxu0 0.0
  %245 = vmatprep.subr.mxu0 0.0
  %246 = vmatpush1.msra.mxu0 0.0
  %247 = vmatprep.subr.mxu0 0.0
  %248 = vmatpush1.msra.mxu0 0.0
  %249 = vmatprep.subr.mxu0 0.0
  %250 = vmatpush1.msra.mxu0 0.0
  %251 = vmatprep.subr.mxu0 0.0
  %252 = vmatpush1.msra.mxu0 0.0
  %253 = vmatprep.subr.mxu0 0.0
  %254 = vmatpush1.msra.mxu0 0.0
  %255 = vmatprep.subr.mxu0 0.0
  %256 = vmatpush1.msra.mxu0 0.0
  %257 = vmatprep.subr.mxu0 0.0
  %258 = vmatpush1.msra.mxu0 0.0
  %259 = vmatprep.subr.mxu0 0.0
  %260 = vmatpush1.msra.mxu0 0.0
  %261 = vmatprep.subr.mxu0 0.0
  %262 = vmatpush1.msra.mxu0 0.0
  %263 = vmatprep.subr.mxu0 0.0
  %264 = vmatpush1.msra.mxu0 0.0
  %265 = vmatprep.subr.mxu0 0.0
  %266 = vmatpush1.msra.mxu0 0.0
  %267 = vmatprep.subr.mxu0 0.0
  %268 = vmatpush1.msra.mxu0 0.0
  %269 = vmatprep.subr.mxu0 0.0
  %270 = vmatpush1.msra.mxu0 0.0
  %271 = vmatprep.subr.mxu0 0.0
  %272 = vmatpush1.msra.mxu0 0.0
  %273 = vmatprep.subr.mxu0 0.0
  %274 = vmatpush1.msra.mxu0 0.0
  %275 = vmatprep.subr.mxu0 0.0
  %276 = vmatpush1.msra.mxu0 0.0
  %277 = vmatprep.subr.mxu0 0.0
  %278 = vmatpush1.msra.mxu0 0.0
  %279 = vmatprep.subr.mxu0 0.0
  %280 = vmatpush1.msra.mxu0 0.0
  %281 = vmatprep.mubr.f32.mxu0 0.0
  %282 = vmatmul.mubr.f32.gmra.mrb[0].mxu0 %v77
  %v283 = vpop.f32.mrb[0].mxu0
  %v284 = vadd.f32 %v174, %v283
  %v285 = vpop.f32.mrb[0].mxu0
  %286 = vmatprep.mubr.f32.mxu0 0.0
  %287 = vmatmul.mubr.f32.gmra.mrb[0].mxu0 %v80
  %v288 = vpop.f32.mrb[0].mxu0
  %v289 = vadd.f32 %v179, %v288
  %v290 = vpop.f32.mrb[0].mxu0
  %291 = vmatprep.mubr.f32.mxu0 0.0
  %292 = vmatmul.mubr.f32.gmra.mrb[0].mxu0 %v83
  %v293 = vpop.f32.mrb[0].mxu0
  %v294 = vadd.f32 %v184, %v293
  %v295 = vpop.f32.mrb[0].mxu0
  %296 = vmatprep.mubr.f32.mxu0 0.0
  %297 = vmatmul.mubr.f32.gmra.mrb[0].mxu0 %v86
  %v298 = vpop.f32.mrb[0].mxu0
  %v299 = vadd.f32 %v189, %v298
  %v300 = vpop.f32.mrb[0].mxu0
  %301 = vmatprep.mubr.f32.mxu0 0.0
  %302 = vmatmul.mubr.f32.gmra.mrb[0].mxu0 %v89
  %v303 = vpop.f32.mrb[0].mxu0
  %v304 = vadd.f32 %v194, %v303
  %v305 = vpop.f32.mrb[0].mxu0
  %306 = vmatprep.mubr.f32.mxu0 0.0
  %307 = vmatmul.mubr.f32.gmra.mrb[0].mxu0 %v92
  %v308 = vpop.f32.mrb[0].mxu0
  %v309 = vadd.f32 %v199, %v308
  %v310 = vpop.f32.mrb[0].mxu0
  %311 = vmatprep.mubr.f32.mxu0 0.0
  %312 = vmatmul.mubr.f32.gmra.mrb[0].mxu0 %v95
  %v313 = vpop.f32.mrb[0].mxu0
  %v314 = vadd.f32 %v204, %v313
  %v315 = vpop.f32.mrb[0].mxu0
  %316 = vmatprep.mubr.f32.mxu0 0.0
  %317 = vmatmul.mubr.f32.gmra.mrb[0].mxu0 %v98
  %v318 = vpop.f32.mrb[0].mxu0
  %v319 = vadd.f32 %v209, %v318
  %v320 = vpop.f32.mrb[0].mxu0
  %321 = vmatprep.mubr.f32.mxu0 0.0
  %322 = vmatmul.mubr.f32.gmra.mrb[0].mxu0 %v101
  %v323 = vpop.f32.mrb[0].mxu0
  %v324 = vadd.f32 %v214, %v323
  %v325 = vpop.f32.mrb[0].mxu0
  %326 = vdwg.mxu0
  %s327 = scalar_lea.vmem %s0, 216
  %v328 = vld [vmem:[%s327] sm:$0xff]
  %v329 = vld [vmem:[%s327 + $0x8] sm:$0xff]
  %v330 = vld [vmem:[%s327 + $0x10] sm:$0xff]
  %v331 = vld [vmem:[%s327 + $0x18] sm:$0xff]
  %v332 = vld [vmem:[%s327 + $0x20] sm:$0xff]
  %v333 = vld [vmem:[%s327 + $0x28] sm:$0xff]
  %v334 = vld [vmem:[%s327 + $0x30] sm:$0xff]
  %v335 = vld [vmem:[%s327 + $0x38] sm:$0xff]
  %v336 = vld [vmem:[%s327 + $0x40] sm:$0xff]
  %v337 = vld [vmem:[%s327 + $0x48] sm:$0xff]
  %v338 = vld [vmem:[%s327 + $0x50] sm:$0xff]
  %v339 = vld [vmem:[%s327 + $0x58] sm:$0xff]
  %v340 = vld [vmem:[%s327 + $0x60] sm:$0xff]
  %v341 = vld [vmem:[%s327 + $0x68] sm:$0xff]
  %v342 = vld [vmem:[%s327 + $0x70] sm:$0xff]
  %v343 = vld [vmem:[%s327 + $0x78] sm:$0xff]
  %v344 = vld [vmem:[%s327 + $0x80] sm:$0xff]
  %v345 = vld [vmem:[%s327 + $0x88] sm:$0xff]
  %v346 = vld [vmem:[%s327 + $0x90] sm:$0xff]
  %v347 = vld [vmem:[%s327 + $0x98] sm:$0xff]
  %v348 = vld [vmem:[%s327 + $0xa0] sm:$0xff]
  %v349 = vld [vmem:[%s327 + $0xa8] sm:$0xff]
  %v350 = vld [vmem:[%s327 + $0xb0] sm:$0xff]
  %v351 = vld [vmem:[%s327 + $0xb8] sm:$0xff]
  %v352 = vld [vmem:[%s327 + $0xc0] sm:$0xff]
  %v353 = vld [vmem:[%s327 + $0xc8] sm:$0xff]
  %v354 = vld [vmem:[%s327 + $0xd0] sm:$0xff]
  %v356 = vsel %vm75, %v330, 0
  %v359 = vsel %vm75, %v333, 0
  %v362 = vsel %vm75, %v336, 0
  %v365 = vsel %vm75, %v339, 0
  %v368 = vsel %vm75, %v342, 0
  %v371 = vsel %vm75, %v345, 0
  %v374 = vsel %vm75, %v348, 0
  %v377 = vsel %vm75, %v351, 0
  %v380 = vsel %vm75, %v354, 0
  %382 = vmatprep.subr.mxu0 0.0
  %383 = vmatpush1.msra.mxu0 %v41
  %384 = vmatprep.subr.mxu0 0.0
  %385 = vmatpush1.msra.mxu0 %v42
  %386 = vmatprep.subr.mxu0 0.0
  %387 = vmatpush1.msra.mxu0 %v43
  %388 = vmatprep.subr.mxu0 0.0
  %389 = vmatpush1.msra.mxu0 %v44
  %390 = vmatprep.subr.mxu0 0.0
  %391 = vmatpush1.msra.mxu0 %v45
  %392 = vmatprep.subr.mxu0 0.0
  %393 = vmatpush1.msra.mxu0 %v46
  %394 = vmatprep.subr.mxu0 0.0
  %395 = vmatpush1.msra.mxu0 %v47
  %396 = vmatprep.subr.mxu0 0.0
  %397 = vmatpush1.msra.mxu0 %v48
  %398 = vmatprep.subr.mxu0 0.0
  %399 = vmatpush1.msra.mxu0 %v49
  %400 = vmatprep.subr.mxu0 0.0
  %401 = vmatpush1.msra.mxu0 %v50
  %402 = vmatprep.subr.mxu0 0.0
  %403 = vmatpush1.msra.mxu0 %v51
  %404 = vmatprep.subr.mxu0 0.0
  %405 = vmatpush1.msra.mxu0 %v52
  %406 = vmatprep.subr.mxu0 0.0
  %407 = vmatpush1.msra.mxu0 %v53
  %408 = vmatprep.subr.mxu0 0.0
  %409 = vmatpush1.msra.mxu0 %v54
  %410 = vmatprep.subr.mxu0 0.0
  %411 = vmatpush1.msra.mxu0 %v55
  %412 = vmatprep.subr.mxu0 0.0
  %413 = vmatpush1.msra.mxu0 %v56
  %414 = vmatprep.subr.mxu0 0.0
  %415 = vmatpush1.msra.mxu0 %v57
  %416 = vmatprep.subr.mxu0 0.0
  %417 = vmatpush1.msra.mxu0 %v58
  %418 = vmatprep.subr.mxu0 0.0
  %419 = vmatpush1.msra.mxu0 %v59
  %420 = vmatprep.subr.mxu0 0.0
  %421 = vmatpush1.msra.mxu0 %v60
  %422 = vmatprep.subr.mxu0 0.0
  %423 = vmatpush1.msra.mxu0 %v61
  %424 = vmatprep.subr.mxu0 0.0
  %425 = vmatpush1.msra.mxu0 %v62
  %426 = vmatprep.subr.mxu0 0.0
  %427 = vmatpush1.msra.mxu0 %v63
  %428 = vmatprep.subr.mxu0 0.0
  %429 = vmatpush1.msra.mxu0 %v64
  %430 = vmatprep.subr.mxu0 0.0
  %431 = vmatpush1.msra.mxu0 %v65
  %432 = vmatprep.subr.mxu0 0.0
  %433 = vmatpush1.msra.mxu0 %v66
  %434 = vmatprep.subr.mxu0 0.0
  %435 = vmatpush1.msra.mxu0 %v67
  %436 = vmatprep.subr.mxu0 0.0
  %437 = vmatpush1.msra.mxu0 %v68
  %438 = vmatprep.subr.mxu0 0.0
  %439 = vmatpush1.msra.mxu0 %v69
  %440 = vmatprep.subr.mxu0 0.0
  %441 = vmatpush1.msra.mxu0 %v70
  %442 = vmatprep.subr.mxu0 0.0
  %443 = vmatpush1.msra.mxu0 %v71
  %444 = vmatprep.subr.mxu0 0.0
  %445 = vmatpush1.msra.mxu0 %v72
  %446 = vmatprep.mubr.f32.mxu0 %v329
  %447 = vmatmul.mubr.f32.gmra.mrb[0].mxu0 %v328
  %v448 = vpop.f32.mrb[0].mxu0
  %v449 = vadd.f32 0.0, %v448
  %v450 = vpop.f32.mrb[0].mxu0
  %451 = vmatprep.mubr.f32.mxu0 %v332
  %452 = vmatmul.mubr.f32.gmra.mrb[0].mxu0 %v331
  %v453 = vpop.f32.mrb[0].mxu0
  %v454 = vadd.f32 0.0, %v453
  %v455 = vpop.f32.mrb[0].mxu0
  %456 = vmatprep.mubr.f32.mxu0 %v335
  %457 = vmatmul.mubr.f32.gmra.mrb[0].mxu0 %v334
  %v458 = vpop.f32.mrb[0].mxu0
  %v459 = vadd.f32 0.0, %v458
  %v460 = vpop.f32.mrb[0].mxu0
  %461 = vmatprep.mubr.f32.mxu0 %v338
  %462 = vmatmul.mubr.f32.gmra.mrb[0].mxu0 %v337
  %v463 = vpop.f32.mrb[0].mxu0
  %v464 = vadd.f32 0.0, %v463
  %v465 = vpop.f32.mrb[0].mxu0
  %466 = vmatprep.mubr.f32.mxu0 %v341
  %467 = vmatmul.mubr.f32.gmra.mrb[0].mxu0 %v340
  %v468 = vpop.f32.mrb[0].mxu0
  %v469 = vadd.f32 0.0, %v468
  %v470 = vpop.f32.mrb[0].mxu0
  %471 = vmatprep.mubr.f32.mxu0 %v344
  %472 = vmatmul.mubr.f32.gmra.mrb[0].mxu0 %v343
  %v473 = vpop.f32.mrb[0].mxu0
  %v474 = vadd.f32 0.0, %v473
  %v475 = vpop.f32.mrb[0].mxu0
  %476 = vmatprep.mubr.f32.mxu0 %v347
  %477 = vmatmul.mubr.f32.gmra.mrb[0].mxu0 %v346
  %v478 = vpop.f32.mrb[0].mxu0
  %v479 = vadd.f32 0.0, %v478
  %v480 = vpop.f32.mrb[0].mxu0
  %481 = vmatprep.mubr.f32.mxu0 %v350
  %482 = vmatmul.mubr.f32.gmra.mrb[0].mxu0 %v349
  %v483 = vpop.f32.mrb[0].mxu0
  %v484 = vadd.f32 0.0, %v483
  %v485 = vpop.f32.mrb[0].mxu0
  %486 = vmatprep.mubr.f32.mxu0 %v353
  %487 = vmatmul.mubr.f32.gmra.mrb[0].mxu0 %v352
  %v488 = vpop.f32.mrb[0].mxu0
  %v489 = vadd.f32 0.0, %v488
  %v490 = vpop.f32.mrb[0].mxu0
  %491 = vdwg.mxu0
  %492 = vmatprep.subr.mxu0 0.0
  %493 = vmatpush1.msra.mxu0 %v73
  %494 = vmatprep.subr.mxu0 0.0
  %495 = vmatpush1.msra.mxu0 %v105
  %496 = vmatprep.subr.mxu0 0.0
  %497 = vmatpush1.msra.mxu0 0.0
  %498 = vmatprep.subr.mxu0 0.0
  %499 = vmatpush1.msra.mxu0 0.0
  %500 = vmatprep.subr.mxu0 0.0
  %501 = vmatpush1.msra.mxu0 0.0
  %502 = vmatprep.subr.mxu0 0.0
  %503 = vmatpush1.msra.mxu0 0.0
  %504 = vmatprep.subr.mxu0 0.0
  %505 = vmatpush1.msra.mxu0 0.0
  %506 = vmatprep.subr.mxu0 0.0
  %507 = vmatpush1.msra.mxu0 0.0
  %508 = vmatprep.subr.mxu0 0.0
  %509 = vmatpush1.msra.mxu0 0.0
  %510 = vmatprep.subr.mxu0 0.0
  %511 = vmatpush1.msra.mxu0 0.0
  %512 = vmatprep.subr.mxu0 0.0
  %513 = vmatpush1.msra.mxu0 0.0
  %514 = vmatprep.subr.mxu0 0.0
  %515 = vmatpush1.msra.mxu0 0.0
  %516 = vmatprep.subr.mxu0 0.0
  %517 = vmatpush1.msra.mxu0 0.0
  %518 = vmatprep.subr.mxu0 0.0
  %519 = vmatpush1.msra.mxu0 0.0
  %520 = vmatprep.subr.mxu0 0.0
  %521 = vmatpush1.msra.mxu0 0.0
  %522 = vmatprep.subr.mxu0 0.0
  %523 = vmatpush1.msra.mxu0 0.0
  %524 = vmatprep.subr.mxu0 0.0
  %525 = vmatpush1.msra.mxu0 0.0
  %526 = vmatprep.subr.mxu0 0.0
  %527 = vmatpush1.msra.mxu0 0.0
  %528 = vmatprep.subr.mxu0 0.0
  %529 = vmatpush1.msra.mxu0 0.0
  %530 = vmatprep.subr.mxu0 0.0
  %531 = vmatpush1.msra.mxu0 0.0
  %532 = vmatprep.subr.mxu0 0.0
  %533 = vmatpush1.msra.mxu0 0.0
  %534 = vmatprep.subr.mxu0 0.0
  %535 = vmatpush1.msra.mxu0 0.0
  %536 = vmatprep.subr.mxu0 0.0
  %537 = vmatpush1.msra.mxu0 0.0
  %538 = vmatprep.subr.mxu0 0.0
  %539 = vmatpush1.msra.mxu0 0.0
  %540 = vmatprep.subr.mxu0 0.0
  %541 = vmatpush1.msra.mxu0 0.0
  %542 = vmatprep.subr.mxu0 0.0
  %543 = vmatpush1.msra.mxu0 0.0
  %544 = vmatprep.subr.mxu0 0.0
  %545 = vmatpush1.msra.mxu0 0.0
  %546 = vmatprep.subr.mxu0 0.0
  %547 = vmatpush1.msra.mxu0 0.0
  %548 = vmatprep.subr.mxu0 0.0
  %549 = vmatpush1.msra.mxu0 0.0
  %550 = vmatprep.subr.mxu0 0.0
  %551 = vmatpush1.msra.mxu0 0.0
  %552 = vmatprep.subr.mxu0 0.0
  %553 = vmatpush1.msra.mxu0 0.0
  %554 = vmatprep.subr.mxu0 0.0
  %555 = vmatpush1.msra.mxu0 0.0
  %556 = vmatprep.mubr.f32.mxu0 0.0
  %557 = vmatmul.mubr.f32.gmra.mrb[0].mxu0 %v356
  %v558 = vpop.f32.mrb[0].mxu0
  %v559 = vadd.f32 %v449, %v558
  %v560 = vpop.f32.mrb[0].mxu0
  %561 = vmatprep.mubr.f32.mxu0 0.0
  %562 = vmatmul.mubr.f32.gmra.mrb[0].mxu0 %v359
  %v563 = vpop.f32.mrb[0].mxu0
  %v564 = vadd.f32 %v454, %v563
  %v565 = vpop.f32.mrb[0].mxu0
  %566 = vmatprep.mubr.f32.mxu0 0.0
  %567 = vmatmul.mubr.f32.gmra.mrb[0].mxu0 %v362
  %v568 = vpop.f32.mrb[0].mxu0
  %v569 = vadd.f32 %v459, %v568
  %v570 = vpop.f32.mrb[0].mxu0
  %571 = vmatprep.mubr.f32.mxu0 0.0
  %572 = vmatmul.mubr.f32.gmra.mrb[0].mxu0 %v365
  %v573 = vpop.f32.mrb[0].mxu0
  %v574 = vadd.f32 %v464, %v573
  %v575 = vpop.f32.mrb[0].mxu0
  %576 = vmatprep.mubr.f32.mxu0 0.0
  %577 = vmatmul.mubr.f32.gmra.mrb[0].mxu0 %v368
  %v578 = vpop.f32.mrb[0].mxu0
  %v579 = vadd.f32 %v469, %v578
  %v580 = vpop.f32.mrb[0].mxu0
  %581 = vmatprep.mubr.f32.mxu0 0.0
  %582 = vmatmul.mubr.f32.gmra.mrb[0].mxu0 %v371
  %v583 = vpop.f32.mrb[0].mxu0
  %v584 = vadd.f32 %v474, %v583
  %v585 = vpop.f32.mrb[0].mxu0
  %586 = vmatprep.mubr.f32.mxu0 0.0
  %587 = vmatmul.mubr.f32.gmra.mrb[0].mxu0 %v374
  %v588 = vpop.f32.mrb[0].mxu0
  %v589 = vadd.f32 %v479, %v588
  %v590 = vpop.f32.mrb[0].mxu0
  %591 = vmatprep.mubr.f32.mxu0 0.0
  %592 = vmatmul.mubr.f32.gmra.mrb[0].mxu0 %v377
  %v593 = vpop.f32.mrb[0].mxu0
  %v594 = vadd.f32 %v484, %v593
  %v595 = vpop.f32.mrb[0].mxu0
  %596 = vmatprep.mubr.f32.mxu0 0.0
  %597 = vmatmul.mubr.f32.gmra.mrb[0].mxu0 %v380
  %v598 = vpop.f32.mrb[0].mxu0
  %v599 = vadd.f32 %v489, %v598
  %v600 = vpop.f32.mrb[0].mxu0
  %601 = vdwg.mxu0
  %v602 = vmax.f32 %v284, %v559
  %v603 = vmax.f32 %v289, %v564
  %v604 = vmax.f32 %v294, %v569
  %v605 = vmax.f32 %v299, %v574
  %v606 = vmax.f32 %v304, %v579
  %v607 = vmax.f32 %v309, %v584
  %v608 = vmax.f32 %v314, %v589
  %v609 = vmax.f32 %v319, %v594
  %v610 = vmax.f32 %v324, %v599
  %s611 = scalar_lea.vmem %s0, 432
  %v612 = vld [vmem:[%s611] sm:$0xff]
  %v613 = vld [vmem:[%s611 + $0x8] sm:$0xff]
  %v614 = vld [vmem:[%s611 + $0x10] sm:$0xff]
  %v615 = vld [vmem:[%s611 + $0x18] sm:$0xff]
  %v616 = vld [vmem:[%s611 + $0x20] sm:$0xff]
  %v617 = vld [vmem:[%s611 + $0x28] sm:$0xff]
  %v618 = vld [vmem:[%s611 + $0x30] sm:$0xff]
  %v619 = vld [vmem:[%s611 + $0x38] sm:$0xff]
  %v620 = vld [vmem:[%s611 + $0x40] sm:$0xff]
  %v621 = vld [vmem:[%s611 + $0x48] sm:$0xff]
  %v622 = vld [vmem:[%s611 + $0x50] sm:$0xff]
  %v623 = vld [vmem:[%s611 + $0x58] sm:$0xff]
  %v624 = vld [vmem:[%s611 + $0x60] sm:$0xff]
  %v625 = vld [vmem:[%s611 + $0x68] sm:$0xff]
  %v626 = vld [vmem:[%s611 + $0x70] sm:$0xff]
  %v627 = vld [vmem:[%s611 + $0x78] sm:$0xff]
  %v628 = vld [vmem:[%s611 + $0x80] sm:$0xff]
  %v629 = vld [vmem:[%s611 + $0x88] sm:$0xff]
  %v630 = vld [vmem:[%s611 + $0x90] sm:$0xff]
  %v631 = vld [vmem:[%s611 + $0x98] sm:$0xff]
  %v632 = vld [vmem:[%s611 + $0xa0] sm:$0xff]
  %v633 = vld [vmem:[%s611 + $0xa8] sm:$0xff]
  %v634 = vld [vmem:[%s611 + $0xb0] sm:$0xff]
  %v635 = vld [vmem:[%s611 + $0xb8] sm:$0xff]
  %v636 = vld [vmem:[%s611 + $0xc0] sm:$0xff]
  %v637 = vld [vmem:[%s611 + $0xc8] sm:$0xff]
  %v638 = vld [vmem:[%s611 + $0xd0] sm:$0xff]
  %v640 = vsel %vm75, %v614, 0
  %v643 = vsel %vm75, %v617, 0
  %v646 = vsel %vm75, %v620, 0
  %v649 = vsel %vm75, %v623, 0
  %v652 = vsel %vm75, %v626, 0
  %v655 = vsel %vm75, %v629, 0
  %v658 = vsel %vm75, %v632, 0
  %v661 = vsel %vm75, %v635, 0
  %v664 = vsel %vm75, %v638, 0
  %666 = vmatprep.subr.mxu0 0.0
  %667 = vmatpush1.msra.mxu0 %v41
  %668 = vmatprep.subr.mxu0 0.0
  %669 = vmatpush1.msra.mxu0 %v42
  %670 = vmatprep.subr.mxu0 0.0
  %671 = vmatpush1.msra.mxu0 %v43
  %672 = vmatprep.subr.mxu0 0.0
  %673 = vmatpush1.msra.mxu0 %v44
  %674 = vmatprep.subr.mxu0 0.0
  %675 = vmatpush1.msra.mxu0 %v45
  %676 = vmatprep.subr.mxu0 0.0
  %677 = vmatpush1.msra.mxu0 %v46
  %678 = vmatprep.subr.mxu0 0.0
  %679 = vmatpush1.msra.mxu0 %v47
  %680 = vmatprep.subr.mxu0 0.0
  %681 = vmatpush1.msra.mxu0 %v48
  %682 = vmatprep.subr.mxu0 0.0
  %683 = vmatpush1.msra.mxu0 %v49
  %684 = vmatprep.subr.mxu0 0.0
  %685 = vmatpush1.msra.mxu0 %v50
  %686 = vmatprep.subr.mxu0 0.0
  %687 = vmatpush1.msra.mxu0 %v51
  %688 = vmatprep.subr.mxu0 0.0
  %689 = vmatpush1.msra.mxu0 %v52
  %690 = vmatprep.subr.mxu0 0.0
  %691 = vmatpush1.msra.mxu0 %v53
  %692 = vmatprep.subr.mxu0 0.0
  %693 = vmatpush1.msra.mxu0 %v54
  %694 = vmatprep.subr.mxu0 0.0
  %695 = vmatpush1.msra.mxu0 %v55
  %696 = vmatprep.subr.mxu0 0.0
  %697 = vmatpush1.msra.mxu0 %v56
  %698 = vmatprep.subr.mxu0 0.0
  %699 = vmatpush1.msra.mxu0 %v57
  %700 = vmatprep.subr.mxu0 0.0
  %701 = vmatpush1.msra.mxu0 %v58
  %702 = vmatprep.subr.mxu0 0.0
  %703 = vmatpush1.msra.mxu0 %v59
  %704 = vmatprep.subr.mxu0 0.0
  %705 = vmatpush1.msra.mxu0 %v60
  %706 = vmatprep.subr.mxu0 0.0
  %707 = vmatpush1.msra.mxu0 %v61
  %708 = vmatprep.subr.mxu0 0.0
  %709 = vmatpush1.msra.mxu0 %v62
  %710 = vmatprep.subr.mxu0 0.0
  %711 = vmatpush1.msra.mxu0 %v63
  %712 = vmatprep.subr.mxu0 0.0
  %713 = vmatpush1.msra.mxu0 %v64
  %714 = vmatprep.subr.mxu0 0.0
  %715 = vmatpush1.msra.mxu0 %v65
  %716 = vmatprep.subr.mxu0 0.0
  %717 = vmatpush1.msra.mxu0 %v66
  %718 = vmatprep.subr.mxu0 0.0
  %719 = vmatpush1.msra.mxu0 %v67
  %720 = vmatprep.subr.mxu0 0.0
  %721 = vmatpush1.msra.mxu0 %v68
  %722 = vmatprep.subr.mxu0 0.0
  %723 = vmatpush1.msra.mxu0 %v69
  %724 = vmatprep.subr.mxu0 0.0
  %725 = vmatpush1.msra.mxu0 %v70
  %726 = vmatprep.subr.mxu0 0.0
  %727 = vmatpush1.msra.mxu0 %v71
  %728 = vmatprep.subr.mxu0 0.0
  %729 = vmatpush1.msra.mxu0 %v72
  %730 = vmatprep.mubr.f32.mxu0 %v613
  %731 = vmatmul.mubr.f32.gmra.mrb[0].mxu0 %v612
  %v732 = vpop.f32.mrb[0].mxu0
  %v733 = vadd.f32 0.0, %v732
  %v734 = vpop.f32.mrb[0].mxu0
  %735 = vmatprep.mubr.f32.mxu0 %v616
  %736 = vmatmul.mubr.f32.gmra.mrb[0].mxu0 %v615
  %v737 = vpop.f32.mrb[0].mxu0
  %v738 = vadd.f32 0.0, %v737
  %v739 = vpop.f32.mrb[0].mxu0
  %740 = vmatprep.mubr.f32.mxu0 %v619
  %741 = vmatmul.mubr.f32.gmra.mrb[0].mxu0 %v618
  %v742 = vpop.f32.mrb[0].mxu0
  %v743 = vadd.f32 0.0, %v742
  %v744 = vpop.f32.mrb[0].mxu0
  %745 = vmatprep.mubr.f32.mxu0 %v622
  %746 = vmatmul.mubr.f32.gmra.mrb[0].mxu0 %v621
  %v747 = vpop.f32.mrb[0].mxu0
  %v748 = vadd.f32 0.0, %v747
  %v749 = vpop.f32.mrb[0].mxu0
  %750 = vmatprep.mubr.f32.mxu0 %v625
  %751 = vmatmul.mubr.f32.gmra.mrb[0].mxu0 %v624
  %v752 = vpop.f32.mrb[0].mxu0
  %v753 = vadd.f32 0.0, %v752
  %v754 = vpop.f32.mrb[0].mxu0
  %755 = vmatprep.mubr.f32.mxu0 %v628
  %756 = vmatmul.mubr.f32.gmra.mrb[0].mxu0 %v627
  %v757 = vpop.f32.mrb[0].mxu0
  %v758 = vadd.f32 0.0, %v757
  %v759 = vpop.f32.mrb[0].mxu0
  %760 = vmatprep.mubr.f32.mxu0 %v631
  %761 = vmatmul.mubr.f32.gmra.mrb[0].mxu0 %v630
  %v762 = vpop.f32.mrb[0].mxu0
  %v763 = vadd.f32 0.0, %v762
  %v764 = vpop.f32.mrb[0].mxu0
  %765 = vmatprep.mubr.f32.mxu0 %v634
  %766 = vmatmul.mubr.f32.gmra.mrb[0].mxu0 %v633
  %v767 = vpop.f32.mrb[0].mxu0
  %v768 = vadd.f32 0.0, %v767
  %v769 = vpop.f32.mrb[0].mxu0
  %770 = vmatprep.mubr.f32.mxu0 %v637
  %771 = vmatmul.mubr.f32.gmra.mrb[0].mxu0 %v636
  %v772 = vpop.f32.mrb[0].mxu0
  %v773 = vadd.f32 0.0, %v772
  %v774 = vpop.f32.mrb[0].mxu0
  %775 = vdwg.mxu0
  %776 = vmatprep.subr.mxu0 0.0
  %777 = vmatpush1.msra.mxu0 %v73
  %778 = vmatprep.subr.mxu0 0.0
  %779 = vmatpush1.msra.mxu0 %v105
  %780 = vmatprep.subr.mxu0 0.0
  %781 = vmatpush1.msra.mxu0 0.0
  %782 = vmatprep.subr.mxu0 0.0
  %783 = vmatpush1.msra.mxu0 0.0
  %784 = vmatprep.subr.mxu0 0.0
  %785 = vmatpush1.msra.mxu0 0.0
  %786 = vmatprep.subr.mxu0 0.0
  %787 = vmatpush1.msra.mxu0 0.0
  %788 = vmatprep.subr.mxu0 0.0
  %789 = vmatpush1.msra.mxu0 0.0
  %790 = vmatprep.subr.mxu0 0.0
  %791 = vmatpush1.msra.mxu0 0.0
  %792 = vmatprep.subr.mxu0 0.0
  %793 = vmatpush1.msra.mxu0 0.0
  %794 = vmatprep.subr.mxu0 0.0
  %795 = vmatpush1.msra.mxu0 0.0
  %796 = vmatprep.subr.mxu0 0.0
  %797 = vmatpush1.msra.mxu0 0.0
  %798 = vmatprep.subr.mxu0 0.0
  %799 = vmatpush1.msra.mxu0 0.0
  %800 = vmatprep.subr.mxu0 0.0
  %801 = vmatpush1.msra.mxu0 0.0
  %802 = vmatprep.subr.mxu0 0.0
  %803 = vmatpush1.msra.mxu0 0.0
  %804 = vmatprep.subr.mxu0 0.0
  %805 = vmatpush1.msra.mxu0 0.0
  %806 = vmatprep.subr.mxu0 0.0
  %807 = vmatpush1.msra.mxu0 0.0
  %808 = vmatprep.subr.mxu0 0.0
  %809 = vmatpush1.msra.mxu0 0.0
  %810 = vmatprep.subr.mxu0 0.0
  %811 = vmatpush1.msra.mxu0 0.0
  %812 = vmatprep.subr.mxu0 0.0
  %813 = vmatpush1.msra.mxu0 0.0
  %814 = vmatprep.subr.mxu0 0.0
  %815 = vmatpush1.msra.mxu0 0.0
  %816 = vmatprep.subr.mxu0 0.0
  %817 = vmatpush1.msra.mxu0 0.0
  %818 = vmatprep.subr.mxu0 0.0
  %819 = vmatpush1.msra.mxu0 0.0
  %820 = vmatprep.subr.mxu0 0.0
  %821 = vmatpush1.msra.mxu0 0.0
  %822 = vmatprep.subr.mxu0 0.0
  %823 = vmatpush1.msra.mxu0 0.0
  %824 = vmatprep.subr.mxu0 0.0
  %825 = vmatpush1.msra.mxu0 0.0
  %826 = vmatprep.subr.mxu0 0.0
  %827 = vmatpush1.msra.mxu0 0.0
  %828 = vmatprep.subr.mxu0 0.0
  %829 = vmatpush1.msra.mxu0 0.0
  %830 = vmatprep.subr.mxu0 0.0
  %831 = vmatpush1.msra.mxu0 0.0
  %832 = vmatprep.subr.mxu0 0.0
  %833 = vmatpush1.msra.mxu0 0.0
  %834 = vmatprep.subr.mxu0 0.0
  %835 = vmatpush1.msra.mxu0 0.0
  %836 = vmatprep.subr.mxu0 0.0
  %837 = vmatpush1.msra.mxu0 0.0
  %838 = vmatprep.subr.mxu0 0.0
  %839 = vmatpush1.msra.mxu0 0.0
  %840 = vmatprep.mubr.f32.mxu0 0.0
  %841 = vmatmul.mubr.f32.gmra.mrb[0].mxu0 %v640
  %v842 = vpop.f32.mrb[0].mxu0
  %v843 = vadd.f32 %v733, %v842
  %v844 = vpop.f32.mrb[0].mxu0
  %845 = vmatprep.mubr.f32.mxu0 0.0
  %846 = vmatmul.mubr.f32.gmra.mrb[0].mxu0 %v643
  %v847 = vpop.f32.mrb[0].mxu0
  %v848 = vadd.f32 %v738, %v847
  %v849 = vpop.f32.mrb[0].mxu0
  %850 = vmatprep.mubr.f32.mxu0 0.0
  %851 = vmatmul.mubr.f32.gmra.mrb[0].mxu0 %v646
  %v852 = vpop.f32.mrb[0].mxu0
  %v853 = vadd.f32 %v743, %v852
  %v854 = vpop.f32.mrb[0].mxu0
  %855 = vmatprep.mubr.f32.mxu0 0.0
  %856 = vmatmul.mubr.f32.gmra.mrb[0].mxu0 %v649
  %v857 = vpop.f32.mrb[0].mxu0
  %v858 = vadd.f32 %v748, %v857
  %v859 = vpop.f32.mrb[0].mxu0
  %860 = vmatprep.mubr.f32.mxu0 0.0
  %861 = vmatmul.mubr.f32.gmra.mrb[0].mxu0 %v652
  %v862 = vpop.f32.mrb[0].mxu0
  %v863 = vadd.f32 %v753, %v862
  %v864 = vpop.f32.mrb[0].mxu0
  %865 = vmatprep.mubr.f32.mxu0 0.0
  %866 = vmatmul.mubr.f32.gmra.mrb[0].mxu0 %v655
  %v867 = vpop.f32.mrb[0].mxu0
  %v868 = vadd.f32 %v758, %v867
  %v869 = vpop.f32.mrb[0].mxu0
  %870 = vmatprep.mubr.f32.mxu0 0.0
  %871 = vmatmul.mubr.f32.gmra.mrb[0].mxu0 %v658
  %v872 = vpop.f32.mrb[0].mxu0
  %v873 = vadd.f32 %v763, %v872
  %v874 = vpop.f32.mrb[0].mxu0
  %875 = vmatprep.mubr.f32.mxu0 0.0
  %876 = vmatmul.mubr.f32.gmra.mrb[0].mxu0 %v661
  %v877 = vpop.f32.mrb[0].mxu0
  %v878 = vadd.f32 %v768, %v877
  %v879 = vpop.f32.mrb[0].mxu0
  %880 = vmatprep.mubr.f32.mxu0 0.0
  %881 = vmatmul.mubr.f32.gmra.mrb[0].mxu0 %v664
  %v882 = vpop.f32.mrb[0].mxu0
  %v883 = vadd.f32 %v773, %v882
  %v884 = vpop.f32.mrb[0].mxu0
  %885 = vdwg.mxu0
  %v886 = vmax.f32 %v602, %v843
  %v887 = vmax.f32 %v603, %v848
  %v888 = vmax.f32 %v604, %v853
  %v889 = vmax.f32 %v605, %v858
  %v890 = vmax.f32 %v606, %v863
  %v891 = vmax.f32 %v607, %v868
  %v892 = vmax.f32 %v608, %v873
  %v893 = vmax.f32 %v609, %v878
  %v894 = vmax.f32 %v610, %v883
  %s895 = scalar_lea.vmem %s0, 648
  %v896 = vld [vmem:[%s895] sm:$0xff]
  %v897 = vld [vmem:[%s895 + $0x8] sm:$0xff]
  %v898 = vld [vmem:[%s895 + $0x10] sm:$0xff]
  %v899 = vld [vmem:[%s895 + $0x18] sm:$0xff]
  %v900 = vld [vmem:[%s895 + $0x20] sm:$0xff]
  %v901 = vld [vmem:[%s895 + $0x28] sm:$0xff]
  %v902 = vld [vmem:[%s895 + $0x30] sm:$0xff]
  %v903 = vld [vmem:[%s895 + $0x38] sm:$0xff]
  %v904 = vld [vmem:[%s895 + $0x40] sm:$0xff]
  %v905 = vld [vmem:[%s895 + $0x48] sm:$0xff]
  %v906 = vld [vmem:[%s895 + $0x50] sm:$0xff]
  %v907 = vld [vmem:[%s895 + $0x58] sm:$0xff]
  %v908 = vld [vmem:[%s895 + $0x60] sm:$0xff]
  %v909 = vld [vmem:[%s895 + $0x68] sm:$0xff]
  %v910 = vld [vmem:[%s895 + $0x70] sm:$0xff]
  %v911 = vld [vmem:[%s895 + $0x78] sm:$0xff]
  %v912 = vld [vmem:[%s895 + $0x80] sm:$0xff]
  %v913 = vld [vmem:[%s895 + $0x88] sm:$0xff]
  %v914 = vld [vmem:[%s895 + $0x90] sm:$0xff]
  %v915 = vld [vmem:[%s895 + $0x98] sm:$0xff]
  %v916 = vld [vmem:[%s895 + $0xa0] sm:$0xff]
  %v917 = vld [vmem:[%s895 + $0xa8] sm:$0xff]
  %v918 = vld [vmem:[%s895 + $0xb0] sm:$0xff]
  %v919 = vld [vmem:[%s895 + $0xb8] sm:$0xff]
  %v920 = vld [vmem:[%s895 + $0xc0] sm:$0xff]
  %v921 = vld [vmem:[%s895 + $0xc8] sm:$0xff]
  %v922 = vld [vmem:[%s895 + $0xd0] sm:$0xff]
  %v924 = vsel %vm75, %v898, 0
  %v927 = vsel %vm75, %v901, 0
  %v930 = vsel %vm75, %v904, 0
  %v933 = vsel %vm75, %v907, 0
  %v936 = vsel %vm75, %v910, 0
  %v939 = vsel %vm75, %v913, 0
  %v942 = vsel %vm75, %v916, 0
  %v945 = vsel %vm75, %v919, 0
  %v948 = vsel %vm75, %v922, 0
  %950 = vmatprep.subr.mxu0 0.0
  %951 = vmatpush1.msra.mxu0 %v41
  %952 = vmatprep.subr.mxu0 0.0
  %953 = vmatpush1.msra.mxu0 %v42
  %954 = vmatprep.subr.mxu0 0.0
  %955 = vmatpush1.msra.mxu0 %v43
  %956 = vmatprep.subr.mxu0 0.0
  %957 = vmatpush1.msra.mxu0 %v44
  %958 = vmatprep.subr.mxu0 0.0
  %959 = vmatpush1.msra.mxu0 %v45
  %960 = vmatprep.subr.mxu0 0.0
  %961 = vmatpush1.msra.mxu0 %v46
  %962 = vmatprep.subr.mxu0 0.0
  %963 = vmatpush1.msra.mxu0 %v47
  %964 = vmatprep.subr.mxu0 0.0
  %965 = vmatpush1.msra.mxu0 %v48
  %966 = vmatprep.subr.mxu0 0.0
  %967 = vmatpush1.msra.mxu0 %v49
  %968 = vmatprep.subr.mxu0 0.0
  %969 = vmatpush1.msra.mxu0 %v50
  %970 = vmatprep.subr.mxu0 0.0
  %971 = vmatpush1.msra.mxu0 %v51
  %972 = vmatprep.subr.mxu0 0.0
  %973 = vmatpush1.msra.mxu0 %v52
  %974 = vmatprep.subr.mxu0 0.0
  %975 = vmatpush1.msra.mxu0 %v53
  %976 = vmatprep.subr.mxu0 0.0
  %977 = vmatpush1.msra.mxu0 %v54
  %978 = vmatprep.subr.mxu0 0.0
  %979 = vmatpush1.msra.mxu0 %v55
  %980 = vmatprep.subr.mxu0 0.0
  %981 = vmatpush1.msra.mxu0 %v56
  %982 = vmatprep.subr.mxu0 0.0
  %983 = vmatpush1.msra.mxu0 %v57
  %984 = vmatprep.subr.mxu0 0.0
  %985 = vmatpush1.msra.mxu0 %v58
  %986 = vmatprep.subr.mxu0 0.0
  %987 = vmatpush1.msra.mxu0 %v59
  %988 = vmatprep.subr.mxu0 0.0
  %989 = vmatpush1.msra.mxu0 %v60
  %990 = vmatprep.subr.mxu0 0.0
  %991 = vmatpush1.msra.mxu0 %v61
  %992 = vmatprep.subr.mxu0 0.0
  %993 = vmatpush1.msra.mxu0 %v62
  %994 = vmatprep.subr.mxu0 0.0
  %995 = vmatpush1.msra.mxu0 %v63
  %996 = vmatprep.subr.mxu0 0.0
  %997 = vmatpush1.msra.mxu0 %v64
  %998 = vmatprep.subr.mxu0 0.0
  %999 = vmatpush1.msra.mxu0 %v65
  %1000 = vmatprep.subr.mxu0 0.0
  %1001 = vmatpush1.msra.mxu0 %v66
  %1002 = vmatprep.subr.mxu0 0.0
  %1003 = vmatpush1.msra.mxu0 %v67
  %1004 = vmatprep.subr.mxu0 0.0
  %1005 = vmatpush1.msra.mxu0 %v68
  %1006 = vmatprep.subr.mxu0 0.0
  %1007 = vmatpush1.msra.mxu0 %v69
  %1008 = vmatprep.subr.mxu0 0.0
  %1009 = vmatpush1.msra.mxu0 %v70
  %1010 = vmatprep.subr.mxu0 0.0
  %1011 = vmatpush1.msra.mxu0 %v71
  %1012 = vmatprep.subr.mxu0 0.0
  %1013 = vmatpush1.msra.mxu0 %v72
  %1014 = vmatprep.mubr.f32.mxu0 %v897
  %1015 = vmatmul.mubr.f32.gmra.mrb[0].mxu0 %v896
  %v1016 = vpop.f32.mrb[0].mxu0
  %v1017 = vadd.f32 0.0, %v1016
  %v1018 = vpop.f32.mrb[0].mxu0
  %1019 = vmatprep.mubr.f32.mxu0 %v900
  %1020 = vmatmul.mubr.f32.gmra.mrb[0].mxu0 %v899
  %v1021 = vpop.f32.mrb[0].mxu0
  %v1022 = vadd.f32 0.0, %v1021
  %v1023 = vpop.f32.mrb[0].mxu0
  %1024 = vmatprep.mubr.f32.mxu0 %v903
  %1025 = vmatmul.mubr.f32.gmra.mrb[0].mxu0 %v902
  %v1026 = vpop.f32.mrb[0].mxu0
  %v1027 = vadd.f32 0.0, %v1026
  %v1028 = vpop.f32.mrb[0].mxu0
  %1029 = vmatprep.mubr.f32.mxu0 %v906
  %1030 = vmatmul.mubr.f32.gmra.mrb[0].mxu0 %v905
  %v1031 = vpop.f32.mrb[0].mxu0
  %v1032 = vadd.f32 0.0, %v1031
  %v1033 = vpop.f32.mrb[0].mxu0
  %1034 = vmatprep.mubr.f32.mxu0 %v909
  %1035 = vmatmul.mubr.f32.gmra.mrb[0].mxu0 %v908
  %v1036 = vpop.f32.mrb[0].mxu0
  %v1037 = vadd.f32 0.0, %v1036
  %v1038 = vpop.f32.mrb[0].mxu0
  %1039 = vmatprep.mubr.f32.mxu0 %v912
  %1040 = vmatmul.mubr.f32.gmra.mrb[0].mxu0 %v911
  %v1041 = vpop.f32.mrb[0].mxu0
  %v1042 = vadd.f32 0.0, %v1041
  %v1043 = vpop.f32.mrb[0].mxu0
  %1044 = vmatprep.mubr.f32.mxu0 %v915
  %1045 = vmatmul.mubr.f32.gmra.mrb[0].mxu0 %v914
  %v1046 = vpop.f32.mrb[0].mxu0
  %v1047 = vadd.f32 0.0, %v1046
  %v1048 = vpop.f32.mrb[0].mxu0
  %1049 = vmatprep.mubr.f32.mxu0 %v918
  %1050 = vmatmul.mubr.f32.gmra.mrb[0].mxu0 %v917
  %v1051 = vpop.f32.mrb[0].mxu0
  %v1052 = vadd.f32 0.0, %v1051
  %v1053 = vpop.f32.mrb[0].mxu0
  %1054 = vmatprep.mubr.f32.mxu0 %v921
  %1055 = vmatmul.mubr.f32.gmra.mrb[0].mxu0 %v920
  %v1056 = vpop.f32.mrb[0].mxu0
  %v1057 = vadd.f32 0.0, %v1056
  %v1058 = vpop.f32.mrb[0].mxu0
  %1059 = vdwg.mxu0
  %1060 = vmatprep.subr.mxu0 0.0
  %1061 = vmatpush1.msra.mxu0 %v73
  %1062 = vmatprep.subr.mxu0 0.0
  %1063 = vmatpush1.msra.mxu0 %v105
  %1064 = vmatprep.subr.mxu0 0.0
  %1065 = vmatpush1.msra.mxu0 0.0
  %1066 = vmatprep.subr.mxu0 0.0
  %1067 = vmatpush1.msra.mxu0 0.0
  %1068 = vmatprep.subr.mxu0 0.0
  %1069 = vmatpush1.msra.mxu0 0.0
  %1070 = vmatprep.subr.mxu0 0.0
  %1071 = vmatpush1.msra.mxu0 0.0
  %1072 = vmatprep.subr.mxu0 0.0
  %1073 = vmatpush1.msra.mxu0 0.0
  %1074 = vmatprep.subr.mxu0 0.0
  %1075 = vmatpush1.msra.mxu0 0.0
  %1076 = vmatprep.subr.mxu0 0.0
  %1077 = vmatpush1.msra.mxu0 0.0
  %1078 = vmatprep.subr.mxu0 0.0
  %1079 = vmatpush1.msra.mxu0 0.0
  %1080 = vmatprep.subr.mxu0 0.0
  %1081 = vmatpush1.msra.mxu0 0.0
  %1082 = vmatprep.subr.mxu0 0.0
  %1083 = vmatpush1.msra.mxu0 0.0
  %1084 = vmatprep.subr.mxu0 0.0
  %1085 = vmatpush1.msra.mxu0 0.0
  %1086 = vmatprep.subr.mxu0 0.0
  %1087 = vmatpush1.msra.mxu0 0.0
  %1088 = vmatprep.subr.mxu0 0.0
  %1089 = vmatpush1.msra.mxu0 0.0
  %1090 = vmatprep.subr.mxu0 0.0
  %1091 = vmatpush1.msra.mxu0 0.0
  %1092 = vmatprep.subr.mxu0 0.0
  %1093 = vmatpush1.msra.mxu0 0.0
  %1094 = vmatprep.subr.mxu0 0.0
  %1095 = vmatpush1.msra.mxu0 0.0
  %1096 = vmatprep.subr.mxu0 0.0
  %1097 = vmatpush1.msra.mxu0 0.0
  %1098 = vmatprep.subr.mxu0 0.0
  %1099 = vmatpush1.msra.mxu0 0.0
  %1100 = vmatprep.subr.mxu0 0.0
  %1101 = vmatpush1.msra.mxu0 0.0
  %1102 = vmatprep.subr.mxu0 0.0
  %1103 = vmatpush1.msra.mxu0 0.0
  %1104 = vmatprep.subr.mxu0 0.0
  %1105 = vmatpush1.msra.mxu0 0.0
  %1106 = vmatprep.subr.mxu0 0.0
  %1107 = vmatpush1.msra.mxu0 0.0
  %1108 = vmatprep.subr.mxu0 0.0
  %1109 = vmatpush1.msra.mxu0 0.0
  %1110 = vmatprep.subr.mxu0 0.0
  %1111 = vmatpush1.msra.mxu0 0.0
  %1112 = vmatprep.subr.mxu0 0.0
  %1113 = vmatpush1.msra.mxu0 0.0
  %1114 = vmatprep.subr.mxu0 0.0
  %1115 = vmatpush1.msra.mxu0 0.0
  %1116 = vmatprep.subr.mxu0 0.0
  %1117 = vmatpush1.msra.mxu0 0.0
  %1118 = vmatprep.subr.mxu0 0.0
  %1119 = vmatpush1.msra.mxu0 0.0
  %1120 = vmatprep.subr.mxu0 0.0
  %1121 = vmatpush1.msra.mxu0 0.0
  %1122 = vmatprep.subr.mxu0 0.0
  %1123 = vmatpush1.msra.mxu0 0.0
  %1124 = vmatprep.mubr.f32.mxu0 0.0
  %1125 = vmatmul.mubr.f32.gmra.mrb[0].mxu0 %v924
  %v1126 = vpop.f32.mrb[0].mxu0
  %v1127 = vadd.f32 %v1017, %v1126
  %v1128 = vpop.f32.mrb[0].mxu0
  %1129 = vmatprep.mubr.f32.mxu0 0.0
  %1130 = vmatmul.mubr.f32.gmra.mrb[0].mxu0 %v927
  %v1131 = vpop.f32.mrb[0].mxu0
  %v1132 = vadd.f32 %v1022, %v1131
  %v1133 = vpop.f32.mrb[0].mxu0
  %1134 = vmatprep.mubr.f32.mxu0 0.0
  %1135 = vmatmul.mubr.f32.gmra.mrb[0].mxu0 %v930
  %v1136 = vpop.f32.mrb[0].mxu0
  %v1137 = vadd.f32 %v1027, %v1136
  %v1138 = vpop.f32.mrb[0].mxu0
  %1139 = vmatprep.mubr.f32.mxu0 0.0
  %1140 = vmatmul.mubr.f32.gmra.mrb[0].mxu0 %v933
  %v1141 = vpop.f32.mrb[0].mxu0
  %v1142 = vadd.f32 %v1032, %v1141
  %v1143 = vpop.f32.mrb[0].mxu0
  %1144 = vmatprep.mubr.f32.mxu0 0.0
  %1145 = vmatmul.mubr.f32.gmra.mrb[0].mxu0 %v936
  %v1146 = vpop.f32.mrb[0].mxu0
  %v1147 = vadd.f32 %v1037, %v1146
  %v1148 = vpop.f32.mrb[0].mxu0
  %1149 = vmatprep.mubr.f32.mxu0 0.0
  %1150 = vmatmul.mubr.f32.gmra.mrb[0].mxu0 %v939
  %v1151 = vpop.f32.mrb[0].mxu0
  %v1152 = vadd.f32 %v1042, %v1151
  %v1153 = vpop.f32.mrb[0].mxu0
  %1154 = vmatprep.mubr.f32.mxu0 0.0
  %1155 = vmatmul.mubr.f32.gmra.mrb[0].mxu0 %v942
  %v1156 = vpop.f32.mrb[0].mxu0
  %v1157 = vadd.f32 %v1047, %v1156
  %v1158 = vpop.f32.mrb[0].mxu0
  %1159 = vmatprep.mubr.f32.mxu0 0.0
  %1160 = vmatmul.mubr.f32.gmra.mrb[0].mxu0 %v945
  %v1161 = vpop.f32.mrb[0].mxu0
  %v1162 = vadd.f32 %v1052, %v1161
  %v1163 = vpop.f32.mrb[0].mxu0
  %1164 = vmatprep.mubr.f32.mxu0 0.0
  %1165 = vmatmul.mubr.f32.gmra.mrb[0].mxu0 %v948
  %v1166 = vpop.f32.mrb[0].mxu0
  %v1167 = vadd.f32 %v1057, %v1166
  %v1168 = vpop.f32.mrb[0].mxu0
  %1169 = vdwg.mxu0
  %v1170 = vmax.f32 %v886, %v1127
  %v1171 = vmax.f32 %v887, %v1132
  %v1172 = vmax.f32 %v888, %v1137
  %v1173 = vmax.f32 %v889, %v1142
  %v1174 = vmax.f32 %v890, %v1147
  %v1175 = vmax.f32 %v891, %v1152
  %v1176 = vmax.f32 %v892, %v1157
  %v1177 = vmax.f32 %v893, %v1162
  %v1178 = vmax.f32 %v894, %v1167
  %s1179 = scalar_lea.vmem %s0, 864
  %v1180 = vld [vmem:[%s1179] sm:$0xff]
  %v1181 = vld [vmem:[%s1179 + $0x8] sm:$0xff]
  %v1182 = vld [vmem:[%s1179 + $0x10] sm:$0xff]
  %v1183 = vld [vmem:[%s1179 + $0x18] sm:$0xff]
  %v1184 = vld [vmem:[%s1179 + $0x20] sm:$0xff]
  %v1185 = vld [vmem:[%s1179 + $0x28] sm:$0xff]
  %v1186 = vld [vmem:[%s1179 + $0x30] sm:$0xff]
  %v1187 = vld [vmem:[%s1179 + $0x38] sm:$0xff]
  %v1188 = vld [vmem:[%s1179 + $0x40] sm:$0xff]
  %v1189 = vld [vmem:[%s1179 + $0x48] sm:$0xff]
  %v1190 = vld [vmem:[%s1179 + $0x50] sm:$0xff]
  %v1191 = vld [vmem:[%s1179 + $0x58] sm:$0xff]
  %v1192 = vld [vmem:[%s1179 + $0x60] sm:$0xff]
  %v1193 = vld [vmem:[%s1179 + $0x68] sm:$0xff]
  %v1194 = vld [vmem:[%s1179 + $0x70] sm:$0xff]
  %v1195 = vld [vmem:[%s1179 + $0x78] sm:$0xff]
  %v1196 = vld [vmem:[%s1179 + $0x80] sm:$0xff]
  %v1197 = vld [vmem:[%s1179 + $0x88] sm:$0xff]
  %v1198 = vld [vmem:[%s1179 + $0x90] sm:$0xff]
  %v1199 = vld [vmem:[%s1179 + $0x98] sm:$0xff]
  %v1200 = vld [vmem:[%s1179 + $0xa0] sm:$0xff]
  %v1201 = vld [vmem:[%s1179 + $0xa8] sm:$0xff]
  %v1202 = vld [vmem:[%s1179 + $0xb0] sm:$0xff]
  %v1203 = vld [vmem:[%s1179 + $0xb8] sm:$0xff]
  %v1204 = vld [vmem:[%s1179 + $0xc0] sm:$0xff]
  %v1205 = vld [vmem:[%s1179 + $0xc8] sm:$0xff]
  %v1206 = vld [vmem:[%s1179 + $0xd0] sm:$0xff]
  %v1208 = vsel %vm75, %v1182, 0
  %v1211 = vsel %vm75, %v1185, 0
  %v1214 = vsel %vm75, %v1188, 0
  %v1217 = vsel %vm75, %v1191, 0
  %v1220 = vsel %vm75, %v1194, 0
  %v1223 = vsel %vm75, %v1197, 0
  %v1226 = vsel %vm75, %v1200, 0
  %v1229 = vsel %vm75, %v1203, 0
  %v1232 = vsel %vm75, %v1206, 0
  %1234 = vmatprep.subr.mxu0 0.0
  %1235 = vmatpush1.msra.mxu0 %v41
  %1236 = vmatprep.subr.mxu0 0.0
  %1237 = vmatpush1.msra.mxu0 %v42
  %1238 = vmatprep.subr.mxu0 0.0
  %1239 = vmatpush1.msra.mxu0 %v43
  %1240 = vmatprep.subr.mxu0 0.0
  %1241 = vmatpush1.msra.mxu0 %v44
  %1242 = vmatprep.subr.mxu0 0.0
  %1243 = vmatpush1.msra.mxu0 %v45
  %1244 = vmatprep.subr.mxu0 0.0
  %1245 = vmatpush1.msra.mxu0 %v46
  %1246 = vmatprep.subr.mxu0 0.0
  %1247 = vmatpush1.msra.mxu0 %v47
  %1248 = vmatprep.subr.mxu0 0.0
  %1249 = vmatpush1.msra.mxu0 %v48
  %1250 = vmatprep.subr.mxu0 0.0
  %1251 = vmatpush1.msra.mxu0 %v49
  %1252 = vmatprep.subr.mxu0 0.0
  %1253 = vmatpush1.msra.mxu0 %v50
  %1254 = vmatprep.subr.mxu0 0.0
  %1255 = vmatpush1.msra.mxu0 %v51
  %1256 = vmatprep.subr.mxu0 0.0
  %1257 = vmatpush1.msra.mxu0 %v52
  %1258 = vmatprep.subr.mxu0 0.0
  %1259 = vmatpush1.msra.mxu0 %v53
  %1260 = vmatprep.subr.mxu0 0.0
  %1261 = vmatpush1.msra.mxu0 %v54
  %1262 = vmatprep.subr.mxu0 0.0
  %1263 = vmatpush1.msra.mxu0 %v55
  %1264 = vmatprep.subr.mxu0 0.0
  %1265 = vmatpush1.msra.mxu0 %v56
  %1266 = vmatprep.subr.mxu0 0.0
  %1267 = vmatpush1.msra.mxu0 %v57
  %1268 = vmatprep.subr.mxu0 0.0
  %1269 = vmatpush1.msra.mxu0 %v58
  %1270 = vmatprep.subr.mxu0 0.0
  %1271 = vmatpush1.msra.mxu0 %v59
  %1272 = vmatprep.subr.mxu0 0.0
  %1273 = vmatpush1.msra.mxu0 %v60
  %1274 = vmatprep.subr.mxu0 0.0
  %1275 = vmatpush1.msra.mxu0 %v61
  %1276 = vmatprep.subr.mxu0 0.0
  %1277 = vmatpush1.msra.mxu0 %v62
  %1278 = vmatprep.subr.mxu0 0.0
  %1279 = vmatpush1.msra.mxu0 %v63
  %1280 = vmatprep.subr.mxu0 0.0
  %1281 = vmatpush1.msra.mxu0 %v64
  %1282 = vmatprep.subr.mxu0 0.0
  %1283 = vmatpush1.msra.mxu0 %v65
  %1284 = vmatprep.subr.mxu0 0.0
  %1285 = vmatpush1.msra.mxu0 %v66
  %1286 = vmatprep.subr.mxu0 0.0
  %1287 = vmatpush1.msra.mxu0 %v67
  %1288 = vmatprep.subr.mxu0 0.0
  %1289 = vmatpush1.msra.mxu0 %v68
  %1290 = vmatprep.subr.mxu0 0.0
  %1291 = vmatpush1.msra.mxu0 %v69
  %1292 = vmatprep.subr.mxu0 0.0
  %1293 = vmatpush1.msra.mxu0 %v70
  %1294 = vmatprep.subr.mxu0 0.0
  %1295 = vmatpush1.msra.mxu0 %v71
  %1296 = vmatprep.subr.mxu0 0.0
  %1297 = vmatpush1.msra.mxu0 %v72
  %1298 = vmatprep.mubr.f32.mxu0 %v1181
  %1299 = vmatmul.mubr.f32.gmra.mrb[0].mxu0 %v1180
  %v1300 = vpop.f32.mrb[0].mxu0
  %v1301 = vadd.f32 0.0, %v1300
  %v1302 = vpop.f32.mrb[0].mxu0
  %1303 = vmatprep.mubr.f32.mxu0 %v1184
  %1304 = vmatmul.mubr.f32.gmra.mrb[0].mxu0 %v1183
  %v1305 = vpop.f32.mrb[0].mxu0
  %v1306 = vadd.f32 0.0, %v1305
  %v1307 = vpop.f32.mrb[0].mxu0
  %1308 = vmatprep.mubr.f32.mxu0 %v1187
  %1309 = vmatmul.mubr.f32.gmra.mrb[0].mxu0 %v1186
  %v1310 = vpop.f32.mrb[0].mxu0
  %v1311 = vadd.f32 0.0, %v1310
  %v1312 = vpop.f32.mrb[0].mxu0
  %1313 = vmatprep.mubr.f32.mxu0 %v1190
  %1314 = vmatmul.mubr.f32.gmra.mrb[0].mxu0 %v1189
  %v1315 = vpop.f32.mrb[0].mxu0
  %v1316 = vadd.f32 0.0, %v1315
  %v1317 = vpop.f32.mrb[0].mxu0
  %1318 = vmatprep.mubr.f32.mxu0 %v1193
  %1319 = vmatmul.mubr.f32.gmra.mrb[0].mxu0 %v1192
  %v1320 = vpop.f32.mrb[0].mxu0
  %v1321 = vadd.f32 0.0, %v1320
  %v1322 = vpop.f32.mrb[0].mxu0
  %1323 = vmatprep.mubr.f32.mxu0 %v1196
  %1324 = vmatmul.mubr.f32.gmra.mrb[0].mxu0 %v1195
  %v1325 = vpop.f32.mrb[0].mxu0
  %v1326 = vadd.f32 0.0, %v1325
  %v1327 = vpop.f32.mrb[0].mxu0
  %1328 = vmatprep.mubr.f32.mxu0 %v1199
  %1329 = vmatmul.mubr.f32.gmra.mrb[0].mxu0 %v1198
  %v1330 = vpop.f32.mrb[0].mxu0
  %v1331 = vadd.f32 0.0, %v1330
  %v1332 = vpop.f32.mrb[0].mxu0
  %1333 = vmatprep.mubr.f32.mxu0 %v1202
  %1334 = vmatmul.mubr.f32.gmra.mrb[0].mxu0 %v1201
  %v1335 = vpop.f32.mrb[0].mxu0
  %v1336 = vadd.f32 0.0, %v1335
  %v1337 = vpop.f32.mrb[0].mxu0
  %1338 = vmatprep.mubr.f32.mxu0 %v1205
  %1339 = vmatmul.mubr.f32.gmra.mrb[0].mxu0 %v1204
  %v1340 = vpop.f32.mrb[0].mxu0
  %v1341 = vadd.f32 0.0, %v1340
  %v1342 = vpop.f32.mrb[0].mxu0
  %1343 = vdwg.mxu0
  %1344 = vmatprep.subr.mxu0 0.0
  %1345 = vmatpush1.msra.mxu0 %v73
  %1346 = vmatprep.subr.mxu0 0.0
  %1347 = vmatpush1.msra.mxu0 %v105
  %1348 = vmatprep.subr.mxu0 0.0
  %1349 = vmatpush1.msra.mxu0 0.0
  %1350 = vmatprep.subr.mxu0 0.0
  %1351 = vmatpush1.msra.mxu0 0.0
  %1352 = vmatprep.subr.mxu0 0.0
  %1353 = vmatpush1.msra.mxu0 0.0
  %1354 = vmatprep.subr.mxu0 0.0
  %1355 = vmatpush1.msra.mxu0 0.0
  %1356 = vmatprep.subr.mxu0 0.0
  %1357 = vmatpush1.msra.mxu0 0.0
  %1358 = vmatprep.subr.mxu0 0.0
  %1359 = vmatpush1.msra.mxu0 0.0
  %1360 = vmatprep.subr.mxu0 0.0
  %1361 = vmatpush1.msra.mxu0 0.0
  %1362 = vmatprep.subr.mxu0 0.0
  %1363 = vmatpush1.msra.mxu0 0.0
  %1364 = vmatprep.subr.mxu0 0.0
  %1365 = vmatpush1.msra.mxu0 0.0
  %1366 = vmatprep.subr.mxu0 0.0
  %1367 = vmatpush1.msra.mxu0 0.0
  %1368 = vmatprep.subr.mxu0 0.0
  %1369 = vmatpush1.msra.mxu0 0.0
  %1370 = vmatprep.subr.mxu0 0.0
  %1371 = vmatpush1.msra.mxu0 0.0
  %1372 = vmatprep.subr.mxu0 0.0
  %1373 = vmatpush1.msra.mxu0 0.0
  %1374 = vmatprep.subr.mxu0 0.0
  %1375 = vmatpush1.msra.mxu0 0.0
  %1376 = vmatprep.subr.mxu0 0.0
  %1377 = vmatpush1.msra.mxu0 0.0
  %1378 = vmatprep.subr.mxu0 0.0
  %1379 = vmatpush1.msra.mxu0 0.0
  %1380 = vmatprep.subr.mxu0 0.0
  %1381 = vmatpush1.msra.mxu0 0.0
  %1382 = vmatprep.subr.mxu0 0.0
  %1383 = vmatpush1.msra.mxu0 0.0
  %1384 = vmatprep.subr.mxu0 0.0
  %1385 = vmatpush1.msra.mxu0 0.0
  %1386 = vmatprep.subr.mxu0 0.0
  %1387 = vmatpush1.msra.mxu0 0.0
  %1388 = vmatprep.subr.mxu0 0.0
  %1389 = vmatpush1.msra.mxu0 0.0
  %1390 = vmatprep.subr.mxu0 0.0
  %1391 = vmatpush1.msra.mxu0 0.0
  %1392 = vmatprep.subr.mxu0 0.0
  %1393 = vmatpush1.msra.mxu0 0.0
  %1394 = vmatprep.subr.mxu0 0.0
  %1395 = vmatpush1.msra.mxu0 0.0
  %1396 = vmatprep.subr.mxu0 0.0
  %1397 = vmatpush1.msra.mxu0 0.0
  %1398 = vmatprep.subr.mxu0 0.0
  %1399 = vmatpush1.msra.mxu0 0.0
  %1400 = vmatprep.subr.mxu0 0.0
  %1401 = vmatpush1.msra.mxu0 0.0
  %1402 = vmatprep.subr.mxu0 0.0
  %1403 = vmatpush1.msra.mxu0 0.0
  %1404 = vmatprep.subr.mxu0 0.0
  %1405 = vmatpush1.msra.mxu0 0.0
  %1406 = vmatprep.subr.mxu0 0.0
  %1407 = vmatpush1.msra.mxu0 0.0
  %1408 = vmatprep.mubr.f32.mxu0 0.0
  %1409 = vmatmul.mubr.f32.gmra.mrb[0].mxu0 %v1208
  %v1410 = vpop.f32.mrb[0].mxu0
  %v1411 = vadd.f32 %v1301, %v1410
  %v1412 = vpop.f32.mrb[0].mxu0
  %1413 = vmatprep.mubr.f32.mxu0 0.0
  %1414 = vmatmul.mubr.f32.gmra.mrb[0].mxu0 %v1211
  %v1415 = vpop.f32.mrb[0].mxu0
  %v1416 = vadd.f32 %v1306, %v1415
  %v1417 = vpop.f32.mrb[0].mxu0
  %1418 = vmatprep.mubr.f32.mxu0 0.0
  %1419 = vmatmul.mubr.f32.gmra.mrb[0].mxu0 %v1214
  %v1420 = vpop.f32.mrb[0].mxu0
  %v1421 = vadd.f32 %v1311, %v1420
  %v1422 = vpop.f32.mrb[0].mxu0
  %1423 = vmatprep.mubr.f32.mxu0 0.0
  %1424 = vmatmul.mubr.f32.gmra.mrb[0].mxu0 %v1217
  %v1425 = vpop.f32.mrb[0].mxu0
  %v1426 = vadd.f32 %v1316, %v1425
  %v1427 = vpop.f32.mrb[0].mxu0
  %1428 = vmatprep.mubr.f32.mxu0 0.0
  %1429 = vmatmul.mubr.f32.gmra.mrb[0].mxu0 %v1220
  %v1430 = vpop.f32.mrb[0].mxu0
  %v1431 = vadd.f32 %v1321, %v1430
  %v1432 = vpop.f32.mrb[0].mxu0
  %1433 = vmatprep.mubr.f32.mxu0 0.0
  %1434 = vmatmul.mubr.f32.gmra.mrb[0].mxu0 %v1223
  %v1435 = vpop.f32.mrb[0].mxu0
  %v1436 = vadd.f32 %v1326, %v1435
  %v1437 = vpop.f32.mrb[0].mxu0
  %1438 = vmatprep.mubr.f32.mxu0 0.0
  %1439 = vmatmul.mubr.f32.gmra.mrb[0].mxu0 %v1226
  %v1440 = vpop.f32.mrb[0].mxu0
  %v1441 = vadd.f32 %v1331, %v1440
  %v1442 = vpop.f32.mrb[0].mxu0
  %1443 = vmatprep.mubr.f32.mxu0 0.0
  %1444 = vmatmul.mubr.f32.gmra.mrb[0].mxu0 %v1229
  %v1445 = vpop.f32.mrb[0].mxu0
  %v1446 = vadd.f32 %v1336, %v1445
  %v1447 = vpop.f32.mrb[0].mxu0
  %1448 = vmatprep.mubr.f32.mxu0 0.0
  %1449 = vmatmul.mubr.f32.gmra.mrb[0].mxu0 %v1232
  %v1450 = vpop.f32.mrb[0].mxu0
  %v1451 = vadd.f32 %v1341, %v1450
  %v1452 = vpop.f32.mrb[0].mxu0
  %1453 = vdwg.mxu0
  %v1454 = vmax.f32 %v1170, %v1411
  %v1455 = vmax.f32 %v1171, %v1416
  %v1456 = vmax.f32 %v1172, %v1421
  %v1457 = vmax.f32 %v1173, %v1426
  %v1458 = vmax.f32 %v1174, %v1431
  %v1459 = vmax.f32 %v1175, %v1436
  %v1460 = vmax.f32 %v1176, %v1441
  %v1461 = vmax.f32 %v1177, %v1446
  %v1462 = vmax.f32 %v1178, %v1451
  %s1463 = scalar_lea.vmem %s0, 1080
  %v1464 = vld [vmem:[%s1463] sm:$0xff]
  %v1465 = vld [vmem:[%s1463 + $0x8] sm:$0xff]
  %v1466 = vld [vmem:[%s1463 + $0x10] sm:$0xff]
  %v1467 = vld [vmem:[%s1463 + $0x18] sm:$0xff]
  %v1468 = vld [vmem:[%s1463 + $0x20] sm:$0xff]
  %v1469 = vld [vmem:[%s1463 + $0x28] sm:$0xff]
  %v1470 = vld [vmem:[%s1463 + $0x30] sm:$0xff]
  %v1471 = vld [vmem:[%s1463 + $0x38] sm:$0xff]
  %v1472 = vld [vmem:[%s1463 + $0x40] sm:$0xff]
  %v1473 = vld [vmem:[%s1463 + $0x48] sm:$0xff]
  %v1474 = vld [vmem:[%s1463 + $0x50] sm:$0xff]
  %v1475 = vld [vmem:[%s1463 + $0x58] sm:$0xff]
  %v1476 = vld [vmem:[%s1463 + $0x60] sm:$0xff]
  %v1477 = vld [vmem:[%s1463 + $0x68] sm:$0xff]
  %v1478 = vld [vmem:[%s1463 + $0x70] sm:$0xff]
  %v1479 = vld [vmem:[%s1463 + $0x78] sm:$0xff]
  %v1480 = vld [vmem:[%s1463 + $0x80] sm:$0xff]
  %v1481 = vld [vmem:[%s1463 + $0x88] sm:$0xff]
  %v1482 = vld [vmem:[%s1463 + $0x90] sm:$0xff]
  %v1483 = vld [vmem:[%s1463 + $0x98] sm:$0xff]
  %v1484 = vld [vmem:[%s1463 + $0xa0] sm:$0xff]
  %v1485 = vld [vmem:[%s1463 + $0xa8] sm:$0xff]
  %v1486 = vld [vmem:[%s1463 + $0xb0] sm:$0xff]
  %v1487 = vld [vmem:[%s1463 + $0xb8] sm:$0xff]
  %v1488 = vld [vmem:[%s1463 + $0xc0] sm:$0xff]
  %v1489 = vld [vmem:[%s1463 + $0xc8] sm:$0xff]
  %v1490 = vld [vmem:[%s1463 + $0xd0] sm:$0xff]
  %v1492 = vsel %vm75, %v1466, 0
  %v1495 = vsel %vm75, %v1469, 0
  %v1498 = vsel %vm75, %v1472, 0
  %v1501 = vsel %vm75, %v1475, 0
  %v1504 = vsel %vm75, %v1478, 0
  %v1507 = vsel %vm75, %v1481, 0
  %v1510 = vsel %vm75, %v1484, 0
  %v1513 = vsel %vm75, %v1487, 0
  %v1516 = vsel %vm75, %v1490, 0
  %1518 = vmatprep.subr.mxu0 0.0
  %1519 = vmatpush1.msra.mxu0 %v41
  %1520 = vmatprep.subr.mxu0 0.0
  %1521 = vmatpush1.msra.mxu0 %v42
  %1522 = vmatprep.subr.mxu0 0.0
  %1523 = vmatpush1.msra.mxu0 %v43
  %1524 = vmatprep.subr.mxu0 0.0
  %1525 = vmatpush1.msra.mxu0 %v44
  %1526 = vmatprep.subr.mxu0 0.0
  %1527 = vmatpush1.msra.mxu0 %v45
  %1528 = vmatprep.subr.mxu0 0.0
  %1529 = vmatpush1.msra.mxu0 %v46
  %1530 = vmatprep.subr.mxu0 0.0
  %1531 = vmatpush1.msra.mxu0 %v47
  %1532 = vmatprep.subr.mxu0 0.0
  %1533 = vmatpush1.msra.mxu0 %v48
  %1534 = vmatprep.subr.mxu0 0.0
  %1535 = vmatpush1.msra.mxu0 %v49
  %1536 = vmatprep.subr.mxu0 0.0
  %1537 = vmatpush1.msra.mxu0 %v50
  %1538 = vmatprep.subr.mxu0 0.0
  %1539 = vmatpush1.msra.mxu0 %v51
  %1540 = vmatprep.subr.mxu0 0.0
  %1541 = vmatpush1.msra.mxu0 %v52
  %1542 = vmatprep.subr.mxu0 0.0
  %1543 = vmatpush1.msra.mxu0 %v53
  %1544 = vmatprep.subr.mxu0 0.0
  %1545 = vmatpush1.msra.mxu0 %v54
  %1546 = vmatprep.subr.mxu0 0.0
  %1547 = vmatpush1.msra.mxu0 %v55
  %1548 = vmatprep.subr.mxu0 0.0
  %1549 = vmatpush1.msra.mxu0 %v56
  %1550 = vmatprep.subr.mxu0 0.0
  %1551 = vmatpush1.msra.mxu0 %v57
  %1552 = vmatprep.subr.mxu0 0.0
  %1553 = vmatpush1.msra.mxu0 %v58
  %1554 = vmatprep.subr.mxu0 0.0
  %1555 = vmatpush1.msra.mxu0 %v59
  %1556 = vmatprep.subr.mxu0 0.0
  %1557 = vmatpush1.msra.mxu0 %v60
  %1558 = vmatprep.subr.mxu0 0.0
  %1559 = vmatpush1.msra.mxu0 %v61
  %1560 = vmatprep.subr.mxu0 0.0
  %1561 = vmatpush1.msra.mxu0 %v62
  %1562 = vmatprep.subr.mxu0 0.0
  %1563 = vmatpush1.msra.mxu0 %v63
  %1564 = vmatprep.subr.mxu0 0.0
  %1565 = vmatpush1.msra.mxu0 %v64
  %1566 = vmatprep.subr.mxu0 0.0
  %1567 = vmatpush1.msra.mxu0 %v65
  %1568 = vmatprep.subr.mxu0 0.0
  %1569 = vmatpush1.msra.mxu0 %v66
  %1570 = vmatprep.subr.mxu0 0.0
  %1571 = vmatpush1.msra.mxu0 %v67
  %1572 = vmatprep.subr.mxu0 0.0
  %1573 = vmatpush1.msra.mxu0 %v68
  %1574 = vmatprep.subr.mxu0 0.0
  %1575 = vmatpush1.msra.mxu0 %v69
  %1576 = vmatprep.subr.mxu0 0.0
  %1577 = vmatpush1.msra.mxu0 %v70
  %1578 = vmatprep.subr.mxu0 0.0
  %1579 = vmatpush1.msra.mxu0 %v71
  %1580 = vmatprep.subr.mxu0 0.0
  %1581 = vmatpush1.msra.mxu0 %v72
  %1582 = vmatprep.mubr.f32.mxu0 %v1465
  %1583 = vmatmul.mubr.f32.gmra.mrb[0].mxu0 %v1464
  %v1584 = vpop.f32.mrb[0].mxu0
  %v1585 = vadd.f32 0.0, %v1584
  %v1586 = vpop.f32.mrb[0].mxu0
  %1587 = vmatprep.mubr.f32.mxu0 %v1468
  %1588 = vmatmul.mubr.f32.gmra.mrb[0].mxu0 %v1467
  %v1589 = vpop.f32.mrb[0].mxu0
  %v1590 = vadd.f32 0.0, %v1589
  %v1591 = vpop.f32.mrb[0].mxu0
  %1592 = vmatprep.mubr.f32.mxu0 %v1471
  %1593 = vmatmul.mubr.f32.gmra.mrb[0].mxu0 %v1470
  %v1594 = vpop.f32.mrb[0].mxu0
  %v1595 = vadd.f32 0.0, %v1594
  %v1596 = vpop.f32.mrb[0].mxu0
  %1597 = vmatprep.mubr.f32.mxu0 %v1474
  %1598 = vmatmul.mubr.f32.gmra.mrb[0].mxu0 %v1473
  %v1599 = vpop.f32.mrb[0].mxu0
  %v1600 = vadd.f32 0.0, %v1599
  %v1601 = vpop.f32.mrb[0].mxu0
  %1602 = vmatprep.mubr.f32.mxu0 %v1477
  %1603 = vmatmul.mubr.f32.gmra.mrb[0].mxu0 %v1476
  %v1604 = vpop.f32.mrb[0].mxu0
  %v1605 = vadd.f32 0.0, %v1604
  %v1606 = vpop.f32.mrb[0].mxu0
  %1607 = vmatprep.mubr.f32.mxu0 %v1480
  %1608 = vmatmul.mubr.f32.gmra.mrb[0].mxu0 %v1479
  %v1609 = vpop.f32.mrb[0].mxu0
  %v1610 = vadd.f32 0.0, %v1609
  %v1611 = vpop.f32.mrb[0].mxu0
  %1612 = vmatprep.mubr.f32.mxu0 %v1483
  %1613 = vmatmul.mubr.f32.gmra.mrb[0].mxu0 %v1482
  %v1614 = vpop.f32.mrb[0].mxu0
  %v1615 = vadd.f32 0.0, %v1614
  %v1616 = vpop.f32.mrb[0].mxu0
  %1617 = vmatprep.mubr.f32.mxu0 %v1486
  %1618 = vmatmul.mubr.f32.gmra.mrb[0].mxu0 %v1485
  %v1619 = vpop.f32.mrb[0].mxu0
  %v1620 = vadd.f32 0.0, %v1619
  %v1621 = vpop.f32.mrb[0].mxu0
  %1622 = vmatprep.mubr.f32.mxu0 %v1489
  %1623 = vmatmul.mubr.f32.gmra.mrb[0].mxu0 %v1488
  %v1624 = vpop.f32.mrb[0].mxu0
  %v1625 = vadd.f32 0.0, %v1624
  %v1626 = vpop.f32.mrb[0].mxu0
  %1627 = vdwg.mxu0
  %1628 = vmatprep.subr.mxu0 0.0
  %1629 = vmatpush1.msra.mxu0 %v73
  %1630 = vmatprep.subr.mxu0 0.0
  %1631 = vmatpush1.msra.mxu0 %v105
  %1632 = vmatprep.subr.mxu0 0.0
  %1633 = vmatpush1.msra.mxu0 0.0
  %1634 = vmatprep.subr.mxu0 0.0
  %1635 = vmatpush1.msra.mxu0 0.0
  %1636 = vmatprep.subr.mxu0 0.0
  %1637 = vmatpush1.msra.mxu0 0.0
  %1638 = vmatprep.subr.mxu0 0.0
  %1639 = vmatpush1.msra.mxu0 0.0
  %1640 = vmatprep.subr.mxu0 0.0
  %1641 = vmatpush1.msra.mxu0 0.0
  %1642 = vmatprep.subr.mxu0 0.0
  %1643 = vmatpush1.msra.mxu0 0.0
  %1644 = vmatprep.subr.mxu0 0.0
  %1645 = vmatpush1.msra.mxu0 0.0
  %1646 = vmatprep.subr.mxu0 0.0
  %1647 = vmatpush1.msra.mxu0 0.0
  %1648 = vmatprep.subr.mxu0 0.0
  %1649 = vmatpush1.msra.mxu0 0.0
  %1650 = vmatprep.subr.mxu0 0.0
  %1651 = vmatpush1.msra.mxu0 0.0
  %1652 = vmatprep.subr.mxu0 0.0
  %1653 = vmatpush1.msra.mxu0 0.0
  %1654 = vmatprep.subr.mxu0 0.0
  %1655 = vmatpush1.msra.mxu0 0.0
  %1656 = vmatprep.subr.mxu0 0.0
  %1657 = vmatpush1.msra.mxu0 0.0
  %1658 = vmatprep.subr.mxu0 0.0
  %1659 = vmatpush1.msra.mxu0 0.0
  %1660 = vmatprep.subr.mxu0 0.0
  %1661 = vmatpush1.msra.mxu0 0.0
  %1662 = vmatprep.subr.mxu0 0.0
  %1663 = vmatpush1.msra.mxu0 0.0
  %1664 = vmatprep.subr.mxu0 0.0
  %1665 = vmatpush1.msra.mxu0 0.0
  %1666 = vmatprep.subr.mxu0 0.0
  %1667 = vmatpush1.msra.mxu0 0.0
  %1668 = vmatprep.subr.mxu0 0.0
  %1669 = vmatpush1.msra.mxu0 0.0
  %1670 = vmatprep.subr.mxu0 0.0
  %1671 = vmatpush1.msra.mxu0 0.0
  %1672 = vmatprep.subr.mxu0 0.0
  %1673 = vmatpush1.msra.mxu0 0.0
  %1674 = vmatprep.subr.mxu0 0.0
  %1675 = vmatpush1.msra.mxu0 0.0
  %1676 = vmatprep.subr.mxu0 0.0
  %1677 = vmatpush1.msra.mxu0 0.0
  %1678 = vmatprep.subr.mxu0 0.0
  %1679 = vmatpush1.msra.mxu0 0.0
  %1680 = vmatprep.subr.mxu0 0.0
  %1681 = vmatpush1.msra.mxu0 0.0
  %1682 = vmatprep.subr.mxu0 0.0
  %1683 = vmatpush1.msra.mxu0 0.0
  %1684 = vmatprep.subr.mxu0 0.0
  %1685 = vmatpush1.msra.mxu0 0.0
  %1686 = vmatprep.subr.mxu0 0.0
  %1687 = vmatpush1.msra.mxu0 0.0
  %1688 = vmatprep.subr.mxu0 0.0
  %1689 = vmatpush1.msra.mxu0 0.0
  %1690 = vmatprep.subr.mxu0 0.0
  %1691 = vmatpush1.msra.mxu0 0.0
  %1692 = vmatprep.mubr.f32.mxu0 0.0
  %1693 = vmatmul.mubr.f32.gmra.mrb[0].mxu0 %v1492
  %v1694 = vpop.f32.mrb[0].mxu0
  %v1695 = vadd.f32 %v1585, %v1694
  %v1696 = vpop.f32.mrb[0].mxu0
  %1697 = vmatprep.mubr.f32.mxu0 0.0
  %1698 = vmatmul.mubr.f32.gmra.mrb[0].mxu0 %v1495
  %v1699 = vpop.f32.mrb[0].mxu0
  %v1700 = vadd.f32 %v1590, %v1699
  %v1701 = vpop.f32.mrb[0].mxu0
  %1702 = vmatprep.mubr.f32.mxu0 0.0
  %1703 = vmatmul.mubr.f32.gmra.mrb[0].mxu0 %v1498
  %v1704 = vpop.f32.mrb[0].mxu0
  %v1705 = vadd.f32 %v1595, %v1704
  %v1706 = vpop.f32.mrb[0].mxu0
  %1707 = vmatprep.mubr.f32.mxu0 0.0
  %1708 = vmatmul.mubr.f32.gmra.mrb[0].mxu0 %v1501
  %v1709 = vpop.f32.mrb[0].mxu0
  %v1710 = vadd.f32 %v1600, %v1709
  %v1711 = vpop.f32.mrb[0].mxu0
  %1712 = vmatprep.mubr.f32.mxu0 0.0
  %1713 = vmatmul.mubr.f32.gmra.mrb[0].mxu0 %v1504
  %v1714 = vpop.f32.mrb[0].mxu0
  %v1715 = vadd.f32 %v1605, %v1714
  %v1716 = vpop.f32.mrb[0].mxu0
  %1717 = vmatprep.mubr.f32.mxu0 0.0
  %1718 = vmatmul.mubr.f32.gmra.mrb[0].mxu0 %v1507
  %v1719 = vpop.f32.mrb[0].mxu0
  %v1720 = vadd.f32 %v1610, %v1719
  %v1721 = vpop.f32.mrb[0].mxu0
  %1722 = vmatprep.mubr.f32.mxu0 0.0
  %1723 = vmatmul.mubr.f32.gmra.mrb[0].mxu0 %v1510
  %v1724 = vpop.f32.mrb[0].mxu0
  %v1725 = vadd.f32 %v1615, %v1724
  %v1726 = vpop.f32.mrb[0].mxu0
  %1727 = vmatprep.mubr.f32.mxu0 0.0
  %1728 = vmatmul.mubr.f32.gmra.mrb[0].mxu0 %v1513
  %v1729 = vpop.f32.mrb[0].mxu0
  %v1730 = vadd.f32 %v1620, %v1729
  %v1731 = vpop.f32.mrb[0].mxu0
  %1732 = vmatprep.mubr.f32.mxu0 0.0
  %1733 = vmatmul.mubr.f32.gmra.mrb[0].mxu0 %v1516
  %v1734 = vpop.f32.mrb[0].mxu0
  %v1735 = vadd.f32 %v1625, %v1734
  %v1736 = vpop.f32.mrb[0].mxu0
  %1737 = vdwg.mxu0
  %v1738 = vmax.f32 %v1454, %v1695
  %v1739 = vmax.f32 %v1455, %v1700
  %v1740 = vmax.f32 %v1456, %v1705
  %v1741 = vmax.f32 %v1457, %v1710
  %v1742 = vmax.f32 %v1458, %v1715
  %v1743 = vmax.f32 %v1459, %v1720
  %v1744 = vmax.f32 %v1460, %v1725
  %v1745 = vmax.f32 %v1461, %v1730
  %v1746 = vmax.f32 %v1462, %v1735
  %s1747 = scalar_lea.vmem %s0, 1296
  %v1748 = vld [vmem:[%s1747] sm:$0xff]
  %v1749 = vld [vmem:[%s1747 + $0x8] sm:$0xff]
  %v1750 = vld [vmem:[%s1747 + $0x10] sm:$0xff]
  %v1751 = vld [vmem:[%s1747 + $0x18] sm:$0xff]
  %v1752 = vld [vmem:[%s1747 + $0x20] sm:$0xff]
  %v1753 = vld [vmem:[%s1747 + $0x28] sm:$0xff]
  %v1754 = vld [vmem:[%s1747 + $0x30] sm:$0xff]
  %v1755 = vld [vmem:[%s1747 + $0x38] sm:$0xff]
  %v1756 = vld [vmem:[%s1747 + $0x40] sm:$0xff]
  %v1757 = vld [vmem:[%s1747 + $0x48] sm:$0xff]
  %v1758 = vld [vmem:[%s1747 + $0x50] sm:$0xff]
  %v1759 = vld [vmem:[%s1747 + $0x58] sm:$0xff]
  %v1760 = vld [vmem:[%s1747 + $0x60] sm:$0xff]
  %v1761 = vld [vmem:[%s1747 + $0x68] sm:$0xff]
  %v1762 = vld [vmem:[%s1747 + $0x70] sm:$0xff]
  %v1763 = vld [vmem:[%s1747 + $0x78] sm:$0xff]
  %v1764 = vld [vmem:[%s1747 + $0x80] sm:$0xff]
  %v1765 = vld [vmem:[%s1747 + $0x88] sm:$0xff]
  %v1766 = vld [vmem:[%s1747 + $0x90] sm:$0xff]
  %v1767 = vld [vmem:[%s1747 + $0x98] sm:$0xff]
  %v1768 = vld [vmem:[%s1747 + $0xa0] sm:$0xff]
  %v1769 = vld [vmem:[%s1747 + $0xa8] sm:$0xff]
  %v1770 = vld [vmem:[%s1747 + $0xb0] sm:$0xff]
  %v1771 = vld [vmem:[%s1747 + $0xb8] sm:$0xff]
  %v1772 = vld [vmem:[%s1747 + $0xc0] sm:$0xff]
  %v1773 = vld [vmem:[%s1747 + $0xc8] sm:$0xff]
  %v1774 = vld [vmem:[%s1747 + $0xd0] sm:$0xff]
  %v1776 = vsel %vm75, %v1750, 0
  %v1779 = vsel %vm75, %v1753, 0
  %v1782 = vsel %vm75, %v1756, 0
  %v1785 = vsel %vm75, %v1759, 0
  %v1788 = vsel %vm75, %v1762, 0
  %v1791 = vsel %vm75, %v1765, 0
  %v1794 = vsel %vm75, %v1768, 0
  %v1797 = vsel %vm75, %v1771, 0
  %v1800 = vsel %vm75, %v1774, 0
  %1802 = vmatprep.subr.mxu0 0.0
  %1803 = vmatpush1.msra.mxu0 %v41
  %1804 = vmatprep.subr.mxu0 0.0
  %1805 = vmatpush1.msra.mxu0 %v42
  %1806 = vmatprep.subr.mxu0 0.0
  %1807 = vmatpush1.msra.mxu0 %v43
  %1808 = vmatprep.subr.mxu0 0.0
  %1809 = vmatpush1.msra.mxu0 %v44
  %1810 = vmatprep.subr.mxu0 0.0
  %1811 = vmatpush1.msra.mxu0 %v45
  %1812 = vmatprep.subr.mxu0 0.0
  %1813 = vmatpush1.msra.mxu0 %v46
  %1814 = vmatprep.subr.mxu0 0.0
  %1815 = vmatpush1.msra.mxu0 %v47
  %1816 = vmatprep.subr.mxu0 0.0
  %1817 = vmatpush1.msra.mxu0 %v48
  %1818 = vmatprep.subr.mxu0 0.0
  %1819 = vmatpush1.msra.mxu0 %v49
  %1820 = vmatprep.subr.mxu0 0.0
  %1821 = vmatpush1.msra.mxu0 %v50
  %1822 = vmatprep.subr.mxu0 0.0
  %1823 = vmatpush1.msra.mxu0 %v51
  %1824 = vmatprep.subr.mxu0 0.0
  %1825 = vmatpush1.msra.mxu0 %v52
  %1826 = vmatprep.subr.mxu0 0.0
  %1827 = vmatpush1.msra.mxu0 %v53
  %1828 = vmatprep.subr.mxu0 0.0
  %1829 = vmatpush1.msra.mxu0 %v54
  %1830 = vmatprep.subr.mxu0 0.0
  %1831 = vmatpush1.msra.mxu0 %v55
  %1832 = vmatprep.subr.mxu0 0.0
  %1833 = vmatpush1.msra.mxu0 %v56
  %1834 = vmatprep.subr.mxu0 0.0
  %1835 = vmatpush1.msra.mxu0 %v57
  %1836 = vmatprep.subr.mxu0 0.0
  %1837 = vmatpush1.msra.mxu0 %v58
  %1838 = vmatprep.subr.mxu0 0.0
  %1839 = vmatpush1.msra.mxu0 %v59
  %1840 = vmatprep.subr.mxu0 0.0
  %1841 = vmatpush1.msra.mxu0 %v60
  %1842 = vmatprep.subr.mxu0 0.0
  %1843 = vmatpush1.msra.mxu0 %v61
  %1844 = vmatprep.subr.mxu0 0.0
  %1845 = vmatpush1.msra.mxu0 %v62
  %1846 = vmatprep.subr.mxu0 0.0
  %1847 = vmatpush1.msra.mxu0 %v63
  %1848 = vmatprep.subr.mxu0 0.0
  %1849 = vmatpush1.msra.mxu0 %v64
  %1850 = vmatprep.subr.mxu0 0.0
  %1851 = vmatpush1.msra.mxu0 %v65
  %1852 = vmatprep.subr.mxu0 0.0
  %1853 = vmatpush1.msra.mxu0 %v66
  %1854 = vmatprep.subr.mxu0 0.0
  %1855 = vmatpush1.msra.mxu0 %v67
  %1856 = vmatprep.subr.mxu0 0.0
  %1857 = vmatpush1.msra.mxu0 %v68
  %1858 = vmatprep.subr.mxu0 0.0
  %1859 = vmatpush1.msra.mxu0 %v69
  %1860 = vmatprep.subr.mxu0 0.0
  %1861 = vmatpush1.msra.mxu0 %v70
  %1862 = vmatprep.subr.mxu0 0.0
  %1863 = vmatpush1.msra.mxu0 %v71
  %1864 = vmatprep.subr.mxu0 0.0
  %1865 = vmatpush1.msra.mxu0 %v72
  %1866 = vmatprep.mubr.f32.mxu0 %v1749
  %1867 = vmatmul.mubr.f32.gmra.mrb[0].mxu0 %v1748
  %v1868 = vpop.f32.mrb[0].mxu0
  %v1869 = vadd.f32 0.0, %v1868
  %v1870 = vpop.f32.mrb[0].mxu0
  %1871 = vmatprep.mubr.f32.mxu0 %v1752
  %1872 = vmatmul.mubr.f32.gmra.mrb[0].mxu0 %v1751
  %v1873 = vpop.f32.mrb[0].mxu0
  %v1874 = vadd.f32 0.0, %v1873
  %v1875 = vpop.f32.mrb[0].mxu0
  %1876 = vmatprep.mubr.f32.mxu0 %v1755
  %1877 = vmatmul.mubr.f32.gmra.mrb[0].mxu0 %v1754
  %v1878 = vpop.f32.mrb[0].mxu0
  %v1879 = vadd.f32 0.0, %v1878
  %v1880 = vpop.f32.mrb[0].mxu0
  %1881 = vmatprep.mubr.f32.mxu0 %v1758
  %1882 = vmatmul.mubr.f32.gmra.mrb[0].mxu0 %v1757
  %v1883 = vpop.f32.mrb[0].mxu0
  %v1884 = vadd.f32 0.0, %v1883
  %v1885 = vpop.f32.mrb[0].mxu0
  %1886 = vmatprep.mubr.f32.mxu0 %v1761
  %1887 = vmatmul.mubr.f32.gmra.mrb[0].mxu0 %v1760
  %v1888 = vpop.f32.mrb[0].mxu0
  %v1889 = vadd.f32 0.0, %v1888
  %v1890 = vpop.f32.mrb[0].mxu0
  %1891 = vmatprep.mubr.f32.mxu0 %v1764
  %1892 = vmatmul.mubr.f32.gmra.mrb[0].mxu0 %v1763
  %v1893 = vpop.f32.mrb[0].mxu0
  %v1894 = vadd.f32 0.0, %v1893
  %v1895 = vpop.f32.mrb[0].mxu0
  %1896 = vmatprep.mubr.f32.mxu0 %v1767
  %1897 = vmatmul.mubr.f32.gmra.mrb[0].mxu0 %v1766
  %v1898 = vpop.f32.mrb[0].mxu0
  %v1899 = vadd.f32 0.0, %v1898
  %v1900 = vpop.f32.mrb[0].mxu0
  %1901 = vmatprep.mubr.f32.mxu0 %v1770
  %1902 = vmatmul.mubr.f32.gmra.mrb[0].mxu0 %v1769
  %v1903 = vpop.f32.mrb[0].mxu0
  %v1904 = vadd.f32 0.0, %v1903
  %v1905 = vpop.f32.mrb[0].mxu0
  %1906 = vmatprep.mubr.f32.mxu0 %v1773
  %1907 = vmatmul.mubr.f32.gmra.mrb[0].mxu0 %v1772
  %v1908 = vpop.f32.mrb[0].mxu0
  %v1909 = vadd.f32 0.0, %v1908
  %v1910 = vpop.f32.mrb[0].mxu0
  %1911 = vdwg.mxu0
  %1912 = vmatprep.subr.mxu0 0.0
  %1913 = vmatpush1.msra.mxu0 %v73
  %1914 = vmatprep.subr.mxu0 0.0
  %1915 = vmatpush1.msra.mxu0 %v105
  %1916 = vmatprep.subr.mxu0 0.0
  %1917 = vmatpush1.msra.mxu0 0.0
  %1918 = vmatprep.subr.mxu0 0.0
  %1919 = vmatpush1.msra.mxu0 0.0
  %1920 = vmatprep.subr.mxu0 0.0
  %1921 = vmatpush1.msra.mxu0 0.0
  %1922 = vmatprep.subr.mxu0 0.0
  %1923 = vmatpush1.msra.mxu0 0.0
  %1924 = vmatprep.subr.mxu0 0.0
  %1925 = vmatpush1.msra.mxu0 0.0
  %1926 = vmatprep.subr.mxu0 0.0
  %1927 = vmatpush1.msra.mxu0 0.0
  %1928 = vmatprep.subr.mxu0 0.0
  %1929 = vmatpush1.msra.mxu0 0.0
  %1930 = vmatprep.subr.mxu0 0.0
  %1931 = vmatpush1.msra.mxu0 0.0
  %1932 = vmatprep.subr.mxu0 0.0
  %1933 = vmatpush1.msra.mxu0 0.0
  %1934 = vmatprep.subr.mxu0 0.0
  %1935 = vmatpush1.msra.mxu0 0.0
  %1936 = vmatprep.subr.mxu0 0.0
  %1937 = vmatpush1.msra.mxu0 0.0
  %1938 = vmatprep.subr.mxu0 0.0
  %1939 = vmatpush1.msra.mxu0 0.0
  %1940 = vmatprep.subr.mxu0 0.0
  %1941 = vmatpush1.msra.mxu0 0.0
  %1942 = vmatprep.subr.mxu0 0.0
  %1943 = vmatpush1.msra.mxu0 0.0
  %1944 = vmatprep.subr.mxu0 0.0
  %1945 = vmatpush1.msra.mxu0 0.0
  %1946 = vmatprep.subr.mxu0 0.0
  %1947 = vmatpush1.msra.mxu0 0.0
  %1948 = vmatprep.subr.mxu0 0.0
  %1949 = vmatpush1.msra.mxu0 0.0
  %1950 = vmatprep.subr.mxu0 0.0
  %1951 = vmatpush1.msra.mxu0 0.0
  %1952 = vmatprep.subr.mxu0 0.0
  %1953 = vmatpush1.msra.mxu0 0.0
  %1954 = vmatprep.subr.mxu0 0.0
  %1955 = vmatpush1.msra.mxu0 0.0
  %1956 = vmatprep.subr.mxu0 0.0
  %1957 = vmatpush1.msra.mxu0 0.0
  %1958 = vmatprep.subr.mxu0 0.0
  %1959 = vmatpush1.msra.mxu0 0.0
  %1960 = vmatprep.subr.mxu0 0.0
  %1961 = vmatpush1.msra.mxu0 0.0
  %1962 = vmatprep.subr.mxu0 0.0
  %1963 = vmatpush1.msra.mxu0 0.0
  %1964 = vmatprep.subr.mxu0 0.0
  %1965 = vmatpush1.msra.mxu0 0.0
  %1966 = vmatprep.subr.mxu0 0.0
  %1967 = vmatpush1.msra.mxu0 0.0
  %1968 = vmatprep.subr.mxu0 0.0
  %1969 = vmatpush1.msra.mxu0 0.0
  %1970 = vmatprep.subr.mxu0 0.0
  %1971 = vmatpush1.msra.mxu0 0.0
  %1972 = vmatprep.subr.mxu0 0.0
  %1973 = vmatpush1.msra.mxu0 0.0
  %1974 = vmatprep.subr.mxu0 0.0
  %1975 = vmatpush1.msra.mxu0 0.0
  %1976 = vmatprep.mubr.f32.mxu0 0.0
  %1977 = vmatmul.mubr.f32.gmra.mrb[0].mxu0 %v1776
  %v1978 = vpop.f32.mrb[0].mxu0
  %v1979 = vadd.f32 %v1869, %v1978
  %v1980 = vpop.f32.mrb[0].mxu0
  %1981 = vmatprep.mubr.f32.mxu0 0.0
  %1982 = vmatmul.mubr.f32.gmra.mrb[0].mxu0 %v1779
  %v1983 = vpop.f32.mrb[0].mxu0
  %v1984 = vadd.f32 %v1874, %v1983
  %v1985 = vpop.f32.mrb[0].mxu0
  %1986 = vmatprep.mubr.f32.mxu0 0.0
  %1987 = vmatmul.mubr.f32.gmra.mrb[0].mxu0 %v1782
  %v1988 = vpop.f32.mrb[0].mxu0
  %v1989 = vadd.f32 %v1879, %v1988
  %v1990 = vpop.f32.mrb[0].mxu0
  %1991 = vmatprep.mubr.f32.mxu0 0.0
  %1992 = vmatmul.mubr.f32.gmra.mrb[0].mxu0 %v1785
  %v1993 = vpop.f32.mrb[0].mxu0
  %v1994 = vadd.f32 %v1884, %v1993
  %v1995 = vpop.f32.mrb[0].mxu0
  %1996 = vmatprep.mubr.f32.mxu0 0.0
  %1997 = vmatmul.mubr.f32.gmra.mrb[0].mxu0 %v1788
  %v1998 = vpop.f32.mrb[0].mxu0
  %v1999 = vadd.f32 %v1889, %v1998
  %v2000 = vpop.f32.mrb[0].mxu0
  %2001 = vmatprep.mubr.f32.mxu0 0.0
  %2002 = vmatmul.mubr.f32.gmra.mrb[0].mxu0 %v1791
  %v2003 = vpop.f32.mrb[0].mxu0
  %v2004 = vadd.f32 %v1894, %v2003
  %v2005 = vpop.f32.mrb[0].mxu0
  %2006 = vmatprep.mubr.f32.mxu0 0.0
  %2007 = vmatmul.mubr.f32.gmra.mrb[0].mxu0 %v1794
  %v2008 = vpop.f32.mrb[0].mxu0
  %v2009 = vadd.f32 %v1899, %v2008
  %v2010 = vpop.f32.mrb[0].mxu0
  %2011 = vmatprep.mubr.f32.mxu0 0.0
  %2012 = vmatmul.mubr.f32.gmra.mrb[0].mxu0 %v1797
  %v2013 = vpop.f32.mrb[0].mxu0
  %v2014 = vadd.f32 %v1904, %v2013
  %v2015 = vpop.f32.mrb[0].mxu0
  %2016 = vmatprep.mubr.f32.mxu0 0.0
  %2017 = vmatmul.mubr.f32.gmra.mrb[0].mxu0 %v1800
  %v2018 = vpop.f32.mrb[0].mxu0
  %v2019 = vadd.f32 %v1909, %v2018
  %v2020 = vpop.f32.mrb[0].mxu0
  %2021 = vdwg.mxu0
  %v2022 = vmax.f32 %v1738, %v1979
  %v2023 = vmax.f32 %v1739, %v1984
  %v2024 = vmax.f32 %v1740, %v1989
  %v2025 = vmax.f32 %v1741, %v1994
  %v2026 = vmax.f32 %v1742, %v1999
  %v2027 = vmax.f32 %v1743, %v2004
  %v2028 = vmax.f32 %v1744, %v2009
  %v2029 = vmax.f32 %v1745, %v2014
  %v2030 = vmax.f32 %v1746, %v2019
  %s2031 = scalar_lea.vmem %s0, 1512
  %v2032 = vld [vmem:[%s2031] sm:$0xff]
  %v2033 = vld [vmem:[%s2031 + $0x8] sm:$0xff]
  %v2034 = vld [vmem:[%s2031 + $0x10] sm:$0xff]
  %v2035 = vld [vmem:[%s2031 + $0x18] sm:$0xff]
  %v2036 = vld [vmem:[%s2031 + $0x20] sm:$0xff]
  %v2037 = vld [vmem:[%s2031 + $0x28] sm:$0xff]
  %v2038 = vld [vmem:[%s2031 + $0x30] sm:$0xff]
  %v2039 = vld [vmem:[%s2031 + $0x38] sm:$0xff]
  %v2040 = vld [vmem:[%s2031 + $0x40] sm:$0xff]
  %v2041 = vld [vmem:[%s2031 + $0x48] sm:$0xff]
  %v2042 = vld [vmem:[%s2031 + $0x50] sm:$0xff]
  %v2043 = vld [vmem:[%s2031 + $0x58] sm:$0xff]
  %v2044 = vld [vmem:[%s2031 + $0x60] sm:$0xff]
  %v2045 = vld [vmem:[%s2031 + $0x68] sm:$0xff]
  %v2046 = vld [vmem:[%s2031 + $0x70] sm:$0xff]
  %v2047 = vld [vmem:[%s2031 + $0x78] sm:$0xff]
  %v2048 = vld [vmem:[%s2031 + $0x80] sm:$0xff]
  %v2049 = vld [vmem:[%s2031 + $0x88] sm:$0xff]
  %v2050 = vld [vmem:[%s2031 + $0x90] sm:$0xff]
  %v2051 = vld [vmem:[%s2031 + $0x98] sm:$0xff]
  %v2052 = vld [vmem:[%s2031 + $0xa0] sm:$0xff]
  %v2053 = vld [vmem:[%s2031 + $0xa8] sm:$0xff]
  %v2054 = vld [vmem:[%s2031 + $0xb0] sm:$0xff]
  %v2055 = vld [vmem:[%s2031 + $0xb8] sm:$0xff]
  %v2056 = vld [vmem:[%s2031 + $0xc0] sm:$0xff]
  %v2057 = vld [vmem:[%s2031 + $0xc8] sm:$0xff]
  %v2058 = vld [vmem:[%s2031 + $0xd0] sm:$0xff]
  %v2060 = vsel %vm75, %v2034, 0
  %v2063 = vsel %vm75, %v2037, 0
  %v2066 = vsel %vm75, %v2040, 0
  %v2069 = vsel %vm75, %v2043, 0
  %v2072 = vsel %vm75, %v2046, 0
  %v2075 = vsel %vm75, %v2049, 0
  %v2078 = vsel %vm75, %v2052, 0
  %v2081 = vsel %vm75, %v2055, 0
  %v2084 = vsel %vm75, %v2058, 0
  %2086 = vmatprep.subr.mxu0 0.0
  %2087 = vmatpush1.msra.mxu0 %v41
  %2088 = vmatprep.subr.mxu0 0.0
  %2089 = vmatpush1.msra.mxu0 %v42
  %2090 = vmatprep.subr.mxu0 0.0
  %2091 = vmatpush1.msra.mxu0 %v43
  %2092 = vmatprep.subr.mxu0 0.0
  %2093 = vmatpush1.msra.mxu0 %v44
  %2094 = vmatprep.subr.mxu0 0.0
  %2095 = vmatpush1.msra.mxu0 %v45
  %2096 = vmatprep.subr.mxu0 0.0
  %2097 = vmatpush1.msra.mxu0 %v46
  %2098 = vmatprep.subr.mxu0 0.0
  %2099 = vmatpush1.msra.mxu0 %v47
  %2100 = vmatprep.subr.mxu0 0.0
  %2101 = vmatpush1.msra.mxu0 %v48
  %2102 = vmatprep.subr.mxu0 0.0
  %2103 = vmatpush1.msra.mxu0 %v49
  %2104 = vmatprep.subr.mxu0 0.0
  %2105 = vmatpush1.msra.mxu0 %v50
  %2106 = vmatprep.subr.mxu0 0.0
  %2107 = vmatpush1.msra.mxu0 %v51
  %2108 = vmatprep.subr.mxu0 0.0
  %2109 = vmatpush1.msra.mxu0 %v52
  %2110 = vmatprep.subr.mxu0 0.0
  %2111 = vmatpush1.msra.mxu0 %v53
  %2112 = vmatprep.subr.mxu0 0.0
  %2113 = vmatpush1.msra.mxu0 %v54
  %2114 = vmatprep.subr.mxu0 0.0
  %2115 = vmatpush1.msra.mxu0 %v55
  %2116 = vmatprep.subr.mxu0 0.0
  %2117 = vmatpush1.msra.mxu0 %v56
  %2118 = vmatprep.subr.mxu0 0.0
  %2119 = vmatpush1.msra.mxu0 %v57
  %2120 = vmatprep.subr.mxu0 0.0
  %2121 = vmatpush1.msra.mxu0 %v58
  %2122 = vmatprep.subr.mxu0 0.0
  %2123 = vmatpush1.msra.mxu0 %v59
  %2124 = vmatprep.subr.mxu0 0.0
  %2125 = vmatpush1.msra.mxu0 %v60
  %2126 = vmatprep.subr.mxu0 0.0
  %2127 = vmatpush1.msra.mxu0 %v61
  %2128 = vmatprep.subr.mxu0 0.0
  %2129 = vmatpush1.msra.mxu0 %v62
  %2130 = vmatprep.subr.mxu0 0.0
  %2131 = vmatpush1.msra.mxu0 %v63
  %2132 = vmatprep.subr.mxu0 0.0
  %2133 = vmatpush1.msra.mxu0 %v64
  %2134 = vmatprep.subr.mxu0 0.0
  %2135 = vmatpush1.msra.mxu0 %v65
  %2136 = vmatprep.subr.mxu0 0.0
  %2137 = vmatpush1.msra.mxu0 %v66
  %2138 = vmatprep.subr.mxu0 0.0
  %2139 = vmatpush1.msra.mxu0 %v67
  %2140 = vmatprep.subr.mxu0 0.0
  %2141 = vmatpush1.msra.mxu0 %v68
  %2142 = vmatprep.subr.mxu0 0.0
  %2143 = vmatpush1.msra.mxu0 %v69
  %2144 = vmatprep.subr.mxu0 0.0
  %2145 = vmatpush1.msra.mxu0 %v70
  %2146 = vmatprep.subr.mxu0 0.0
  %2147 = vmatpush1.msra.mxu0 %v71
  %2148 = vmatprep.subr.mxu0 0.0
  %2149 = vmatpush1.msra.mxu0 %v72
  %2150 = vmatprep.mubr.f32.mxu0 %v2033
  %2151 = vmatmul.mubr.f32.gmra.mrb[0].mxu0 %v2032
  %v2152 = vpop.f32.mrb[0].mxu0
  %v2153 = vadd.f32 0.0, %v2152
  %v2154 = vpop.f32.mrb[0].mxu0
  %2155 = vmatprep.mubr.f32.mxu0 %v2036
  %2156 = vmatmul.mubr.f32.gmra.mrb[0].mxu0 %v2035
  %v2157 = vpop.f32.mrb[0].mxu0
  %v2158 = vadd.f32 0.0, %v2157
  %v2159 = vpop.f32.mrb[0].mxu0
  %2160 = vmatprep.mubr.f32.mxu0 %v2039
  %2161 = vmatmul.mubr.f32.gmra.mrb[0].mxu0 %v2038
  %v2162 = vpop.f32.mrb[0].mxu0
  %v2163 = vadd.f32 0.0, %v2162
  %v2164 = vpop.f32.mrb[0].mxu0
  %2165 = vmatprep.mubr.f32.mxu0 %v2042
  %2166 = vmatmul.mubr.f32.gmra.mrb[0].mxu0 %v2041
  %v2167 = vpop.f32.mrb[0].mxu0
  %v2168 = vadd.f32 0.0, %v2167
  %v2169 = vpop.f32.mrb[0].mxu0
  %2170 = vmatprep.mubr.f32.mxu0 %v2045
  %2171 = vmatmul.mubr.f32.gmra.mrb[0].mxu0 %v2044
  %v2172 = vpop.f32.mrb[0].mxu0
  %v2173 = vadd.f32 0.0, %v2172
  %v2174 = vpop.f32.mrb[0].mxu0
  %2175 = vmatprep.mubr.f32.mxu0 %v2048
  %2176 = vmatmul.mubr.f32.gmra.mrb[0].mxu0 %v2047
  %v2177 = vpop.f32.mrb[0].mxu0
  %v2178 = vadd.f32 0.0, %v2177
  %v2179 = vpop.f32.mrb[0].mxu0
  %2180 = vmatprep.mubr.f32.mxu0 %v2051
  %2181 = vmatmul.mubr.f32.gmra.mrb[0].mxu0 %v2050
  %v2182 = vpop.f32.mrb[0].mxu0
  %v2183 = vadd.f32 0.0, %v2182
  %v2184 = vpop.f32.mrb[0].mxu0
  %2185 = vmatprep.mubr.f32.mxu0 %v2054
  %2186 = vmatmul.mubr.f32.gmra.mrb[0].mxu0 %v2053
  %v2187 = vpop.f32.mrb[0].mxu0
  %v2188 = vadd.f32 0.0, %v2187
  %v2189 = vpop.f32.mrb[0].mxu0
  %2190 = vmatprep.mubr.f32.mxu0 %v2057
  %2191 = vmatmul.mubr.f32.gmra.mrb[0].mxu0 %v2056
  %v2192 = vpop.f32.mrb[0].mxu0
  %v2193 = vadd.f32 0.0, %v2192
  %v2194 = vpop.f32.mrb[0].mxu0
  %2195 = vdwg.mxu0
  %2196 = vmatprep.subr.mxu0 0.0
  %2197 = vmatpush1.msra.mxu0 %v73
  %2198 = vmatprep.subr.mxu0 0.0
  %2199 = vmatpush1.msra.mxu0 %v105
  %2200 = vmatprep.subr.mxu0 0.0
  %2201 = vmatpush1.msra.mxu0 0.0
  %2202 = vmatprep.subr.mxu0 0.0
  %2203 = vmatpush1.msra.mxu0 0.0
  %2204 = vmatprep.subr.mxu0 0.0
  %2205 = vmatpush1.msra.mxu0 0.0
  %2206 = vmatprep.subr.mxu0 0.0
  %2207 = vmatpush1.msra.mxu0 0.0
  %2208 = vmatprep.subr.mxu0 0.0
  %2209 = vmatpush1.msra.mxu0 0.0
  %2210 = vmatprep.subr.mxu0 0.0
  %2211 = vmatpush1.msra.mxu0 0.0
  %2212 = vmatprep.subr.mxu0 0.0
  %2213 = vmatpush1.msra.mxu0 0.0
  %2214 = vmatprep.subr.mxu0 0.0
  %2215 = vmatpush1.msra.mxu0 0.0
  %2216 = vmatprep.subr.mxu0 0.0
  %2217 = vmatpush1.msra.mxu0 0.0
  %2218 = vmatprep.subr.mxu0 0.0
  %2219 = vmatpush1.msra.mxu0 0.0
  %2220 = vmatprep.subr.mxu0 0.0
  %2221 = vmatpush1.msra.mxu0 0.0
  %2222 = vmatprep.subr.mxu0 0.0
  %2223 = vmatpush1.msra.mxu0 0.0
  %2224 = vmatprep.subr.mxu0 0.0
  %2225 = vmatpush1.msra.mxu0 0.0
  %2226 = vmatprep.subr.mxu0 0.0
  %2227 = vmatpush1.msra.mxu0 0.0
  %2228 = vmatprep.subr.mxu0 0.0
  %2229 = vmatpush1.msra.mxu0 0.0
  %2230 = vmatprep.subr.mxu0 0.0
  %2231 = vmatpush1.msra.mxu0 0.0
  %2232 = vmatprep.subr.mxu0 0.0
  %2233 = vmatpush1.msra.mxu0 0.0
  %2234 = vmatprep.subr.mxu0 0.0
  %2235 = vmatpush1.msra.mxu0 0.0
  %2236 = vmatprep.subr.mxu0 0.0
  %2237 = vmatpush1.msra.mxu0 0.0
  %2238 = vmatprep.subr.mxu0 0.0
  %2239 = vmatpush1.msra.mxu0 0.0
  %2240 = vmatprep.subr.mxu0 0.0
  %2241 = vmatpush1.msra.mxu0 0.0
  %2242 = vmatprep.subr.mxu0 0.0
  %2243 = vmatpush1.msra.mxu0 0.0
  %2244 = vmatprep.subr.mxu0 0.0
  %2245 = vmatpush1.msra.mxu0 0.0
  %2246 = vmatprep.subr.mxu0 0.0
  %2247 = vmatpush1.msra.mxu0 0.0
  %2248 = vmatprep.subr.mxu0 0.0
  %2249 = vmatpush1.msra.mxu0 0.0
  %2250 = vmatprep.subr.mxu0 0.0
  %2251 = vmatpush1.msra.mxu0 0.0
  %2252 = vmatprep.subr.mxu0 0.0
  %2253 = vmatpush1.msra.mxu0 0.0
  %2254 = vmatprep.subr.mxu0 0.0
  %2255 = vmatpush1.msra.mxu0 0.0
  %2256 = vmatprep.subr.mxu0 0.0
  %2257 = vmatpush1.msra.mxu0 0.0
  %2258 = vmatprep.subr.mxu0 0.0
  %2259 = vmatpush1.msra.mxu0 0.0
  %2260 = vmatprep.mubr.f32.mxu0 0.0
  %2261 = vmatmul.mubr.f32.gmra.mrb[0].mxu0 %v2060
  %v2262 = vpop.f32.mrb[0].mxu0
  %v2263 = vadd.f32 %v2153, %v2262
  %v2264 = vpop.f32.mrb[0].mxu0
  %2265 = vmatprep.mubr.f32.mxu0 0.0
  %2266 = vmatmul.mubr.f32.gmra.mrb[0].mxu0 %v2063
  %v2267 = vpop.f32.mrb[0].mxu0
  %v2268 = vadd.f32 %v2158, %v2267
  %v2269 = vpop.f32.mrb[0].mxu0
  %2270 = vmatprep.mubr.f32.mxu0 0.0
  %2271 = vmatmul.mubr.f32.gmra.mrb[0].mxu0 %v2066
  %v2272 = vpop.f32.mrb[0].mxu0
  %v2273 = vadd.f32 %v2163, %v2272
  %v2274 = vpop.f32.mrb[0].mxu0
  %2275 = vmatprep.mubr.f32.mxu0 0.0
  %2276 = vmatmul.mubr.f32.gmra.mrb[0].mxu0 %v2069
  %v2277 = vpop.f32.mrb[0].mxu0
  %v2278 = vadd.f32 %v2168, %v2277
  %v2279 = vpop.f32.mrb[0].mxu0
  %2280 = vmatprep.mubr.f32.mxu0 0.0
  %2281 = vmatmul.mubr.f32.gmra.mrb[0].mxu0 %v2072
  %v2282 = vpop.f32.mrb[0].mxu0
  %v2283 = vadd.f32 %v2173, %v2282
  %v2284 = vpop.f32.mrb[0].mxu0
  %2285 = vmatprep.mubr.f32.mxu0 0.0
  %2286 = vmatmul.mubr.f32.gmra.mrb[0].mxu0 %v2075
  %v2287 = vpop.f32.mrb[0].mxu0
  %v2288 = vadd.f32 %v2178, %v2287
  %v2289 = vpop.f32.mrb[0].mxu0
  %2290 = vmatprep.mubr.f32.mxu0 0.0
  %2291 = vmatmul.mubr.f32.gmra.mrb[0].mxu0 %v2078
  %v2292 = vpop.f32.mrb[0].mxu0
  %v2293 = vadd.f32 %v2183, %v2292
  %v2294 = vpop.f32.mrb[0].mxu0
  %2295 = vmatprep.mubr.f32.mxu0 0.0
  %2296 = vmatmul.mubr.f32.gmra.mrb[0].mxu0 %v2081
  %v2297 = vpop.f32.mrb[0].mxu0
  %v2298 = vadd.f32 %v2188, %v2297
  %v2299 = vpop.f32.mrb[0].mxu0
  %2300 = vmatprep.mubr.f32.mxu0 0.0
  %2301 = vmatmul.mubr.f32.gmra.mrb[0].mxu0 %v2084
  %v2302 = vpop.f32.mrb[0].mxu0
  %v2303 = vadd.f32 %v2193, %v2302
  %v2304 = vpop.f32.mrb[0].mxu0
  %2305 = vdwg.mxu0
  %v2306 = vmax.f32 %v2022, %v2263
  %v2307 = vmax.f32 %v2023, %v2268
  %v2308 = vmax.f32 %v2024, %v2273
  %v2309 = vmax.f32 %v2025, %v2278
  %v2310 = vmax.f32 %v2026, %v2283
  %v2311 = vmax.f32 %v2027, %v2288
  %v2312 = vmax.f32 %v2028, %v2293
  %v2313 = vmax.f32 %v2029, %v2298
  %v2314 = vmax.f32 %v2030, %v2303
  %s2315 = scalar_lea.vmem %s0, 1728
  %v2316 = vld [vmem:[%s2315] sm:$0xff]
  %v2317 = vld [vmem:[%s2315 + $0x8] sm:$0xff]
  %v2318 = vld [vmem:[%s2315 + $0x10] sm:$0xff]
  %v2319 = vld [vmem:[%s2315 + $0x18] sm:$0xff]
  %v2320 = vld [vmem:[%s2315 + $0x20] sm:$0xff]
  %v2321 = vld [vmem:[%s2315 + $0x28] sm:$0xff]
  %v2322 = vld [vmem:[%s2315 + $0x30] sm:$0xff]
  %v2323 = vld [vmem:[%s2315 + $0x38] sm:$0xff]
  %v2324 = vld [vmem:[%s2315 + $0x40] sm:$0xff]
  %v2325 = vld [vmem:[%s2315 + $0x48] sm:$0xff]
  %v2326 = vld [vmem:[%s2315 + $0x50] sm:$0xff]
  %v2327 = vld [vmem:[%s2315 + $0x58] sm:$0xff]
  %v2328 = vld [vmem:[%s2315 + $0x60] sm:$0xff]
  %v2329 = vld [vmem:[%s2315 + $0x68] sm:$0xff]
  %v2330 = vld [vmem:[%s2315 + $0x70] sm:$0xff]
  %v2331 = vld [vmem:[%s2315 + $0x78] sm:$0xff]
  %v2332 = vld [vmem:[%s2315 + $0x80] sm:$0xff]
  %v2333 = vld [vmem:[%s2315 + $0x88] sm:$0xff]
  %v2334 = vld [vmem:[%s2315 + $0x90] sm:$0xff]
  %v2335 = vld [vmem:[%s2315 + $0x98] sm:$0xff]
  %v2336 = vld [vmem:[%s2315 + $0xa0] sm:$0xff]
  %v2337 = vld [vmem:[%s2315 + $0xa8] sm:$0xff]
  %v2338 = vld [vmem:[%s2315 + $0xb0] sm:$0xff]
  %v2339 = vld [vmem:[%s2315 + $0xb8] sm:$0xff]
  %v2340 = vld [vmem:[%s2315 + $0xc0] sm:$0xff]
  %v2341 = vld [vmem:[%s2315 + $0xc8] sm:$0xff]
  %v2342 = vld [vmem:[%s2315 + $0xd0] sm:$0xff]
  %v2344 = vsel %vm75, %v2318, 0
  %v2347 = vsel %vm75, %v2321, 0
  %v2350 = vsel %vm75, %v2324, 0
  %v2353 = vsel %vm75, %v2327, 0
  %v2356 = vsel %vm75, %v2330, 0
  %v2359 = vsel %vm75, %v2333, 0
  %v2362 = vsel %vm75, %v2336, 0
  %v2365 = vsel %vm75, %v2339, 0
  %v2368 = vsel %vm75, %v2342, 0
  %2370 = vmatprep.subr.mxu0 0.0
  %2371 = vmatpush1.msra.mxu0 %v41
  %2372 = vmatprep.subr.mxu0 0.0
  %2373 = vmatpush1.msra.mxu0 %v42
  %2374 = vmatprep.subr.mxu0 0.0
  %2375 = vmatpush1.msra.mxu0 %v43
  %2376 = vmatprep.subr.mxu0 0.0
  %2377 = vmatpush1.msra.mxu0 %v44
  %2378 = vmatprep.subr.mxu0 0.0
  %2379 = vmatpush1.msra.mxu0 %v45
  %2380 = vmatprep.subr.mxu0 0.0
  %2381 = vmatpush1.msra.mxu0 %v46
  %2382 = vmatprep.subr.mxu0 0.0
  %2383 = vmatpush1.msra.mxu0 %v47
  %2384 = vmatprep.subr.mxu0 0.0
  %2385 = vmatpush1.msra.mxu0 %v48
  %2386 = vmatprep.subr.mxu0 0.0
  %2387 = vmatpush1.msra.mxu0 %v49
  %2388 = vmatprep.subr.mxu0 0.0
  %2389 = vmatpush1.msra.mxu0 %v50
  %2390 = vmatprep.subr.mxu0 0.0
  %2391 = vmatpush1.msra.mxu0 %v51
  %2392 = vmatprep.subr.mxu0 0.0
  %2393 = vmatpush1.msra.mxu0 %v52
  %2394 = vmatprep.subr.mxu0 0.0
  %2395 = vmatpush1.msra.mxu0 %v53
  %2396 = vmatprep.subr.mxu0 0.0
  %2397 = vmatpush1.msra.mxu0 %v54
  %2398 = vmatprep.subr.mxu0 0.0
  %2399 = vmatpush1.msra.mxu0 %v55
  %2400 = vmatprep.subr.mxu0 0.0
  %2401 = vmatpush1.msra.mxu0 %v56
  %2402 = vmatprep.subr.mxu0 0.0
  %2403 = vmatpush1.msra.mxu0 %v57
  %2404 = vmatprep.subr.mxu0 0.0
  %2405 = vmatpush1.msra.mxu0 %v58
  %2406 = vmatprep.subr.mxu0 0.0
  %2407 = vmatpush1.msra.mxu0 %v59
  %2408 = vmatprep.subr.mxu0 0.0
  %2409 = vmatpush1.msra.mxu0 %v60
  %2410 = vmatprep.subr.mxu0 0.0
  %2411 = vmatpush1.msra.mxu0 %v61
  %2412 = vmatprep.subr.mxu0 0.0
  %2413 = vmatpush1.msra.mxu0 %v62
  %2414 = vmatprep.subr.mxu0 0.0
  %2415 = vmatpush1.msra.mxu0 %v63
  %2416 = vmatprep.subr.mxu0 0.0
  %2417 = vmatpush1.msra.mxu0 %v64
  %2418 = vmatprep.subr.mxu0 0.0
  %2419 = vmatpush1.msra.mxu0 %v65
  %2420 = vmatprep.subr.mxu0 0.0
  %2421 = vmatpush1.msra.mxu0 %v66
  %2422 = vmatprep.subr.mxu0 0.0
  %2423 = vmatpush1.msra.mxu0 %v67
  %2424 = vmatprep.subr.mxu0 0.0
  %2425 = vmatpush1.msra.mxu0 %v68
  %2426 = vmatprep.subr.mxu0 0.0
  %2427 = vmatpush1.msra.mxu0 %v69
  %2428 = vmatprep.subr.mxu0 0.0
  %2429 = vmatpush1.msra.mxu0 %v70
  %2430 = vmatprep.subr.mxu0 0.0
  %2431 = vmatpush1.msra.mxu0 %v71
  %2432 = vmatprep.subr.mxu0 0.0
  %2433 = vmatpush1.msra.mxu0 %v72
  %2434 = vmatprep.mubr.f32.mxu0 %v2317
  %2435 = vmatmul.mubr.f32.gmra.mrb[0].mxu0 %v2316
  %v2436 = vpop.f32.mrb[0].mxu0
  %v2437 = vadd.f32 0.0, %v2436
  %v2438 = vpop.f32.mrb[0].mxu0
  %2439 = vmatprep.mubr.f32.mxu0 %v2320
  %2440 = vmatmul.mubr.f32.gmra.mrb[0].mxu0 %v2319
  %v2441 = vpop.f32.mrb[0].mxu0
  %v2442 = vadd.f32 0.0, %v2441
  %v2443 = vpop.f32.mrb[0].mxu0
  %2444 = vmatprep.mubr.f32.mxu0 %v2323
  %2445 = vmatmul.mubr.f32.gmra.mrb[0].mxu0 %v2322
  %v2446 = vpop.f32.mrb[0].mxu0
  %v2447 = vadd.f32 0.0, %v2446
  %v2448 = vpop.f32.mrb[0].mxu0
  %2449 = vmatprep.mubr.f32.mxu0 %v2326
  %2450 = vmatmul.mubr.f32.gmra.mrb[0].mxu0 %v2325
  %v2451 = vpop.f32.mrb[0].mxu0
  %v2452 = vadd.f32 0.0, %v2451
  %v2453 = vpop.f32.mrb[0].mxu0
  %2454 = vmatprep.mubr.f32.mxu0 %v2329
  %2455 = vmatmul.mubr.f32.gmra.mrb[0].mxu0 %v2328
  %v2456 = vpop.f32.mrb[0].mxu0
  %v2457 = vadd.f32 0.0, %v2456
  %v2458 = vpop.f32.mrb[0].mxu0
  %2459 = vmatprep.mubr.f32.mxu0 %v2332
  %2460 = vmatmul.mubr.f32.gmra.mrb[0].mxu0 %v2331
  %v2461 = vpop.f32.mrb[0].mxu0
  %v2462 = vadd.f32 0.0, %v2461
  %v2463 = vpop.f32.mrb[0].mxu0
  %2464 = vmatprep.mubr.f32.mxu0 %v2335
  %2465 = vmatmul.mubr.f32.gmra.mrb[0].mxu0 %v2334
  %v2466 = vpop.f32.mrb[0].mxu0
  %v2467 = vadd.f32 0.0, %v2466
  %v2468 = vpop.f32.mrb[0].mxu0
  %2469 = vmatprep.mubr.f32.mxu0 %v2338
  %2470 = vmatmul.mubr.f32.gmra.mrb[0].mxu0 %v2337
  %v2471 = vpop.f32.mrb[0].mxu0
  %v2472 = vadd.f32 0.0, %v2471
  %v2473 = vpop.f32.mrb[0].mxu0
  %2474 = vmatprep.mubr.f32.mxu0 %v2341
  %2475 = vmatmul.mubr.f32.gmra.mrb[0].mxu0 %v2340
  %v2476 = vpop.f32.mrb[0].mxu0
  %v2477 = vadd.f32 0.0, %v2476
  %v2478 = vpop.f32.mrb[0].mxu0
  %2479 = vdwg.mxu0
  %2480 = vmatprep.subr.mxu0 0.0
  %2481 = vmatpush1.msra.mxu0 %v73
  %2482 = vmatprep.subr.mxu0 0.0
  %2483 = vmatpush1.msra.mxu0 %v105
  %2484 = vmatprep.subr.mxu0 0.0
  %2485 = vmatpush1.msra.mxu0 0.0
  %2486 = vmatprep.subr.mxu0 0.0
  %2487 = vmatpush1.msra.mxu0 0.0
  %2488 = vmatprep.subr.mxu0 0.0
  %2489 = vmatpush1.msra.mxu0 0.0
  %2490 = vmatprep.subr.mxu0 0.0
  %2491 = vmatpush1.msra.mxu0 0.0
  %2492 = vmatprep.subr.mxu0 0.0
  %2493 = vmatpush1.msra.mxu0 0.0
  %2494 = vmatprep.subr.mxu0 0.0
  %2495 = vmatpush1.msra.mxu0 0.0
  %2496 = vmatprep.subr.mxu0 0.0
  %2497 = vmatpush1.msra.mxu0 0.0
  %2498 = vmatprep.subr.mxu0 0.0
  %2499 = vmatpush1.msra.mxu0 0.0
  %2500 = vmatprep.subr.mxu0 0.0
  %2501 = vmatpush1.msra.mxu0 0.0
  %2502 = vmatprep.subr.mxu0 0.0
  %2503 = vmatpush1.msra.mxu0 0.0
  %2504 = vmatprep.subr.mxu0 0.0
  %2505 = vmatpush1.msra.mxu0 0.0
  %2506 = vmatprep.subr.mxu0 0.0
  %2507 = vmatpush1.msra.mxu0 0.0
  %2508 = vmatprep.subr.mxu0 0.0
  %2509 = vmatpush1.msra.mxu0 0.0
  %2510 = vmatprep.subr.mxu0 0.0
  %2511 = vmatpush1.msra.mxu0 0.0
  %2512 = vmatprep.subr.mxu0 0.0
  %2513 = vmatpush1.msra.mxu0 0.0
  %2514 = vmatprep.subr.mxu0 0.0
  %2515 = vmatpush1.msra.mxu0 0.0
  %2516 = vmatprep.subr.mxu0 0.0
  %2517 = vmatpush1.msra.mxu0 0.0
  %2518 = vmatprep.subr.mxu0 0.0
  %2519 = vmatpush1.msra.mxu0 0.0
  %2520 = vmatprep.subr.mxu0 0.0
  %2521 = vmatpush1.msra.mxu0 0.0
  %2522 = vmatprep.subr.mxu0 0.0
  %2523 = vmatpush1.msra.mxu0 0.0
  %2524 = vmatprep.subr.mxu0 0.0
  %2525 = vmatpush1.msra.mxu0 0.0
  %2526 = vmatprep.subr.mxu0 0.0
  %2527 = vmatpush1.msra.mxu0 0.0
  %2528 = vmatprep.subr.mxu0 0.0
  %2529 = vmatpush1.msra.mxu0 0.0
  %2530 = vmatprep.subr.mxu0 0.0
  %2531 = vmatpush1.msra.mxu0 0.0
  %2532 = vmatprep.subr.mxu0 0.0
  %2533 = vmatpush1.msra.mxu0 0.0
  %2534 = vmatprep.subr.mxu0 0.0
  %2535 = vmatpush1.msra.mxu0 0.0
  %2536 = vmatprep.subr.mxu0 0.0
  %2537 = vmatpush1.msra.mxu0 0.0
  %2538 = vmatprep.subr.mxu0 0.0
  %2539 = vmatpush1.msra.mxu0 0.0
  %2540 = vmatprep.subr.mxu0 0.0
  %2541 = vmatpush1.msra.mxu0 0.0
  %2542 = vmatprep.subr.mxu0 0.0
  %2543 = vmatpush1.msra.mxu0 0.0
  %2544 = vmatprep.mubr.f32.mxu0 0.0
  %2545 = vmatmul.mubr.f32.gmra.mrb[0].mxu0 %v2344
  %v2546 = vpop.f32.mrb[0].mxu0
  %v2547 = vadd.f32 %v2437, %v2546
  %v2548 = vpop.f32.mrb[0].mxu0
  %2549 = vmatprep.mubr.f32.mxu0 0.0
  %2550 = vmatmul.mubr.f32.gmra.mrb[0].mxu0 %v2347
  %v2551 = vpop.f32.mrb[0].mxu0
  %v2552 = vadd.f32 %v2442, %v2551
  %v2553 = vpop.f32.mrb[0].mxu0
  %2554 = vmatprep.mubr.f32.mxu0 0.0
  %2555 = vmatmul.mubr.f32.gmra.mrb[0].mxu0 %v2350
  %v2556 = vpop.f32.mrb[0].mxu0
  %v2557 = vadd.f32 %v2447, %v2556
  %v2558 = vpop.f32.mrb[0].mxu0
  %2559 = vmatprep.mubr.f32.mxu0 0.0
  %2560 = vmatmul.mubr.f32.gmra.mrb[0].mxu0 %v2353
  %v2561 = vpop.f32.mrb[0].mxu0
  %v2562 = vadd.f32 %v2452, %v2561
  %v2563 = vpop.f32.mrb[0].mxu0
  %2564 = vmatprep.mubr.f32.mxu0 0.0
  %2565 = vmatmul.mubr.f32.gmra.mrb[0].mxu0 %v2356
  %v2566 = vpop.f32.mrb[0].mxu0
  %v2567 = vadd.f32 %v2457, %v2566
  %v2568 = vpop.f32.mrb[0].mxu0
  %2569 = vmatprep.mubr.f32.mxu0 0.0
  %2570 = vmatmul.mubr.f32.gmra.mrb[0].mxu0 %v2359
  %v2571 = vpop.f32.mrb[0].mxu0
  %v2572 = vadd.f32 %v2462, %v2571
  %v2573 = vpop.f32.mrb[0].mxu0
  %2574 = vmatprep.mubr.f32.mxu0 0.0
  %2575 = vmatmul.mubr.f32.gmra.mrb[0].mxu0 %v2362
  %v2576 = vpop.f32.mrb[0].mxu0
  %v2577 = vadd.f32 %v2467, %v2576
  %v2578 = vpop.f32.mrb[0].mxu0
  %2579 = vmatprep.mubr.f32.mxu0 0.0
  %2580 = vmatmul.mubr.f32.gmra.mrb[0].mxu0 %v2365
  %v2581 = vpop.f32.mrb[0].mxu0
  %v2582 = vadd.f32 %v2472, %v2581
  %v2583 = vpop.f32.mrb[0].mxu0
  %2584 = vmatprep.mubr.f32.mxu0 0.0
  %2585 = vmatmul.mubr.f32.gmra.mrb[0].mxu0 %v2368
  %v2586 = vpop.f32.mrb[0].mxu0
  %v2587 = vadd.f32 %v2477, %v2586
  %v2588 = vpop.f32.mrb[0].mxu0
  %2589 = vdwg.mxu0
  %v2590 = vmax.f32 %v2306, %v2547
  %v2591 = vmax.f32 %v2307, %v2552
  %v2592 = vmax.f32 %v2308, %v2557
  %v2593 = vmax.f32 %v2309, %v2562
  %v2594 = vmax.f32 %v2310, %v2567
  %v2595 = vmax.f32 %v2311, %v2572
  %v2596 = vmax.f32 %v2312, %v2577
  %v2597 = vmax.f32 %v2313, %v2582
  %v2598 = vmax.f32 %v2314, %v2587
  %v2599 = vld [vmem:[%s2] sm:$0x1]
  %v2601 = vlaneseq
  %v2602 = vshrl.u32 %v2601, 7
  %v2603 = vsub.s32 0, %v2602
  %v2604 = vrot.slane %v2599, %v2603
  %v2606 = vadd.f32 %v2590, %v2604
  %v2607 = vadd.f32 %v2591, %v2604
  %v2608 = vadd.f32 %v2592, %v2604
  %v2609 = vadd.f32 %v2593, %v2604
  %v2610 = vadd.f32 %v2594, %v2604
  %v2611 = vadd.f32 %v2595, %v2604
  %v2612 = vadd.f32 %v2596, %v2604
  %v2613 = vadd.f32 %v2597, %v2604
  %v2614 = vadd.f32 %v2598, %v2604
  %v2615 = vmax.f32 %v2606, 0.0
  %v2616 = vmax.f32 %v2607, 0.0
  %v2617 = vmax.f32 %v2608, 0.0
  %v2618 = vmax.f32 %v2609, 0.0
  %v2619 = vmax.f32 %v2610, 0.0
  %v2620 = vmax.f32 %v2611, 0.0
  %v2621 = vmax.f32 %v2612, 0.0
  %v2622 = vmax.f32 %v2613, 0.0
  %v2623 = vmax.f32 %v2614, 0.0
  %vm2624 = vcmask 244736
  %2625 = vst.msk [vmem:[%s3] sm:$0xff] %vm2624, %v2615
  %2626 = vst.msk [vmem:[%s3 + $0x8] sm:$0xff] %vm2624, %v2616
  %2627 = vst.msk [vmem:[%s3 + $0x10] sm:$0xff] %vm2624, %v2617
  %2628 = vst.msk [vmem:[%s3 + $0x18] sm:$0xff] %vm2624, %v2618
  %2629 = vst.msk [vmem:[%s3 + $0x20] sm:$0xff] %vm2624, %v2619
  %2630 = vst.msk [vmem:[%s3 + $0x28] sm:$0xff] %vm2624, %v2620
  %2631 = vst.msk [vmem:[%s3 + $0x30] sm:$0xff] %vm2624, %v2621
  %2632 = vst.msk [vmem:[%s3 + $0x38] sm:$0xff] %vm2624, %v2622
  %2633 = vst.msk [vmem:[%s3 + $0x40] sm:$0xff] %vm2624, %v2623
  // Predicated region
  $region14: #{simple_net_dropout_forward.4} parent=0 // pred_check
    _
  $region15: #{simple_net_dropout_forward.4} parent=0 // pred_check_branch
    %2635 = sbr.rel (0) target = $region17
  $region16: #{simple_net_dropout_forward.4} parent=0 // pred_region
    _
  $region17: #{simple_net_dropout_forward.4} parent=0 // pred_fallthru
    _
  // Predicated region
  $region18: #{simple_net_dropout_forward.4} parent=0 // pred_check
    _
  $region19: #{simple_net_dropout_forward.4} parent=0 // pred_check_branch
    %2637 = sbr.rel (0) target = $region21
  $region20: #{simple_net_dropout_forward.4} parent=0 // pred_region
    _
  $region21: #{simple_net_dropout_forward.4} parent=0 // pred_fallthru
    _

// kernel: simple_net_dropout_forward.5
$region0: #{simple_net_dropout_forward.5}
  #allocation0 [shape = 'u32[]', space=smem, size = 0x4, offset = 0x4, fixed_abs, tag = 'smem constant byte address 0x4 - core index']
  #allocation1 [shape = 'u32[144,128]{1,0:T(1,128)}', space=vmem, size = 0x12000, scoped, tag = 'internal scratch']
  %s0 = inlined_call_operand.vmem [shape: f32[8,1080], index: 0, kind: input, shape index: {}]
  %s1 = inlined_call_operand.vmem [shape: f32[1080,150], index: 1, kind: input, shape index: {}]
  %s2 = inlined_call_operand.vmem [shape: f32[1,150], index: 2, kind: input, shape index: {}]
  %s3 = inlined_call_operand.vmem [shape: f32[150,15], index: 3, kind: input, shape index: {}]
  %s4 = inlined_call_operand.vmem [shape: f32[1,15], index: 4, kind: input, shape index: {}]
  %s5 = inlined_call_operand.vmem [shape: f32[8,15], index: 5, kind: output, shape index: {}]
  %s6 = sld [smem:[#allocation0]]
  $region30: #{simple_net_dropout_forward.5} parent=0
    _
  %s8 = ssub.s32 1, %s6
  %s9 = scalar_select 0, %s8, %s6
  // Predicated region
  $region2: #{simple_net_dropout_forward.5} parent=0 // pred_check
    _
  $region3: #{simple_net_dropout_forward.5} parent=0 // pred_check_branch
    %11 = sbr.rel (0) target = $region5
  $region4: #{simple_net_dropout_forward.5} parent=0 // pred_region
    _
  $region5: #{simple_net_dropout_forward.5} parent=0 // pred_fallthru
    _
  // Predicated region
  $region6: #{simple_net_dropout_forward.5} parent=0 // pred_check
    _
  $region7: #{simple_net_dropout_forward.5} parent=0 // pred_check_branch
    %13 = sbr.rel (0) target = $region9
  $region8: #{simple_net_dropout_forward.5} parent=0 // pred_region
    _
  $region9: #{simple_net_dropout_forward.5} parent=0 // pred_fallthru
    _
  // Predicated region
  $region10: #{simple_net_dropout_forward.5} parent=0 // pred_check
    _
  $region11: #{simple_net_dropout_forward.5} parent=0 // pred_check_branch
    %15 = sbr.rel (0) target = $region13
  $region12: #{simple_net_dropout_forward.5} parent=0 // pred_region
    _
  $region13: #{simple_net_dropout_forward.5} parent=0 // pred_fallthru
    _
  // Predicated region
  $region14: #{simple_net_dropout_forward.5} parent=0 // pred_check
    _
  $region15: #{simple_net_dropout_forward.5} parent=0 // pred_check_branch
    %17 = sbr.rel (0) target = $region17
  $region16: #{simple_net_dropout_forward.5} parent=0 // pred_region
    _
  $region17: #{simple_net_dropout_forward.5} parent=0 // pred_fallthru
    _
  // Predicated region
  $region18: #{simple_net_dropout_forward.5} parent=0 // pred_check
    _
  $region19: #{simple_net_dropout_forward.5} parent=0 // pred_check_branch
    %19 = sbr.rel (0) target = $region21
  $region20: #{simple_net_dropout_forward.5} parent=0 // pred_region
    _
  $region21: #{simple_net_dropout_forward.5} parent=0 // pred_fallthru
    _
  %v20 = vld [vmem:[%s0] sm:$0xff]
  %v21 = vld [vmem:[%s0 + $0x8] sm:$0xff]
  %v22 = vld [vmem:[%s0 + $0x10] sm:$0xff]
  %v23 = vld [vmem:[%s0 + $0x18] sm:$0xff]
  %v24 = vld [vmem:[%s0 + $0x20] sm:$0xff]
  %v25 = vld [vmem:[%s0 + $0x28] sm:$0xff]
  %v26 = vld [vmem:[%s0 + $0x30] sm:$0xff]
  %v27 = vld [vmem:[%s0 + $0x38] sm:$0xff]
  %v28 = vld [vmem:[%s0 + $0x40] sm:$0xff]
  %v29 = vld [vmem:[%s1] sm:$0xff]
  %v30 = vld [vmem:[%s1 + $0x8] sm:$0xff]
  %v31 = vld [vmem:[%s1 + $0x10] sm:$0xff]
  %v32 = vld [vmem:[%s1 + $0x18] sm:$0xff]
  %v33 = vld [vmem:[%s1 + $0x20] sm:$0xff]
  %v34 = vld [vmem:[%s1 + $0x28] sm:$0xff]
  %v35 = vld [vmem:[%s1 + $0x30] sm:$0xff]
  %v36 = vld [vmem:[%s1 + $0x38] sm:$0xff]
  %v37 = vld [vmem:[%s1 + $0x40] sm:$0xff]
  %v38 = vld [vmem:[%s1 + $0x48] sm:$0xff]
  %v39 = vld [vmem:[%s1 + $0x50] sm:$0xff]
  %v40 = vld [vmem:[%s1 + $0x58] sm:$0xff]
  %v41 = vld [vmem:[%s1 + $0x60] sm:$0xff]
  %v42 = vld [vmem:[%s1 + $0x68] sm:$0xff]
  %v43 = vld [vmem:[%s1 + $0x70] sm:$0xff]
  %v44 = vld [vmem:[%s1 + $0x78] sm:$0xff]
  %v45 = vld [vmem:[%s1 + $0x80] sm:$0xff]
  %v46 = vld [vmem:[%s1 + $0x88] sm:$0xff]
  %v47 = vld [vmem:[%s1 + $0x90] sm:$0xff]
  %v48 = vld [vmem:[%s1 + $0x98] sm:$0xff]
  %v49 = vld [vmem:[%s1 + $0xa0] sm:$0xff]
  %v50 = vld [vmem:[%s1 + $0xa8] sm:$0xff]
  %v51 = vld [vmem:[%s1 + $0xb0] sm:$0xff]
  %v52 = vld [vmem:[%s1 + $0xb8] sm:$0xff]
  %v53 = vld [vmem:[%s1 + $0xc0] sm:$0xff]
  %v54 = vld [vmem:[%s1 + $0xc8] sm:$0xff]
  %v55 = vld [vmem:[%s1 + $0xd0] sm:$0xff]
  %v56 = vld [vmem:[%s1 + $0xd8] sm:$0xff]
  %v57 = vld [vmem:[%s1 + $0xe0] sm:$0xff]
  %v58 = vld [vmem:[%s1 + $0xe8] sm:$0xff]
  %v59 = vld [vmem:[%s1 + $0xf0] sm:$0xff]
  %v60 = vld [vmem:[%s1 + $0xf8] sm:$0xff]
  %v61 = vld [vmem:[%s1 + $0x100] sm:$0xff]
  %v62 = vld [vmem:[%s1 + $0x108] sm:$0xff]
  %v63 = vld [vmem:[%s1 + $0x110] sm:$0xff]
  %v64 = vld [vmem:[%s1 + $0x118] sm:$0xff]
  %v65 = vld [vmem:[%s1 + $0x120] sm:$0xff]
  %v66 = vld [vmem:[%s1 + $0x128] sm:$0xff]
  %v67 = vld [vmem:[%s1 + $0x130] sm:$0xff]
  %v68 = vld [vmem:[%s1 + $0x138] sm:$0xff]
  %v69 = vld [vmem:[%s1 + $0x140] sm:$0xff]
  %v70 = vld [vmem:[%s1 + $0x148] sm:$0xff]
  %v71 = vld [vmem:[%s1 + $0x150] sm:$0xff]
  %v72 = vld [vmem:[%s1 + $0x158] sm:$0xff]
  %v73 = vld [vmem:[%s1 + $0x160] sm:$0xff]
  %v74 = vld [vmem:[%s1 + $0x168] sm:$0xff]
  %v75 = vld [vmem:[%s1 + $0x170] sm:$0xff]
  %v76 = vld [vmem:[%s1 + $0x178] sm:$0xff]
  %v77 = vld [vmem:[%s1 + $0x180] sm:$0xff]
  %v78 = vld [vmem:[%s1 + $0x188] sm:$0xff]
  %v79 = vld [vmem:[%s1 + $0x190] sm:$0xff]
  %v80 = vld [vmem:[%s1 + $0x198] sm:$0xff]
  %v81 = vld [vmem:[%s1 + $0x1a0] sm:$0xff]
  %v82 = vld [vmem:[%s1 + $0x1a8] sm:$0xff]
  %v83 = vld [vmem:[%s1 + $0x1b0] sm:$0xff]
  %v84 = vld [vmem:[%s1 + $0x1b8] sm:$0xff]
  %v85 = vld [vmem:[%s1 + $0x1c0] sm:$0xff]
  %v86 = vld [vmem:[%s1 + $0x1c8] sm:$0xff]
  %v87 = vld [vmem:[%s1 + $0x1d0] sm:$0xff]
  %v88 = vld [vmem:[%s1 + $0x1d8] sm:$0xff]
  %v89 = vld [vmem:[%s1 + $0x1e0] sm:$0xff]
  %v90 = vld [vmem:[%s1 + $0x1e8] sm:$0xff]
  %v91 = vld [vmem:[%s1 + $0x1f0] sm:$0xff]
  %v92 = vld [vmem:[%s1 + $0x1f8] sm:$0xff]
  %v93 = vld [vmem:[%s1 + $0x200] sm:$0xff]
  %v94 = vld [vmem:[%s1 + $0x208] sm:$0xff]
  %v95 = vld [vmem:[%s1 + $0x210] sm:$0xff]
  %v96 = vld [vmem:[%s1 + $0x218] sm:$0xff]
  %v97 = vld [vmem:[%s1 + $0x220] sm:$0xff]
  %v98 = vld [vmem:[%s1 + $0x228] sm:$0xff]
  %v99 = vld [vmem:[%s1 + $0x230] sm:$0xff]
  %v100 = vld [vmem:[%s1 + $0x238] sm:$0xff]
  %v101 = vld [vmem:[%s1 + $0x240] sm:$0xff]
  %v102 = vld [vmem:[%s1 + $0x248] sm:$0xff]
  %v103 = vld [vmem:[%s1 + $0x250] sm:$0xff]
  %v104 = vld [vmem:[%s1 + $0x258] sm:$0xff]
  %v105 = vld [vmem:[%s1 + $0x260] sm:$0xff]
  %v106 = vld [vmem:[%s1 + $0x268] sm:$0xff]
  %v107 = vld [vmem:[%s1 + $0x270] sm:$0xff]
  %v108 = vld [vmem:[%s1 + $0x278] sm:$0xff]
  %v109 = vld [vmem:[%s1 + $0x280] sm:$0xff]
  %v110 = vld [vmem:[%s1 + $0x288] sm:$0xff]
  %v111 = vld [vmem:[%s1 + $0x290] sm:$0xff]
  %v112 = vld [vmem:[%s1 + $0x298] sm:$0xff]
  %v113 = vld [vmem:[%s1 + $0x2a0] sm:$0xff]
  %v114 = vld [vmem:[%s1 + $0x2a8] sm:$0xff]
  %v115 = vld [vmem:[%s1 + $0x2b0] sm:$0xff]
  %v116 = vld [vmem:[%s1 + $0x2b8] sm:$0xff]
  %v117 = vld [vmem:[%s1 + $0x2c0] sm:$0xff]
  %v118 = vld [vmem:[%s1 + $0x2c8] sm:$0xff]
  %v119 = vld [vmem:[%s1 + $0x2d0] sm:$0xff]
  %v120 = vld [vmem:[%s1 + $0x2d8] sm:$0xff]
  %v121 = vld [vmem:[%s1 + $0x2e0] sm:$0xff]
  %v122 = vld [vmem:[%s1 + $0x2e8] sm:$0xff]
  %v123 = vld [vmem:[%s1 + $0x2f0] sm:$0xff]
  %v124 = vld [vmem:[%s1 + $0x2f8] sm:$0xff]
  %v125 = vld [vmem:[%s1 + $0x300] sm:$0xff]
  %v126 = vld [vmem:[%s1 + $0x308] sm:$0xff]
  %v127 = vld [vmem:[%s1 + $0x310] sm:$0xff]
  %v128 = vld [vmem:[%s1 + $0x318] sm:$0xff]
  %v129 = vld [vmem:[%s1 + $0x320] sm:$0xff]
  %v130 = vld [vmem:[%s1 + $0x328] sm:$0xff]
  %v131 = vld [vmem:[%s1 + $0x330] sm:$0xff]
  %v132 = vld [vmem:[%s1 + $0x338] sm:$0xff]
  %v133 = vld [vmem:[%s1 + $0x340] sm:$0xff]
  %v134 = vld [vmem:[%s1 + $0x348] sm:$0xff]
  %v135 = vld [vmem:[%s1 + $0x350] sm:$0xff]
  %v136 = vld [vmem:[%s1 + $0x358] sm:$0xff]
  %v137 = vld [vmem:[%s1 + $0x360] sm:$0xff]
  %v138 = vld [vmem:[%s1 + $0x368] sm:$0xff]
  %v139 = vld [vmem:[%s1 + $0x370] sm:$0xff]
  %v140 = vld [vmem:[%s1 + $0x378] sm:$0xff]
  %v141 = vld [vmem:[%s1 + $0x380] sm:$0xff]
  %v142 = vld [vmem:[%s1 + $0x388] sm:$0xff]
  %v143 = vld [vmem:[%s1 + $0x390] sm:$0xff]
  %v144 = vld [vmem:[%s1 + $0x398] sm:$0xff]
  %v145 = vld [vmem:[%s1 + $0x3a0] sm:$0xff]
  %v146 = vld [vmem:[%s1 + $0x3a8] sm:$0xff]
  %v147 = vld [vmem:[%s1 + $0x3b0] sm:$0xff]
  %v148 = vld [vmem:[%s1 + $0x3b8] sm:$0xff]
  %v149 = vld [vmem:[%s1 + $0x3c0] sm:$0xff]
  %v150 = vld [vmem:[%s1 + $0x3c8] sm:$0xff]
  %v151 = vld [vmem:[%s1 + $0x3d0] sm:$0xff]
  %v152 = vld [vmem:[%s1 + $0x3d8] sm:$0xff]
  %v153 = vld [vmem:[%s1 + $0x3e0] sm:$0xff]
  %v154 = vld [vmem:[%s1 + $0x3e8] sm:$0xff]
  %v155 = vld [vmem:[%s1 + $0x3f0] sm:$0xff]
  %v156 = vld [vmem:[%s1 + $0x3f8] sm:$0xff]
  %v157 = vld [vmem:[%s1 + $0x400] sm:$0xff]
  %v158 = vld [vmem:[%s1 + $0x408] sm:$0xff]
  %v159 = vld [vmem:[%s1 + $0x410] sm:$0xff]
  %v160 = vld [vmem:[%s1 + $0x418] sm:$0xff]
  %v161 = vld [vmem:[%s1 + $0x420] sm:$0xff]
  %v162 = vld [vmem:[%s1 + $0x428] sm:$0xff]
  %v163 = vld [vmem:[%s1 + $0x430] sm:$0xff]
  %v164 = vld [vmem:[%s1 + $0x438] sm:$0xff]
  %v165 = vld [vmem:[%s1 + $0x440] sm:$0xff]
  %v166 = vld [vmem:[%s1 + $0x448] sm:$0xff]
  %v167 = vld [vmem:[%s1 + $0x450] sm:$0xff]
  %v168 = vld [vmem:[%s1 + $0x458] sm:$0xff]
  %v169 = vld [vmem:[%s1 + $0x460] sm:$0xff]
  %v170 = vld [vmem:[%s1 + $0x468] sm:$0xff]
  %v171 = vld [vmem:[%s1 + $0x470] sm:$0xff]
  %v172 = vld [vmem:[%s1 + $0x478] sm:$0xff]
  %v173 = vld [vmem:[%s1 + $0x480] sm:$0xff]
  %v174 = vld [vmem:[%s1 + $0x488] sm:$0xff]
  %v175 = vld [vmem:[%s1 + $0x490] sm:$0xff]
  %v176 = vld [vmem:[%s1 + $0x498] sm:$0xff]
  %v177 = vld [vmem:[%s1 + $0x4a0] sm:$0xff]
  %v178 = vld [vmem:[%s1 + $0x4a8] sm:$0xff]
  %v179 = vld [vmem:[%s1 + $0x4b0] sm:$0xff]
  %v180 = vld [vmem:[%s1 + $0x4b8] sm:$0xff]
  %v181 = vld [vmem:[%s1 + $0x4c0] sm:$0xff]
  %v182 = vld [vmem:[%s1 + $0x4c8] sm:$0xff]
  %v183 = vld [vmem:[%s1 + $0x4d0] sm:$0xff]
  %v184 = vld [vmem:[%s1 + $0x4d8] sm:$0xff]
  %v185 = vld [vmem:[%s1 + $0x4e0] sm:$0xff]
  %v186 = vld [vmem:[%s1 + $0x4e8] sm:$0xff]
  %v187 = vld [vmem:[%s1 + $0x4f0] sm:$0xff]
  %v188 = vld [vmem:[%s1 + $0x4f8] sm:$0xff]
  %v189 = vld [vmem:[%s1 + $0x500] sm:$0xff]
  %v190 = vld [vmem:[%s1 + $0x508] sm:$0xff]
  %v191 = vld [vmem:[%s1 + $0x510] sm:$0xff]
  %v192 = vld [vmem:[%s1 + $0x518] sm:$0xff]
  %v193 = vld [vmem:[%s1 + $0x520] sm:$0xff]
  %v194 = vld [vmem:[%s1 + $0x528] sm:$0xff]
  %v195 = vld [vmem:[%s1 + $0x530] sm:$0xff]
  %v196 = vld [vmem:[%s1 + $0x538] sm:$0xff]
  %v197 = vld [vmem:[%s1 + $0x540] sm:$0xff]
  %v198 = vld [vmem:[%s1 + $0x548] sm:$0xff]
  %v199 = vld [vmem:[%s1 + $0x550] sm:$0xff]
  %v200 = vld [vmem:[%s1 + $0x558] sm:$0xff]
  %v201 = vld [vmem:[%s1 + $0x560] sm:$0xff]
  %v202 = vld [vmem:[%s1 + $0x568] sm:$0xff]
  %v203 = vld [vmem:[%s1 + $0x570] sm:$0xff]
  %v204 = vld [vmem:[%s1 + $0x578] sm:$0xff]
  %v205 = vld [vmem:[%s1 + $0x580] sm:$0xff]
  %v206 = vld [vmem:[%s1 + $0x588] sm:$0xff]
  %v207 = vld [vmem:[%s1 + $0x590] sm:$0xff]
  %v208 = vld [vmem:[%s1 + $0x598] sm:$0xff]
  %v209 = vld [vmem:[%s1 + $0x5a0] sm:$0xff]
  %v210 = vld [vmem:[%s1 + $0x5a8] sm:$0xff]
  %v211 = vld [vmem:[%s1 + $0x5b0] sm:$0xff]
  %v212 = vld [vmem:[%s1 + $0x5b8] sm:$0xff]
  %v213 = vld [vmem:[%s1 + $0x5c0] sm:$0xff]
  %v214 = vld [vmem:[%s1 + $0x5c8] sm:$0xff]
  %v215 = vld [vmem:[%s1 + $0x5d0] sm:$0xff]
  %v216 = vld [vmem:[%s1 + $0x5d8] sm:$0xff]
  %v217 = vld [vmem:[%s1 + $0x5e0] sm:$0xff]
  %v218 = vld [vmem:[%s1 + $0x5e8] sm:$0xff]
  %v219 = vld [vmem:[%s1 + $0x5f0] sm:$0xff]
  %v220 = vld [vmem:[%s1 + $0x5f8] sm:$0xff]
  %v221 = vld [vmem:[%s1 + $0x600] sm:$0xff]
  %v222 = vld [vmem:[%s1 + $0x608] sm:$0xff]
  %v223 = vld [vmem:[%s1 + $0x610] sm:$0xff]
  %v224 = vld [vmem:[%s1 + $0x618] sm:$0xff]
  %v225 = vld [vmem:[%s1 + $0x620] sm:$0xff]
  %v226 = vld [vmem:[%s1 + $0x628] sm:$0xff]
  %v227 = vld [vmem:[%s1 + $0x630] sm:$0xff]
  %v228 = vld [vmem:[%s1 + $0x638] sm:$0xff]
  %v229 = vld [vmem:[%s1 + $0x640] sm:$0xff]
  %v230 = vld [vmem:[%s1 + $0x648] sm:$0xff]
  %v231 = vld [vmem:[%s1 + $0x650] sm:$0xff]
  %v232 = vld [vmem:[%s1 + $0x658] sm:$0xff]
  %v233 = vld [vmem:[%s1 + $0x660] sm:$0xff]
  %v234 = vld [vmem:[%s1 + $0x668] sm:$0xff]
  %v235 = vld [vmem:[%s1 + $0x670] sm:$0xff]
  %v236 = vld [vmem:[%s1 + $0x678] sm:$0xff]
  %v237 = vld [vmem:[%s1 + $0x680] sm:$0xff]
  %v238 = vld [vmem:[%s1 + $0x688] sm:$0xff]
  %v239 = vld [vmem:[%s1 + $0x690] sm:$0xff]
  %v240 = vld [vmem:[%s1 + $0x698] sm:$0xff]
  %v241 = vld [vmem:[%s1 + $0x6a0] sm:$0xff]
  %v242 = vld [vmem:[%s1 + $0x6a8] sm:$0xff]
  %v243 = vld [vmem:[%s1 + $0x6b0] sm:$0xff]
  %v244 = vld [vmem:[%s1 + $0x6b8] sm:$0xff]
  %v245 = vld [vmem:[%s1 + $0x6c0] sm:$0xff]
  %v246 = vld [vmem:[%s1 + $0x6c8] sm:$0xff]
  %v247 = vld [vmem:[%s1 + $0x6d0] sm:$0xff]
  %v248 = vld [vmem:[%s1 + $0x6d8] sm:$0xff]
  %v249 = vld [vmem:[%s1 + $0x6e0] sm:$0xff]
  %v250 = vld [vmem:[%s1 + $0x6e8] sm:$0xff]
  %v251 = vld [vmem:[%s1 + $0x6f0] sm:$0xff]
  %v252 = vld [vmem:[%s1 + $0x6f8] sm:$0xff]
  %v253 = vld [vmem:[%s1 + $0x700] sm:$0xff]
  %v254 = vld [vmem:[%s1 + $0x708] sm:$0xff]
  %v255 = vld [vmem:[%s1 + $0x710] sm:$0xff]
  %v256 = vld [vmem:[%s1 + $0x718] sm:$0xff]
  %v257 = vld [vmem:[%s1 + $0x720] sm:$0xff]
  %v258 = vld [vmem:[%s1 + $0x728] sm:$0xff]
  %v259 = vld [vmem:[%s1 + $0x730] sm:$0xff]
  %v260 = vld [vmem:[%s1 + $0x738] sm:$0xff]
  %v261 = vld [vmem:[%s1 + $0x740] sm:$0xff]
  %v262 = vld [vmem:[%s1 + $0x748] sm:$0xff]
  %v263 = vld [vmem:[%s1 + $0x750] sm:$0xff]
  %v264 = vld [vmem:[%s1 + $0x758] sm:$0xff]
  %v265 = vld [vmem:[%s1 + $0x760] sm:$0xff]
  %v266 = vld [vmem:[%s1 + $0x768] sm:$0xff]
  %v267 = vld [vmem:[%s1 + $0x770] sm:$0xff]
  %v268 = vld [vmem:[%s1 + $0x778] sm:$0xff]
  %v269 = vld [vmem:[%s1 + $0x780] sm:$0xff]
  %v270 = vld [vmem:[%s1 + $0x788] sm:$0xff]
  %v271 = vld [vmem:[%s1 + $0x790] sm:$0xff]
  %v272 = vld [vmem:[%s1 + $0x798] sm:$0xff]
  %v273 = vld [vmem:[%s1 + $0x7a0] sm:$0xff]
  %v274 = vld [vmem:[%s1 + $0x7a8] sm:$0xff]
  %v275 = vld [vmem:[%s1 + $0x7b0] sm:$0xff]
  %v276 = vld [vmem:[%s1 + $0x7b8] sm:$0xff]
  %v277 = vld [vmem:[%s1 + $0x7c0] sm:$0xff]
  %v278 = vld [vmem:[%s1 + $0x7c8] sm:$0xff]
  %v279 = vld [vmem:[%s1 + $0x7d0] sm:$0xff]
  %v280 = vld [vmem:[%s1 + $0x7d8] sm:$0xff]
  %v281 = vld [vmem:[%s1 + $0x7e0] sm:$0xff]
  %v282 = vld [vmem:[%s1 + $0x7e8] sm:$0xff]
  %v283 = vld [vmem:[%s1 + $0x7f0] sm:$0xff]
  %v284 = vld [vmem:[%s1 + $0x7f8] sm:$0xff]
  %v285 = vld [vmem:[%s1 + $0x800] sm:$0xff]
  %v286 = vld [vmem:[%s1 + $0x808] sm:$0xff]
  %v287 = vld [vmem:[%s1 + $0x810] sm:$0xff]
  %v288 = vld [vmem:[%s1 + $0x818] sm:$0xff]
  %v289 = vld [vmem:[%s1 + $0x820] sm:$0xff]
  %v290 = vld [vmem:[%s1 + $0x828] sm:$0xff]
  %v291 = vld [vmem:[%s1 + $0x830] sm:$0xff]
  %v292 = vld [vmem:[%s1 + $0x838] sm:$0xff]
  %v293 = vld [vmem:[%s1 + $0x840] sm:$0xff]
  %v294 = vld [vmem:[%s1 + $0x848] sm:$0xff]
  %v295 = vld [vmem:[%s1 + $0x850] sm:$0xff]
  %v296 = vld [vmem:[%s1 + $0x858] sm:$0xff]
  %v297 = vld [vmem:[%s1 + $0x860] sm:$0xff]
  %v298 = vld [vmem:[%s1 + $0x868] sm:$0xff]
  %v299 = vld [vmem:[%s2] sm:$0x3]
  %v301 = vlaneseq
  %v302 = vshrl.u32 %v301, 7
  %v303 = vsub.s32 0, %v302
  %v304 = vrot.slane %v299, %v303
  %v305 = vlaneseq
  %v306 = vshrl.u32 %v305, 7
  %v307 = vsub.s32 1, %v306
  %v308 = vrot.slane %v299, %v307
  %vm311 = vcmask 457728
  %v313 = vsel %vm311, %v28, 0
  %315 = vmatprep.subr.mxu0 %v30
  %316 = vmatpush1.msra.mxu0 %v29
  %317 = vmatprep.subr.mxu0 %v32
  %318 = vmatpush1.msra.mxu0 %v31
  %319 = vmatprep.subr.mxu0 %v34
  %320 = vmatpush1.msra.mxu0 %v33
  %321 = vmatprep.subr.mxu0 %v36
  %322 = vmatpush1.msra.mxu0 %v35
  %323 = vmatprep.subr.mxu0 %v38
  %324 = vmatpush1.msra.mxu0 %v37
  %325 = vmatprep.subr.mxu0 %v40
  %326 = vmatpush1.msra.mxu0 %v39
  %327 = vmatprep.subr.mxu0 %v42
  %328 = vmatpush1.msra.mxu0 %v41
  %329 = vmatprep.subr.mxu0 %v44
  %330 = vmatpush1.msra.mxu0 %v43
  %331 = vmatprep.subr.mxu0 %v46
  %332 = vmatpush1.msra.mxu0 %v45
  %333 = vmatprep.subr.mxu0 %v48
  %334 = vmatpush1.msra.mxu0 %v47
  %335 = vmatprep.subr.mxu0 %v50
  %336 = vmatpush1.msra.mxu0 %v49
  %337 = vmatprep.subr.mxu0 %v52
  %338 = vmatpush1.msra.mxu0 %v51
  %339 = vmatprep.subr.mxu0 %v54
  %340 = vmatpush1.msra.mxu0 %v53
  %341 = vmatprep.subr.mxu0 %v56
  %342 = vmatpush1.msra.mxu0 %v55
  %343 = vmatprep.subr.mxu0 %v58
  %344 = vmatpush1.msra.mxu0 %v57
  %345 = vmatprep.subr.mxu0 %v60
  %346 = vmatpush1.msra.mxu0 %v59
  %347 = vmatprep.subr.mxu0 %v62
  %348 = vmatpush1.msra.mxu0 %v61
  %349 = vmatprep.subr.mxu0 %v64
  %350 = vmatpush1.msra.mxu0 %v63
  %351 = vmatprep.subr.mxu0 %v66
  %352 = vmatpush1.msra.mxu0 %v65
  %353 = vmatprep.subr.mxu0 %v68
  %354 = vmatpush1.msra.mxu0 %v67
  %355 = vmatprep.subr.mxu0 %v70
  %356 = vmatpush1.msra.mxu0 %v69
  %357 = vmatprep.subr.mxu0 %v72
  %358 = vmatpush1.msra.mxu0 %v71
  %359 = vmatprep.subr.mxu0 %v74
  %360 = vmatpush1.msra.mxu0 %v73
  %361 = vmatprep.subr.mxu0 %v76
  %362 = vmatpush1.msra.mxu0 %v75
  %363 = vmatprep.subr.mxu0 %v78
  %364 = vmatpush1.msra.mxu0 %v77
  %365 = vmatprep.subr.mxu0 %v80
  %366 = vmatpush1.msra.mxu0 %v79
  %367 = vmatprep.subr.mxu0 %v82
  %368 = vmatpush1.msra.mxu0 %v81
  %369 = vmatprep.subr.mxu0 %v84
  %370 = vmatpush1.msra.mxu0 %v83
  %371 = vmatprep.subr.mxu0 %v86
  %372 = vmatpush1.msra.mxu0 %v85
  %373 = vmatprep.subr.mxu0 %v88
  %374 = vmatpush1.msra.mxu0 %v87
  %375 = vmatprep.subr.mxu0 %v90
  %376 = vmatpush1.msra.mxu0 %v89
  %377 = vmatprep.subr.mxu0 %v92
  %378 = vmatpush1.msra.mxu0 %v91
  %379 = vmatprep.mubr.f32.mxu0 %v21
  %380 = vmatmul.mubr.f32.gmra.mrb[0].mxu0 %v20
  %v381 = vpop.f32.mrb[0].mxu0
  %v382 = vadd.f32 %v304, %v381
  %v383 = vpop.f32.mrb[0].mxu0
  %v384 = vadd.f32 %v308, %v383
  %385 = vdwg.mxu0
  %386 = vmatprep.subr.mxu0 %v94
  %387 = vmatpush1.msra.mxu0 %v93
  %388 = vmatprep.subr.mxu0 %v96
  %389 = vmatpush1.msra.mxu0 %v95
  %390 = vmatprep.subr.mxu0 %v98
  %391 = vmatpush1.msra.mxu0 %v97
  %392 = vmatprep.subr.mxu0 %v100
  %393 = vmatpush1.msra.mxu0 %v99
  %394 = vmatprep.subr.mxu0 %v102
  %395 = vmatpush1.msra.mxu0 %v101
  %396 = vmatprep.subr.mxu0 %v104
  %397 = vmatpush1.msra.mxu0 %v103
  %398 = vmatprep.subr.mxu0 %v106
  %399 = vmatpush1.msra.mxu0 %v105
  %400 = vmatprep.subr.mxu0 %v108
  %401 = vmatpush1.msra.mxu0 %v107
  %402 = vmatprep.subr.mxu0 %v110
  %403 = vmatpush1.msra.mxu0 %v109
  %404 = vmatprep.subr.mxu0 %v112
  %405 = vmatpush1.msra.mxu0 %v111
  %406 = vmatprep.subr.mxu0 %v114
  %407 = vmatpush1.msra.mxu0 %v113
  %408 = vmatprep.subr.mxu0 %v116
  %409 = vmatpush1.msra.mxu0 %v115
  %410 = vmatprep.subr.mxu0 %v118
  %411 = vmatpush1.msra.mxu0 %v117
  %412 = vmatprep.subr.mxu0 %v120
  %413 = vmatpush1.msra.mxu0 %v119
  %414 = vmatprep.subr.mxu0 %v122
  %415 = vmatpush1.msra.mxu0 %v121
  %416 = vmatprep.subr.mxu0 %v124
  %417 = vmatpush1.msra.mxu0 %v123
  %418 = vmatprep.subr.mxu0 %v126
  %419 = vmatpush1.msra.mxu0 %v125
  %420 = vmatprep.subr.mxu0 %v128
  %421 = vmatpush1.msra.mxu0 %v127
  %422 = vmatprep.subr.mxu0 %v130
  %423 = vmatpush1.msra.mxu0 %v129
  %424 = vmatprep.subr.mxu0 %v132
  %425 = vmatpush1.msra.mxu0 %v131
  %426 = vmatprep.subr.mxu0 %v134
  %427 = vmatpush1.msra.mxu0 %v133
  %428 = vmatprep.subr.mxu0 %v136
  %429 = vmatpush1.msra.mxu0 %v135
  %430 = vmatprep.subr.mxu0 %v138
  %431 = vmatpush1.msra.mxu0 %v137
  %432 = vmatprep.subr.mxu0 %v140
  %433 = vmatpush1.msra.mxu0 %v139
  %434 = vmatprep.subr.mxu0 %v142
  %435 = vmatpush1.msra.mxu0 %v141
  %436 = vmatprep.subr.mxu0 %v144
  %437 = vmatpush1.msra.mxu0 %v143
  %438 = vmatprep.subr.mxu0 %v146
  %439 = vmatpush1.msra.mxu0 %v145
  %440 = vmatprep.subr.mxu0 %v148
  %441 = vmatpush1.msra.mxu0 %v147
  %442 = vmatprep.subr.mxu0 %v150
  %443 = vmatpush1.msra.mxu0 %v149
  %444 = vmatprep.subr.mxu0 %v152
  %445 = vmatpush1.msra.mxu0 %v151
  %446 = vmatprep.subr.mxu0 %v154
  %447 = vmatpush1.msra.mxu0 %v153
  %448 = vmatprep.subr.mxu0 %v156
  %449 = vmatpush1.msra.mxu0 %v155
  %450 = vmatprep.mubr.f32.mxu0 %v23
  %451 = vmatmul.mubr.f32.gmra.mrb[0].mxu0 %v22
  %v452 = vpop.f32.mrb[0].mxu0
  %v453 = vadd.f32 %v382, %v452
  %v454 = vpop.f32.mrb[0].mxu0
  %v455 = vadd.f32 %v384, %v454
  %456 = vdwg.mxu0
  %457 = vmatprep.subr.mxu0 %v158
  %458 = vmatpush1.msra.mxu0 %v157
  %459 = vmatprep.subr.mxu0 %v160
  %460 = vmatpush1.msra.mxu0 %v159
  %461 = vmatprep.subr.mxu0 %v162
  %462 = vmatpush1.msra.mxu0 %v161
  %463 = vmatprep.subr.mxu0 %v164
  %464 = vmatpush1.msra.mxu0 %v163
  %465 = vmatprep.subr.mxu0 %v166
  %466 = vmatpush1.msra.mxu0 %v165
  %467 = vmatprep.subr.mxu0 %v168
  %468 = vmatpush1.msra.mxu0 %v167
  %469 = vmatprep.subr.mxu0 %v170
  %470 = vmatpush1.msra.mxu0 %v169
  %471 = vmatprep.subr.mxu0 %v172
  %472 = vmatpush1.msra.mxu0 %v171
  %473 = vmatprep.subr.mxu0 %v174
  %474 = vmatpush1.msra.mxu0 %v173
  %475 = vmatprep.subr.mxu0 %v176
  %476 = vmatpush1.msra.mxu0 %v175
  %477 = vmatprep.subr.mxu0 %v178
  %478 = vmatpush1.msra.mxu0 %v177
  %479 = vmatprep.subr.mxu0 %v180
  %480 = vmatpush1.msra.mxu0 %v179
  %481 = vmatprep.subr.mxu0 %v182
  %482 = vmatpush1.msra.mxu0 %v181
  %483 = vmatprep.subr.mxu0 %v184
  %484 = vmatpush1.msra.mxu0 %v183
  %485 = vmatprep.subr.mxu0 %v186
  %486 = vmatpush1.msra.mxu0 %v185
  %487 = vmatprep.subr.mxu0 %v188
  %488 = vmatpush1.msra.mxu0 %v187
  %489 = vmatprep.subr.mxu0 %v190
  %490 = vmatpush1.msra.mxu0 %v189
  %491 = vmatprep.subr.mxu0 %v192
  %492 = vmatpush1.msra.mxu0 %v191
  %493 = vmatprep.subr.mxu0 %v194
  %494 = vmatpush1.msra.mxu0 %v193
  %495 = vmatprep.subr.mxu0 %v196
  %496 = vmatpush1.msra.mxu0 %v195
  %497 = vmatprep.subr.mxu0 %v198
  %498 = vmatpush1.msra.mxu0 %v197
  %499 = vmatprep.subr.mxu0 %v200
  %500 = vmatpush1.msra.mxu0 %v199
  %501 = vmatprep.subr.mxu0 %v202
  %502 = vmatpush1.msra.mxu0 %v201
  %503 = vmatprep.subr.mxu0 %v204
  %504 = vmatpush1.msra.mxu0 %v203
  %505 = vmatprep.subr.mxu0 %v206
  %506 = vmatpush1.msra.mxu0 %v205
  %507 = vmatprep.subr.mxu0 %v208
  %508 = vmatpush1.msra.mxu0 %v207
  %509 = vmatprep.subr.mxu0 %v210
  %510 = vmatpush1.msra.mxu0 %v209
  %511 = vmatprep.subr.mxu0 %v212
  %512 = vmatpush1.msra.mxu0 %v211
  %513 = vmatprep.subr.mxu0 %v214
  %514 = vmatpush1.msra.mxu0 %v213
  %515 = vmatprep.subr.mxu0 %v216
  %516 = vmatpush1.msra.mxu0 %v215
  %517 = vmatprep.subr.mxu0 %v218
  %518 = vmatpush1.msra.mxu0 %v217
  %519 = vmatprep.subr.mxu0 %v220
  %520 = vmatpush1.msra.mxu0 %v219
  %521 = vmatprep.mubr.f32.mxu0 %v25
  %522 = vmatmul.mubr.f32.gmra.mrb[0].mxu0 %v24
  %v523 = vpop.f32.mrb[0].mxu0
  %v524 = vadd.f32 %v453, %v523
  %v525 = vpop.f32.mrb[0].mxu0
  %v526 = vadd.f32 %v455, %v525
  %527 = vdwg.mxu0
  %528 = vmatprep.subr.mxu0 %v222
  %529 = vmatpush1.msra.mxu0 %v221
  %530 = vmatprep.subr.mxu0 %v224
  %531 = vmatpush1.msra.mxu0 %v223
  %532 = vmatprep.subr.mxu0 %v226
  %533 = vmatpush1.msra.mxu0 %v225
  %534 = vmatprep.subr.mxu0 %v228
  %535 = vmatpush1.msra.mxu0 %v227
  %536 = vmatprep.subr.mxu0 %v230
  %537 = vmatpush1.msra.mxu0 %v229
  %538 = vmatprep.subr.mxu0 %v232
  %539 = vmatpush1.msra.mxu0 %v231
  %540 = vmatprep.subr.mxu0 %v234
  %541 = vmatpush1.msra.mxu0 %v233
  %542 = vmatprep.subr.mxu0 %v236
  %543 = vmatpush1.msra.mxu0 %v235
  %544 = vmatprep.subr.mxu0 %v238
  %545 = vmatpush1.msra.mxu0 %v237
  %546 = vmatprep.subr.mxu0 %v240
  %547 = vmatpush1.msra.mxu0 %v239
  %548 = vmatprep.subr.mxu0 %v242
  %549 = vmatpush1.msra.mxu0 %v241
  %550 = vmatprep.subr.mxu0 %v244
  %551 = vmatpush1.msra.mxu0 %v243
  %552 = vmatprep.subr.mxu0 %v246
  %553 = vmatpush1.msra.mxu0 %v245
  %554 = vmatprep.subr.mxu0 %v248
  %555 = vmatpush1.msra.mxu0 %v247
  %556 = vmatprep.subr.mxu0 %v250
  %557 = vmatpush1.msra.mxu0 %v249
  %558 = vmatprep.subr.mxu0 %v252
  %559 = vmatpush1.msra.mxu0 %v251
  %560 = vmatprep.subr.mxu0 %v254
  %561 = vmatpush1.msra.mxu0 %v253
  %562 = vmatprep.subr.mxu0 %v256
  %563 = vmatpush1.msra.mxu0 %v255
  %564 = vmatprep.subr.mxu0 %v258
  %565 = vmatpush1.msra.mxu0 %v257
  %566 = vmatprep.subr.mxu0 %v260
  %567 = vmatpush1.msra.mxu0 %v259
  %568 = vmatprep.subr.mxu0 %v262
  %569 = vmatpush1.msra.mxu0 %v261
  %570 = vmatprep.subr.mxu0 %v264
  %571 = vmatpush1.msra.mxu0 %v263
  %572 = vmatprep.subr.mxu0 %v266
  %573 = vmatpush1.msra.mxu0 %v265
  %574 = vmatprep.subr.mxu0 %v268
  %575 = vmatpush1.msra.mxu0 %v267
  %576 = vmatprep.subr.mxu0 %v270
  %577 = vmatpush1.msra.mxu0 %v269
  %578 = vmatprep.subr.mxu0 %v272
  %579 = vmatpush1.msra.mxu0 %v271
  %580 = vmatprep.subr.mxu0 %v274
  %581 = vmatpush1.msra.mxu0 %v273
  %582 = vmatprep.subr.mxu0 %v276
  %583 = vmatpush1.msra.mxu0 %v275
  %584 = vmatprep.subr.mxu0 %v278
  %585 = vmatpush1.msra.mxu0 %v277
  %586 = vmatprep.subr.mxu0 %v280
  %587 = vmatpush1.msra.mxu0 %v279
  %588 = vmatprep.subr.mxu0 %v282
  %589 = vmatpush1.msra.mxu0 %v281
  %590 = vmatprep.subr.mxu0 %v284
  %591 = vmatpush1.msra.mxu0 %v283
  %592 = vmatprep.mubr.f32.mxu0 %v27
  %593 = vmatmul.mubr.f32.gmra.mrb[0].mxu0 %v26
  %v594 = vpop.f32.mrb[0].mxu0
  %v595 = vadd.f32 %v524, %v594
  %v596 = vpop.f32.mrb[0].mxu0
  %v597 = vadd.f32 %v526, %v596
  %598 = vdwg.mxu0
  %599 = vmatprep.subr.mxu0 %v286
  %600 = vmatpush1.msra.mxu0 %v285
  %601 = vmatprep.subr.mxu0 %v288
  %602 = vmatpush1.msra.mxu0 %v287
  %603 = vmatprep.subr.mxu0 %v290
  %604 = vmatpush1.msra.mxu0 %v289
  %605 = vmatprep.subr.mxu0 %v292
  %606 = vmatpush1.msra.mxu0 %v291
  %607 = vmatprep.subr.mxu0 %v294
  %608 = vmatpush1.msra.mxu0 %v293
  %609 = vmatprep.subr.mxu0 %v296
  %610 = vmatpush1.msra.mxu0 %v295
  %611 = vmatprep.subr.mxu0 %v298
  %612 = vmatpush1.msra.mxu0 %v297
  %613 = vmatprep.subr.mxu0 0.0
  %614 = vmatpush1.msra.mxu0 0.0
  %615 = vmatprep.subr.mxu0 0.0
  %616 = vmatpush1.msra.mxu0 0.0
  %617 = vmatprep.subr.mxu0 0.0
  %618 = vmatpush1.msra.mxu0 0.0
  %619 = vmatprep.subr.mxu0 0.0
  %620 = vmatpush1.msra.mxu0 0.0
  %621 = vmatprep.subr.mxu0 0.0
  %622 = vmatpush1.msra.mxu0 0.0
  %623 = vmatprep.subr.mxu0 0.0
  %624 = vmatpush1.msra.mxu0 0.0
  %625 = vmatprep.subr.mxu0 0.0
  %626 = vmatpush1.msra.mxu0 0.0
  %627 = vmatprep.subr.mxu0 0.0
  %628 = vmatpush1.msra.mxu0 0.0
  %629 = vmatprep.subr.mxu0 0.0
  %630 = vmatpush1.msra.mxu0 0.0
  %631 = vmatprep.subr.mxu0 0.0
  %632 = vmatpush1.msra.mxu0 0.0
  %633 = vmatprep.subr.mxu0 0.0
  %634 = vmatpush1.msra.mxu0 0.0
  %635 = vmatprep.subr.mxu0 0.0
  %636 = vmatpush1.msra.mxu0 0.0
  %637 = vmatprep.subr.mxu0 0.0
  %638 = vmatpush1.msra.mxu0 0.0
  %639 = vmatprep.subr.mxu0 0.0
  %640 = vmatpush1.msra.mxu0 0.0
  %641 = vmatprep.subr.mxu0 0.0
  %642 = vmatpush1.msra.mxu0 0.0
  %643 = vmatprep.subr.mxu0 0.0
  %644 = vmatpush1.msra.mxu0 0.0
  %645 = vmatprep.subr.mxu0 0.0
  %646 = vmatpush1.msra.mxu0 0.0
  %647 = vmatprep.subr.mxu0 0.0
  %648 = vmatpush1.msra.mxu0 0.0
  %649 = vmatprep.subr.mxu0 0.0
  %650 = vmatpush1.msra.mxu0 0.0
  %651 = vmatprep.subr.mxu0 0.0
  %652 = vmatpush1.msra.mxu0 0.0
  %653 = vmatprep.subr.mxu0 0.0
  %654 = vmatpush1.msra.mxu0 0.0
  %655 = vmatprep.subr.mxu0 0.0
  %656 = vmatpush1.msra.mxu0 0.0
  %657 = vmatprep.subr.mxu0 0.0
  %658 = vmatpush1.msra.mxu0 0.0
  %659 = vmatprep.subr.mxu0 0.0
  %660 = vmatpush1.msra.mxu0 0.0
  %661 = vmatprep.subr.mxu0 0.0
  %662 = vmatpush1.msra.mxu0 0.0
  %663 = vmatprep.mubr.f32.mxu0 0.0
  %664 = vmatmul.mubr.f32.gmra.mrb[0].mxu0 %v313
  %v665 = vpop.f32.mrb[0].mxu0
  %v666 = vadd.f32 %v595, %v665
  %v667 = vpop.f32.mrb[0].mxu0
  %v668 = vadd.f32 %v597, %v667
  %669 = vdwg.mxu0
  %v670 = vmax.f32 %v666, 0.0
  %v671 = vmax.f32 %v668, 0.0
  %v672 = vld [vmem:[%s3] sm:$0xff]
  %v673 = vld [vmem:[%s3 + $0x8] sm:$0xff]
  %v674 = vld [vmem:[%s3 + $0x10] sm:$0xff]
  %v675 = vld [vmem:[%s3 + $0x18] sm:$0xff]
  %v676 = vld [vmem:[%s3 + $0x20] sm:$0xff]
  %v677 = vld [vmem:[%s3 + $0x28] sm:$0xff]
  %v678 = vld [vmem:[%s3 + $0x30] sm:$0xff]
  %v679 = vld [vmem:[%s3 + $0x38] sm:$0xff]
  %v680 = vld [vmem:[%s3 + $0x40] sm:$0xff]
  %v681 = vld [vmem:[%s3 + $0x48] sm:$0xff]
  %v682 = vld [vmem:[%s3 + $0x50] sm:$0xff]
  %v683 = vld [vmem:[%s3 + $0x58] sm:$0xff]
  %v684 = vld [vmem:[%s3 + $0x60] sm:$0xff]
  %v685 = vld [vmem:[%s3 + $0x68] sm:$0xff]
  %v686 = vld [vmem:[%s3 + $0x70] sm:$0xff]
  %v687 = vld [vmem:[%s3 + $0x78] sm:$0xff]
  %v688 = vld [vmem:[%s3 + $0x80] sm:$0xff]
  %v689 = vld [vmem:[%s3 + $0x88] sm:$0xff]
  %v690 = vld [vmem:[%s3 + $0x90] sm:$0x3f]
  %v691 = vld [vmem:[%s4] sm:$0x1]
  %v693 = vlaneseq
  %v694 = vshrl.u32 %v693, 7
  %v695 = vsub.s32 0, %v694
  %v696 = vrot.slane %v691, %v695
  %vm698 = vcmask 179200
  %v700 = vsel %vm698, %v671, 0
  %vm702 = vcmask 1045504
  %v704 = vsel %vm702, %v690, 0
  %706 = vmatprep.subr.mxu0 0.0
  %707 = vmatpush1.msra.mxu0 %v672
  %708 = vmatprep.subr.mxu0 0.0
  %709 = vmatpush1.msra.mxu0 %v673
  %710 = vmatprep.subr.mxu0 0.0
  %711 = vmatpush1.msra.mxu0 %v674
  %712 = vmatprep.subr.mxu0 0.0
  %713 = vmatpush1.msra.mxu0 %v675
  %714 = vmatprep.subr.mxu0 0.0
  %715 = vmatpush1.msra.mxu0 %v676
  %716 = vmatprep.subr.mxu0 0.0
  %717 = vmatpush1.msra.mxu0 %v677
  %718 = vmatprep.subr.mxu0 0.0
  %719 = vmatpush1.msra.mxu0 %v678
  %720 = vmatprep.subr.mxu0 0.0
  %721 = vmatpush1.msra.mxu0 %v679
  %722 = vmatprep.subr.mxu0 0.0
  %723 = vmatpush1.msra.mxu0 %v680
  %724 = vmatprep.subr.mxu0 0.0
  %725 = vmatpush1.msra.mxu0 %v681
  %726 = vmatprep.subr.mxu0 0.0
  %727 = vmatpush1.msra.mxu0 %v682
  %728 = vmatprep.subr.mxu0 0.0
  %729 = vmatpush1.msra.mxu0 %v683
  %730 = vmatprep.subr.mxu0 0.0
  %731 = vmatpush1.msra.mxu0 %v684
  %732 = vmatprep.subr.mxu0 0.0
  %733 = vmatpush1.msra.mxu0 %v685
  %734 = vmatprep.subr.mxu0 0.0
  %735 = vmatpush1.msra.mxu0 %v686
  %736 = vmatprep.subr.mxu0 0.0
  %737 = vmatpush1.msra.mxu0 %v687
  %738 = vmatprep.subr.mxu0 0.0
  %739 = vmatpush1.msra.mxu0 %v688
  %740 = vmatprep.subr.mxu0 0.0
  %741 = vmatpush1.msra.mxu0 %v689
  %742 = vmatprep.subr.mxu0 0.0
  %743 = vmatpush1.msra.mxu0 %v704
  %744 = vmatprep.subr.mxu0 0.0
  %745 = vmatpush1.msra.mxu0 0.0
  %746 = vmatprep.subr.mxu0 0.0
  %747 = vmatpush1.msra.mxu0 0.0
  %748 = vmatprep.subr.mxu0 0.0
  %749 = vmatpush1.msra.mxu0 0.0
  %750 = vmatprep.subr.mxu0 0.0
  %751 = vmatpush1.msra.mxu0 0.0
  %752 = vmatprep.subr.mxu0 0.0
  %753 = vmatpush1.msra.mxu0 0.0
  %754 = vmatprep.subr.mxu0 0.0
  %755 = vmatpush1.msra.mxu0 0.0
  %756 = vmatprep.subr.mxu0 0.0
  %757 = vmatpush1.msra.mxu0 0.0
  %758 = vmatprep.subr.mxu0 0.0
  %759 = vmatpush1.msra.mxu0 0.0
  %760 = vmatprep.subr.mxu0 0.0
  %761 = vmatpush1.msra.mxu0 0.0
  %762 = vmatprep.subr.mxu0 0.0
  %763 = vmatpush1.msra.mxu0 0.0
  %764 = vmatprep.subr.mxu0 0.0
  %765 = vmatpush1.msra.mxu0 0.0
  %766 = vmatprep.subr.mxu0 0.0
  %767 = vmatpush1.msra.mxu0 0.0
  %768 = vmatprep.subr.mxu0 0.0
  %769 = vmatpush1.msra.mxu0 0.0
  %770 = vmatprep.mubr.f32.mxu0 %v700
  %771 = vmatmul.mubr.f32.gmra.mrb[0].mxu0 %v670
  %v772 = vpop.f32.mrb[0].mxu0
  %v773 = vadd.f32 %v696, %v772
  %v774 = vpop.f32.mrb[0].mxu0
  %775 = vdwg.mxu0
  %vm776 = vcmask 121856
  %777 = vst.msk [vmem:[%s5] sm:$0xff] %vm776, %v773
  // Predicated region
  $region22: #{simple_net_dropout_forward.5} parent=0 // pred_check
    _
  $region23: #{simple_net_dropout_forward.5} parent=0 // pred_check_branch
    %779 = sbr.rel (0) target = $region25
  $region24: #{simple_net_dropout_forward.5} parent=0 // pred_region
    _
  $region25: #{simple_net_dropout_forward.5} parent=0 // pred_fallthru
    _
  // Predicated region
  $region26: #{simple_net_dropout_forward.5} parent=0 // pred_check
    _
  $region27: #{simple_net_dropout_forward.5} parent=0 // pred_check_branch
    %781 = sbr.rel (0) target = $region29
  $region28: #{simple_net_dropout_forward.5} parent=0 // pred_region
    _
  $region29: #{simple_net_dropout_forward.5} parent=0 // pred_fallthru
    _

</llo_original>
